<compile_context>
chip_gen: v7x
topology: tpu7x:2x2x1
jax: 0.10.0
libtpu: 0.0.40
codegen_flags: <defaults>
</compile_context>

<pallas_src>
import jax
import jax.numpy as jnp
from jax.experimental import pallas as pl
from jax.experimental.pallas import tpu as pltpu

NUM_CLASSES = 154
TB = 8                                    # images per conv-stack grid step
_C1, _C2, _C3, _C4 = 128, 128, 128, 256   # lane-padded conv channel widths
_N1, _N2, _N3 = 1280, 640, 256            # lane-padded fc widths
# Per-layer flat-spatial geometry (row-major with width = layer input width).
_MP1, _WP1 = 1024, 34                     # conv1: 30*34 = 1020 rows, pad to 1024
_MP2, _WP2 = 210, 15                      # conv2: 14*15
_MP3, _WP3 = 42, 7                        # conv3: 6*7
_MP4, _WP4 = 6, 3                         # conv4: 2*3
_P1R, _P2R, _P3R = 232, 56, 16            # pooled rows written back (incl. 0-tail)
_SCONV_ROWS = 1064                        # >= _MP1 + _WP1 + 2, multiple of 8


# ----------------------- fused conv-stack kernel ----------------------------

def _conv_stack_kernel(x_ref, w1_ref, b1_ref, sel1_ref,
                       w2_ref, b2_ref, sel2_ref,
                       w3_ref, b3_ref, sel3_ref,
                       w4_ref, b4_ref,
                       o_ref, s_conv, s_act, s_out):
    f32 = jnp.float32

    def pool(acc, mp, wp, zero_rows, sel_ref):
        # acc: (mp, 128) f32 ReLU'd conv output, flat row-major (width wp).
        # Store acc + a zero tail to scratch once, re-load the three shifted
        # 2x2 windows with pl.ds (XLU/loads, no value-slice relayout), then do
        # the stride-2 decimation as a bf16 one-hot selection matmul.
        s_conv[pl.ds(0, mp), :] = acc
        s_conv[pl.ds(mp, zero_rows), :] = jnp.zeros((zero_rows, 128), f32)
        pm = jnp.maximum(jnp.maximum(acc, s_conv[pl.ds(1, mp), :]),
                         jnp.maximum(s_conv[pl.ds(wp, mp), :],
                                     s_conv[pl.ds(wp + 1, mp), :]))
        return jnp.dot(sel_ref[...], pm.astype(jnp.bfloat16),
                       preferred_element_type=f32)

    def conv2x2(mp, wp, w_ref, b_ref):
        # 2x2 conv reading s_act (flat row-major, width wp); taps paired into
        # two K=256 dots (tap-major weight rows are contiguous).
        def lhs(off):
            a = s_act[pl.ds(off, mp), :]
            b = s_act[pl.ds(off + 1, mp), :]
            return jnp.concatenate([a, b], axis=1).astype(jnp.bfloat16)
        acc = jnp.dot(lhs(0), w_ref[pl.ds(0, 256), :],
                      preferred_element_type=f32)
        acc = acc + jnp.dot(lhs(wp), w_ref[pl.ds(256, 256), :],
                            preferred_element_type=f32)
        return jnp.maximum(acc + b_ref[...], 0.0)

    def body(t, carry):
        # conv1: pre-packed im2col LHS -> one K=32 MXU dot.
        acc1 = jnp.dot(x_ref[t], w1_ref[...], preferred_element_type=f32)
        acc1 = jnp.maximum(acc1 + b1_ref[...], 0.0)               # (1024, 128)
        s_act[...] = pool(acc1, _MP1, _WP1, 40, sel1_ref)         # (232, 128)

        acc2 = conv2x2(_MP2, _WP2, w2_ref, b2_ref)                # (210, 128)
        s_act[pl.ds(0, _P2R), :] = pool(acc2, _MP2, _WP2, 16, sel2_ref)

        acc3 = conv2x2(_MP3, _WP3, w3_ref, b3_ref)                # (42, 128)
        s_act[pl.ds(0, _P3R), :] = pool(acc3, _MP3, _WP3, 8, sel3_ref)

        acc4 = conv2x2(_MP4, _WP4, w4_ref, b4_ref)                # (6, 256)
        # 2x2 pool of the 2x3 flat layout -> single 1x1 row (flat rows 0,1,3,4).
        s_out[pl.ds(t, 1), :] = jnp.maximum(
            jnp.maximum(acc4[0:1], acc4[1:2]),
            jnp.maximum(acc4[3:4], acc4[4:5]))
        return carry

    jax.lax.fori_loop(0, TB, body, 0)
    o_ref[...] = s_out[...].astype(o_ref.dtype)


def conv_stack(x_im2col, packed):
    """x_im2col: (Bp, 1024, 32) bf16 conv1 im2col.  Returns (Bp, 256) bf16."""
    Bp = x_im2col.shape[0]
    assert Bp % TB == 0
    return pl.pallas_call(
        _conv_stack_kernel,
        grid=(Bp // TB,),
        out_shape=jax.ShapeDtypeStruct((Bp, _C4), jnp.bfloat16),
        in_specs=[
            pl.BlockSpec((TB, _MP1, 32), lambda i: (i, 0, 0)),
            pl.BlockSpec(packed["w1"].shape, lambda i: (0, 0)),
            pl.BlockSpec(packed["b1"].shape, lambda i: (0, 0)),
            pl.BlockSpec(packed["sel1"].shape, lambda i: (0, 0)),
            pl.BlockSpec(packed["w2"].shape, lambda i: (0, 0)),
            pl.BlockSpec(packed["b2"].shape, lambda i: (0, 0)),
            pl.BlockSpec(packed["sel2"].shape, lambda i: (0, 0)),
            pl.BlockSpec(packed["w3"].shape, lambda i: (0, 0)),
            pl.BlockSpec(packed["b3"].shape, lambda i: (0, 0)),
            pl.BlockSpec(packed["sel3"].shape, lambda i: (0, 0)),
            pl.BlockSpec(packed["w4"].shape, lambda i: (0, 0)),
            pl.BlockSpec(packed["b4"].shape, lambda i: (0, 0)),
        ],
        out_specs=pl.BlockSpec((TB, _C4), lambda i: (i, 0)),
        scratch_shapes=[
            pltpu.VMEM((_SCONV_ROWS, 128), jnp.float32),   # conv out + 0-tail
            pltpu.VMEM((_P1R, 128), jnp.float32),          # pooled / next input
            pltpu.VMEM((TB, _C4), jnp.float32),            # per-tile features
        ],
        compiler_params=pltpu.CompilerParams(
            dimension_semantics=("parallel",),
            vmem_limit_bytes=48 * 1024 * 1024),
    )(x_im2col, packed["w1"], packed["b1"], packed["sel1"],
      packed["w2"], packed["b2"], packed["sel2"],
      packed["w3"], packed["b3"], packed["sel3"],
      packed["w4"], packed["b4"])


# --------------------------- fused FC tail kernel ---------------------------

def _fc_head_kernel(x_ref, w1_ref, b1_ref, w2_ref, b2_ref, w3_ref, b3_ref,
                    o_ref):
    h = jnp.dot(x_ref[...], w1_ref[...], preferred_element_type=jnp.float32)
    h = jnp.maximum(h + b1_ref[...], 0.0)
    h = jnp.dot(h.astype(jnp.bfloat16), w2_ref[...],
                preferred_element_type=jnp.float32)
    h = jnp.maximum(h + b2_ref[...], 0.0)
    out = jnp.dot(h.astype(jnp.bfloat16), w3_ref[...],
                  preferred_element_type=jnp.float32)
    o_ref[...] = out + b3_ref[...]


def _fc_tile(bp):
    # Prefer a tile that leaves >= 2 grid steps (keeps both v7x TCs busy).
    for tb in (256, 128, 64, 32, 16, 8):
        if bp % tb == 0 and bp // tb >= 2:
            return tb
    return bp


def fc_head(x, w1, b1, w2, b2, w3, b3):
    Bp, cin = x.shape
    n3 = w3.shape[1]
    tb = _fc_tile(Bp)
    return pl.pallas_call(
        _fc_head_kernel,
        grid=(Bp // tb,),
        out_shape=jax.ShapeDtypeStruct((Bp, n3), jnp.float32),
        in_specs=[
            pl.BlockSpec((tb, cin), lambda i: (i, 0)),
            pl.BlockSpec(w1.shape, lambda i: (0, 0)),
            pl.BlockSpec(b1.shape, lambda i: (0, 0)),
            pl.BlockSpec(w2.shape, lambda i: (0, 0)),
            pl.BlockSpec(b2.shape, lambda i: (0, 0)),
            pl.BlockSpec(w3.shape, lambda i: (0, 0)),
            pl.BlockSpec(b3.shape, lambda i: (0, 0)),
        ],
        out_specs=pl.BlockSpec((tb, n3), lambda i: (i, 0)),
        compiler_params=pltpu.CompilerParams(
            dimension_semantics=("parallel",)),
    )(x, w1, b1, w2, b2, w3, b3)


# ------------------------------- parameters ---------------------------------

def _uinit(key, shape, fan_in):
    bound = 1.0 / (fan_in ** 0.5)
    return jax.random.uniform(key, shape, jnp.float32, -bound, bound)


def init_params(key):
    ks = jax.random.split(key, 14)
    p = {}
    # conv weights in torch layout (Cout, Cin, kh, kw)
    p["w1"] = _uinit(ks[0], (32, 1, 5, 5), 1 * 5 * 5)
    p["b1"] = _uinit(ks[1], (32,), 1 * 5 * 5)
    p["w2"] = _uinit(ks[2], (64, 32, 2, 2), 32 * 2 * 2)
    p["b2"] = _uinit(ks[3], (64,), 32 * 2 * 2)
    p["w3"] = _uinit(ks[4], (120, 64, 2, 2), 64 * 2 * 2)
    p["b3"] = _uinit(ks[5], (120,), 64 * 2 * 2)
    p["w4"] = _uinit(ks[6], (240, 120, 2, 2), 120 * 2 * 2)
    p["b4"] = _uinit(ks[7], (240,), 120 * 2 * 2)
    # linear weights in torch layout (out, in)
    p["fc1_w"] = _uinit(ks[8], (1200, 240), 240)
    p["fc1_b"] = _uinit(ks[9], (1200,), 240)
    p["fc2_w"] = _uinit(ks[10], (600, 1200), 1200)
    p["fc2_b"] = _uinit(ks[11], (600,), 1200)
    p["fc3_w"] = _uinit(ks[12], (154, 600), 600)
    p["fc3_b"] = _uinit(ks[13], (154,), 600)
    return p


def _make_sel(p, wpo, wp, cols, rows):
    """One-hot (rows, cols) bf16 matrix selecting flat index 2*py*wp + 2*px."""
    r = jnp.arange(rows)[:, None]
    c = jnp.arange(cols)[None, :]
    src = 2 * (r // wpo) * wp + 2 * (r % wpo)
    return ((c == src) & (r < p)).astype(jnp.bfloat16)


def prepare_params(p):
    """One-time weight layout: transpose, zero-pad to lane-dense widths, bf16."""
    def conv1_w(w):                    # (32,1,5,5) -> (32, 128): taps along K
        cout = w.shape[0]
        wt = jnp.transpose(w, (2, 3, 1, 0)).reshape(25, cout)
        wt = jnp.pad(wt, ((0, 32 - 25), (0, _C1 - cout)))
        return wt.astype(jnp.bfloat16)

    def conv_w(w, cin_pad, cout_pad):  # (cout,cin,2,2) -> (4*cin_pad, cout_pad)
        cout, cin, kh, kw = w.shape
        wt = jnp.transpose(w, (2, 3, 1, 0))
        wt = jnp.pad(wt, ((0, 0), (0, 0),
                          (0, cin_pad - cin), (0, cout_pad - cout)))
        return wt.reshape(kh * kw * cin_pad, cout_pad).astype(jnp.bfloat16)

    def conv_b(b, cout_pad):
        return jnp.pad(b, (0, cout_pad - b.shape[0])
                       ).reshape(1, cout_pad).astype(jnp.float32)

    def fc_w(w, in_pad, out_pad):
        wt = jnp.transpose(w)
        wt = jnp.pad(wt, ((0, in_pad - wt.shape[0]),
                          (0, out_pad - wt.shape[1])))
        return wt.astype(jnp.bfloat16)

    def fc_b(b, out_pad):
        return jnp.pad(b, (0, out_pad - b.shape[0])
                       ).reshape(1, out_pad).astype(jnp.float32)

    return {
        "w1": conv1_w(p["w1"]),              "b1": conv_b(p["b1"], _C1),
        "w2": conv_w(p["w2"], _C1, _C2),     "b2": conv_b(p["b2"], _C2),
        "w3": conv_w(p["w3"], _C2, _C3),     "b3": conv_b(p["b3"], _C3),
        "w4": conv_w(p["w4"], _C3, _C4),     "b4": conv_b(p["b4"], _C4),
        "sel1": _make_sel(225, 15, _WP1, _MP1, _P1R),
        "sel2": _make_sel(49, 7, _WP2, _MP2, _P2R),
        "sel3": _make_sel(9, 3, _WP3, _MP3, _P3R),
        "fc1_w": fc_w(p["fc1_w"], _C4, _N1), "fc1_b": fc_b(p["fc1_b"], _N1),
        "fc2_w": fc_w(p["fc2_w"], _N1, _N2), "fc2_b": fc_b(p["fc2_b"], _N2),
        "fc3_w": fc_w(p["fc3_w"], _N2, _N3), "fc3_b": fc_b(p["fc3_b"], _N3),
    }


# --------------------------------- forward ----------------------------------

def cnn_forward(packed, x_nchw):
    # x.cuda() in the torch forward is a device move -- no-op here.
    B = x_nchw.shape[0]
    Bp = ((B + TB - 1) // TB) * TB
    x = x_nchw.astype(jnp.float32)
    if Bp != B:
        x = jnp.pad(x, ((0, Bp - B), (0, 0), (0, 0), (0, 0)))
    # conv1 padding=1: 32x32 -> 34x34, flatten spatial row-major (+ zero tail).
    xp = jnp.pad(x[:, 0], ((0, 0), (1, 1), (1, 1)))             # (Bp, 34, 34)
    xf = jnp.pad(xp.reshape(Bp, 34 * 34), ((0, 0), (0, 8)))     # (Bp, 1164)
    # conv1 im2col: the 25 taps become the K (lane) dim -> one K=32 MXU dot.
    taps = [xf[:, dy * 34 + dx: dy * 34 + dx + 1020]
            for dy in range(5) for dx in range(5)]
    lhs = jnp.stack(taps, axis=-1)                              # (Bp, 1020, 25)
    lhs = jnp.pad(lhs, ((0, 0), (0, 4), (0, 7))).astype(jnp.bfloat16)
    feats = conv_stack(lhs, packed)                             # (Bp, 256) bf16
    logits = fc_head(feats, packed["fc1_w"], packed["fc1_b"],
                     packed["fc2_w"], packed["fc2_b"],
                     packed["fc3_w"], packed["fc3_b"])          # (Bp, 256) f32
    # TODO(synk): the original forward computes LogSoftmax into `output` but
    # returns the pre-softmax fc3 logits, so log-softmax is intentionally not
    # applied to the returned value.
    return logits[:B, :NUM_CLASSES]


# ------------------------- plain-JAX reference check ------------------------

def _conv_ref(x, w, b, pad):
    wt = jnp.transpose(w, (2, 3, 1, 0)).astype(jnp.bfloat16)    # HWIO
    y = jax.lax.conv_general_dilated(
        x.astype(jnp.bfloat16), wt, (1, 1), ((pad, pad), (pad, pad)),
        dimension_numbers=("NHWC", "HWIO", "NHWC"),
        preferred_element_type=jnp.float32)
    return jnp.maximum(y + b.astype(jnp.float32), 0.0)


def _pool_ref(x):
    return jax.lax.reduce_window(x, -jnp.inf, jax.lax.max,
                                 (1, 2, 2, 1), (1, 2, 2, 1), "VALID")


def _fc_ref(x, w, b, relu):
    y = jnp.dot(x.astype(jnp.bfloat16),
                jnp.transpose(w).astype(jnp.bfloat16),
                preferred_element_type=jnp.float32) + b.astype(jnp.float32)
    return jnp.maximum(y, 0.0) if relu else y


def cnn_reference(params, x_nchw):
    x = jnp.transpose(x_nchw, (0, 2, 3, 1)).astype(jnp.float32)
    x = _pool_ref(_conv_ref(x, params["w1"], params["b1"], 1))
    x = _pool_ref(_conv_ref(x, params["w2"], params["b2"], 0))
    x = _pool_ref(_conv_ref(x, params["w3"], params["b3"], 0))
    x = _pool_ref(_conv_ref(x, params["w4"], params["b4"], 0))
    x = x.reshape(x.shape[0], -1)
    x = _fc_ref(x, params["fc1_w"], params["fc1_b"], True)
    x = _fc_ref(x, params["fc2_w"], params["fc2_b"], True)
    x = _fc_ref(x, params["fc3_w"], params["fc3_b"], False)
    return x


if __name__ == "__main__":
    key = jax.random.PRNGKey(0)
    pkey, xkey = jax.random.split(key)
    params = init_params(pkey)
    packed = prepare_params(params)          # one-time layout/pad/bf16 cast
    # NCHW input, matching torch Conv2d(1, ...) on 32x32 images; batch=2.
    x = jax.random.normal(xkey, (2, 1, 32, 32), dtype=jnp.float32)
    out = jax.jit(cnn_forward)(packed, x)
    jax.block_until_ready(out)
    assert out.shape == (2, NUM_CLASSES), out.shape
    assert bool(jnp.all(jnp.isfinite(out)))
    ref = cnn_reference(params, x)
    assert bool(jnp.allclose(out, ref, rtol=2e-2, atol=2e-2)), (
        float(jnp.max(jnp.abs(out - ref))))
    print("KERNEL_OK")
</pallas_src>

<mosaic_0001>
module attributes {stable_mosaic.version = 11 : i64} {
  func.func @_fc_head_kernel(%arg0: i32, %arg1: memref<8x256xbf16, #tpu.memory_space<vmem>>, %arg2: memref<256x1280xbf16, #tpu.memory_space<vmem>>, %arg3: memref<1x1280xf32, #tpu.memory_space<vmem>>, %arg4: memref<1280x640xbf16, #tpu.memory_space<vmem>>, %arg5: memref<1x640xf32, #tpu.memory_space<vmem>>, %arg6: memref<640x256xbf16, #tpu.memory_space<vmem>>, %arg7: memref<1x256xf32, #tpu.memory_space<vmem>>, %arg8: memref<8x256xf32, #tpu.memory_space<vmem>>) attributes {dimension_semantics = [#tpu.dimension_semantics<parallel>], iteration_bounds = array<i64: 1>, scalar_prefetch = 0 : i64, scratch_operands = 0 : i64, tpu.core_type = #tpu.core_type<tc>, window_params = [{transform_indices = @transform_0, window_bounds = array<i64: 8, 256>}, {pipeline_mode = #tpu.pipeline_mode<synchronous>, transform_indices = @transform_1, window_bounds = array<i64: 256, 1280>}, {pipeline_mode = #tpu.pipeline_mode<synchronous>, transform_indices = @transform_2, window_bounds = array<i64: 1, 1280>}, {pipeline_mode = #tpu.pipeline_mode<synchronous>, transform_indices = @transform_3, window_bounds = array<i64: 1280, 640>}, {pipeline_mode = #tpu.pipeline_mode<synchronous>, transform_indices = @transform_4, window_bounds = array<i64: 1, 640>}, {pipeline_mode = #tpu.pipeline_mode<synchronous>, transform_indices = @transform_5, window_bounds = array<i64: 640, 256>}, {pipeline_mode = #tpu.pipeline_mode<synchronous>, transform_indices = @transform_6, window_bounds = array<i64: 1, 256>}, {transform_indices = @transform_7, window_bounds = array<i64: 8, 256>}]} {
    %c0 = arith.constant 0 : index
    %c0_0 = arith.constant 0 : index
    %0 = vector.load %arg1[%c0, %c0_0] : memref<8x256xbf16, #tpu.memory_space<vmem>>, vector<8x256xbf16>
    %c0_1 = arith.constant 0 : index
    %c0_2 = arith.constant 0 : index
    %1 = vector.load %arg2[%c0_1, %c0_2] : memref<256x1280xbf16, #tpu.memory_space<vmem>>, vector<256x1280xbf16>
    %cst = arith.constant dense<0.000000e+00> : vector<8x1280xf32>
    %2 = tpu.matmul %0, %1, %cst {dimension_numbers = #tpu.dot_dimension_numbers<[1], [0], [0], [1], [0, 0, 1, 1], [], []>} : vector<8x256xbf16>, vector<256x1280xbf16>, vector<8x1280xf32> -> vector<8x1280xf32>
    %c0_3 = arith.constant 0 : index
    %c0_4 = arith.constant 0 : index
    %3 = vector.load %arg3[%c0_3, %c0_4] : memref<1x1280xf32, #tpu.memory_space<vmem>>, vector<1x1280xf32>
    %4 = vector.broadcast %3 : vector<1x1280xf32> to vector<8x1280xf32>
    %5 = arith.addf %2, %4 : vector<8x1280xf32>
    %cst_5 = arith.constant 0.000000e+00 : f32
    %6 = vector.broadcast %cst_5 : f32 to vector<8x1280xf32>
    %7 = arith.maximumf %5, %6 : vector<8x1280xf32>
    %8 = arith.truncf %7 : vector<8x1280xf32> to vector<8x1280xbf16>
    %c0_6 = arith.constant 0 : index
    %c0_7 = arith.constant 0 : index
    %9 = vector.load %arg4[%c0_6, %c0_7] : memref<1280x640xbf16, #tpu.memory_space<vmem>>, vector<1280x640xbf16>
    %cst_8 = arith.constant dense<0.000000e+00> : vector<8x640xf32>
    %10 = tpu.matmul %8, %9, %cst_8 {dimension_numbers = #tpu.dot_dimension_numbers<[1], [0], [0], [1], [0, 0, 1, 1], [], []>} : vector<8x1280xbf16>, vector<1280x640xbf16>, vector<8x640xf32> -> vector<8x640xf32>
    %c0_9 = arith.constant 0 : index
    %c0_10 = arith.constant 0 : index
    %11 = vector.load %arg5[%c0_9, %c0_10] : memref<1x640xf32, #tpu.memory_space<vmem>>, vector<1x640xf32>
    %12 = vector.broadcast %11 : vector<1x640xf32> to vector<8x640xf32>
    %13 = arith.addf %10, %12 : vector<8x640xf32>
    %cst_11 = arith.constant 0.000000e+00 : f32
    %14 = vector.broadcast %cst_11 : f32 to vector<8x640xf32>
    %15 = arith.maximumf %13, %14 : vector<8x640xf32>
    %16 = arith.truncf %15 : vector<8x640xf32> to vector<8x640xbf16>
    %c0_12 = arith.constant 0 : index
    %c0_13 = arith.constant 0 : index
    %17 = vector.load %arg6[%c0_12, %c0_13] : memref<640x256xbf16, #tpu.memory_space<vmem>>, vector<640x256xbf16>
    %cst_14 = arith.constant dense<0.000000e+00> : vector<8x256xf32>
    %18 = tpu.matmul %16, %17, %cst_14 {dimension_numbers = #tpu.dot_dimension_numbers<[1], [0], [0], [1], [0, 0, 1, 1], [], []>} : vector<8x640xbf16>, vector<640x256xbf16>, vector<8x256xf32> -> vector<8x256xf32>
    %c0_15 = arith.constant 0 : index
    %c0_16 = arith.constant 0 : index
    %19 = vector.load %arg7[%c0_15, %c0_16] : memref<1x256xf32, #tpu.memory_space<vmem>>, vector<1x256xf32>
    %20 = vector.broadcast %19 : vector<1x256xf32> to vector<8x256xf32>
    %21 = arith.addf %18, %20 : vector<8x256xf32>
    %c0_17 = arith.constant 0 : index
    %c0_18 = arith.constant 0 : index
    %22 = vector.load %arg8[%c0_17, %c0_18] : memref<8x256xf32, #tpu.memory_space<vmem>>, vector<8x256xf32>
    tpu.vector_store %arg8[%c0_17, %c0_18], %21 {strides = array<i32>} : memref<8x256xf32, #tpu.memory_space<vmem>>, vector<8x256xf32>,
    return
  }
  func.func @transform_0(%arg0: i32) -> (i32, i32) {
    %c0_i32 = arith.constant 0 : i32
    %c0_i32_0 = arith.constant 0 : i32
    return %arg0, %c0_i32 : i32, i32
  }
  func.func @transform_1(%arg0: i32) -> (i32, i32) {
    %c0_i32 = arith.constant 0 : i32
    %c0_i32_0 = arith.constant 0 : i32
    %c0_i32_1 = arith.constant 0 : i32
    return %c0_i32, %c0_i32_0 : i32, i32
  }
  func.func @transform_2(%arg0: i32) -> (i32, i32) {
    %c0_i32 = arith.constant 0 : i32
    %c0_i32_0 = arith.constant 0 : i32
    %c0_i32_1 = arith.constant 0 : i32
    return %c0_i32, %c0_i32_0 : i32, i32
  }
  func.func @transform_3(%arg0: i32) -> (i32, i32) {
    %c0_i32 = arith.constant 0 : i32
    %c0_i32_0 = arith.constant 0 : i32
    %c0_i32_1 = arith.constant 0 : i32
    return %c0_i32, %c0_i32_0 : i32, i32
  }
  func.func @transform_4(%arg0: i32) -> (i32, i32) {
    %c0_i32 = arith.constant 0 : i32
    %c0_i32_0 = arith.constant 0 : i32
    %c0_i32_1 = arith.constant 0 : i32
    return %c0_i32, %c0_i32_0 : i32, i32
  }
  func.func @transform_5(%arg0: i32) -> (i32, i32) {
    %c0_i32 = arith.constant 0 : i32
    %c0_i32_0 = arith.constant 0 : i32
    %c0_i32_1 = arith.constant 0 : i32
    return %c0_i32, %c0_i32_0 : i32, i32
  }
  func.func @transform_6(%arg0: i32) -> (i32, i32) {
    %c0_i32 = arith.constant 0 : i32
    %c0_i32_0 = arith.constant 0 : i32
    %c0_i32_1 = arith.constant 0 : i32
    return %c0_i32, %c0_i32_0 : i32, i32
  }
  func.func @transform_7(%arg0: i32) -> (i32, i32) {
    %c0_i32 = arith.constant 0 : i32
    %c0_i32_0 = arith.constant 0 : i32
    return %arg0, %c0_i32 : i32, i32
  }
}

module attributes {stable_mosaic.version = 11 : i64} {
  func.func @_conv_stack_kernel(%arg0: i32, %arg1: memref<8x1024x32xbf16, #tpu.memory_space<vmem>>, %arg2: memref<32x128xbf16, #tpu.memory_space<vmem>>, %arg3: memref<1x128xf32, #tpu.memory_space<vmem>>, %arg4: memref<232x1024xbf16, #tpu.memory_space<vmem>>, %arg5: memref<512x128xbf16, #tpu.memory_space<vmem>>, %arg6: memref<1x128xf32, #tpu.memory_space<vmem>>, %arg7: memref<56x210xbf16, #tpu.memory_space<vmem>>, %arg8: memref<512x128xbf16, #tpu.memory_space<vmem>>, %arg9: memref<1x128xf32, #tpu.memory_space<vmem>>, %arg10: memref<16x42xbf16, #tpu.memory_space<vmem>>, %arg11: memref<512x256xbf16, #tpu.memory_space<vmem>>, %arg12: memref<1x256xf32, #tpu.memory_space<vmem>>, %arg13: memref<8x256xbf16, #tpu.memory_space<vmem>>, %arg14: memref<1064x128xf32, #tpu.memory_space<vmem>>, %arg15: memref<232x128xf32, #tpu.memory_space<vmem>>, %arg16: memref<8x256xf32, #tpu.memory_space<vmem>>) attributes {dimension_semantics = [#tpu.dimension_semantics<parallel>], iteration_bounds = array<i64: 1>, scalar_prefetch = 0 : i64, scratch_operands = 3 : i64, tpu.core_type = #tpu.core_type<tc>, window_params = [{transform_indices = @transform_0, window_bounds = array<i64: 8, 1024, 32>}, {pipeline_mode = #tpu.pipeline_mode<synchronous>, transform_indices = @transform_1, window_bounds = array<i64: 32, 128>}, {pipeline_mode = #tpu.pipeline_mode<synchronous>, transform_indices = @transform_2, window_bounds = array<i64: 1, 128>}, {pipeline_mode = #tpu.pipeline_mode<synchronous>, transform_indices = @transform_3, window_bounds = array<i64: 232, 1024>}, {pipeline_mode = #tpu.pipeline_mode<synchronous>, transform_indices = @transform_4, window_bounds = array<i64: 512, 128>}, {pipeline_mode = #tpu.pipeline_mode<synchronous>, transform_indices = @transform_5, window_bounds = array<i64: 1, 128>}, {pipeline_mode = #tpu.pipeline_mode<synchronous>, transform_indices = @transform_6, window_bounds = array<i64: 56, 210>}, {pipeline_mode = #tpu.pipeline_mode<synchronous>, transform_indices = @transform_7, window_bounds = array<i64: 512, 128>}, {pipeline_mode = #tpu.pipeline_mode<synchronous>, transform_indices = @transform_8, window_bounds = array<i64: 1, 128>}, {pipeline_mode = #tpu.pipeline_mode<synchronous>, transform_indices = @transform_9, window_bounds = array<i64: 16, 42>}, {pipeline_mode = #tpu.pipeline_mode<synchronous>, transform_indices = @transform_10, window_bounds = array<i64: 512, 256>}, {pipeline_mode = #tpu.pipeline_mode<synchronous>, transform_indices = @transform_11, window_bounds = array<i64: 1, 256>}, {transform_indices = @transform_12, window_bounds = array<i64: 8, 256>}]} {
    %c0_i32 = arith.constant 0 : i32
    %c8_i32 = arith.constant 8 : i32
    %0 = arith.addi %c0_i32, %c8_i32 : i32
    %c1_i32 = arith.constant 1 : i32
    scf.for %arg17 = %c0_i32 to %0 step %c1_i32  : i32 {
      %4 = arith.index_cast %arg17 : i32 to index
      %c0_4 = arith.constant 0 : index
      %c0_5 = arith.constant 0 : index
      %5 = vector.load %arg1[%4, %c0_4, %c0_5] : memref<8x1024x32xbf16, #tpu.memory_space<vmem>>, vector<1x1024x32xbf16>
      %6 = vector.shape_cast %5 : vector<1x1024x32xbf16> to vector<1024x32xbf16>
      %c0_6 = arith.constant 0 : index
      %c0_7 = arith.constant 0 : index
      %7 = vector.load %arg2[%c0_6, %c0_7] : memref<32x128xbf16, #tpu.memory_space<vmem>>, vector<32x128xbf16>
      %cst = arith.constant dense<0.000000e+00> : vector<1024x128xf32>
      %8 = tpu.matmul %6, %7, %cst {dimension_numbers = #tpu.dot_dimension_numbers<[1], [0], [0], [1], [0, 0, 1, 1], [], []>} : vector<1024x32xbf16>, vector<32x128xbf16>, vector<1024x128xf32> -> vector<1024x128xf32>
      %c0_8 = arith.constant 0 : index
      %c0_9 = arith.constant 0 : index
      %9 = vector.load %arg3[%c0_8, %c0_9] : memref<1x128xf32, #tpu.memory_space<vmem>>, vector<1x128xf32>
      %10 = vector.broadcast %9 : vector<1x128xf32> to vector<1024x128xf32>
      %11 = arith.addf %8, %10 : vector<1024x128xf32>
      %cst_10 = arith.constant 0.000000e+00 : f32
      %12 = vector.broadcast %cst_10 : f32 to vector<1024x128xf32>
      %13 = arith.maximumf %11, %12 : vector<1024x128xf32>
      %c0_11 = arith.constant 0 : index
      %c0_12 = arith.constant 0 : index
      %14 = vector.load %arg14[%c0_11, %c0_12] : memref<1064x128xf32, #tpu.memory_space<vmem>>, vector<1024x128xf32>
      tpu.vector_store %arg14[%c0_11, %c0_12], %13 {strides = array<i32>} : memref<1064x128xf32, #tpu.memory_space<vmem>>, vector<1024x128xf32>,
      %cst_13 = arith.constant 0.000000e+00 : f32
      %15 = vector.broadcast %cst_13 : f32 to vector<40x128xf32>
      %c1024 = arith.constant 1024 : index
      %c0_14 = arith.constant 0 : index
      %16 = vector.load %arg14[%c1024, %c0_14] : memref<1064x128xf32, #tpu.memory_space<vmem>>, vector<40x128xf32>
      tpu.vector_store %arg14[%c1024, %c0_14], %15 {strides = array<i32>} : memref<1064x128xf32, #tpu.memory_space<vmem>>, vector<40x128xf32>,
      %c1 = arith.constant 1 : index
      %c0_15 = arith.constant 0 : index
      %17 = vector.load %arg14[%c1, %c0_15] : memref<1064x128xf32, #tpu.memory_space<vmem>>, vector<1024x128xf32>
      %18 = arith.maximumf %13, %17 : vector<1024x128xf32>
      %c34 = arith.constant 34 : index
      %c0_16 = arith.constant 0 : index
      %19 = vector.load %arg14[%c34, %c0_16] : memref<1064x128xf32, #tpu.memory_space<vmem>>, vector<1024x128xf32>
      %c35 = arith.constant 35 : index
      %c0_17 = arith.constant 0 : index
      %20 = vector.load %arg14[%c35, %c0_17] : memref<1064x128xf32, #tpu.memory_space<vmem>>, vector<1024x128xf32>
      %21 = arith.maximumf %19, %20 : vector<1024x128xf32>
      %22 = arith.maximumf %18, %21 : vector<1024x128xf32>
      %c0_18 = arith.constant 0 : index
      %c0_19 = arith.constant 0 : index
      %23 = vector.load %arg4[%c0_18, %c0_19] : memref<232x1024xbf16, #tpu.memory_space<vmem>>, vector<232x1024xbf16>
      %24 = arith.truncf %22 : vector<1024x128xf32> to vector<1024x128xbf16>
      %cst_20 = arith.constant dense<0.000000e+00> : vector<232x128xf32>
      %25 = tpu.matmul %23, %24, %cst_20 {dimension_numbers = #tpu.dot_dimension_numbers<[1], [0], [0], [1], [0, 0, 1, 1], [], []>} : vector<232x1024xbf16>, vector<1024x128xbf16>, vector<232x128xf32> -> vector<232x128xf32>
      %c0_21 = arith.constant 0 : index
      %c0_22 = arith.constant 0 : index
      %26 = vector.load %arg15[%c0_21, %c0_22] : memref<232x128xf32, #tpu.memory_space<vmem>>, vector<232x128xf32>
      tpu.vector_store %arg15[%c0_21, %c0_22], %25 {strides = array<i32>} : memref<232x128xf32, #tpu.memory_space<vmem>>, vector<232x128xf32>,
      %c0_23 = arith.constant 0 : index
      %c0_24 = arith.constant 0 : index
      %27 = vector.load %arg15[%c0_23, %c0_24] : memref<232x128xf32, #tpu.memory_space<vmem>>, vector<210x128xf32>
      %c1_25 = arith.constant 1 : index
      %c0_26 = arith.constant 0 : index
      %28 = vector.load %arg15[%c1_25, %c0_26] : memref<232x128xf32, #tpu.memory_space<vmem>>, vector<210x128xf32>
      %29 = tpu.concatenate %27, %28 in 1 : vector<210x128xf32>, vector<210x128xf32> -> vector<210x256xf32>
      %30 = arith.truncf %29 : vector<210x256xf32> to vector<210x256xbf16>
      %c0_27 = arith.constant 0 : index
      %c0_28 = arith.constant 0 : index
      %31 = vector.load %arg5[%c0_27, %c0_28] : memref<512x128xbf16, #tpu.memory_space<vmem>>, vector<256x128xbf16>
      %cst_29 = arith.constant dense<0.000000e+00> : vector<210x128xf32>
      %32 = tpu.matmul %30, %31, %cst_29 {dimension_numbers = #tpu.dot_dimension_numbers<[1], [0], [0], [1], [0, 0, 1, 1], [], []>} : vector<210x256xbf16>, vector<256x128xbf16>, vector<210x128xf32> -> vector<210x128xf32>
      %c15 = arith.constant 15 : index
      %c0_30 = arith.constant 0 : index
      %33 = vector.load %arg15[%c15, %c0_30] : memref<232x128xf32, #tpu.memory_space<vmem>>, vector<210x128xf32>
      %c16 = arith.constant 16 : index
      %c0_31 = arith.constant 0 : index
      %34 = vector.load %arg15[%c16, %c0_31] : memref<232x128xf32, #tpu.memory_space<vmem>>, vector<210x128xf32>
      %35 = tpu.concatenate %33, %34 in 1 : vector<210x128xf32>, vector<210x128xf32> -> vector<210x256xf32>
      %36 = arith.truncf %35 : vector<210x256xf32> to vector<210x256xbf16>
      %c256 = arith.constant 256 : index
      %c0_32 = arith.constant 0 : index
      %37 = vector.load %arg5[%c256, %c0_32] : memref<512x128xbf16, #tpu.memory_space<vmem>>, vector<256x128xbf16>
      %cst_33 = arith.constant dense<0.000000e+00> : vector<210x128xf32>
      %38 = tpu.matmul %36, %37, %cst_33 {dimension_numbers = #tpu.dot_dimension_numbers<[1], [0], [0], [1], [0, 0, 1, 1], [], []>} : vector<210x256xbf16>, vector<256x128xbf16>, vector<210x128xf32> -> vector<210x128xf32>
      %39 = arith.addf %32, %38 : vector<210x128xf32>
      %c0_34 = arith.constant 0 : index
      %c0_35 = arith.constant 0 : index
      %40 = vector.load %arg6[%c0_34, %c0_35] : memref<1x128xf32, #tpu.memory_space<vmem>>, vector<1x128xf32>
      %41 = vector.broadcast %40 : vector<1x128xf32> to vector<210x128xf32>
      %42 = arith.addf %39, %41 : vector<210x128xf32>
      %cst_36 = arith.constant 0.000000e+00 : f32
      %43 = vector.broadcast %cst_36 : f32 to vector<210x128xf32>
      %44 = arith.maximumf %42, %43 : vector<210x128xf32>
      %c0_37 = arith.constant 0 : index
      %c0_38 = arith.constant 0 : index
      %45 = vector.load %arg14[%c0_37, %c0_38] : memref<1064x128xf32, #tpu.memory_space<vmem>>, vector<210x128xf32>
      tpu.vector_store %arg14[%c0_37, %c0_38], %44 {strides = array<i32>} : memref<1064x128xf32, #tpu.memory_space<vmem>>, vector<210x128xf32>,
      %cst_39 = arith.constant 0.000000e+00 : f32
      %46 = vector.broadcast %cst_39 : f32 to vector<16x128xf32>
      %c210 = arith.constant 210 : index
      %c0_40 = arith.constant 0 : index
      %47 = vector.load %arg14[%c210, %c0_40] : memref<1064x128xf32, #tpu.memory_space<vmem>>, vector<16x128xf32>
      tpu.vector_store %arg14[%c210, %c0_40], %46 {strides = array<i32>} : memref<1064x128xf32, #tpu.memory_space<vmem>>, vector<16x128xf32>,
      %c1_41 = arith.constant 1 : index
      %c0_42 = arith.constant 0 : index
      %48 = vector.load %arg14[%c1_41, %c0_42] : memref<1064x128xf32, #tpu.memory_space<vmem>>, vector<210x128xf32>
      %49 = arith.maximumf %44, %48 : vector<210x128xf32>
      %c15_43 = arith.constant 15 : index
      %c0_44 = arith.constant 0 : index
      %50 = vector.load %arg14[%c15_43, %c0_44] : memref<1064x128xf32, #tpu.memory_space<vmem>>, vector<210x128xf32>
      %c16_45 = arith.constant 16 : index
      %c0_46 = arith.constant 0 : index
      %51 = vector.load %arg14[%c16_45, %c0_46] : memref<1064x128xf32, #tpu.memory_space<vmem>>, vector<210x128xf32>
      %52 = arith.maximumf %50, %51 : vector<210x128xf32>
      %53 = arith.maximumf %49, %52 : vector<210x128xf32>
      %c0_47 = arith.constant 0 : index
      %c0_48 = arith.constant 0 : index
      %54 = vector.load %arg7[%c0_47, %c0_48] : memref<56x210xbf16, #tpu.memory_space<vmem>>, vector<56x210xbf16>
      %55 = arith.truncf %53 : vector<210x128xf32> to vector<210x128xbf16>
      %cst_49 = arith.constant dense<0.000000e+00> : vector<56x128xf32>
      %56 = tpu.matmul %54, %55, %cst_49 {dimension_numbers = #tpu.dot_dimension_numbers<[1], [0], [0], [1], [0, 0, 1, 1], [], []>} : vector<56x210xbf16>, vector<210x128xbf16>, vector<56x128xf32> -> vector<56x128xf32>
      %c0_50 = arith.constant 0 : index
      %c0_51 = arith.constant 0 : index
      %57 = vector.load %arg15[%c0_50, %c0_51] : memref<232x128xf32, #tpu.memory_space<vmem>>, vector<56x128xf32>
      tpu.vector_store %arg15[%c0_50, %c0_51], %56 {strides = array<i32>} : memref<232x128xf32, #tpu.memory_space<vmem>>, vector<56x128xf32>,
      %c0_52 = arith.constant 0 : index
      %c0_53 = arith.constant 0 : index
      %58 = vector.load %arg15[%c0_52, %c0_53] : memref<232x128xf32, #tpu.memory_space<vmem>>, vector<42x128xf32>
      %c1_54 = arith.constant 1 : index
      %c0_55 = arith.constant 0 : index
      %59 = vector.load %arg15[%c1_54, %c0_55] : memref<232x128xf32, #tpu.memory_space<vmem>>, vector<42x128xf32>
      %60 = tpu.concatenate %58, %59 in 1 : vector<42x128xf32>, vector<42x128xf32> -> vector<42x256xf32>
      %61 = arith.truncf %60 : vector<42x256xf32> to vector<42x256xbf16>
      %c0_56 = arith.constant 0 : index
      %c0_57 = arith.constant 0 : index
      %62 = vector.load %arg8[%c0_56, %c0_57] : memref<512x128xbf16, #tpu.memory_space<vmem>>, vector<256x128xbf16>
      %cst_58 = arith.constant dense<0.000000e+00> : vector<42x128xf32>
      %63 = tpu.matmul %61, %62, %cst_58 {dimension_numbers = #tpu.dot_dimension_numbers<[1], [0], [0], [1], [0, 0, 1, 1], [], []>} : vector<42x256xbf16>, vector<256x128xbf16>, vector<42x128xf32> -> vector<42x128xf32>
      %c7 = arith.constant 7 : index
      %c0_59 = arith.constant 0 : index
      %64 = vector.load %arg15[%c7, %c0_59] : memref<232x128xf32, #tpu.memory_space<vmem>>, vector<42x128xf32>
      %c8 = arith.constant 8 : index
      %c0_60 = arith.constant 0 : index
      %65 = vector.load %arg15[%c8, %c0_60] : memref<232x128xf32, #tpu.memory_space<vmem>>, vector<42x128xf32>
      %66 = tpu.concatenate %64, %65 in 1 : vector<42x128xf32>, vector<42x128xf32> -> vector<42x256xf32>
      %67 = arith.truncf %66 : vector<42x256xf32> to vector<42x256xbf16>
      %c256_61 = arith.constant 256 : index
      %c0_62 = arith.constant 0 : index
      %68 = vector.load %arg8[%c256_61, %c0_62] : memref<512x128xbf16, #tpu.memory_space<vmem>>, vector<256x128xbf16>
      %cst_63 = arith.constant dense<0.000000e+00> : vector<42x128xf32>
      %69 = tpu.matmul %67, %68, %cst_63 {dimension_numbers = #tpu.dot_dimension_numbers<[1], [0], [0], [1], [0, 0, 1, 1], [], []>} : vector<42x256xbf16>, vector<256x128xbf16>, vector<42x128xf32> -> vector<42x128xf32>
      %70 = arith.addf %63, %69 : vector<42x128xf32>
      %c0_64 = arith.constant 0 : index
      %c0_65 = arith.constant 0 : index
      %71 = vector.load %arg9[%c0_64, %c0_65] : memref<1x128xf32, #tpu.memory_space<vmem>>, vector<1x128xf32>
      %72 = vector.broadcast %71 : vector<1x128xf32> to vector<42x128xf32>
      %73 = arith.addf %70, %72 : vector<42x128xf32>
      %cst_66 = arith.constant 0.000000e+00 : f32
      %74 = vector.broadcast %cst_66 : f32 to vector<42x128xf32>
      %75 = arith.maximumf %73, %74 : vector<42x128xf32>
      %c0_67 = arith.constant 0 : index
      %c0_68 = arith.constant 0 : index
      %76 = vector.load %arg14[%c0_67, %c0_68] : memref<1064x128xf32, #tpu.memory_space<vmem>>, vector<42x128xf32>
      tpu.vector_store %arg14[%c0_67, %c0_68], %75 {strides = array<i32>} : memref<1064x128xf32, #tpu.memory_space<vmem>>, vector<42x128xf32>,
      %cst_69 = arith.constant 0.000000e+00 : f32
      %77 = vector.broadcast %cst_69 : f32 to vector<8x128xf32>
      %c42 = arith.constant 42 : index
      %c0_70 = arith.constant 0 : index
      %78 = vector.load %arg14[%c42, %c0_70] : memref<1064x128xf32, #tpu.memory_space<vmem>>, vector<8x128xf32>
      tpu.vector_store %arg14[%c42, %c0_70], %77 {strides = array<i32>} : memref<1064x128xf32, #tpu.memory_space<vmem>>, vector<8x128xf32>,
      %c1_71 = arith.constant 1 : index
      %c0_72 = arith.constant 0 : index
      %79 = vector.load %arg14[%c1_71, %c0_72] : memref<1064x128xf32, #tpu.memory_space<vmem>>, vector<42x128xf32>
      %80 = arith.maximumf %75, %79 : vector<42x128xf32>
      %c7_73 = arith.constant 7 : index
      %c0_74 = arith.constant 0 : index
      %81 = vector.load %arg14[%c7_73, %c0_74] : memref<1064x128xf32, #tpu.memory_space<vmem>>, vector<42x128xf32>
      %c8_75 = arith.constant 8 : index
      %c0_76 = arith.constant 0 : index
      %82 = vector.load %arg14[%c8_75, %c0_76] : memref<1064x128xf32, #tpu.memory_space<vmem>>, vector<42x128xf32>
      %83 = arith.maximumf %81, %82 : vector<42x128xf32>
      %84 = arith.maximumf %80, %83 : vector<42x128xf32>
      %c0_77 = arith.constant 0 : index
      %c0_78 = arith.constant 0 : index
      %85 = vector.load %arg10[%c0_77, %c0_78] : memref<16x42xbf16, #tpu.memory_space<vmem>>, vector<16x42xbf16>
      %86 = arith.truncf %84 : vector<42x128xf32> to vector<42x128xbf16>
      %cst_79 = arith.constant dense<0.000000e+00> : vector<16x128xf32>
      %87 = tpu.matmul %85, %86, %cst_79 {dimension_numbers = #tpu.dot_dimension_numbers<[1], [0], [0], [1], [0, 0, 1, 1], [], []>} : vector<16x42xbf16>, vector<42x128xbf16>, vector<16x128xf32> -> vector<16x128xf32>
      %c0_80 = arith.constant 0 : index
      %c0_81 = arith.constant 0 : index
      %88 = vector.load %arg15[%c0_80, %c0_81] : memref<232x128xf32, #tpu.memory_space<vmem>>, vector<16x128xf32>
      tpu.vector_store %arg15[%c0_80, %c0_81], %87 {strides = array<i32>} : memref<232x128xf32, #tpu.memory_space<vmem>>, vector<16x128xf32>,
      %c0_82 = arith.constant 0 : index
      %c0_83 = arith.constant 0 : index
      %89 = vector.load %arg15[%c0_82, %c0_83] : memref<232x128xf32, #tpu.memory_space<vmem>>, vector<6x128xf32>
      %c1_84 = arith.constant 1 : index
      %c0_85 = arith.constant 0 : index
      %90 = vector.load %arg15[%c1_84, %c0_85] : memref<232x128xf32, #tpu.memory_space<vmem>>, vector<6x128xf32>
      %91 = tpu.concatenate %89, %90 in 1 : vector<6x128xf32>, vector<6x128xf32> -> vector<6x256xf32>
      %92 = arith.truncf %91 : vector<6x256xf32> to vector<6x256xbf16>
      %c0_86 = arith.constant 0 : index
      %c0_87 = arith.constant 0 : index
      %93 = vector.load %arg11[%c0_86, %c0_87] : memref<512x256xbf16, #tpu.memory_space<vmem>>, vector<256x256xbf16>
      %cst_88 = arith.constant dense<0.000000e+00> : vector<6x256xf32>
      %94 = tpu.matmul %92, %93, %cst_88 {dimension_numbers = #tpu.dot_dimension_numbers<[1], [0], [0], [1], [0, 0, 1, 1], [], []>} : vector<6x256xbf16>, vector<256x256xbf16>, vector<6x256xf32> -> vector<6x256xf32>
      %c3 = arith.constant 3 : index
      %c0_89 = arith.constant 0 : index
      %95 = vector.load %arg15[%c3, %c0_89] : memref<232x128xf32, #tpu.memory_space<vmem>>, vector<6x128xf32>
      %c4 = arith.constant 4 : index
      %c0_90 = arith.constant 0 : index
      %96 = vector.load %arg15[%c4, %c0_90] : memref<232x128xf32, #tpu.memory_space<vmem>>, vector<6x128xf32>
      %97 = tpu.concatenate %95, %96 in 1 : vector<6x128xf32>, vector<6x128xf32> -> vector<6x256xf32>
      %98 = arith.truncf %97 : vector<6x256xf32> to vector<6x256xbf16>
      %c256_91 = arith.constant 256 : index
      %c0_92 = arith.constant 0 : index
      %99 = vector.load %arg11[%c256_91, %c0_92] : memref<512x256xbf16, #tpu.memory_space<vmem>>, vector<256x256xbf16>
      %cst_93 = arith.constant dense<0.000000e+00> : vector<6x256xf32>
      %100 = tpu.matmul %98, %99, %cst_93 {dimension_numbers = #tpu.dot_dimension_numbers<[1], [0], [0], [1], [0, 0, 1, 1], [], []>} : vector<6x256xbf16>, vector<256x256xbf16>, vector<6x256xf32> -> vector<6x256xf32>
      %101 = arith.addf %94, %100 : vector<6x256xf32>
      %c0_94 = arith.constant 0 : index
      %c0_95 = arith.constant 0 : index
      %102 = vector.load %arg12[%c0_94, %c0_95] : memref<1x256xf32, #tpu.memory_space<vmem>>, vector<1x256xf32>
      %103 = vector.broadcast %102 : vector<1x256xf32> to vector<6x256xf32>
      %104 = arith.addf %101, %103 : vector<6x256xf32>
      %cst_96 = arith.constant 0.000000e+00 : f32
      %105 = vector.broadcast %cst_96 : f32 to vector<6x256xf32>
      %106 = arith.maximumf %104, %105 : vector<6x256xf32>
      %107 = vector.extract_strided_slice %106 {offsets = [0, 0], sizes = [1, 256], strides = [1, 1]} : vector<6x256xf32> to vector<1x256xf32>
      %108 = vector.extract_strided_slice %106 {offsets = [1, 0], sizes = [1, 256], strides = [1, 1]} : vector<6x256xf32> to vector<1x256xf32>
      %109 = arith.maximumf %107, %108 : vector<1x256xf32>
      %110 = vector.extract_strided_slice %106 {offsets = [3, 0], sizes = [1, 256], strides = [1, 1]} : vector<6x256xf32> to vector<1x256xf32>
      %111 = vector.extract_strided_slice %106 {offsets = [4, 0], sizes = [1, 256], strides = [1, 1]} : vector<6x256xf32> to vector<1x256xf32>
      %112 = arith.maximumf %110, %111 : vector<1x256xf32>
      %113 = arith.maximumf %109, %112 : vector<1x256xf32>
      %114 = arith.index_cast %arg17 : i32 to index
      %c0_97 = arith.constant 0 : index
      %115 = vector.load %arg16[%114, %c0_97] : memref<8x256xf32, #tpu.memory_space<vmem>>, vector<1x256xf32>
      tpu.vector_store %arg16[%114, %c0_97], %113 {strides = array<i32>} : memref<8x256xf32, #tpu.memory_space<vmem>>, vector<1x256xf32>,
    }
    %c8_i32_0 = arith.constant 8 : i32
    %c0 = arith.constant 0 : index
    %c0_1 = arith.constant 0 : index
    %1 = vector.load %arg16[%c0, %c0_1] : memref<8x256xf32, #tpu.memory_space<vmem>>, vector<8x256xf32>
    %2 = arith.truncf %1 : vector<8x256xf32> to vector<8x256xbf16>
    %c0_2 = arith.constant 0 : index
    %c0_3 = arith.constant 0 : index
    %3 = vector.load %arg13[%c0_2, %c0_3] : memref<8x256xbf16, #tpu.memory_space<vmem>>, vector<8x256xbf16>
    tpu.vector_store %arg13[%c0_2, %c0_3], %2 {strides = array<i32>} : memref<8x256xbf16, #tpu.memory_space<vmem>>, vector<8x256xbf16>,
    return
  }
  func.func @transform_0(%arg0: i32) -> (i32, i32, i32) {
    %c0_i32 = arith.constant 0 : i32
    %c0_i32_0 = arith.constant 0 : i32
    %c0_i32_1 = arith.constant 0 : i32
    return %arg0, %c0_i32, %c0_i32_0 : i32, i32, i32
  }
  func.func @transform_1(%arg0: i32) -> (i32, i32) {
    %c0_i32 = arith.constant 0 : i32
    %c0_i32_0 = arith.constant 0 : i32
    %c0_i32_1 = arith.constant 0 : i32
    return %c0_i32, %c0_i32_0 : i32, i32
  }
  func.func @transform_2(%arg0: i32) -> (i32, i32) {
    %c0_i32 = arith.constant 0 : i32
    %c0_i32_0 = arith.constant 0 : i32
    %c0_i32_1 = arith.constant 0 : i32
    return %c0_i32, %c0_i32_0 : i32, i32
  }
  func.func @transform_3(%arg0: i32) -> (i32, i32) {
    %c0_i32 = arith.constant 0 : i32
    %c0_i32_0 = arith.constant 0 : i32
    %c0_i32_1 = arith.constant 0 : i32
    return %c0_i32, %c0_i32_0 : i32, i32
  }
  func.func @transform_4(%arg0: i32) -> (i32, i32) {
    %c0_i32 = arith.constant 0 : i32
    %c0_i32_0 = arith.constant 0 : i32
    %c0_i32_1 = arith.constant 0 : i32
    return %c0_i32, %c0_i32_0 : i32, i32
  }
  func.func @transform_5(%arg0: i32) -> (i32, i32) {
    %c0_i32 = arith.constant 0 : i32
    %c0_i32_0 = arith.constant 0 : i32
    %c0_i32_1 = arith.constant 0 : i32
    return %c0_i32, %c0_i32_0 : i32, i32
  }
  func.func @transform_6(%arg0: i32) -> (i32, i32) {
    %c0_i32 = arith.constant 0 : i32
    %c0_i32_0 = arith.constant 0 : i32
    %c0_i32_1 = arith.constant 0 : i32
    return %c0_i32, %c0_i32_0 : i32, i32
  }
  func.func @transform_7(%arg0: i32) -> (i32, i32) {
    %c0_i32 = arith.constant 0 : i32
    %c0_i32_0 = arith.constant 0 : i32
    %c0_i32_1 = arith.constant 0 : i32
    return %c0_i32, %c0_i32_0 : i32, i32
  }
  func.func @transform_8(%arg0: i32) -> (i32, i32) {
    %c0_i32 = arith.constant 0 : i32
    %c0_i32_0 = arith.constant 0 : i32
    %c0_i32_1 = arith.constant 0 : i32
    return %c0_i32, %c0_i32_0 : i32, i32
  }
  func.func @transform_9(%arg0: i32) -> (i32, i32) {
    %c0_i32 = arith.constant 0 : i32
    %c0_i32_0 = arith.constant 0 : i32
    %c0_i32_1 = arith.constant 0 : i32
    return %c0_i32, %c0_i32_0 : i32, i32
  }
  func.func @transform_10(%arg0: i32) -> (i32, i32) {
    %c0_i32 = arith.constant 0 : i32
    %c0_i32_0 = arith.constant 0 : i32
    %c0_i32_1 = arith.constant 0 : i32
    return %c0_i32, %c0_i32_0 : i32, i32
  }
  func.func @transform_11(%arg0: i32) -> (i32, i32) {
    %c0_i32 = arith.constant 0 : i32
    %c0_i32_0 = arith.constant 0 : i32
    %c0_i32_1 = arith.constant 0 : i32
    return %c0_i32, %c0_i32_0 : i32, i32
  }
  func.func @transform_12(%arg0: i32) -> (i32, i32) {
    %c0_i32 = arith.constant 0 : i32
    %c0_i32_0 = arith.constant 0 : i32
    return %arg0, %c0_i32 : i32, i32
  }
}

</mosaic_0001>

<llo_original>
// kernel: cnn_forward.3
$region0: #{cnn_forward.3}
  #allocation0 [shape = 'u32[]', space=smem, size = 0x4, offset = 0x4, fixed_abs, tag = 'smem constant byte address 0x4 - core index']
  #allocation1 [shape = 'u32[144,128]{1,0:T(1,128)}', space=vmem, size = 0x12000, scoped, tag = 'internal scratch']
  %s0 = inlined_call_operand.vmem [shape: bf16[8,256], index: 0, kind: input, shape index: {}]
  %s1 = inlined_call_operand.vmem [shape: bf16[256,1280], index: 1, kind: input, shape index: {}]
  %s2 = inlined_call_operand.vmem [shape: f32[1,1280], index: 2, kind: input, shape index: {}]
  %s3 = inlined_call_operand.vmem [shape: bf16[1280,640], index: 3, kind: input, shape index: {}]
  %s4 = inlined_call_operand.vmem [shape: f32[1,640], index: 4, kind: input, shape index: {}]
  %s5 = inlined_call_operand.vmem [shape: bf16[640,256], index: 5, kind: input, shape index: {}]
  %s6 = inlined_call_operand.vmem [shape: f32[1,256], index: 6, kind: input, shape index: {}]
  %s7 = inlined_call_operand.vmem [shape: f32[8,256], index: 7, kind: output, shape index: {}]
  %s8 = sld [smem:[#allocation0]]
  $region38: #{cnn_forward.3} parent=0
    _
  %s10 = ssub.s32 1, %s8
  %s11 = scalar_select 0, %s10, %s8
  // Predicated region
  $region2: #{cnn_forward.3} parent=0 // pred_check
    _
  $region3: #{cnn_forward.3} parent=0 // pred_check_branch
    %13 = sbr.rel (0) target = $region5
  $region4: #{cnn_forward.3} parent=0 // pred_region
    _
  $region5: #{cnn_forward.3} parent=0 // pred_fallthru
    _
  // Predicated region
  $region6: #{cnn_forward.3} parent=0 // pred_check
    _
  $region7: #{cnn_forward.3} parent=0 // pred_check_branch
    %15 = sbr.rel (0) target = $region9
  $region8: #{cnn_forward.3} parent=0 // pred_region
    _
  $region9: #{cnn_forward.3} parent=0 // pred_fallthru
    _
  // Predicated region
  $region10: #{cnn_forward.3} parent=0 // pred_check
    _
  $region11: #{cnn_forward.3} parent=0 // pred_check_branch
    %17 = sbr.rel (0) target = $region13
  $region12: #{cnn_forward.3} parent=0 // pred_region
    _
  $region13: #{cnn_forward.3} parent=0 // pred_fallthru
    _
  // Predicated region
  $region14: #{cnn_forward.3} parent=0 // pred_check
    _
  $region15: #{cnn_forward.3} parent=0 // pred_check_branch
    %19 = sbr.rel (0) target = $region17
  $region16: #{cnn_forward.3} parent=0 // pred_region
    _
  $region17: #{cnn_forward.3} parent=0 // pred_fallthru
    _
  // Predicated region
  $region18: #{cnn_forward.3} parent=0 // pred_check
    _
  $region19: #{cnn_forward.3} parent=0 // pred_check_branch
    %21 = sbr.rel (0) target = $region21
  $region20: #{cnn_forward.3} parent=0 // pred_region
    _
  $region21: #{cnn_forward.3} parent=0 // pred_fallthru
    _
  // Predicated region
  $region22: #{cnn_forward.3} parent=0 // pred_check
    _
  $region23: #{cnn_forward.3} parent=0 // pred_check_branch
    %23 = sbr.rel (0) target = $region25
  $region24: #{cnn_forward.3} parent=0 // pred_region
    _
  $region25: #{cnn_forward.3} parent=0 // pred_fallthru
    _
  // Predicated region
  $region26: #{cnn_forward.3} parent=0 // pred_check
    _
  $region27: #{cnn_forward.3} parent=0 // pred_check_branch
    %25 = sbr.rel (0) target = $region29
  $region28: #{cnn_forward.3} parent=0 // pred_region
    _
  $region29: #{cnn_forward.3} parent=0 // pred_fallthru
    _
  %v27 = vld [vmem:[%s0] sm:$0xff]
  %v28 = vld [vmem:[%s1] sm:$0xff]
  %v29 = vld [vmem:[%s1 + $0x8] sm:$0xff]
  %v30 = vld [vmem:[%s1 + $0x10] sm:$0xff]
  %v31 = vld [vmem:[%s1 + $0x18] sm:$0xff]
  %v32 = vld [vmem:[%s1 + $0x20] sm:$0xff]
  %v33 = vld [vmem:[%s1 + $0x28] sm:$0xff]
  %v34 = vld [vmem:[%s1 + $0x30] sm:$0xff]
  %v35 = vld [vmem:[%s1 + $0x38] sm:$0xff]
  %v36 = vld [vmem:[%s1 + $0x40] sm:$0xff]
  %v37 = vld [vmem:[%s1 + $0x48] sm:$0xff]
  %v38 = vld [vmem:[%s1 + $0x50] sm:$0xff]
  %v39 = vld [vmem:[%s1 + $0x58] sm:$0xff]
  %v40 = vld [vmem:[%s1 + $0x60] sm:$0xff]
  %v41 = vld [vmem:[%s1 + $0x68] sm:$0xff]
  %v42 = vld [vmem:[%s1 + $0x70] sm:$0xff]
  %v43 = vld [vmem:[%s1 + $0x78] sm:$0xff]
  %v44 = vld [vmem:[%s1 + $0x80] sm:$0xff]
  %v45 = vld [vmem:[%s1 + $0x88] sm:$0xff]
  %v46 = vld [vmem:[%s1 + $0x90] sm:$0xff]
  %v47 = vld [vmem:[%s1 + $0x98] sm:$0xff]
  %v48 = vld [vmem:[%s1 + $0xa0] sm:$0xff]
  %v49 = vld [vmem:[%s1 + $0xa8] sm:$0xff]
  %v50 = vld [vmem:[%s1 + $0xb0] sm:$0xff]
  %v51 = vld [vmem:[%s1 + $0xb8] sm:$0xff]
  %v52 = vld [vmem:[%s1 + $0xc0] sm:$0xff]
  %v53 = vld [vmem:[%s1 + $0xc8] sm:$0xff]
  %v54 = vld [vmem:[%s1 + $0xd0] sm:$0xff]
  %v55 = vld [vmem:[%s1 + $0xd8] sm:$0xff]
  %v56 = vld [vmem:[%s1 + $0xe0] sm:$0xff]
  %v57 = vld [vmem:[%s1 + $0xe8] sm:$0xff]
  %v58 = vld [vmem:[%s1 + $0xf0] sm:$0xff]
  %v59 = vld [vmem:[%s1 + $0xf8] sm:$0xff]
  %v60 = vld [vmem:[%s1 + $0x100] sm:$0xff]
  %v61 = vld [vmem:[%s1 + $0x108] sm:$0xff]
  %v62 = vld [vmem:[%s1 + $0x110] sm:$0xff]
  %v63 = vld [vmem:[%s1 + $0x118] sm:$0xff]
  %v64 = vld [vmem:[%s1 + $0x120] sm:$0xff]
  %v65 = vld [vmem:[%s1 + $0x128] sm:$0xff]
  %v66 = vld [vmem:[%s1 + $0x130] sm:$0xff]
  %v67 = vld [vmem:[%s1 + $0x138] sm:$0xff]
  %v68 = vld [vmem:[%s1 + $0x140] sm:$0xff]
  %v69 = vld [vmem:[%s1 + $0x148] sm:$0xff]
  %v70 = vld [vmem:[%s1 + $0x150] sm:$0xff]
  %v71 = vld [vmem:[%s1 + $0x158] sm:$0xff]
  %v72 = vld [vmem:[%s1 + $0x160] sm:$0xff]
  %v73 = vld [vmem:[%s1 + $0x168] sm:$0xff]
  %v74 = vld [vmem:[%s1 + $0x170] sm:$0xff]
  %v75 = vld [vmem:[%s1 + $0x178] sm:$0xff]
  %v76 = vld [vmem:[%s1 + $0x180] sm:$0xff]
  %v77 = vld [vmem:[%s1 + $0x188] sm:$0xff]
  %v78 = vld [vmem:[%s1 + $0x190] sm:$0xff]
  %v79 = vld [vmem:[%s1 + $0x198] sm:$0xff]
  %v80 = vld [vmem:[%s1 + $0x1a0] sm:$0xff]
  %v81 = vld [vmem:[%s1 + $0x1a8] sm:$0xff]
  %v82 = vld [vmem:[%s1 + $0x1b0] sm:$0xff]
  %v83 = vld [vmem:[%s1 + $0x1b8] sm:$0xff]
  %v84 = vld [vmem:[%s1 + $0x1c0] sm:$0xff]
  %v85 = vld [vmem:[%s1 + $0x1c8] sm:$0xff]
  %v86 = vld [vmem:[%s1 + $0x1d0] sm:$0xff]
  %v87 = vld [vmem:[%s1 + $0x1d8] sm:$0xff]
  %v88 = vld [vmem:[%s1 + $0x1e0] sm:$0xff]
  %v89 = vld [vmem:[%s1 + $0x1e8] sm:$0xff]
  %v90 = vld [vmem:[%s1 + $0x1f0] sm:$0xff]
  %v91 = vld [vmem:[%s1 + $0x1f8] sm:$0xff]
  %v92 = vld [vmem:[%s1 + $0x200] sm:$0xff]
  %v93 = vld [vmem:[%s1 + $0x208] sm:$0xff]
  %v94 = vld [vmem:[%s1 + $0x210] sm:$0xff]
  %v95 = vld [vmem:[%s1 + $0x218] sm:$0xff]
  %v96 = vld [vmem:[%s1 + $0x220] sm:$0xff]
  %v97 = vld [vmem:[%s1 + $0x228] sm:$0xff]
  %v98 = vld [vmem:[%s1 + $0x230] sm:$0xff]
  %v99 = vld [vmem:[%s1 + $0x238] sm:$0xff]
  %v100 = vld [vmem:[%s1 + $0x240] sm:$0xff]
  %v101 = vld [vmem:[%s1 + $0x248] sm:$0xff]
  %v102 = vld [vmem:[%s1 + $0x250] sm:$0xff]
  %v103 = vld [vmem:[%s1 + $0x258] sm:$0xff]
  %v104 = vld [vmem:[%s1 + $0x260] sm:$0xff]
  %v105 = vld [vmem:[%s1 + $0x268] sm:$0xff]
  %v106 = vld [vmem:[%s1 + $0x270] sm:$0xff]
  %v107 = vld [vmem:[%s1 + $0x278] sm:$0xff]
  %v108 = vld [vmem:[%s1 + $0x280] sm:$0xff]
  %v109 = vld [vmem:[%s1 + $0x288] sm:$0xff]
  %v110 = vld [vmem:[%s1 + $0x290] sm:$0xff]
  %v111 = vld [vmem:[%s1 + $0x298] sm:$0xff]
  %v112 = vld [vmem:[%s1 + $0x2a0] sm:$0xff]
  %v113 = vld [vmem:[%s1 + $0x2a8] sm:$0xff]
  %v114 = vld [vmem:[%s1 + $0x2b0] sm:$0xff]
  %v115 = vld [vmem:[%s1 + $0x2b8] sm:$0xff]
  %v116 = vld [vmem:[%s1 + $0x2c0] sm:$0xff]
  %v117 = vld [vmem:[%s1 + $0x2c8] sm:$0xff]
  %v118 = vld [vmem:[%s1 + $0x2d0] sm:$0xff]
  %v119 = vld [vmem:[%s1 + $0x2d8] sm:$0xff]
  %v120 = vld [vmem:[%s1 + $0x2e0] sm:$0xff]
  %v121 = vld [vmem:[%s1 + $0x2e8] sm:$0xff]
  %v122 = vld [vmem:[%s1 + $0x2f0] sm:$0xff]
  %v123 = vld [vmem:[%s1 + $0x2f8] sm:$0xff]
  %v124 = vld [vmem:[%s1 + $0x300] sm:$0xff]
  %v125 = vld [vmem:[%s1 + $0x308] sm:$0xff]
  %v126 = vld [vmem:[%s1 + $0x310] sm:$0xff]
  %v127 = vld [vmem:[%s1 + $0x318] sm:$0xff]
  %v128 = vld [vmem:[%s1 + $0x320] sm:$0xff]
  %v129 = vld [vmem:[%s1 + $0x328] sm:$0xff]
  %v130 = vld [vmem:[%s1 + $0x330] sm:$0xff]
  %v131 = vld [vmem:[%s1 + $0x338] sm:$0xff]
  %v132 = vld [vmem:[%s1 + $0x340] sm:$0xff]
  %v133 = vld [vmem:[%s1 + $0x348] sm:$0xff]
  %v134 = vld [vmem:[%s1 + $0x350] sm:$0xff]
  %v135 = vld [vmem:[%s1 + $0x358] sm:$0xff]
  %v136 = vld [vmem:[%s1 + $0x360] sm:$0xff]
  %v137 = vld [vmem:[%s1 + $0x368] sm:$0xff]
  %v138 = vld [vmem:[%s1 + $0x370] sm:$0xff]
  %v139 = vld [vmem:[%s1 + $0x378] sm:$0xff]
  %v140 = vld [vmem:[%s1 + $0x380] sm:$0xff]
  %v141 = vld [vmem:[%s1 + $0x388] sm:$0xff]
  %v142 = vld [vmem:[%s1 + $0x390] sm:$0xff]
  %v143 = vld [vmem:[%s1 + $0x398] sm:$0xff]
  %v144 = vld [vmem:[%s1 + $0x3a0] sm:$0xff]
  %v145 = vld [vmem:[%s1 + $0x3a8] sm:$0xff]
  %v146 = vld [vmem:[%s1 + $0x3b0] sm:$0xff]
  %v147 = vld [vmem:[%s1 + $0x3b8] sm:$0xff]
  %v148 = vld [vmem:[%s1 + $0x3c0] sm:$0xff]
  %v149 = vld [vmem:[%s1 + $0x3c8] sm:$0xff]
  %v150 = vld [vmem:[%s1 + $0x3d0] sm:$0xff]
  %v151 = vld [vmem:[%s1 + $0x3d8] sm:$0xff]
  %v152 = vld [vmem:[%s1 + $0x3e0] sm:$0xff]
  %v153 = vld [vmem:[%s1 + $0x3e8] sm:$0xff]
  %v154 = vld [vmem:[%s1 + $0x3f0] sm:$0xff]
  %v155 = vld [vmem:[%s1 + $0x3f8] sm:$0xff]
  %v156 = vld [vmem:[%s1 + $0x400] sm:$0xff]
  %v157 = vld [vmem:[%s1 + $0x408] sm:$0xff]
  %v158 = vld [vmem:[%s1 + $0x410] sm:$0xff]
  %v159 = vld [vmem:[%s1 + $0x418] sm:$0xff]
  %v160 = vld [vmem:[%s1 + $0x420] sm:$0xff]
  %v161 = vld [vmem:[%s1 + $0x428] sm:$0xff]
  %v162 = vld [vmem:[%s1 + $0x430] sm:$0xff]
  %v163 = vld [vmem:[%s1 + $0x438] sm:$0xff]
  %v164 = vld [vmem:[%s1 + $0x440] sm:$0xff]
  %v165 = vld [vmem:[%s1 + $0x448] sm:$0xff]
  %v166 = vld [vmem:[%s1 + $0x450] sm:$0xff]
  %v167 = vld [vmem:[%s1 + $0x458] sm:$0xff]
  %v168 = vld [vmem:[%s1 + $0x460] sm:$0xff]
  %v169 = vld [vmem:[%s1 + $0x468] sm:$0xff]
  %v170 = vld [vmem:[%s1 + $0x470] sm:$0xff]
  %v171 = vld [vmem:[%s1 + $0x478] sm:$0xff]
  %v172 = vld [vmem:[%s1 + $0x480] sm:$0xff]
  %v173 = vld [vmem:[%s1 + $0x488] sm:$0xff]
  %v174 = vld [vmem:[%s1 + $0x490] sm:$0xff]
  %v175 = vld [vmem:[%s1 + $0x498] sm:$0xff]
  %v176 = vld [vmem:[%s1 + $0x4a0] sm:$0xff]
  %v177 = vld [vmem:[%s1 + $0x4a8] sm:$0xff]
  %v178 = vld [vmem:[%s1 + $0x4b0] sm:$0xff]
  %v179 = vld [vmem:[%s1 + $0x4b8] sm:$0xff]
  %v180 = vld [vmem:[%s1 + $0x4c0] sm:$0xff]
  %v181 = vld [vmem:[%s1 + $0x4c8] sm:$0xff]
  %v182 = vld [vmem:[%s1 + $0x4d0] sm:$0xff]
  %v183 = vld [vmem:[%s1 + $0x4d8] sm:$0xff]
  %v184 = vld [vmem:[%s1 + $0x4e0] sm:$0xff]
  %v185 = vld [vmem:[%s1 + $0x4e8] sm:$0xff]
  %v186 = vld [vmem:[%s1 + $0x4f0] sm:$0xff]
  %v187 = vld [vmem:[%s1 + $0x4f8] sm:$0xff]
  %v188 = vld [vmem:[%s2] sm:$0xff]
  %v189 = vld [vmem:[%s2 + $0x8] sm:$0x3]
  %v192 = vlaneseq
  %v193 = vshrl.u32 %v192, 7
  %v194 = vsub.s32 0, %v193
  %v195 = vrot.slane %v188, %v194
  %v196 = vlaneseq
  %v197 = vshrl.u32 %v196, 7
  %v198 = vsub.s32 1, %v197
  %v199 = vrot.slane %v188, %v198
  %v200 = vlaneseq
  %v201 = vshrl.u32 %v200, 7
  %v202 = vsub.s32 2, %v201
  %v203 = vrot.slane %v188, %v202
  %v204 = vlaneseq
  %v205 = vshrl.u32 %v204, 7
  %v206 = vsub.s32 3, %v205
  %v207 = vrot.slane %v188, %v206
  %v208 = vlaneseq
  %v209 = vshrl.u32 %v208, 7
  %v210 = vsub.s32 4, %v209
  %v211 = vrot.slane %v188, %v210
  %v212 = vlaneseq
  %v213 = vshrl.u32 %v212, 7
  %v214 = vsub.s32 5, %v213
  %v215 = vrot.slane %v188, %v214
  %v216 = vlaneseq
  %v217 = vshrl.u32 %v216, 7
  %v218 = vsub.s32 6, %v217
  %v219 = vrot.slane %v188, %v218
  %v220 = vlaneseq
  %v221 = vshrl.u32 %v220, 7
  %v222 = vsub.s32 7, %v221
  %v223 = vrot.slane %v188, %v222
  %v224 = vlaneseq
  %v225 = vshrl.u32 %v224, 7
  %v226 = vsub.s32 0, %v225
  %v227 = vrot.slane %v189, %v226
  %v228 = vlaneseq
  %v229 = vshrl.u32 %v228, 7
  %v230 = vsub.s32 1, %v229
  %v231 = vrot.slane %v189, %v230
  %v243 = vunpack.c.l.b16 %v27
  %v244 = vunpack.c.h.b16 %v27
  %v245 = vpack.c.b16 %v243, %v243
  %v246 = vpack.c.b16 %v244, %v244
  %v409 = vunpack.c.l.b16 %v28
  %v410 = vunpack.c.h.b16 %v28
  %v411 = vunpack.c.l.b16 %v29
  %v412 = vunpack.c.h.b16 %v29
  %v413 = vunpack.c.l.b16 %v30
  %v414 = vunpack.c.h.b16 %v30
  %v415 = vunpack.c.l.b16 %v31
  %v416 = vunpack.c.h.b16 %v31
  %v417 = vunpack.c.l.b16 %v32
  %v418 = vunpack.c.h.b16 %v32
  %v419 = vunpack.c.l.b16 %v33
  %v420 = vunpack.c.h.b16 %v33
  %v421 = vunpack.c.l.b16 %v34
  %v422 = vunpack.c.h.b16 %v34
  %v423 = vunpack.c.l.b16 %v35
  %v424 = vunpack.c.h.b16 %v35
  %v425 = vunpack.c.l.b16 %v36
  %v426 = vunpack.c.h.b16 %v36
  %v427 = vunpack.c.l.b16 %v37
  %v428 = vunpack.c.h.b16 %v37
  %v429 = vunpack.c.l.b16 %v38
  %v430 = vunpack.c.h.b16 %v38
  %v431 = vunpack.c.l.b16 %v39
  %v432 = vunpack.c.h.b16 %v39
  %v433 = vunpack.c.l.b16 %v40
  %v434 = vunpack.c.h.b16 %v40
  %v435 = vunpack.c.l.b16 %v41
  %v436 = vunpack.c.h.b16 %v41
  %v437 = vunpack.c.l.b16 %v42
  %v438 = vunpack.c.h.b16 %v42
  %v439 = vunpack.c.l.b16 %v43
  %v440 = vunpack.c.h.b16 %v43
  %v441 = vunpack.c.l.b16 %v44
  %v442 = vunpack.c.h.b16 %v44
  %v443 = vunpack.c.l.b16 %v45
  %v444 = vunpack.c.h.b16 %v45
  %v445 = vunpack.c.l.b16 %v46
  %v446 = vunpack.c.h.b16 %v46
  %v447 = vunpack.c.l.b16 %v47
  %v448 = vunpack.c.h.b16 %v47
  %v449 = vunpack.c.l.b16 %v48
  %v450 = vunpack.c.h.b16 %v48
  %v451 = vunpack.c.l.b16 %v49
  %v452 = vunpack.c.h.b16 %v49
  %v453 = vunpack.c.l.b16 %v50
  %v454 = vunpack.c.h.b16 %v50
  %v455 = vunpack.c.l.b16 %v51
  %v456 = vunpack.c.h.b16 %v51
  %v457 = vunpack.c.l.b16 %v52
  %v458 = vunpack.c.h.b16 %v52
  %v459 = vunpack.c.l.b16 %v53
  %v460 = vunpack.c.h.b16 %v53
  %v461 = vunpack.c.l.b16 %v54
  %v462 = vunpack.c.h.b16 %v54
  %v463 = vunpack.c.l.b16 %v55
  %v464 = vunpack.c.h.b16 %v55
  %v465 = vunpack.c.l.b16 %v56
  %v466 = vunpack.c.h.b16 %v56
  %v467 = vunpack.c.l.b16 %v57
  %v468 = vunpack.c.h.b16 %v57
  %v469 = vunpack.c.l.b16 %v58
  %v470 = vunpack.c.h.b16 %v58
  %v471 = vunpack.c.l.b16 %v59
  %v472 = vunpack.c.h.b16 %v59
  %v473 = vunpack.c.l.b16 %v60
  %v474 = vunpack.c.h.b16 %v60
  %v475 = vunpack.c.l.b16 %v61
  %v476 = vunpack.c.h.b16 %v61
  %v477 = vunpack.c.l.b16 %v62
  %v478 = vunpack.c.h.b16 %v62
  %v479 = vunpack.c.l.b16 %v63
  %v480 = vunpack.c.h.b16 %v63
  %v481 = vunpack.c.l.b16 %v64
  %v482 = vunpack.c.h.b16 %v64
  %v483 = vunpack.c.l.b16 %v65
  %v484 = vunpack.c.h.b16 %v65
  %v485 = vunpack.c.l.b16 %v66
  %v486 = vunpack.c.h.b16 %v66
  %v487 = vunpack.c.l.b16 %v67
  %v488 = vunpack.c.h.b16 %v67
  %v489 = vunpack.c.l.b16 %v68
  %v490 = vunpack.c.h.b16 %v68
  %v491 = vunpack.c.l.b16 %v69
  %v492 = vunpack.c.h.b16 %v69
  %v493 = vunpack.c.l.b16 %v70
  %v494 = vunpack.c.h.b16 %v70
  %v495 = vunpack.c.l.b16 %v71
  %v496 = vunpack.c.h.b16 %v71
  %v497 = vunpack.c.l.b16 %v72
  %v498 = vunpack.c.h.b16 %v72
  %v499 = vunpack.c.l.b16 %v73
  %v500 = vunpack.c.h.b16 %v73
  %v501 = vunpack.c.l.b16 %v74
  %v502 = vunpack.c.h.b16 %v74
  %v503 = vunpack.c.l.b16 %v75
  %v504 = vunpack.c.h.b16 %v75
  %v505 = vunpack.c.l.b16 %v76
  %v506 = vunpack.c.h.b16 %v76
  %v507 = vunpack.c.l.b16 %v77
  %v508 = vunpack.c.h.b16 %v77
  %v509 = vunpack.c.l.b16 %v78
  %v510 = vunpack.c.h.b16 %v78
  %v511 = vunpack.c.l.b16 %v79
  %v512 = vunpack.c.h.b16 %v79
  %v513 = vunpack.c.l.b16 %v80
  %v514 = vunpack.c.h.b16 %v80
  %v515 = vunpack.c.l.b16 %v81
  %v516 = vunpack.c.h.b16 %v81
  %v517 = vunpack.c.l.b16 %v82
  %v518 = vunpack.c.h.b16 %v82
  %v519 = vunpack.c.l.b16 %v83
  %v520 = vunpack.c.h.b16 %v83
  %v521 = vunpack.c.l.b16 %v84
  %v522 = vunpack.c.h.b16 %v84
  %v523 = vunpack.c.l.b16 %v85
  %v524 = vunpack.c.h.b16 %v85
  %v525 = vunpack.c.l.b16 %v86
  %v526 = vunpack.c.h.b16 %v86
  %v527 = vunpack.c.l.b16 %v87
  %v528 = vunpack.c.h.b16 %v87
  %v529 = vunpack.c.l.b16 %v88
  %v530 = vunpack.c.h.b16 %v88
  %v531 = vunpack.c.l.b16 %v89
  %v532 = vunpack.c.h.b16 %v89
  %v533 = vunpack.c.l.b16 %v90
  %v534 = vunpack.c.h.b16 %v90
  %v535 = vunpack.c.l.b16 %v91
  %v536 = vunpack.c.h.b16 %v91
  %v537 = vunpack.c.l.b16 %v92
  %v538 = vunpack.c.h.b16 %v92
  %v539 = vunpack.c.l.b16 %v93
  %v540 = vunpack.c.h.b16 %v93
  %v541 = vunpack.c.l.b16 %v94
  %v542 = vunpack.c.h.b16 %v94
  %v543 = vunpack.c.l.b16 %v95
  %v544 = vunpack.c.h.b16 %v95
  %v545 = vunpack.c.l.b16 %v96
  %v546 = vunpack.c.h.b16 %v96
  %v547 = vunpack.c.l.b16 %v97
  %v548 = vunpack.c.h.b16 %v97
  %v549 = vunpack.c.l.b16 %v98
  %v550 = vunpack.c.h.b16 %v98
  %v551 = vunpack.c.l.b16 %v99
  %v552 = vunpack.c.h.b16 %v99
  %v553 = vunpack.c.l.b16 %v100
  %v554 = vunpack.c.h.b16 %v100
  %v555 = vunpack.c.l.b16 %v101
  %v556 = vunpack.c.h.b16 %v101
  %v557 = vunpack.c.l.b16 %v102
  %v558 = vunpack.c.h.b16 %v102
  %v559 = vunpack.c.l.b16 %v103
  %v560 = vunpack.c.h.b16 %v103
  %v561 = vunpack.c.l.b16 %v104
  %v562 = vunpack.c.h.b16 %v104
  %v563 = vunpack.c.l.b16 %v105
  %v564 = vunpack.c.h.b16 %v105
  %v565 = vunpack.c.l.b16 %v106
  %v566 = vunpack.c.h.b16 %v106
  %v567 = vunpack.c.l.b16 %v107
  %v568 = vunpack.c.h.b16 %v107
  %v569 = vunpack.c.l.b16 %v108
  %v570 = vunpack.c.h.b16 %v108
  %v571 = vunpack.c.l.b16 %v109
  %v572 = vunpack.c.h.b16 %v109
  %v573 = vunpack.c.l.b16 %v110
  %v574 = vunpack.c.h.b16 %v110
  %v575 = vunpack.c.l.b16 %v111
  %v576 = vunpack.c.h.b16 %v111
  %v577 = vunpack.c.l.b16 %v112
  %v578 = vunpack.c.h.b16 %v112
  %v579 = vunpack.c.l.b16 %v113
  %v580 = vunpack.c.h.b16 %v113
  %v581 = vunpack.c.l.b16 %v114
  %v582 = vunpack.c.h.b16 %v114
  %v583 = vunpack.c.l.b16 %v115
  %v584 = vunpack.c.h.b16 %v115
  %v585 = vunpack.c.l.b16 %v116
  %v586 = vunpack.c.h.b16 %v116
  %v587 = vunpack.c.l.b16 %v117
  %v588 = vunpack.c.h.b16 %v117
  %v589 = vunpack.c.l.b16 %v118
  %v590 = vunpack.c.h.b16 %v118
  %v591 = vunpack.c.l.b16 %v119
  %v592 = vunpack.c.h.b16 %v119
  %v593 = vunpack.c.l.b16 %v120
  %v594 = vunpack.c.h.b16 %v120
  %v595 = vunpack.c.l.b16 %v121
  %v596 = vunpack.c.h.b16 %v121
  %v597 = vunpack.c.l.b16 %v122
  %v598 = vunpack.c.h.b16 %v122
  %v599 = vunpack.c.l.b16 %v123
  %v600 = vunpack.c.h.b16 %v123
  %v601 = vunpack.c.l.b16 %v124
  %v602 = vunpack.c.h.b16 %v124
  %v603 = vunpack.c.l.b16 %v125
  %v604 = vunpack.c.h.b16 %v125
  %v605 = vunpack.c.l.b16 %v126
  %v606 = vunpack.c.h.b16 %v126
  %v607 = vunpack.c.l.b16 %v127
  %v608 = vunpack.c.h.b16 %v127
  %v609 = vunpack.c.l.b16 %v128
  %v610 = vunpack.c.h.b16 %v128
  %v611 = vunpack.c.l.b16 %v129
  %v612 = vunpack.c.h.b16 %v129
  %v613 = vunpack.c.l.b16 %v130
  %v614 = vunpack.c.h.b16 %v130
  %v615 = vunpack.c.l.b16 %v131
  %v616 = vunpack.c.h.b16 %v131
  %v617 = vunpack.c.l.b16 %v132
  %v618 = vunpack.c.h.b16 %v132
  %v619 = vunpack.c.l.b16 %v133
  %v620 = vunpack.c.h.b16 %v133
  %v621 = vunpack.c.l.b16 %v134
  %v622 = vunpack.c.h.b16 %v134
  %v623 = vunpack.c.l.b16 %v135
  %v624 = vunpack.c.h.b16 %v135
  %v625 = vunpack.c.l.b16 %v136
  %v626 = vunpack.c.h.b16 %v136
  %v627 = vunpack.c.l.b16 %v137
  %v628 = vunpack.c.h.b16 %v137
  %v629 = vunpack.c.l.b16 %v138
  %v630 = vunpack.c.h.b16 %v138
  %v631 = vunpack.c.l.b16 %v139
  %v632 = vunpack.c.h.b16 %v139
  %v633 = vunpack.c.l.b16 %v140
  %v634 = vunpack.c.h.b16 %v140
  %v635 = vunpack.c.l.b16 %v141
  %v636 = vunpack.c.h.b16 %v141
  %v637 = vunpack.c.l.b16 %v142
  %v638 = vunpack.c.h.b16 %v142
  %v639 = vunpack.c.l.b16 %v143
  %v640 = vunpack.c.h.b16 %v143
  %v641 = vunpack.c.l.b16 %v144
  %v642 = vunpack.c.h.b16 %v144
  %v643 = vunpack.c.l.b16 %v145
  %v644 = vunpack.c.h.b16 %v145
  %v645 = vunpack.c.l.b16 %v146
  %v646 = vunpack.c.h.b16 %v146
  %v647 = vunpack.c.l.b16 %v147
  %v648 = vunpack.c.h.b16 %v147
  %v649 = vunpack.c.l.b16 %v148
  %v650 = vunpack.c.h.b16 %v148
  %v651 = vunpack.c.l.b16 %v149
  %v652 = vunpack.c.h.b16 %v149
  %v653 = vunpack.c.l.b16 %v150
  %v654 = vunpack.c.h.b16 %v150
  %v655 = vunpack.c.l.b16 %v151
  %v656 = vunpack.c.h.b16 %v151
  %v657 = vunpack.c.l.b16 %v152
  %v658 = vunpack.c.h.b16 %v152
  %v659 = vunpack.c.l.b16 %v153
  %v660 = vunpack.c.h.b16 %v153
  %v661 = vunpack.c.l.b16 %v154
  %v662 = vunpack.c.h.b16 %v154
  %v663 = vunpack.c.l.b16 %v155
  %v664 = vunpack.c.h.b16 %v155
  %v665 = vunpack.c.l.b16 %v156
  %v666 = vunpack.c.h.b16 %v156
  %v667 = vunpack.c.l.b16 %v157
  %v668 = vunpack.c.h.b16 %v157
  %v669 = vunpack.c.l.b16 %v158
  %v670 = vunpack.c.h.b16 %v158
  %v671 = vunpack.c.l.b16 %v159
  %v672 = vunpack.c.h.b16 %v159
  %v673 = vunpack.c.l.b16 %v160
  %v674 = vunpack.c.h.b16 %v160
  %v675 = vunpack.c.l.b16 %v161
  %v676 = vunpack.c.h.b16 %v161
  %v677 = vunpack.c.l.b16 %v162
  %v678 = vunpack.c.h.b16 %v162
  %v679 = vunpack.c.l.b16 %v163
  %v680 = vunpack.c.h.b16 %v163
  %v681 = vunpack.c.l.b16 %v164
  %v682 = vunpack.c.h.b16 %v164
  %v683 = vunpack.c.l.b16 %v165
  %v684 = vunpack.c.h.b16 %v165
  %v685 = vunpack.c.l.b16 %v166
  %v686 = vunpack.c.h.b16 %v166
  %v687 = vunpack.c.l.b16 %v167
  %v688 = vunpack.c.h.b16 %v167
  %v689 = vunpack.c.l.b16 %v168
  %v690 = vunpack.c.h.b16 %v168
  %v691 = vunpack.c.l.b16 %v169
  %v692 = vunpack.c.h.b16 %v169
  %v693 = vunpack.c.l.b16 %v170
  %v694 = vunpack.c.h.b16 %v170
  %v695 = vunpack.c.l.b16 %v171
  %v696 = vunpack.c.h.b16 %v171
  %v697 = vunpack.c.l.b16 %v172
  %v698 = vunpack.c.h.b16 %v172
  %v699 = vunpack.c.l.b16 %v173
  %v700 = vunpack.c.h.b16 %v173
  %v701 = vunpack.c.l.b16 %v174
  %v702 = vunpack.c.h.b16 %v174
  %v703 = vunpack.c.l.b16 %v175
  %v704 = vunpack.c.h.b16 %v175
  %v705 = vunpack.c.l.b16 %v176
  %v706 = vunpack.c.h.b16 %v176
  %v707 = vunpack.c.l.b16 %v177
  %v708 = vunpack.c.h.b16 %v177
  %v709 = vunpack.c.l.b16 %v178
  %v710 = vunpack.c.h.b16 %v178
  %v711 = vunpack.c.l.b16 %v179
  %v712 = vunpack.c.h.b16 %v179
  %v713 = vunpack.c.l.b16 %v180
  %v714 = vunpack.c.h.b16 %v180
  %v715 = vunpack.c.l.b16 %v181
  %v716 = vunpack.c.h.b16 %v181
  %v717 = vunpack.c.l.b16 %v182
  %v718 = vunpack.c.h.b16 %v182
  %v719 = vunpack.c.l.b16 %v183
  %v720 = vunpack.c.h.b16 %v183
  %v721 = vunpack.c.l.b16 %v184
  %v722 = vunpack.c.h.b16 %v184
  %v723 = vunpack.c.l.b16 %v185
  %v724 = vunpack.c.h.b16 %v185
  %v725 = vunpack.c.l.b16 %v186
  %v726 = vunpack.c.h.b16 %v186
  %v727 = vunpack.c.l.b16 %v187
  %v728 = vunpack.c.h.b16 %v187
  %v729 = vpack.c.b16 %v419, %v409
  %v730 = vpack.c.b16 %v420, %v410
  %v731 = vpack.c.b16 %v421, %v411
  %v732 = vpack.c.b16 %v422, %v412
  %v733 = vpack.c.b16 %v423, %v413
  %v734 = vpack.c.b16 %v424, %v414
  %v735 = vpack.c.b16 %v425, %v415
  %v736 = vpack.c.b16 %v426, %v416
  %v737 = vpack.c.b16 %v427, %v417
  %v738 = vpack.c.b16 %v428, %v418
  %v739 = vpack.c.b16 %v439, %v429
  %v740 = vpack.c.b16 %v440, %v430
  %v741 = vpack.c.b16 %v441, %v431
  %v742 = vpack.c.b16 %v442, %v432
  %v743 = vpack.c.b16 %v443, %v433
  %v744 = vpack.c.b16 %v444, %v434
  %v745 = vpack.c.b16 %v445, %v435
  %v746 = vpack.c.b16 %v446, %v436
  %v747 = vpack.c.b16 %v447, %v437
  %v748 = vpack.c.b16 %v448, %v438
  %v749 = vpack.c.b16 %v459, %v449
  %v750 = vpack.c.b16 %v460, %v450
  %v751 = vpack.c.b16 %v461, %v451
  %v752 = vpack.c.b16 %v462, %v452
  %v753 = vpack.c.b16 %v463, %v453
  %v754 = vpack.c.b16 %v464, %v454
  %v755 = vpack.c.b16 %v465, %v455
  %v756 = vpack.c.b16 %v466, %v456
  %v757 = vpack.c.b16 %v467, %v457
  %v758 = vpack.c.b16 %v468, %v458
  %v759 = vpack.c.b16 %v479, %v469
  %v760 = vpack.c.b16 %v480, %v470
  %v761 = vpack.c.b16 %v481, %v471
  %v762 = vpack.c.b16 %v482, %v472
  %v763 = vpack.c.b16 %v483, %v473
  %v764 = vpack.c.b16 %v484, %v474
  %v765 = vpack.c.b16 %v485, %v475
  %v766 = vpack.c.b16 %v486, %v476
  %v767 = vpack.c.b16 %v487, %v477
  %v768 = vpack.c.b16 %v488, %v478
  %v769 = vpack.c.b16 %v499, %v489
  %v770 = vpack.c.b16 %v500, %v490
  %v771 = vpack.c.b16 %v501, %v491
  %v772 = vpack.c.b16 %v502, %v492
  %v773 = vpack.c.b16 %v503, %v493
  %v774 = vpack.c.b16 %v504, %v494
  %v775 = vpack.c.b16 %v505, %v495
  %v776 = vpack.c.b16 %v506, %v496
  %v777 = vpack.c.b16 %v507, %v497
  %v778 = vpack.c.b16 %v508, %v498
  %v779 = vpack.c.b16 %v519, %v509
  %v780 = vpack.c.b16 %v520, %v510
  %v781 = vpack.c.b16 %v521, %v511
  %v782 = vpack.c.b16 %v522, %v512
  %v783 = vpack.c.b16 %v523, %v513
  %v784 = vpack.c.b16 %v524, %v514
  %v785 = vpack.c.b16 %v525, %v515
  %v786 = vpack.c.b16 %v526, %v516
  %v787 = vpack.c.b16 %v527, %v517
  %v788 = vpack.c.b16 %v528, %v518
  %v789 = vpack.c.b16 %v539, %v529
  %v790 = vpack.c.b16 %v540, %v530
  %v791 = vpack.c.b16 %v541, %v531
  %v792 = vpack.c.b16 %v542, %v532
  %v793 = vpack.c.b16 %v543, %v533
  %v794 = vpack.c.b16 %v544, %v534
  %v795 = vpack.c.b16 %v545, %v535
  %v796 = vpack.c.b16 %v546, %v536
  %v797 = vpack.c.b16 %v547, %v537
  %v798 = vpack.c.b16 %v548, %v538
  %v799 = vpack.c.b16 %v559, %v549
  %v800 = vpack.c.b16 %v560, %v550
  %v801 = vpack.c.b16 %v561, %v551
  %v802 = vpack.c.b16 %v562, %v552
  %v803 = vpack.c.b16 %v563, %v553
  %v804 = vpack.c.b16 %v564, %v554
  %v805 = vpack.c.b16 %v565, %v555
  %v806 = vpack.c.b16 %v566, %v556
  %v807 = vpack.c.b16 %v567, %v557
  %v808 = vpack.c.b16 %v568, %v558
  %v809 = vpack.c.b16 %v579, %v569
  %v810 = vpack.c.b16 %v580, %v570
  %v811 = vpack.c.b16 %v581, %v571
  %v812 = vpack.c.b16 %v582, %v572
  %v813 = vpack.c.b16 %v583, %v573
  %v814 = vpack.c.b16 %v584, %v574
  %v815 = vpack.c.b16 %v585, %v575
  %v816 = vpack.c.b16 %v586, %v576
  %v817 = vpack.c.b16 %v587, %v577
  %v818 = vpack.c.b16 %v588, %v578
  %v819 = vpack.c.b16 %v599, %v589
  %v820 = vpack.c.b16 %v600, %v590
  %v821 = vpack.c.b16 %v601, %v591
  %v822 = vpack.c.b16 %v602, %v592
  %v823 = vpack.c.b16 %v603, %v593
  %v824 = vpack.c.b16 %v604, %v594
  %v825 = vpack.c.b16 %v605, %v595
  %v826 = vpack.c.b16 %v606, %v596
  %v827 = vpack.c.b16 %v607, %v597
  %v828 = vpack.c.b16 %v608, %v598
  %v829 = vpack.c.b16 %v619, %v609
  %v830 = vpack.c.b16 %v620, %v610
  %v831 = vpack.c.b16 %v621, %v611
  %v832 = vpack.c.b16 %v622, %v612
  %v833 = vpack.c.b16 %v623, %v613
  %v834 = vpack.c.b16 %v624, %v614
  %v835 = vpack.c.b16 %v625, %v615
  %v836 = vpack.c.b16 %v626, %v616
  %v837 = vpack.c.b16 %v627, %v617
  %v838 = vpack.c.b16 %v628, %v618
  %v839 = vpack.c.b16 %v639, %v629
  %v840 = vpack.c.b16 %v640, %v630
  %v841 = vpack.c.b16 %v641, %v631
  %v842 = vpack.c.b16 %v642, %v632
  %v843 = vpack.c.b16 %v643, %v633
  %v844 = vpack.c.b16 %v644, %v634
  %v845 = vpack.c.b16 %v645, %v635
  %v846 = vpack.c.b16 %v646, %v636
  %v847 = vpack.c.b16 %v647, %v637
  %v848 = vpack.c.b16 %v648, %v638
  %v849 = vpack.c.b16 %v659, %v649
  %v850 = vpack.c.b16 %v660, %v650
  %v851 = vpack.c.b16 %v661, %v651
  %v852 = vpack.c.b16 %v662, %v652
  %v853 = vpack.c.b16 %v663, %v653
  %v854 = vpack.c.b16 %v664, %v654
  %v855 = vpack.c.b16 %v665, %v655
  %v856 = vpack.c.b16 %v666, %v656
  %v857 = vpack.c.b16 %v667, %v657
  %v858 = vpack.c.b16 %v668, %v658
  %v859 = vpack.c.b16 %v679, %v669
  %v860 = vpack.c.b16 %v680, %v670
  %v861 = vpack.c.b16 %v681, %v671
  %v862 = vpack.c.b16 %v682, %v672
  %v863 = vpack.c.b16 %v683, %v673
  %v864 = vpack.c.b16 %v684, %v674
  %v865 = vpack.c.b16 %v685, %v675
  %v866 = vpack.c.b16 %v686, %v676
  %v867 = vpack.c.b16 %v687, %v677
  %v868 = vpack.c.b16 %v688, %v678
  %v869 = vpack.c.b16 %v699, %v689
  %v870 = vpack.c.b16 %v700, %v690
  %v871 = vpack.c.b16 %v701, %v691
  %v872 = vpack.c.b16 %v702, %v692
  %v873 = vpack.c.b16 %v703, %v693
  %v874 = vpack.c.b16 %v704, %v694
  %v875 = vpack.c.b16 %v705, %v695
  %v876 = vpack.c.b16 %v706, %v696
  %v877 = vpack.c.b16 %v707, %v697
  %v878 = vpack.c.b16 %v708, %v698
  %v879 = vpack.c.b16 %v719, %v709
  %v880 = vpack.c.b16 %v720, %v710
  %v881 = vpack.c.b16 %v721, %v711
  %v882 = vpack.c.b16 %v722, %v712
  %v883 = vpack.c.b16 %v723, %v713
  %v884 = vpack.c.b16 %v724, %v714
  %v885 = vpack.c.b16 %v725, %v715
  %v886 = vpack.c.b16 %v726, %v716
  %v887 = vpack.c.b16 %v727, %v717
  %v888 = vpack.c.b16 %v728, %v718
  %1049 = vmatprep.subr.bf16.mxu0 %v730
  %1050 = vmatpush1.bf16.msra.mxu0 %v729
  %1051 = vmatprep.subr.bf16.mxu0 %v740
  %1052 = vmatpush1.bf16.msra.mxu0 %v739
  %1053 = vmatprep.subr.bf16.mxu0 %v750
  %1054 = vmatpush1.bf16.msra.mxu0 %v749
  %1055 = vmatprep.subr.bf16.mxu0 %v760
  %1056 = vmatpush1.bf16.msra.mxu0 %v759
  %1057 = vmatprep.subr.bf16.mxu0 %v770
  %1058 = vmatpush1.bf16.msra.mxu0 %v769
  %1059 = vmatprep.subr.bf16.mxu0 %v780
  %1060 = vmatpush1.bf16.msra.mxu0 %v779
  %1061 = vmatprep.subr.bf16.mxu0 %v790
  %1062 = vmatpush1.bf16.msra.mxu0 %v789
  %1063 = vmatprep.subr.bf16.mxu0 %v800
  %1064 = vmatpush1.bf16.msra.mxu0 %v799
  %1065 = vmatprep.subr.bf16.mxu0 %v810
  %1066 = vmatpush1.bf16.msra.mxu0 %v809
  %1067 = vmatprep.subr.bf16.mxu0 %v820
  %1068 = vmatpush1.bf16.msra.mxu0 %v819
  %1069 = vmatprep.subr.bf16.mxu0 %v830
  %1070 = vmatpush1.bf16.msra.mxu0 %v829
  %1071 = vmatprep.subr.bf16.mxu0 %v840
  %1072 = vmatpush1.bf16.msra.mxu0 %v839
  %1073 = vmatprep.subr.bf16.mxu0 %v850
  %1074 = vmatpush1.bf16.msra.mxu0 %v849
  %1075 = vmatprep.subr.bf16.mxu0 %v860
  %1076 = vmatpush1.bf16.msra.mxu0 %v859
  %1077 = vmatprep.subr.bf16.mxu0 %v870
  %1078 = vmatpush1.bf16.msra.mxu0 %v869
  %1079 = vmatprep.subr.bf16.mxu0 %v880
  %1080 = vmatpush1.bf16.msra.mxu0 %v879
  %1081 = vmatprep.mubr.bf16.mxu0 %v246
  %1082 = vmatmul.mubr.bf16.gmra.mrb[0].mxu0 %v245
  %v1083 = vpop.f32.mrb[0].mxu0
  %v1084 = vadd.f32 %v195, %v1083
  %v1085 = vpop.f32.mrb[0].mxu0
  %v1086 = vadd.f32 %v199, %v1085
  %v1087 = vpop.f32.mrb[0].mxu0
  %v1088 = vpop.f32.mrb[0].mxu0
  %1089 = vdwg.mxu0
  %1090 = vmatprep.subr.bf16.mxu0 %v732
  %1091 = vmatpush1.bf16.msra.mxu0 %v731
  %1092 = vmatprep.subr.bf16.mxu0 %v742
  %1093 = vmatpush1.bf16.msra.mxu0 %v741
  %1094 = vmatprep.subr.bf16.mxu0 %v752
  %1095 = vmatpush1.bf16.msra.mxu0 %v751
  %1096 = vmatprep.subr.bf16.mxu0 %v762
  %1097 = vmatpush1.bf16.msra.mxu0 %v761
  %1098 = vmatprep.subr.bf16.mxu0 %v772
  %1099 = vmatpush1.bf16.msra.mxu0 %v771
  %1100 = vmatprep.subr.bf16.mxu0 %v782
  %1101 = vmatpush1.bf16.msra.mxu0 %v781
  %1102 = vmatprep.subr.bf16.mxu0 %v792
  %1103 = vmatpush1.bf16.msra.mxu0 %v791
  %1104 = vmatprep.subr.bf16.mxu0 %v802
  %1105 = vmatpush1.bf16.msra.mxu0 %v801
  %1106 = vmatprep.subr.bf16.mxu0 %v812
  %1107 = vmatpush1.bf16.msra.mxu0 %v811
  %1108 = vmatprep.subr.bf16.mxu0 %v822
  %1109 = vmatpush1.bf16.msra.mxu0 %v821
  %1110 = vmatprep.subr.bf16.mxu0 %v832
  %1111 = vmatpush1.bf16.msra.mxu0 %v831
  %1112 = vmatprep.subr.bf16.mxu0 %v842
  %1113 = vmatpush1.bf16.msra.mxu0 %v841
  %1114 = vmatprep.subr.bf16.mxu0 %v852
  %1115 = vmatpush1.bf16.msra.mxu0 %v851
  %1116 = vmatprep.subr.bf16.mxu0 %v862
  %1117 = vmatpush1.bf16.msra.mxu0 %v861
  %1118 = vmatprep.subr.bf16.mxu0 %v872
  %1119 = vmatpush1.bf16.msra.mxu0 %v871
  %1120 = vmatprep.subr.bf16.mxu0 %v882
  %1121 = vmatpush1.bf16.msra.mxu0 %v881
  %1122 = vmatprep.mubr.bf16.mxu0 %v246
  %1123 = vmatmul.mubr.bf16.gmra.mrb[0].mxu0 %v245
  %v1124 = vpop.f32.mrb[0].mxu0
  %v1125 = vadd.f32 %v203, %v1124
  %v1126 = vpop.f32.mrb[0].mxu0
  %v1127 = vadd.f32 %v207, %v1126
  %v1128 = vpop.f32.mrb[0].mxu0
  %v1129 = vpop.f32.mrb[0].mxu0
  %1130 = vdwg.mxu0
  %1131 = vmatprep.subr.bf16.mxu0 %v734
  %1132 = vmatpush1.bf16.msra.mxu0 %v733
  %1133 = vmatprep.subr.bf16.mxu0 %v744
  %1134 = vmatpush1.bf16.msra.mxu0 %v743
  %1135 = vmatprep.subr.bf16.mxu0 %v754
  %1136 = vmatpush1.bf16.msra.mxu0 %v753
  %1137 = vmatprep.subr.bf16.mxu0 %v764
  %1138 = vmatpush1.bf16.msra.mxu0 %v763
  %1139 = vmatprep.subr.bf16.mxu0 %v774
  %1140 = vmatpush1.bf16.msra.mxu0 %v773
  %1141 = vmatprep.subr.bf16.mxu0 %v784
  %1142 = vmatpush1.bf16.msra.mxu0 %v783
  %1143 = vmatprep.subr.bf16.mxu0 %v794
  %1144 = vmatpush1.bf16.msra.mxu0 %v793
  %1145 = vmatprep.subr.bf16.mxu0 %v804
  %1146 = vmatpush1.bf16.msra.mxu0 %v803
  %1147 = vmatprep.subr.bf16.mxu0 %v814
  %1148 = vmatpush1.bf16.msra.mxu0 %v813
  %1149 = vmatprep.subr.bf16.mxu0 %v824
  %1150 = vmatpush1.bf16.msra.mxu0 %v823
  %1151 = vmatprep.subr.bf16.mxu0 %v834
  %1152 = vmatpush1.bf16.msra.mxu0 %v833
  %1153 = vmatprep.subr.bf16.mxu0 %v844
  %1154 = vmatpush1.bf16.msra.mxu0 %v843
  %1155 = vmatprep.subr.bf16.mxu0 %v854
  %1156 = vmatpush1.bf16.msra.mxu0 %v853
  %1157 = vmatprep.subr.bf16.mxu0 %v864
  %1158 = vmatpush1.bf16.msra.mxu0 %v863
  %1159 = vmatprep.subr.bf16.mxu0 %v874
  %1160 = vmatpush1.bf16.msra.mxu0 %v873
  %1161 = vmatprep.subr.bf16.mxu0 %v884
  %1162 = vmatpush1.bf16.msra.mxu0 %v883
  %1163 = vmatprep.mubr.bf16.mxu0 %v246
  %1164 = vmatmul.mubr.bf16.gmra.mrb[0].mxu0 %v245
  %v1165 = vpop.f32.mrb[0].mxu0
  %v1166 = vadd.f32 %v211, %v1165
  %v1167 = vpop.f32.mrb[0].mxu0
  %v1168 = vadd.f32 %v215, %v1167
  %v1169 = vpop.f32.mrb[0].mxu0
  %v1170 = vpop.f32.mrb[0].mxu0
  %1171 = vdwg.mxu0
  %1172 = vmatprep.subr.bf16.mxu0 %v736
  %1173 = vmatpush1.bf16.msra.mxu0 %v735
  %1174 = vmatprep.subr.bf16.mxu0 %v746
  %1175 = vmatpush1.bf16.msra.mxu0 %v745
  %1176 = vmatprep.subr.bf16.mxu0 %v756
  %1177 = vmatpush1.bf16.msra.mxu0 %v755
  %1178 = vmatprep.subr.bf16.mxu0 %v766
  %1179 = vmatpush1.bf16.msra.mxu0 %v765
  %1180 = vmatprep.subr.bf16.mxu0 %v776
  %1181 = vmatpush1.bf16.msra.mxu0 %v775
  %1182 = vmatprep.subr.bf16.mxu0 %v786
  %1183 = vmatpush1.bf16.msra.mxu0 %v785
  %1184 = vmatprep.subr.bf16.mxu0 %v796
  %1185 = vmatpush1.bf16.msra.mxu0 %v795
  %1186 = vmatprep.subr.bf16.mxu0 %v806
  %1187 = vmatpush1.bf16.msra.mxu0 %v805
  %1188 = vmatprep.subr.bf16.mxu0 %v816
  %1189 = vmatpush1.bf16.msra.mxu0 %v815
  %1190 = vmatprep.subr.bf16.mxu0 %v826
  %1191 = vmatpush1.bf16.msra.mxu0 %v825
  %1192 = vmatprep.subr.bf16.mxu0 %v836
  %1193 = vmatpush1.bf16.msra.mxu0 %v835
  %1194 = vmatprep.subr.bf16.mxu0 %v846
  %1195 = vmatpush1.bf16.msra.mxu0 %v845
  %1196 = vmatprep.subr.bf16.mxu0 %v856
  %1197 = vmatpush1.bf16.msra.mxu0 %v855
  %1198 = vmatprep.subr.bf16.mxu0 %v866
  %1199 = vmatpush1.bf16.msra.mxu0 %v865
  %1200 = vmatprep.subr.bf16.mxu0 %v876
  %1201 = vmatpush1.bf16.msra.mxu0 %v875
  %1202 = vmatprep.subr.bf16.mxu0 %v886
  %1203 = vmatpush1.bf16.msra.mxu0 %v885
  %1204 = vmatprep.mubr.bf16.mxu0 %v246
  %1205 = vmatmul.mubr.bf16.gmra.mrb[0].mxu0 %v245
  %v1206 = vpop.f32.mrb[0].mxu0
  %v1207 = vadd.f32 %v219, %v1206
  %v1208 = vpop.f32.mrb[0].mxu0
  %v1209 = vadd.f32 %v223, %v1208
  %v1210 = vpop.f32.mrb[0].mxu0
  %v1211 = vpop.f32.mrb[0].mxu0
  %1212 = vdwg.mxu0
  %1213 = vmatprep.subr.bf16.mxu0 %v738
  %1214 = vmatpush1.bf16.msra.mxu0 %v737
  %1215 = vmatprep.subr.bf16.mxu0 %v748
  %1216 = vmatpush1.bf16.msra.mxu0 %v747
  %1217 = vmatprep.subr.bf16.mxu0 %v758
  %1218 = vmatpush1.bf16.msra.mxu0 %v757
  %1219 = vmatprep.subr.bf16.mxu0 %v768
  %1220 = vmatpush1.bf16.msra.mxu0 %v767
  %1221 = vmatprep.subr.bf16.mxu0 %v778
  %1222 = vmatpush1.bf16.msra.mxu0 %v777
  %1223 = vmatprep.subr.bf16.mxu0 %v788
  %1224 = vmatpush1.bf16.msra.mxu0 %v787
  %1225 = vmatprep.subr.bf16.mxu0 %v798
  %1226 = vmatpush1.bf16.msra.mxu0 %v797
  %1227 = vmatprep.subr.bf16.mxu0 %v808
  %1228 = vmatpush1.bf16.msra.mxu0 %v807
  %1229 = vmatprep.subr.bf16.mxu0 %v818
  %1230 = vmatpush1.bf16.msra.mxu0 %v817
  %1231 = vmatprep.subr.bf16.mxu0 %v828
  %1232 = vmatpush1.bf16.msra.mxu0 %v827
  %1233 = vmatprep.subr.bf16.mxu0 %v838
  %1234 = vmatpush1.bf16.msra.mxu0 %v837
  %1235 = vmatprep.subr.bf16.mxu0 %v848
  %1236 = vmatpush1.bf16.msra.mxu0 %v847
  %1237 = vmatprep.subr.bf16.mxu0 %v858
  %1238 = vmatpush1.bf16.msra.mxu0 %v857
  %1239 = vmatprep.subr.bf16.mxu0 %v868
  %1240 = vmatpush1.bf16.msra.mxu0 %v867
  %1241 = vmatprep.subr.bf16.mxu0 %v878
  %1242 = vmatpush1.bf16.msra.mxu0 %v877
  %1243 = vmatprep.subr.bf16.mxu0 %v888
  %1244 = vmatpush1.bf16.msra.mxu0 %v887
  %1245 = vmatprep.mubr.bf16.mxu0 %v246
  %1246 = vmatmul.mubr.bf16.gmra.mrb[0].mxu0 %v245
  %v1247 = vpop.f32.mrb[0].mxu0
  %v1248 = vadd.f32 %v227, %v1247
  %v1249 = vpop.f32.mrb[0].mxu0
  %v1250 = vadd.f32 %v231, %v1249
  %v1251 = vpop.f32.mrb[0].mxu0
  %v1252 = vpop.f32.mrb[0].mxu0
  %1253 = vdwg.mxu0
  %v1254 = vmax.f32 %v1084, 0.0
  %v1255 = vmax.f32 %v1086, 0.0
  %v1256 = vmax.f32 %v1125, 0.0
  %v1257 = vmax.f32 %v1127, 0.0
  %v1258 = vmax.f32 %v1166, 0.0
  %v1259 = vmax.f32 %v1168, 0.0
  %v1260 = vmax.f32 %v1207, 0.0
  %v1261 = vmax.f32 %v1209, 0.0
  %v1262 = vmax.f32 %v1248, 0.0
  %v1263 = vmax.f32 %v1250, 0.0
  %v1264 = vpack.c.bf16 %v1254, %v1254
  %v1265 = vpack.c.bf16 %v1255, %v1255
  %v1266 = vpack.c.bf16 %v1256, %v1256
  %v1267 = vpack.c.bf16 %v1257, %v1257
  %v1268 = vpack.c.bf16 %v1258, %v1258
  %v1269 = vpack.c.bf16 %v1259, %v1259
  %v1270 = vpack.c.bf16 %v1260, %v1260
  %v1271 = vpack.c.bf16 %v1261, %v1261
  %v1272 = vpack.c.bf16 %v1262, %v1262
  %v1273 = vpack.c.bf16 %v1263, %v1263
  %v1274 = vld [vmem:[%s3] sm:$0xff]
  %v1275 = vld [vmem:[%s3 + $0x8] sm:$0xff]
  %v1276 = vld [vmem:[%s3 + $0x10] sm:$0xf]
  %v1277 = vld [vmem:[%s3 + $0x14] sm:$0xff]
  %v1278 = vld [vmem:[%s3 + $0x1c] sm:$0xff]
  %v1279 = vld [vmem:[%s3 + $0x24] sm:$0xf]
  %v1280 = vld [vmem:[%s3 + $0x28] sm:$0xff]
  %v1281 = vld [vmem:[%s3 + $0x30] sm:$0xff]
  %v1282 = vld [vmem:[%s3 + $0x38] sm:$0xf]
  %v1283 = vld [vmem:[%s3 + $0x3c] sm:$0xff]
  %v1284 = vld [vmem:[%s3 + $0x44] sm:$0xff]
  %v1285 = vld [vmem:[%s3 + $0x4c] sm:$0xf]
  %v1286 = vld [vmem:[%s3 + $0x50] sm:$0xff]
  %v1287 = vld [vmem:[%s3 + $0x58] sm:$0xff]
  %v1288 = vld [vmem:[%s3 + $0x60] sm:$0xf]
  %v1289 = vld [vmem:[%s3 + $0x64] sm:$0xff]
  %v1290 = vld [vmem:[%s3 + $0x6c] sm:$0xff]
  %v1291 = vld [vmem:[%s3 + $0x74] sm:$0xf]
  %v1292 = vld [vmem:[%s3 + $0x78] sm:$0xff]
  %v1293 = vld [vmem:[%s3 + $0x80] sm:$0xff]
  %v1294 = vld [vmem:[%s3 + $0x88] sm:$0xf]
  %v1295 = vld [vmem:[%s3 + $0x8c] sm:$0xff]
  %v1296 = vld [vmem:[%s3 + $0x94] sm:$0xff]
  %v1297 = vld [vmem:[%s3 + $0x9c] sm:$0xf]
  %v1298 = vld [vmem:[%s3 + $0xa0] sm:$0xff]
  %v1299 = vld [vmem:[%s3 + $0xa8] sm:$0xff]
  %v1300 = vld [vmem:[%s3 + $0xb0] sm:$0xf]
  %v1301 = vld [vmem:[%s3 + $0xb4] sm:$0xff]
  %v1302 = vld [vmem:[%s3 + $0xbc] sm:$0xff]
  %v1303 = vld [vmem:[%s3 + $0xc4] sm:$0xf]
  %v1304 = vld [vmem:[%s3 + $0xc8] sm:$0xff]
  %v1305 = vld [vmem:[%s3 + $0xd0] sm:$0xff]
  %v1306 = vld [vmem:[%s3 + $0xd8] sm:$0xf]
  %v1307 = vld [vmem:[%s3 + $0xdc] sm:$0xff]
  %v1308 = vld [vmem:[%s3 + $0xe4] sm:$0xff]
  %v1309 = vld [vmem:[%s3 + $0xec] sm:$0xf]
  %v1310 = vld [vmem:[%s3 + $0xf0] sm:$0xff]
  %v1311 = vld [vmem:[%s3 + $0xf8] sm:$0xff]
  %v1312 = vld [vmem:[%s3 + $0x100] sm:$0xf]
  %v1313 = vld [vmem:[%s3 + $0x104] sm:$0xff]
  %v1314 = vld [vmem:[%s3 + $0x10c] sm:$0xff]
  %v1315 = vld [vmem:[%s3 + $0x114] sm:$0xf]
  %v1316 = vld [vmem:[%s3 + $0x118] sm:$0xff]
  %v1317 = vld [vmem:[%s3 + $0x120] sm:$0xff]
  %v1318 = vld [vmem:[%s3 + $0x128] sm:$0xf]
  %v1319 = vld [vmem:[%s3 + $0x12c] sm:$0xff]
  %v1320 = vld [vmem:[%s3 + $0x134] sm:$0xff]
  %v1321 = vld [vmem:[%s3 + $0x13c] sm:$0xf]
  %v1322 = vld [vmem:[%s3 + $0x140] sm:$0xff]
  %v1323 = vld [vmem:[%s3 + $0x148] sm:$0xff]
  %v1324 = vld [vmem:[%s3 + $0x150] sm:$0xf]
  %v1325 = vld [vmem:[%s3 + $0x154] sm:$0xff]
  %v1326 = vld [vmem:[%s3 + $0x15c] sm:$0xff]
  %v1327 = vld [vmem:[%s3 + $0x164] sm:$0xf]
  %v1328 = vld [vmem:[%s3 + $0x168] sm:$0xff]
  %v1329 = vld [vmem:[%s3 + $0x170] sm:$0xff]
  %v1330 = vld [vmem:[%s3 + $0x178] sm:$0xf]
  %v1331 = vld [vmem:[%s3 + $0x17c] sm:$0xff]
  %v1332 = vld [vmem:[%s3 + $0x184] sm:$0xff]
  %v1333 = vld [vmem:[%s3 + $0x18c] sm:$0xf]
  %v1334 = vld [vmem:[%s3 + $0x190] sm:$0xff]
  %v1335 = vld [vmem:[%s3 + $0x198] sm:$0xff]
  %v1336 = vld [vmem:[%s3 + $0x1a0] sm:$0xf]
  %v1337 = vld [vmem:[%s3 + $0x1a4] sm:$0xff]
  %v1338 = vld [vmem:[%s3 + $0x1ac] sm:$0xff]
  %v1339 = vld [vmem:[%s3 + $0x1b4] sm:$0xf]
  %v1340 = vld [vmem:[%s3 + $0x1b8] sm:$0xff]
  %v1341 = vld [vmem:[%s3 + $0x1c0] sm:$0xff]
  %v1342 = vld [vmem:[%s3 + $0x1c8] sm:$0xf]
  %v1343 = vld [vmem:[%s3 + $0x1cc] sm:$0xff]
  %v1344 = vld [vmem:[%s3 + $0x1d4] sm:$0xff]
  %v1345 = vld [vmem:[%s3 + $0x1dc] sm:$0xf]
  %v1346 = vld [vmem:[%s3 + $0x1e0] sm:$0xff]
  %v1347 = vld [vmem:[%s3 + $0x1e8] sm:$0xff]
  %v1348 = vld [vmem:[%s3 + $0x1f0] sm:$0xf]
  %v1349 = vld [vmem:[%s3 + $0x1f4] sm:$0xff]
  %v1350 = vld [vmem:[%s3 + $0x1fc] sm:$0xff]
  %v1351 = vld [vmem:[%s3 + $0x204] sm:$0xf]
  %v1352 = vld [vmem:[%s3 + $0x208] sm:$0xff]
  %v1353 = vld [vmem:[%s3 + $0x210] sm:$0xff]
  %v1354 = vld [vmem:[%s3 + $0x218] sm:$0xf]
  %v1355 = vld [vmem:[%s3 + $0x21c] sm:$0xff]
  %v1356 = vld [vmem:[%s3 + $0x224] sm:$0xff]
  %v1357 = vld [vmem:[%s3 + $0x22c] sm:$0xf]
  %v1358 = vld [vmem:[%s3 + $0x230] sm:$0xff]
  %v1359 = vld [vmem:[%s3 + $0x238] sm:$0xff]
  %v1360 = vld [vmem:[%s3 + $0x240] sm:$0xf]
  %v1361 = vld [vmem:[%s3 + $0x244] sm:$0xff]
  %v1362 = vld [vmem:[%s3 + $0x24c] sm:$0xff]
  %v1363 = vld [vmem:[%s3 + $0x254] sm:$0xf]
  %v1364 = vld [vmem:[%s3 + $0x258] sm:$0xff]
  %v1365 = vld [vmem:[%s3 + $0x260] sm:$0xff]
  %v1366 = vld [vmem:[%s3 + $0x268] sm:$0xf]
  %v1367 = vld [vmem:[%s3 + $0x26c] sm:$0xff]
  %v1368 = vld [vmem:[%s3 + $0x274] sm:$0xff]
  %v1369 = vld [vmem:[%s3 + $0x27c] sm:$0xf]
  %v1370 = vld [vmem:[%s3 + $0x280] sm:$0xff]
  %v1371 = vld [vmem:[%s3 + $0x288] sm:$0xff]
  %v1372 = vld [vmem:[%s3 + $0x290] sm:$0xf]
  %v1373 = vld [vmem:[%s3 + $0x294] sm:$0xff]
  %v1374 = vld [vmem:[%s3 + $0x29c] sm:$0xff]
  %v1375 = vld [vmem:[%s3 + $0x2a4] sm:$0xf]
  %v1376 = vld [vmem:[%s3 + $0x2a8] sm:$0xff]
  %v1377 = vld [vmem:[%s3 + $0x2b0] sm:$0xff]
  %v1378 = vld [vmem:[%s3 + $0x2b8] sm:$0xf]
  %v1379 = vld [vmem:[%s3 + $0x2bc] sm:$0xff]
  %v1380 = vld [vmem:[%s3 + $0x2c4] sm:$0xff]
  %v1381 = vld [vmem:[%s3 + $0x2cc] sm:$0xf]
  %v1382 = vld [vmem:[%s3 + $0x2d0] sm:$0xff]
  %v1383 = vld [vmem:[%s3 + $0x2d8] sm:$0xff]
  %v1384 = vld [vmem:[%s3 + $0x2e0] sm:$0xf]
  %v1385 = vld [vmem:[%s3 + $0x2e4] sm:$0xff]
  %v1386 = vld [vmem:[%s3 + $0x2ec] sm:$0xff]
  %v1387 = vld [vmem:[%s3 + $0x2f4] sm:$0xf]
  %v1388 = vld [vmem:[%s3 + $0x2f8] sm:$0xff]
  %v1389 = vld [vmem:[%s3 + $0x300] sm:$0xff]
  %v1390 = vld [vmem:[%s3 + $0x308] sm:$0xf]
  %v1391 = vld [vmem:[%s3 + $0x30c] sm:$0xff]
  %v1392 = vld [vmem:[%s3 + $0x314] sm:$0xff]
  %v1393 = vld [vmem:[%s3 + $0x31c] sm:$0xf]
  %v1394 = vld [vmem:[%s3 + $0x320] sm:$0xff]
  %v1395 = vld [vmem:[%s3 + $0x328] sm:$0xff]
  %v1396 = vld [vmem:[%s3 + $0x330] sm:$0xf]
  %v1397 = vld [vmem:[%s3 + $0x334] sm:$0xff]
  %v1398 = vld [vmem:[%s3 + $0x33c] sm:$0xff]
  %v1399 = vld [vmem:[%s3 + $0x344] sm:$0xf]
  %v1400 = vld [vmem:[%s3 + $0x348] sm:$0xff]
  %v1401 = vld [vmem:[%s3 + $0x350] sm:$0xff]
  %v1402 = vld [vmem:[%s3 + $0x358] sm:$0xf]
  %v1403 = vld [vmem:[%s3 + $0x35c] sm:$0xff]
  %v1404 = vld [vmem:[%s3 + $0x364] sm:$0xff]
  %v1405 = vld [vmem:[%s3 + $0x36c] sm:$0xf]
  %v1406 = vld [vmem:[%s3 + $0x370] sm:$0xff]
  %v1407 = vld [vmem:[%s3 + $0x378] sm:$0xff]
  %v1408 = vld [vmem:[%s3 + $0x380] sm:$0xf]
  %v1409 = vld [vmem:[%s3 + $0x384] sm:$0xff]
  %v1410 = vld [vmem:[%s3 + $0x38c] sm:$0xff]
  %v1411 = vld [vmem:[%s3 + $0x394] sm:$0xf]
  %v1412 = vld [vmem:[%s3 + $0x398] sm:$0xff]
  %v1413 = vld [vmem:[%s3 + $0x3a0] sm:$0xff]
  %v1414 = vld [vmem:[%s3 + $0x3a8] sm:$0xf]
  %v1415 = vld [vmem:[%s3 + $0x3ac] sm:$0xff]
  %v1416 = vld [vmem:[%s3 + $0x3b4] sm:$0xff]
  %v1417 = vld [vmem:[%s3 + $0x3bc] sm:$0xf]
  %v1418 = vld [vmem:[%s3 + $0x3c0] sm:$0xff]
  %v1419 = vld [vmem:[%s3 + $0x3c8] sm:$0xff]
  %v1420 = vld [vmem:[%s3 + $0x3d0] sm:$0xf]
  %v1421 = vld [vmem:[%s3 + $0x3d4] sm:$0xff]
  %v1422 = vld [vmem:[%s3 + $0x3dc] sm:$0xff]
  %v1423 = vld [vmem:[%s3 + $0x3e4] sm:$0xf]
  %v1424 = vld [vmem:[%s3 + $0x3e8] sm:$0xff]
  %v1425 = vld [vmem:[%s3 + $0x3f0] sm:$0xff]
  %v1426 = vld [vmem:[%s3 + $0x3f8] sm:$0xf]
  %v1427 = vld [vmem:[%s3 + $0x3fc] sm:$0xff]
  %v1428 = vld [vmem:[%s3 + $0x404] sm:$0xff]
  %v1429 = vld [vmem:[%s3 + $0x40c] sm:$0xf]
  %v1430 = vld [vmem:[%s3 + $0x410] sm:$0xff]
  %v1431 = vld [vmem:[%s3 + $0x418] sm:$0xff]
  %v1432 = vld [vmem:[%s3 + $0x420] sm:$0xf]
  %v1433 = vld [vmem:[%s3 + $0x424] sm:$0xff]
  %v1434 = vld [vmem:[%s3 + $0x42c] sm:$0xff]
  %v1435 = vld [vmem:[%s3 + $0x434] sm:$0xf]
  %v1436 = vld [vmem:[%s3 + $0x438] sm:$0xff]
  %v1437 = vld [vmem:[%s3 + $0x440] sm:$0xff]
  %v1438 = vld [vmem:[%s3 + $0x448] sm:$0xf]
  %v1439 = vld [vmem:[%s3 + $0x44c] sm:$0xff]
  %v1440 = vld [vmem:[%s3 + $0x454] sm:$0xff]
  %v1441 = vld [vmem:[%s3 + $0x45c] sm:$0xf]
  %v1442 = vld [vmem:[%s3 + $0x460] sm:$0xff]
  %v1443 = vld [vmem:[%s3 + $0x468] sm:$0xff]
  %v1444 = vld [vmem:[%s3 + $0x470] sm:$0xf]
  %v1445 = vld [vmem:[%s3 + $0x474] sm:$0xff]
  %v1446 = vld [vmem:[%s3 + $0x47c] sm:$0xff]
  %v1447 = vld [vmem:[%s3 + $0x484] sm:$0xf]
  %v1448 = vld [vmem:[%s3 + $0x488] sm:$0xff]
  %v1449 = vld [vmem:[%s3 + $0x490] sm:$0xff]
  %v1450 = vld [vmem:[%s3 + $0x498] sm:$0xf]
  %v1451 = vld [vmem:[%s3 + $0x49c] sm:$0xff]
  %v1452 = vld [vmem:[%s3 + $0x4a4] sm:$0xff]
  %v1453 = vld [vmem:[%s3 + $0x4ac] sm:$0xf]
  %v1454 = vld [vmem:[%s3 + $0x4b0] sm:$0xff]
  %v1455 = vld [vmem:[%s3 + $0x4b8] sm:$0xff]
  %v1456 = vld [vmem:[%s3 + $0x4c0] sm:$0xf]
  %v1457 = vld [vmem:[%s3 + $0x4c4] sm:$0xff]
  %v1458 = vld [vmem:[%s3 + $0x4cc] sm:$0xff]
  %v1459 = vld [vmem:[%s3 + $0x4d4] sm:$0xf]
  %v1460 = vld [vmem:[%s3 + $0x4d8] sm:$0xff]
  %v1461 = vld [vmem:[%s3 + $0x4e0] sm:$0xff]
  %v1462 = vld [vmem:[%s3 + $0x4e8] sm:$0xf]
  %v1463 = vld [vmem:[%s3 + $0x4ec] sm:$0xff]
  %v1464 = vld [vmem:[%s3 + $0x4f4] sm:$0xff]
  %v1465 = vld [vmem:[%s3 + $0x4fc] sm:$0xf]
  %v1466 = vld [vmem:[%s3 + $0x500] sm:$0xff]
  %v1467 = vld [vmem:[%s3 + $0x508] sm:$0xff]
  %v1468 = vld [vmem:[%s3 + $0x510] sm:$0xf]
  %v1469 = vld [vmem:[%s3 + $0x514] sm:$0xff]
  %v1470 = vld [vmem:[%s3 + $0x51c] sm:$0xff]
  %v1471 = vld [vmem:[%s3 + $0x524] sm:$0xf]
  %v1472 = vld [vmem:[%s3 + $0x528] sm:$0xff]
  %v1473 = vld [vmem:[%s3 + $0x530] sm:$0xff]
  %v1474 = vld [vmem:[%s3 + $0x538] sm:$0xf]
  %v1475 = vld [vmem:[%s3 + $0x53c] sm:$0xff]
  %v1476 = vld [vmem:[%s3 + $0x544] sm:$0xff]
  %v1477 = vld [vmem:[%s3 + $0x54c] sm:$0xf]
  %v1478 = vld [vmem:[%s3 + $0x550] sm:$0xff]
  %v1479 = vld [vmem:[%s3 + $0x558] sm:$0xff]
  %v1480 = vld [vmem:[%s3 + $0x560] sm:$0xf]
  %v1481 = vld [vmem:[%s3 + $0x564] sm:$0xff]
  %v1482 = vld [vmem:[%s3 + $0x56c] sm:$0xff]
  %v1483 = vld [vmem:[%s3 + $0x574] sm:$0xf]
  %v1484 = vld [vmem:[%s3 + $0x578] sm:$0xff]
  %v1485 = vld [vmem:[%s3 + $0x580] sm:$0xff]
  %v1486 = vld [vmem:[%s3 + $0x588] sm:$0xf]
  %v1487 = vld [vmem:[%s3 + $0x58c] sm:$0xff]
  %v1488 = vld [vmem:[%s3 + $0x594] sm:$0xff]
  %v1489 = vld [vmem:[%s3 + $0x59c] sm:$0xf]
  %v1490 = vld [vmem:[%s3 + $0x5a0] sm:$0xff]
  %v1491 = vld [vmem:[%s3 + $0x5a8] sm:$0xff]
  %v1492 = vld [vmem:[%s3 + $0x5b0] sm:$0xf]
  %v1493 = vld [vmem:[%s3 + $0x5b4] sm:$0xff]
  %v1494 = vld [vmem:[%s3 + $0x5bc] sm:$0xff]
  %v1495 = vld [vmem:[%s3 + $0x5c4] sm:$0xf]
  %v1496 = vld [vmem:[%s3 + $0x5c8] sm:$0xff]
  %v1497 = vld [vmem:[%s3 + $0x5d0] sm:$0xff]
  %v1498 = vld [vmem:[%s3 + $0x5d8] sm:$0xf]
  %v1499 = vld [vmem:[%s3 + $0x5dc] sm:$0xff]
  %v1500 = vld [vmem:[%s3 + $0x5e4] sm:$0xff]
  %v1501 = vld [vmem:[%s3 + $0x5ec] sm:$0xf]
  %v1502 = vld [vmem:[%s3 + $0x5f0] sm:$0xff]
  %v1503 = vld [vmem:[%s3 + $0x5f8] sm:$0xff]
  %v1504 = vld [vmem:[%s3 + $0x600] sm:$0xf]
  %v1505 = vld [vmem:[%s3 + $0x604] sm:$0xff]
  %v1506 = vld [vmem:[%s3 + $0x60c] sm:$0xff]
  %v1507 = vld [vmem:[%s3 + $0x614] sm:$0xf]
  %v1508 = vld [vmem:[%s3 + $0x618] sm:$0xff]
  %v1509 = vld [vmem:[%s3 + $0x620] sm:$0xff]
  %v1510 = vld [vmem:[%s3 + $0x628] sm:$0xf]
  %v1511 = vld [vmem:[%s3 + $0x62c] sm:$0xff]
  %v1512 = vld [vmem:[%s3 + $0x634] sm:$0xff]
  %v1513 = vld [vmem:[%s3 + $0x63c] sm:$0xf]
  %v1514 = vld [vmem:[%s3 + $0x640] sm:$0xff]
  %v1515 = vld [vmem:[%s3 + $0x648] sm:$0xff]
  %v1516 = vld [vmem:[%s3 + $0x650] sm:$0xf]
  %v1517 = vld [vmem:[%s3 + $0x654] sm:$0xff]
  %v1518 = vld [vmem:[%s3 + $0x65c] sm:$0xff]
  %v1519 = vld [vmem:[%s3 + $0x664] sm:$0xf]
  %v1520 = vld [vmem:[%s3 + $0x668] sm:$0xff]
  %v1521 = vld [vmem:[%s3 + $0x670] sm:$0xff]
  %v1522 = vld [vmem:[%s3 + $0x678] sm:$0xf]
  %v1523 = vld [vmem:[%s3 + $0x67c] sm:$0xff]
  %v1524 = vld [vmem:[%s3 + $0x684] sm:$0xff]
  %v1525 = vld [vmem:[%s3 + $0x68c] sm:$0xf]
  %v1526 = vld [vmem:[%s3 + $0x690] sm:$0xff]
  %v1527 = vld [vmem:[%s3 + $0x698] sm:$0xff]
  %v1528 = vld [vmem:[%s3 + $0x6a0] sm:$0xf]
  %v1529 = vld [vmem:[%s3 + $0x6a4] sm:$0xff]
  %v1530 = vld [vmem:[%s3 + $0x6ac] sm:$0xff]
  %v1531 = vld [vmem:[%s3 + $0x6b4] sm:$0xf]
  %v1532 = vld [vmem:[%s3 + $0x6b8] sm:$0xff]
  %v1533 = vld [vmem:[%s3 + $0x6c0] sm:$0xff]
  %v1534 = vld [vmem:[%s3 + $0x6c8] sm:$0xf]
  %v1535 = vld [vmem:[%s3 + $0x6cc] sm:$0xff]
  %v1536 = vld [vmem:[%s3 + $0x6d4] sm:$0xff]
  %v1537 = vld [vmem:[%s3 + $0x6dc] sm:$0xf]
  %v1538 = vld [vmem:[%s3 + $0x6e0] sm:$0xff]
  %v1539 = vld [vmem:[%s3 + $0x6e8] sm:$0xff]
  %v1540 = vld [vmem:[%s3 + $0x6f0] sm:$0xf]
  %v1541 = vld [vmem:[%s3 + $0x6f4] sm:$0xff]
  %v1542 = vld [vmem:[%s3 + $0x6fc] sm:$0xff]
  %v1543 = vld [vmem:[%s3 + $0x704] sm:$0xf]
  %v1544 = vld [vmem:[%s3 + $0x708] sm:$0xff]
  %v1545 = vld [vmem:[%s3 + $0x710] sm:$0xff]
  %v1546 = vld [vmem:[%s3 + $0x718] sm:$0xf]
  %v1547 = vld [vmem:[%s3 + $0x71c] sm:$0xff]
  %v1548 = vld [vmem:[%s3 + $0x724] sm:$0xff]
  %v1549 = vld [vmem:[%s3 + $0x72c] sm:$0xf]
  %v1550 = vld [vmem:[%s3 + $0x730] sm:$0xff]
  %v1551 = vld [vmem:[%s3 + $0x738] sm:$0xff]
  %v1552 = vld [vmem:[%s3 + $0x740] sm:$0xf]
  %v1553 = vld [vmem:[%s3 + $0x744] sm:$0xff]
  %v1554 = vld [vmem:[%s3 + $0x74c] sm:$0xff]
  %v1555 = vld [vmem:[%s3 + $0x754] sm:$0xf]
  %v1556 = vld [vmem:[%s3 + $0x758] sm:$0xff]
  %v1557 = vld [vmem:[%s3 + $0x760] sm:$0xff]
  %v1558 = vld [vmem:[%s3 + $0x768] sm:$0xf]
  %v1559 = vld [vmem:[%s3 + $0x76c] sm:$0xff]
  %v1560 = vld [vmem:[%s3 + $0x774] sm:$0xff]
  %v1561 = vld [vmem:[%s3 + $0x77c] sm:$0xf]
  %v1562 = vld [vmem:[%s3 + $0x780] sm:$0xff]
  %v1563 = vld [vmem:[%s3 + $0x788] sm:$0xff]
  %v1564 = vld [vmem:[%s3 + $0x790] sm:$0xf]
  %v1565 = vld [vmem:[%s3 + $0x794] sm:$0xff]
  %v1566 = vld [vmem:[%s3 + $0x79c] sm:$0xff]
  %v1567 = vld [vmem:[%s3 + $0x7a4] sm:$0xf]
  %v1568 = vld [vmem:[%s3 + $0x7a8] sm:$0xff]
  %v1569 = vld [vmem:[%s3 + $0x7b0] sm:$0xff]
  %v1570 = vld [vmem:[%s3 + $0x7b8] sm:$0xf]
  %v1571 = vld [vmem:[%s3 + $0x7bc] sm:$0xff]
  %v1572 = vld [vmem:[%s3 + $0x7c4] sm:$0xff]
  %v1573 = vld [vmem:[%s3 + $0x7cc] sm:$0xf]
  %v1574 = vld [vmem:[%s3 + $0x7d0] sm:$0xff]
  %v1575 = vld [vmem:[%s3 + $0x7d8] sm:$0xff]
  %v1576 = vld [vmem:[%s3 + $0x7e0] sm:$0xf]
  %v1577 = vld [vmem:[%s3 + $0x7e4] sm:$0xff]
  %v1578 = vld [vmem:[%s3 + $0x7ec] sm:$0xff]
  %v1579 = vld [vmem:[%s3 + $0x7f4] sm:$0xf]
  %v1580 = vld [vmem:[%s3 + $0x7f8] sm:$0xff]
  %v1581 = vld [vmem:[%s3 + $0x800] sm:$0xff]
  %v1582 = vld [vmem:[%s3 + $0x808] sm:$0xf]
  %v1583 = vld [vmem:[%s3 + $0x80c] sm:$0xff]
  %v1584 = vld [vmem:[%s3 + $0x814] sm:$0xff]
  %v1585 = vld [vmem:[%s3 + $0x81c] sm:$0xf]
  %v1586 = vld [vmem:[%s3 + $0x820] sm:$0xff]
  %v1587 = vld [vmem:[%s3 + $0x828] sm:$0xff]
  %v1588 = vld [vmem:[%s3 + $0x830] sm:$0xf]
  %v1589 = vld [vmem:[%s3 + $0x834] sm:$0xff]
  %v1590 = vld [vmem:[%s3 + $0x83c] sm:$0xff]
  %v1591 = vld [vmem:[%s3 + $0x844] sm:$0xf]
  %v1592 = vld [vmem:[%s3 + $0x848] sm:$0xff]
  %v1593 = vld [vmem:[%s3 + $0x850] sm:$0xff]
  %v1594 = vld [vmem:[%s3 + $0x858] sm:$0xf]
  %v1595 = vld [vmem:[%s3 + $0x85c] sm:$0xff]
  %v1596 = vld [vmem:[%s3 + $0x864] sm:$0xff]
  %v1597 = vld [vmem:[%s3 + $0x86c] sm:$0xf]
  %v1598 = vld [vmem:[%s3 + $0x870] sm:$0xff]
  %v1599 = vld [vmem:[%s3 + $0x878] sm:$0xff]
  %v1600 = vld [vmem:[%s3 + $0x880] sm:$0xf]
  %v1601 = vld [vmem:[%s3 + $0x884] sm:$0xff]
  %v1602 = vld [vmem:[%s3 + $0x88c] sm:$0xff]
  %v1603 = vld [vmem:[%s3 + $0x894] sm:$0xf]
  %v1604 = vld [vmem:[%s3 + $0x898] sm:$0xff]
  %v1605 = vld [vmem:[%s3 + $0x8a0] sm:$0xff]
  %v1606 = vld [vmem:[%s3 + $0x8a8] sm:$0xf]
  %v1607 = vld [vmem:[%s3 + $0x8ac] sm:$0xff]
  %v1608 = vld [vmem:[%s3 + $0x8b4] sm:$0xff]
  %v1609 = vld [vmem:[%s3 + $0x8bc] sm:$0xf]
  %v1610 = vld [vmem:[%s3 + $0x8c0] sm:$0xff]
  %v1611 = vld [vmem:[%s3 + $0x8c8] sm:$0xff]
  %v1612 = vld [vmem:[%s3 + $0x8d0] sm:$0xf]
  %v1613 = vld [vmem:[%s3 + $0x8d4] sm:$0xff]
  %v1614 = vld [vmem:[%s3 + $0x8dc] sm:$0xff]
  %v1615 = vld [vmem:[%s3 + $0x8e4] sm:$0xf]
  %v1616 = vld [vmem:[%s3 + $0x8e8] sm:$0xff]
  %v1617 = vld [vmem:[%s3 + $0x8f0] sm:$0xff]
  %v1618 = vld [vmem:[%s3 + $0x8f8] sm:$0xf]
  %v1619 = vld [vmem:[%s3 + $0x8fc] sm:$0xff]
  %v1620 = vld [vmem:[%s3 + $0x904] sm:$0xff]
  %v1621 = vld [vmem:[%s3 + $0x90c] sm:$0xf]
  %v1622 = vld [vmem:[%s3 + $0x910] sm:$0xff]
  %v1623 = vld [vmem:[%s3 + $0x918] sm:$0xff]
  %v1624 = vld [vmem:[%s3 + $0x920] sm:$0xf]
  %v1625 = vld [vmem:[%s3 + $0x924] sm:$0xff]
  %v1626 = vld [vmem:[%s3 + $0x92c] sm:$0xff]
  %v1627 = vld [vmem:[%s3 + $0x934] sm:$0xf]
  %v1628 = vld [vmem:[%s3 + $0x938] sm:$0xff]
  %v1629 = vld [vmem:[%s3 + $0x940] sm:$0xff]
  %v1630 = vld [vmem:[%s3 + $0x948] sm:$0xf]
  %v1631 = vld [vmem:[%s3 + $0x94c] sm:$0xff]
  %v1632 = vld [vmem:[%s3 + $0x954] sm:$0xff]
  %v1633 = vld [vmem:[%s3 + $0x95c] sm:$0xf]
  %v1634 = vld [vmem:[%s3 + $0x960] sm:$0xff]
  %v1635 = vld [vmem:[%s3 + $0x968] sm:$0xff]
  %v1636 = vld [vmem:[%s3 + $0x970] sm:$0xf]
  %v1637 = vld [vmem:[%s3 + $0x974] sm:$0xff]
  %v1638 = vld [vmem:[%s3 + $0x97c] sm:$0xff]
  %v1639 = vld [vmem:[%s3 + $0x984] sm:$0xf]
  %v1640 = vld [vmem:[%s3 + $0x988] sm:$0xff]
  %v1641 = vld [vmem:[%s3 + $0x990] sm:$0xff]
  %v1642 = vld [vmem:[%s3 + $0x998] sm:$0xf]
  %v1643 = vld [vmem:[%s3 + $0x99c] sm:$0xff]
  %v1644 = vld [vmem:[%s3 + $0x9a4] sm:$0xff]
  %v1645 = vld [vmem:[%s3 + $0x9ac] sm:$0xf]
  %v1646 = vld [vmem:[%s3 + $0x9b0] sm:$0xff]
  %v1647 = vld [vmem:[%s3 + $0x9b8] sm:$0xff]
  %v1648 = vld [vmem:[%s3 + $0x9c0] sm:$0xf]
  %v1649 = vld [vmem:[%s3 + $0x9c4] sm:$0xff]
  %v1650 = vld [vmem:[%s3 + $0x9cc] sm:$0xff]
  %v1651 = vld [vmem:[%s3 + $0x9d4] sm:$0xf]
  %v1652 = vld [vmem:[%s3 + $0x9d8] sm:$0xff]
  %v1653 = vld [vmem:[%s3 + $0x9e0] sm:$0xff]
  %v1654 = vld [vmem:[%s3 + $0x9e8] sm:$0xf]
  %v1655 = vld [vmem:[%s3 + $0x9ec] sm:$0xff]
  %v1656 = vld [vmem:[%s3 + $0x9f4] sm:$0xff]
  %v1657 = vld [vmem:[%s3 + $0x9fc] sm:$0xf]
  %v1658 = vld [vmem:[%s3 + $0xa00] sm:$0xff]
  %v1659 = vld [vmem:[%s3 + $0xa08] sm:$0xff]
  %v1660 = vld [vmem:[%s3 + $0xa10] sm:$0xf]
  %v1661 = vld [vmem:[%s3 + $0xa14] sm:$0xff]
  %v1662 = vld [vmem:[%s3 + $0xa1c] sm:$0xff]
  %v1663 = vld [vmem:[%s3 + $0xa24] sm:$0xf]
  %v1664 = vld [vmem:[%s3 + $0xa28] sm:$0xff]
  %v1665 = vld [vmem:[%s3 + $0xa30] sm:$0xff]
  %v1666 = vld [vmem:[%s3 + $0xa38] sm:$0xf]
  %v1667 = vld [vmem:[%s3 + $0xa3c] sm:$0xff]
  %v1668 = vld [vmem:[%s3 + $0xa44] sm:$0xff]
  %v1669 = vld [vmem:[%s3 + $0xa4c] sm:$0xf]
  %v1670 = vld [vmem:[%s3 + $0xa50] sm:$0xff]
  %v1671 = vld [vmem:[%s3 + $0xa58] sm:$0xff]
  %v1672 = vld [vmem:[%s3 + $0xa60] sm:$0xf]
  %v1673 = vld [vmem:[%s3 + $0xa64] sm:$0xff]
  %v1674 = vld [vmem:[%s3 + $0xa6c] sm:$0xff]
  %v1675 = vld [vmem:[%s3 + $0xa74] sm:$0xf]
  %v1676 = vld [vmem:[%s3 + $0xa78] sm:$0xff]
  %v1677 = vld [vmem:[%s3 + $0xa80] sm:$0xff]
  %v1678 = vld [vmem:[%s3 + $0xa88] sm:$0xf]
  %v1679 = vld [vmem:[%s3 + $0xa8c] sm:$0xff]
  %v1680 = vld [vmem:[%s3 + $0xa94] sm:$0xff]
  %v1681 = vld [vmem:[%s3 + $0xa9c] sm:$0xf]
  %v1682 = vld [vmem:[%s3 + $0xaa0] sm:$0xff]
  %v1683 = vld [vmem:[%s3 + $0xaa8] sm:$0xff]
  %v1684 = vld [vmem:[%s3 + $0xab0] sm:$0xf]
  %v1685 = vld [vmem:[%s3 + $0xab4] sm:$0xff]
  %v1686 = vld [vmem:[%s3 + $0xabc] sm:$0xff]
  %v1687 = vld [vmem:[%s3 + $0xac4] sm:$0xf]
  %v1688 = vld [vmem:[%s3 + $0xac8] sm:$0xff]
  %v1689 = vld [vmem:[%s3 + $0xad0] sm:$0xff]
  %v1690 = vld [vmem:[%s3 + $0xad8] sm:$0xf]
  %v1691 = vld [vmem:[%s3 + $0xadc] sm:$0xff]
  %v1692 = vld [vmem:[%s3 + $0xae4] sm:$0xff]
  %v1693 = vld [vmem:[%s3 + $0xaec] sm:$0xf]
  %v1694 = vld [vmem:[%s3 + $0xaf0] sm:$0xff]
  %v1695 = vld [vmem:[%s3 + $0xaf8] sm:$0xff]
  %v1696 = vld [vmem:[%s3 + $0xb00] sm:$0xf]
  %v1697 = vld [vmem:[%s3 + $0xb04] sm:$0xff]
  %v1698 = vld [vmem:[%s3 + $0xb0c] sm:$0xff]
  %v1699 = vld [vmem:[%s3 + $0xb14] sm:$0xf]
  %v1700 = vld [vmem:[%s3 + $0xb18] sm:$0xff]
  %v1701 = vld [vmem:[%s3 + $0xb20] sm:$0xff]
  %v1702 = vld [vmem:[%s3 + $0xb28] sm:$0xf]
  %v1703 = vld [vmem:[%s3 + $0xb2c] sm:$0xff]
  %v1704 = vld [vmem:[%s3 + $0xb34] sm:$0xff]
  %v1705 = vld [vmem:[%s3 + $0xb3c] sm:$0xf]
  %v1706 = vld [vmem:[%s3 + $0xb40] sm:$0xff]
  %v1707 = vld [vmem:[%s3 + $0xb48] sm:$0xff]
  %v1708 = vld [vmem:[%s3 + $0xb50] sm:$0xf]
  %v1709 = vld [vmem:[%s3 + $0xb54] sm:$0xff]
  %v1710 = vld [vmem:[%s3 + $0xb5c] sm:$0xff]
  %v1711 = vld [vmem:[%s3 + $0xb64] sm:$0xf]
  %v1712 = vld [vmem:[%s3 + $0xb68] sm:$0xff]
  %v1713 = vld [vmem:[%s3 + $0xb70] sm:$0xff]
  %v1714 = vld [vmem:[%s3 + $0xb78] sm:$0xf]
  %v1715 = vld [vmem:[%s3 + $0xb7c] sm:$0xff]
  %v1716 = vld [vmem:[%s3 + $0xb84] sm:$0xff]
  %v1717 = vld [vmem:[%s3 + $0xb8c] sm:$0xf]
  %v1718 = vld [vmem:[%s3 + $0xb90] sm:$0xff]
  %v1719 = vld [vmem:[%s3 + $0xb98] sm:$0xff]
  %v1720 = vld [vmem:[%s3 + $0xba0] sm:$0xf]
  %v1721 = vld [vmem:[%s3 + $0xba4] sm:$0xff]
  %v1722 = vld [vmem:[%s3 + $0xbac] sm:$0xff]
  %v1723 = vld [vmem:[%s3 + $0xbb4] sm:$0xf]
  %v1724 = vld [vmem:[%s3 + $0xbb8] sm:$0xff]
  %v1725 = vld [vmem:[%s3 + $0xbc0] sm:$0xff]
  %v1726 = vld [vmem:[%s3 + $0xbc8] sm:$0xf]
  %v1727 = vld [vmem:[%s3 + $0xbcc] sm:$0xff]
  %v1728 = vld [vmem:[%s3 + $0xbd4] sm:$0xff]
  %v1729 = vld [vmem:[%s3 + $0xbdc] sm:$0xf]
  %v1730 = vld [vmem:[%s3 + $0xbe0] sm:$0xff]
  %v1731 = vld [vmem:[%s3 + $0xbe8] sm:$0xff]
  %v1732 = vld [vmem:[%s3 + $0xbf0] sm:$0xf]
  %v1733 = vld [vmem:[%s3 + $0xbf4] sm:$0xff]
  %v1734 = vld [vmem:[%s3 + $0xbfc] sm:$0xff]
  %v1735 = vld [vmem:[%s3 + $0xc04] sm:$0xf]
  %v1736 = vld [vmem:[%s3 + $0xc08] sm:$0xff]
  %v1737 = vld [vmem:[%s3 + $0xc10] sm:$0xff]
  %v1738 = vld [vmem:[%s3 + $0xc18] sm:$0xf]
  %v1739 = vld [vmem:[%s3 + $0xc1c] sm:$0xff]
  %v1740 = vld [vmem:[%s3 + $0xc24] sm:$0xff]
  %v1741 = vld [vmem:[%s3 + $0xc2c] sm:$0xf]
  %v1742 = vld [vmem:[%s3 + $0xc30] sm:$0xff]
  %v1743 = vld [vmem:[%s3 + $0xc38] sm:$0xff]
  %v1744 = vld [vmem:[%s3 + $0xc40] sm:$0xf]
  %v1745 = vld [vmem:[%s3 + $0xc44] sm:$0xff]
  %v1746 = vld [vmem:[%s3 + $0xc4c] sm:$0xff]
  %v1747 = vld [vmem:[%s3 + $0xc54] sm:$0xf]
  %v1748 = vld [vmem:[%s3 + $0xc58] sm:$0xff]
  %v1749 = vld [vmem:[%s3 + $0xc60] sm:$0xff]
  %v1750 = vld [vmem:[%s3 + $0xc68] sm:$0xf]
  %v1751 = vld [vmem:[%s3 + $0xc6c] sm:$0xff]
  %v1752 = vld [vmem:[%s3 + $0xc74] sm:$0xff]
  %v1753 = vld [vmem:[%s3 + $0xc7c] sm:$0xf]
  %v1754 = vld [vmem:[%s4] sm:$0x1f]
  %v1756 = vlaneseq
  %v1757 = vshrl.u32 %v1756, 7
  %v1758 = vsub.s32 0, %v1757
  %v1759 = vrot.slane %v1754, %v1758
  %v1760 = vlaneseq
  %v1761 = vshrl.u32 %v1760, 7
  %v1762 = vsub.s32 1, %v1761
  %v1763 = vrot.slane %v1754, %v1762
  %v1764 = vlaneseq
  %v1765 = vshrl.u32 %v1764, 7
  %v1766 = vsub.s32 2, %v1765
  %v1767 = vrot.slane %v1754, %v1766
  %v1768 = vlaneseq
  %v1769 = vshrl.u32 %v1768, 7
  %v1770 = vsub.s32 3, %v1769
  %v1771 = vrot.slane %v1754, %v1770
  %v1772 = vlaneseq
  %v1773 = vshrl.u32 %v1772, 7
  %v1774 = vsub.s32 4, %v1773
  %v1775 = vrot.slane %v1754, %v1774
  %v2261 = vunpack.c.l.b16 %v1274
  %v2262 = vunpack.c.h.b16 %v1274
  %v2263 = vunpack.c.l.b16 %v1275
  %v2264 = vunpack.c.h.b16 %v1275
  %v2265 = vunpack.c.l.b16 %v1276
  %v2266 = vunpack.c.l.b16 %v1277
  %v2267 = vunpack.c.h.b16 %v1277
  %v2268 = vunpack.c.l.b16 %v1278
  %v2269 = vunpack.c.h.b16 %v1278
  %v2270 = vunpack.c.l.b16 %v1279
  %v2271 = vunpack.c.l.b16 %v1280
  %v2272 = vunpack.c.h.b16 %v1280
  %v2273 = vunpack.c.l.b16 %v1281
  %v2274 = vunpack.c.h.b16 %v1281
  %v2275 = vunpack.c.l.b16 %v1282
  %v2276 = vunpack.c.l.b16 %v1283
  %v2277 = vunpack.c.h.b16 %v1283
  %v2278 = vunpack.c.l.b16 %v1284
  %v2279 = vunpack.c.h.b16 %v1284
  %v2280 = vunpack.c.l.b16 %v1285
  %v2281 = vunpack.c.l.b16 %v1286
  %v2282 = vunpack.c.h.b16 %v1286
  %v2283 = vunpack.c.l.b16 %v1287
  %v2284 = vunpack.c.h.b16 %v1287
  %v2285 = vunpack.c.l.b16 %v1288
  %v2286 = vunpack.c.l.b16 %v1289
  %v2287 = vunpack.c.h.b16 %v1289
  %v2288 = vunpack.c.l.b16 %v1290
  %v2289 = vunpack.c.h.b16 %v1290
  %v2290 = vunpack.c.l.b16 %v1291
  %v2291 = vunpack.c.l.b16 %v1292
  %v2292 = vunpack.c.h.b16 %v1292
  %v2293 = vunpack.c.l.b16 %v1293
  %v2294 = vunpack.c.h.b16 %v1293
  %v2295 = vunpack.c.l.b16 %v1294
  %v2296 = vunpack.c.l.b16 %v1295
  %v2297 = vunpack.c.h.b16 %v1295
  %v2298 = vunpack.c.l.b16 %v1296
  %v2299 = vunpack.c.h.b16 %v1296
  %v2300 = vunpack.c.l.b16 %v1297
  %v2301 = vunpack.c.l.b16 %v1298
  %v2302 = vunpack.c.h.b16 %v1298
  %v2303 = vunpack.c.l.b16 %v1299
  %v2304 = vunpack.c.h.b16 %v1299
  %v2305 = vunpack.c.l.b16 %v1300
  %v2306 = vunpack.c.l.b16 %v1301
  %v2307 = vunpack.c.h.b16 %v1301
  %v2308 = vunpack.c.l.b16 %v1302
  %v2309 = vunpack.c.h.b16 %v1302
  %v2310 = vunpack.c.l.b16 %v1303
  %v2311 = vunpack.c.l.b16 %v1304
  %v2312 = vunpack.c.h.b16 %v1304
  %v2313 = vunpack.c.l.b16 %v1305
  %v2314 = vunpack.c.h.b16 %v1305
  %v2315 = vunpack.c.l.b16 %v1306
  %v2316 = vunpack.c.l.b16 %v1307
  %v2317 = vunpack.c.h.b16 %v1307
  %v2318 = vunpack.c.l.b16 %v1308
  %v2319 = vunpack.c.h.b16 %v1308
  %v2320 = vunpack.c.l.b16 %v1309
  %v2321 = vunpack.c.l.b16 %v1310
  %v2322 = vunpack.c.h.b16 %v1310
  %v2323 = vunpack.c.l.b16 %v1311
  %v2324 = vunpack.c.h.b16 %v1311
  %v2325 = vunpack.c.l.b16 %v1312
  %v2326 = vunpack.c.l.b16 %v1313
  %v2327 = vunpack.c.h.b16 %v1313
  %v2328 = vunpack.c.l.b16 %v1314
  %v2329 = vunpack.c.h.b16 %v1314
  %v2330 = vunpack.c.l.b16 %v1315
  %v2331 = vunpack.c.l.b16 %v1316
  %v2332 = vunpack.c.h.b16 %v1316
  %v2333 = vunpack.c.l.b16 %v1317
  %v2334 = vunpack.c.h.b16 %v1317
  %v2335 = vunpack.c.l.b16 %v1318
  %v2336 = vunpack.c.l.b16 %v1319
  %v2337 = vunpack.c.h.b16 %v1319
  %v2338 = vunpack.c.l.b16 %v1320
  %v2339 = vunpack.c.h.b16 %v1320
  %v2340 = vunpack.c.l.b16 %v1321
  %v2341 = vunpack.c.l.b16 %v1322
  %v2342 = vunpack.c.h.b16 %v1322
  %v2343 = vunpack.c.l.b16 %v1323
  %v2344 = vunpack.c.h.b16 %v1323
  %v2345 = vunpack.c.l.b16 %v1324
  %v2346 = vunpack.c.l.b16 %v1325
  %v2347 = vunpack.c.h.b16 %v1325
  %v2348 = vunpack.c.l.b16 %v1326
  %v2349 = vunpack.c.h.b16 %v1326
  %v2350 = vunpack.c.l.b16 %v1327
  %v2351 = vunpack.c.l.b16 %v1328
  %v2352 = vunpack.c.h.b16 %v1328
  %v2353 = vunpack.c.l.b16 %v1329
  %v2354 = vunpack.c.h.b16 %v1329
  %v2355 = vunpack.c.l.b16 %v1330
  %v2356 = vunpack.c.l.b16 %v1331
  %v2357 = vunpack.c.h.b16 %v1331
  %v2358 = vunpack.c.l.b16 %v1332
  %v2359 = vunpack.c.h.b16 %v1332
  %v2360 = vunpack.c.l.b16 %v1333
  %v2361 = vunpack.c.l.b16 %v1334
  %v2362 = vunpack.c.h.b16 %v1334
  %v2363 = vunpack.c.l.b16 %v1335
  %v2364 = vunpack.c.h.b16 %v1335
  %v2365 = vunpack.c.l.b16 %v1336
  %v2366 = vunpack.c.l.b16 %v1337
  %v2367 = vunpack.c.h.b16 %v1337
  %v2368 = vunpack.c.l.b16 %v1338
  %v2369 = vunpack.c.h.b16 %v1338
  %v2370 = vunpack.c.l.b16 %v1339
  %v2371 = vunpack.c.l.b16 %v1340
  %v2372 = vunpack.c.h.b16 %v1340
  %v2373 = vunpack.c.l.b16 %v1341
  %v2374 = vunpack.c.h.b16 %v1341
  %v2375 = vunpack.c.l.b16 %v1342
  %v2376 = vunpack.c.l.b16 %v1343
  %v2377 = vunpack.c.h.b16 %v1343
  %v2378 = vunpack.c.l.b16 %v1344
  %v2379 = vunpack.c.h.b16 %v1344
  %v2380 = vunpack.c.l.b16 %v1345
  %v2381 = vunpack.c.l.b16 %v1346
  %v2382 = vunpack.c.h.b16 %v1346
  %v2383 = vunpack.c.l.b16 %v1347
  %v2384 = vunpack.c.h.b16 %v1347
  %v2385 = vunpack.c.l.b16 %v1348
  %v2386 = vunpack.c.l.b16 %v1349
  %v2387 = vunpack.c.h.b16 %v1349
  %v2388 = vunpack.c.l.b16 %v1350
  %v2389 = vunpack.c.h.b16 %v1350
  %v2390 = vunpack.c.l.b16 %v1351
  %v2391 = vunpack.c.l.b16 %v1352
  %v2392 = vunpack.c.h.b16 %v1352
  %v2393 = vunpack.c.l.b16 %v1353
  %v2394 = vunpack.c.h.b16 %v1353
  %v2395 = vunpack.c.l.b16 %v1354
  %v2396 = vunpack.c.l.b16 %v1355
  %v2397 = vunpack.c.h.b16 %v1355
  %v2398 = vunpack.c.l.b16 %v1356
  %v2399 = vunpack.c.h.b16 %v1356
  %v2400 = vunpack.c.l.b16 %v1357
  %v2401 = vunpack.c.l.b16 %v1358
  %v2402 = vunpack.c.h.b16 %v1358
  %v2403 = vunpack.c.l.b16 %v1359
  %v2404 = vunpack.c.h.b16 %v1359
  %v2405 = vunpack.c.l.b16 %v1360
  %v2406 = vunpack.c.l.b16 %v1361
  %v2407 = vunpack.c.h.b16 %v1361
  %v2408 = vunpack.c.l.b16 %v1362
  %v2409 = vunpack.c.h.b16 %v1362
  %v2410 = vunpack.c.l.b16 %v1363
  %v2411 = vunpack.c.l.b16 %v1364
  %v2412 = vunpack.c.h.b16 %v1364
  %v2413 = vunpack.c.l.b16 %v1365
  %v2414 = vunpack.c.h.b16 %v1365
  %v2415 = vunpack.c.l.b16 %v1366
  %v2416 = vunpack.c.l.b16 %v1367
  %v2417 = vunpack.c.h.b16 %v1367
  %v2418 = vunpack.c.l.b16 %v1368
  %v2419 = vunpack.c.h.b16 %v1368
  %v2420 = vunpack.c.l.b16 %v1369
  %v2421 = vunpack.c.l.b16 %v1370
  %v2422 = vunpack.c.h.b16 %v1370
  %v2423 = vunpack.c.l.b16 %v1371
  %v2424 = vunpack.c.h.b16 %v1371
  %v2425 = vunpack.c.l.b16 %v1372
  %v2426 = vunpack.c.l.b16 %v1373
  %v2427 = vunpack.c.h.b16 %v1373
  %v2428 = vunpack.c.l.b16 %v1374
  %v2429 = vunpack.c.h.b16 %v1374
  %v2430 = vunpack.c.l.b16 %v1375
  %v2431 = vunpack.c.l.b16 %v1376
  %v2432 = vunpack.c.h.b16 %v1376
  %v2433 = vunpack.c.l.b16 %v1377
  %v2434 = vunpack.c.h.b16 %v1377
  %v2435 = vunpack.c.l.b16 %v1378
  %v2436 = vunpack.c.l.b16 %v1379
  %v2437 = vunpack.c.h.b16 %v1379
  %v2438 = vunpack.c.l.b16 %v1380
  %v2439 = vunpack.c.h.b16 %v1380
  %v2440 = vunpack.c.l.b16 %v1381
  %v2441 = vunpack.c.l.b16 %v1382
  %v2442 = vunpack.c.h.b16 %v1382
  %v2443 = vunpack.c.l.b16 %v1383
  %v2444 = vunpack.c.h.b16 %v1383
  %v2445 = vunpack.c.l.b16 %v1384
  %v2446 = vunpack.c.l.b16 %v1385
  %v2447 = vunpack.c.h.b16 %v1385
  %v2448 = vunpack.c.l.b16 %v1386
  %v2449 = vunpack.c.h.b16 %v1386
  %v2450 = vunpack.c.l.b16 %v1387
  %v2451 = vunpack.c.l.b16 %v1388
  %v2452 = vunpack.c.h.b16 %v1388
  %v2453 = vunpack.c.l.b16 %v1389
  %v2454 = vunpack.c.h.b16 %v1389
  %v2455 = vunpack.c.l.b16 %v1390
  %v2456 = vunpack.c.l.b16 %v1391
  %v2457 = vunpack.c.h.b16 %v1391
  %v2458 = vunpack.c.l.b16 %v1392
  %v2459 = vunpack.c.h.b16 %v1392
  %v2460 = vunpack.c.l.b16 %v1393
  %v2461 = vunpack.c.l.b16 %v1394
  %v2462 = vunpack.c.h.b16 %v1394
  %v2463 = vunpack.c.l.b16 %v1395
  %v2464 = vunpack.c.h.b16 %v1395
  %v2465 = vunpack.c.l.b16 %v1396
  %v2466 = vunpack.c.l.b16 %v1397
  %v2467 = vunpack.c.h.b16 %v1397
  %v2468 = vunpack.c.l.b16 %v1398
  %v2469 = vunpack.c.h.b16 %v1398
  %v2470 = vunpack.c.l.b16 %v1399
  %v2471 = vunpack.c.l.b16 %v1400
  %v2472 = vunpack.c.h.b16 %v1400
  %v2473 = vunpack.c.l.b16 %v1401
  %v2474 = vunpack.c.h.b16 %v1401
  %v2475 = vunpack.c.l.b16 %v1402
  %v2476 = vunpack.c.l.b16 %v1403
  %v2477 = vunpack.c.h.b16 %v1403
  %v2478 = vunpack.c.l.b16 %v1404
  %v2479 = vunpack.c.h.b16 %v1404
  %v2480 = vunpack.c.l.b16 %v1405
  %v2481 = vunpack.c.l.b16 %v1406
  %v2482 = vunpack.c.h.b16 %v1406
  %v2483 = vunpack.c.l.b16 %v1407
  %v2484 = vunpack.c.h.b16 %v1407
  %v2485 = vunpack.c.l.b16 %v1408
  %v2486 = vunpack.c.l.b16 %v1409
  %v2487 = vunpack.c.h.b16 %v1409
  %v2488 = vunpack.c.l.b16 %v1410
  %v2489 = vunpack.c.h.b16 %v1410
  %v2490 = vunpack.c.l.b16 %v1411
  %v2491 = vunpack.c.l.b16 %v1412
  %v2492 = vunpack.c.h.b16 %v1412
  %v2493 = vunpack.c.l.b16 %v1413
  %v2494 = vunpack.c.h.b16 %v1413
  %v2495 = vunpack.c.l.b16 %v1414
  %v2496 = vunpack.c.l.b16 %v1415
  %v2497 = vunpack.c.h.b16 %v1415
  %v2498 = vunpack.c.l.b16 %v1416
  %v2499 = vunpack.c.h.b16 %v1416
  %v2500 = vunpack.c.l.b16 %v1417
  %v2501 = vunpack.c.l.b16 %v1418
  %v2502 = vunpack.c.h.b16 %v1418
  %v2503 = vunpack.c.l.b16 %v1419
  %v2504 = vunpack.c.h.b16 %v1419
  %v2505 = vunpack.c.l.b16 %v1420
  %v2506 = vunpack.c.l.b16 %v1421
  %v2507 = vunpack.c.h.b16 %v1421
  %v2508 = vunpack.c.l.b16 %v1422
  %v2509 = vunpack.c.h.b16 %v1422
  %v2510 = vunpack.c.l.b16 %v1423
  %v2511 = vunpack.c.l.b16 %v1424
  %v2512 = vunpack.c.h.b16 %v1424
  %v2513 = vunpack.c.l.b16 %v1425
  %v2514 = vunpack.c.h.b16 %v1425
  %v2515 = vunpack.c.l.b16 %v1426
  %v2516 = vunpack.c.l.b16 %v1427
  %v2517 = vunpack.c.h.b16 %v1427
  %v2518 = vunpack.c.l.b16 %v1428
  %v2519 = vunpack.c.h.b16 %v1428
  %v2520 = vunpack.c.l.b16 %v1429
  %v2521 = vunpack.c.l.b16 %v1430
  %v2522 = vunpack.c.h.b16 %v1430
  %v2523 = vunpack.c.l.b16 %v1431
  %v2524 = vunpack.c.h.b16 %v1431
  %v2525 = vunpack.c.l.b16 %v1432
  %v2526 = vunpack.c.l.b16 %v1433
  %v2527 = vunpack.c.h.b16 %v1433
  %v2528 = vunpack.c.l.b16 %v1434
  %v2529 = vunpack.c.h.b16 %v1434
  %v2530 = vunpack.c.l.b16 %v1435
  %v2531 = vunpack.c.l.b16 %v1436
  %v2532 = vunpack.c.h.b16 %v1436
  %v2533 = vunpack.c.l.b16 %v1437
  %v2534 = vunpack.c.h.b16 %v1437
  %v2535 = vunpack.c.l.b16 %v1438
  %v2536 = vunpack.c.l.b16 %v1439
  %v2537 = vunpack.c.h.b16 %v1439
  %v2538 = vunpack.c.l.b16 %v1440
  %v2539 = vunpack.c.h.b16 %v1440
  %v2540 = vunpack.c.l.b16 %v1441
  %v2541 = vunpack.c.l.b16 %v1442
  %v2542 = vunpack.c.h.b16 %v1442
  %v2543 = vunpack.c.l.b16 %v1443
  %v2544 = vunpack.c.h.b16 %v1443
  %v2545 = vunpack.c.l.b16 %v1444
  %v2546 = vunpack.c.l.b16 %v1445
  %v2547 = vunpack.c.h.b16 %v1445
  %v2548 = vunpack.c.l.b16 %v1446
  %v2549 = vunpack.c.h.b16 %v1446
  %v2550 = vunpack.c.l.b16 %v1447
  %v2551 = vunpack.c.l.b16 %v1448
  %v2552 = vunpack.c.h.b16 %v1448
  %v2553 = vunpack.c.l.b16 %v1449
  %v2554 = vunpack.c.h.b16 %v1449
  %v2555 = vunpack.c.l.b16 %v1450
  %v2556 = vunpack.c.l.b16 %v1451
  %v2557 = vunpack.c.h.b16 %v1451
  %v2558 = vunpack.c.l.b16 %v1452
  %v2559 = vunpack.c.h.b16 %v1452
  %v2560 = vunpack.c.l.b16 %v1453
  %v2561 = vunpack.c.l.b16 %v1454
  %v2562 = vunpack.c.h.b16 %v1454
  %v2563 = vunpack.c.l.b16 %v1455
  %v2564 = vunpack.c.h.b16 %v1455
  %v2565 = vunpack.c.l.b16 %v1456
  %v2566 = vunpack.c.l.b16 %v1457
  %v2567 = vunpack.c.h.b16 %v1457
  %v2568 = vunpack.c.l.b16 %v1458
  %v2569 = vunpack.c.h.b16 %v1458
  %v2570 = vunpack.c.l.b16 %v1459
  %v2571 = vunpack.c.l.b16 %v1460
  %v2572 = vunpack.c.h.b16 %v1460
  %v2573 = vunpack.c.l.b16 %v1461
  %v2574 = vunpack.c.h.b16 %v1461
  %v2575 = vunpack.c.l.b16 %v1462
  %v2576 = vunpack.c.l.b16 %v1463
  %v2577 = vunpack.c.h.b16 %v1463
  %v2578 = vunpack.c.l.b16 %v1464
  %v2579 = vunpack.c.h.b16 %v1464
  %v2580 = vunpack.c.l.b16 %v1465
  %v2581 = vunpack.c.l.b16 %v1466
  %v2582 = vunpack.c.h.b16 %v1466
  %v2583 = vunpack.c.l.b16 %v1467
  %v2584 = vunpack.c.h.b16 %v1467
  %v2585 = vunpack.c.l.b16 %v1468
  %v2586 = vunpack.c.l.b16 %v1469
  %v2587 = vunpack.c.h.b16 %v1469
  %v2588 = vunpack.c.l.b16 %v1470
  %v2589 = vunpack.c.h.b16 %v1470
  %v2590 = vunpack.c.l.b16 %v1471
  %v2591 = vunpack.c.l.b16 %v1472
  %v2592 = vunpack.c.h.b16 %v1472
  %v2593 = vunpack.c.l.b16 %v1473
  %v2594 = vunpack.c.h.b16 %v1473
  %v2595 = vunpack.c.l.b16 %v1474
  %v2596 = vunpack.c.l.b16 %v1475
  %v2597 = vunpack.c.h.b16 %v1475
  %v2598 = vunpack.c.l.b16 %v1476
  %v2599 = vunpack.c.h.b16 %v1476
  %v2600 = vunpack.c.l.b16 %v1477
  %v2601 = vunpack.c.l.b16 %v1478
  %v2602 = vunpack.c.h.b16 %v1478
  %v2603 = vunpack.c.l.b16 %v1479
  %v2604 = vunpack.c.h.b16 %v1479
  %v2605 = vunpack.c.l.b16 %v1480
  %v2606 = vunpack.c.l.b16 %v1481
  %v2607 = vunpack.c.h.b16 %v1481
  %v2608 = vunpack.c.l.b16 %v1482
  %v2609 = vunpack.c.h.b16 %v1482
  %v2610 = vunpack.c.l.b16 %v1483
  %v2611 = vunpack.c.l.b16 %v1484
  %v2612 = vunpack.c.h.b16 %v1484
  %v2613 = vunpack.c.l.b16 %v1485
  %v2614 = vunpack.c.h.b16 %v1485
  %v2615 = vunpack.c.l.b16 %v1486
  %v2616 = vunpack.c.l.b16 %v1487
  %v2617 = vunpack.c.h.b16 %v1487
  %v2618 = vunpack.c.l.b16 %v1488
  %v2619 = vunpack.c.h.b16 %v1488
  %v2620 = vunpack.c.l.b16 %v1489
  %v2621 = vunpack.c.l.b16 %v1490
  %v2622 = vunpack.c.h.b16 %v1490
  %v2623 = vunpack.c.l.b16 %v1491
  %v2624 = vunpack.c.h.b16 %v1491
  %v2625 = vunpack.c.l.b16 %v1492
  %v2626 = vunpack.c.l.b16 %v1493
  %v2627 = vunpack.c.h.b16 %v1493
  %v2628 = vunpack.c.l.b16 %v1494
  %v2629 = vunpack.c.h.b16 %v1494
  %v2630 = vunpack.c.l.b16 %v1495
  %v2631 = vunpack.c.l.b16 %v1496
  %v2632 = vunpack.c.h.b16 %v1496
  %v2633 = vunpack.c.l.b16 %v1497
  %v2634 = vunpack.c.h.b16 %v1497
  %v2635 = vunpack.c.l.b16 %v1498
  %v2636 = vunpack.c.l.b16 %v1499
  %v2637 = vunpack.c.h.b16 %v1499
  %v2638 = vunpack.c.l.b16 %v1500
  %v2639 = vunpack.c.h.b16 %v1500
  %v2640 = vunpack.c.l.b16 %v1501
  %v2641 = vunpack.c.l.b16 %v1502
  %v2642 = vunpack.c.h.b16 %v1502
  %v2643 = vunpack.c.l.b16 %v1503
  %v2644 = vunpack.c.h.b16 %v1503
  %v2645 = vunpack.c.l.b16 %v1504
  %v2646 = vunpack.c.l.b16 %v1505
  %v2647 = vunpack.c.h.b16 %v1505
  %v2648 = vunpack.c.l.b16 %v1506
  %v2649 = vunpack.c.h.b16 %v1506
  %v2650 = vunpack.c.l.b16 %v1507
  %v2651 = vunpack.c.l.b16 %v1508
  %v2652 = vunpack.c.h.b16 %v1508
  %v2653 = vunpack.c.l.b16 %v1509
  %v2654 = vunpack.c.h.b16 %v1509
  %v2655 = vunpack.c.l.b16 %v1510
  %v2656 = vunpack.c.l.b16 %v1511
  %v2657 = vunpack.c.h.b16 %v1511
  %v2658 = vunpack.c.l.b16 %v1512
  %v2659 = vunpack.c.h.b16 %v1512
  %v2660 = vunpack.c.l.b16 %v1513
  %v2661 = vunpack.c.l.b16 %v1514
  %v2662 = vunpack.c.h.b16 %v1514
  %v2663 = vunpack.c.l.b16 %v1515
  %v2664 = vunpack.c.h.b16 %v1515
  %v2665 = vunpack.c.l.b16 %v1516
  %v2666 = vunpack.c.l.b16 %v1517
  %v2667 = vunpack.c.h.b16 %v1517
  %v2668 = vunpack.c.l.b16 %v1518
  %v2669 = vunpack.c.h.b16 %v1518
  %v2670 = vunpack.c.l.b16 %v1519
  %v2671 = vunpack.c.l.b16 %v1520
  %v2672 = vunpack.c.h.b16 %v1520
  %v2673 = vunpack.c.l.b16 %v1521
  %v2674 = vunpack.c.h.b16 %v1521
  %v2675 = vunpack.c.l.b16 %v1522
  %v2676 = vunpack.c.l.b16 %v1523
  %v2677 = vunpack.c.h.b16 %v1523
  %v2678 = vunpack.c.l.b16 %v1524
  %v2679 = vunpack.c.h.b16 %v1524
  %v2680 = vunpack.c.l.b16 %v1525
  %v2681 = vunpack.c.l.b16 %v1526
  %v2682 = vunpack.c.h.b16 %v1526
  %v2683 = vunpack.c.l.b16 %v1527
  %v2684 = vunpack.c.h.b16 %v1527
  %v2685 = vunpack.c.l.b16 %v1528
  %v2686 = vunpack.c.l.b16 %v1529
  %v2687 = vunpack.c.h.b16 %v1529
  %v2688 = vunpack.c.l.b16 %v1530
  %v2689 = vunpack.c.h.b16 %v1530
  %v2690 = vunpack.c.l.b16 %v1531
  %v2691 = vunpack.c.l.b16 %v1532
  %v2692 = vunpack.c.h.b16 %v1532
  %v2693 = vunpack.c.l.b16 %v1533
  %v2694 = vunpack.c.h.b16 %v1533
  %v2695 = vunpack.c.l.b16 %v1534
  %v2696 = vunpack.c.l.b16 %v1535
  %v2697 = vunpack.c.h.b16 %v1535
  %v2698 = vunpack.c.l.b16 %v1536
  %v2699 = vunpack.c.h.b16 %v1536
  %v2700 = vunpack.c.l.b16 %v1537
  %v2701 = vunpack.c.l.b16 %v1538
  %v2702 = vunpack.c.h.b16 %v1538
  %v2703 = vunpack.c.l.b16 %v1539
  %v2704 = vunpack.c.h.b16 %v1539
  %v2705 = vunpack.c.l.b16 %v1540
  %v2706 = vunpack.c.l.b16 %v1541
  %v2707 = vunpack.c.h.b16 %v1541
  %v2708 = vunpack.c.l.b16 %v1542
  %v2709 = vunpack.c.h.b16 %v1542
  %v2710 = vunpack.c.l.b16 %v1543
  %v2711 = vunpack.c.l.b16 %v1544
  %v2712 = vunpack.c.h.b16 %v1544
  %v2713 = vunpack.c.l.b16 %v1545
  %v2714 = vunpack.c.h.b16 %v1545
  %v2715 = vunpack.c.l.b16 %v1546
  %v2716 = vunpack.c.l.b16 %v1547
  %v2717 = vunpack.c.h.b16 %v1547
  %v2718 = vunpack.c.l.b16 %v1548
  %v2719 = vunpack.c.h.b16 %v1548
  %v2720 = vunpack.c.l.b16 %v1549
  %v2721 = vunpack.c.l.b16 %v1550
  %v2722 = vunpack.c.h.b16 %v1550
  %v2723 = vunpack.c.l.b16 %v1551
  %v2724 = vunpack.c.h.b16 %v1551
  %v2725 = vunpack.c.l.b16 %v1552
  %v2726 = vunpack.c.l.b16 %v1553
  %v2727 = vunpack.c.h.b16 %v1553
  %v2728 = vunpack.c.l.b16 %v1554
  %v2729 = vunpack.c.h.b16 %v1554
  %v2730 = vunpack.c.l.b16 %v1555
  %v2731 = vunpack.c.l.b16 %v1556
  %v2732 = vunpack.c.h.b16 %v1556
  %v2733 = vunpack.c.l.b16 %v1557
  %v2734 = vunpack.c.h.b16 %v1557
  %v2735 = vunpack.c.l.b16 %v1558
  %v2736 = vunpack.c.l.b16 %v1559
  %v2737 = vunpack.c.h.b16 %v1559
  %v2738 = vunpack.c.l.b16 %v1560
  %v2739 = vunpack.c.h.b16 %v1560
  %v2740 = vunpack.c.l.b16 %v1561
  %v2741 = vunpack.c.l.b16 %v1562
  %v2742 = vunpack.c.h.b16 %v1562
  %v2743 = vunpack.c.l.b16 %v1563
  %v2744 = vunpack.c.h.b16 %v1563
  %v2745 = vunpack.c.l.b16 %v1564
  %v2746 = vunpack.c.l.b16 %v1565
  %v2747 = vunpack.c.h.b16 %v1565
  %v2748 = vunpack.c.l.b16 %v1566
  %v2749 = vunpack.c.h.b16 %v1566
  %v2750 = vunpack.c.l.b16 %v1567
  %v2751 = vunpack.c.l.b16 %v1568
  %v2752 = vunpack.c.h.b16 %v1568
  %v2753 = vunpack.c.l.b16 %v1569
  %v2754 = vunpack.c.h.b16 %v1569
  %v2755 = vunpack.c.l.b16 %v1570
  %v2756 = vunpack.c.l.b16 %v1571
  %v2757 = vunpack.c.h.b16 %v1571
  %v2758 = vunpack.c.l.b16 %v1572
  %v2759 = vunpack.c.h.b16 %v1572
  %v2760 = vunpack.c.l.b16 %v1573
  %v2761 = vunpack.c.l.b16 %v1574
  %v2762 = vunpack.c.h.b16 %v1574
  %v2763 = vunpack.c.l.b16 %v1575
  %v2764 = vunpack.c.h.b16 %v1575
  %v2765 = vunpack.c.l.b16 %v1576
  %v2766 = vunpack.c.l.b16 %v1577
  %v2767 = vunpack.c.h.b16 %v1577
  %v2768 = vunpack.c.l.b16 %v1578
  %v2769 = vunpack.c.h.b16 %v1578
  %v2770 = vunpack.c.l.b16 %v1579
  %v2771 = vunpack.c.l.b16 %v1580
  %v2772 = vunpack.c.h.b16 %v1580
  %v2773 = vunpack.c.l.b16 %v1581
  %v2774 = vunpack.c.h.b16 %v1581
  %v2775 = vunpack.c.l.b16 %v1582
  %v2776 = vunpack.c.l.b16 %v1583
  %v2777 = vunpack.c.h.b16 %v1583
  %v2778 = vunpack.c.l.b16 %v1584
  %v2779 = vunpack.c.h.b16 %v1584
  %v2780 = vunpack.c.l.b16 %v1585
  %v2781 = vunpack.c.l.b16 %v1586
  %v2782 = vunpack.c.h.b16 %v1586
  %v2783 = vunpack.c.l.b16 %v1587
  %v2784 = vunpack.c.h.b16 %v1587
  %v2785 = vunpack.c.l.b16 %v1588
  %v2786 = vunpack.c.l.b16 %v1589
  %v2787 = vunpack.c.h.b16 %v1589
  %v2788 = vunpack.c.l.b16 %v1590
  %v2789 = vunpack.c.h.b16 %v1590
  %v2790 = vunpack.c.l.b16 %v1591
  %v2791 = vunpack.c.l.b16 %v1592
  %v2792 = vunpack.c.h.b16 %v1592
  %v2793 = vunpack.c.l.b16 %v1593
  %v2794 = vunpack.c.h.b16 %v1593
  %v2795 = vunpack.c.l.b16 %v1594
  %v2796 = vunpack.c.l.b16 %v1595
  %v2797 = vunpack.c.h.b16 %v1595
  %v2798 = vunpack.c.l.b16 %v1596
  %v2799 = vunpack.c.h.b16 %v1596
  %v2800 = vunpack.c.l.b16 %v1597
  %v2801 = vunpack.c.l.b16 %v1598
  %v2802 = vunpack.c.h.b16 %v1598
  %v2803 = vunpack.c.l.b16 %v1599
  %v2804 = vunpack.c.h.b16 %v1599
  %v2805 = vunpack.c.l.b16 %v1600
  %v2806 = vunpack.c.l.b16 %v1601
  %v2807 = vunpack.c.h.b16 %v1601
  %v2808 = vunpack.c.l.b16 %v1602
  %v2809 = vunpack.c.h.b16 %v1602
  %v2810 = vunpack.c.l.b16 %v1603
  %v2811 = vunpack.c.l.b16 %v1604
  %v2812 = vunpack.c.h.b16 %v1604
  %v2813 = vunpack.c.l.b16 %v1605
  %v2814 = vunpack.c.h.b16 %v1605
  %v2815 = vunpack.c.l.b16 %v1606
  %v2816 = vunpack.c.l.b16 %v1607
  %v2817 = vunpack.c.h.b16 %v1607
  %v2818 = vunpack.c.l.b16 %v1608
  %v2819 = vunpack.c.h.b16 %v1608
  %v2820 = vunpack.c.l.b16 %v1609
  %v2821 = vunpack.c.l.b16 %v1610
  %v2822 = vunpack.c.h.b16 %v1610
  %v2823 = vunpack.c.l.b16 %v1611
  %v2824 = vunpack.c.h.b16 %v1611
  %v2825 = vunpack.c.l.b16 %v1612
  %v2826 = vunpack.c.l.b16 %v1613
  %v2827 = vunpack.c.h.b16 %v1613
  %v2828 = vunpack.c.l.b16 %v1614
  %v2829 = vunpack.c.h.b16 %v1614
  %v2830 = vunpack.c.l.b16 %v1615
  %v2831 = vunpack.c.l.b16 %v1616
  %v2832 = vunpack.c.h.b16 %v1616
  %v2833 = vunpack.c.l.b16 %v1617
  %v2834 = vunpack.c.h.b16 %v1617
  %v2835 = vunpack.c.l.b16 %v1618
  %v2836 = vunpack.c.l.b16 %v1619
  %v2837 = vunpack.c.h.b16 %v1619
  %v2838 = vunpack.c.l.b16 %v1620
  %v2839 = vunpack.c.h.b16 %v1620
  %v2840 = vunpack.c.l.b16 %v1621
  %v2841 = vunpack.c.l.b16 %v1622
  %v2842 = vunpack.c.h.b16 %v1622
  %v2843 = vunpack.c.l.b16 %v1623
  %v2844 = vunpack.c.h.b16 %v1623
  %v2845 = vunpack.c.l.b16 %v1624
  %v2846 = vunpack.c.l.b16 %v1625
  %v2847 = vunpack.c.h.b16 %v1625
  %v2848 = vunpack.c.l.b16 %v1626
  %v2849 = vunpack.c.h.b16 %v1626
  %v2850 = vunpack.c.l.b16 %v1627
  %v2851 = vunpack.c.l.b16 %v1628
  %v2852 = vunpack.c.h.b16 %v1628
  %v2853 = vunpack.c.l.b16 %v1629
  %v2854 = vunpack.c.h.b16 %v1629
  %v2855 = vunpack.c.l.b16 %v1630
  %v2856 = vunpack.c.l.b16 %v1631
  %v2857 = vunpack.c.h.b16 %v1631
  %v2858 = vunpack.c.l.b16 %v1632
  %v2859 = vunpack.c.h.b16 %v1632
  %v2860 = vunpack.c.l.b16 %v1633
  %v2861 = vunpack.c.l.b16 %v1634
  %v2862 = vunpack.c.h.b16 %v1634
  %v2863 = vunpack.c.l.b16 %v1635
  %v2864 = vunpack.c.h.b16 %v1635
  %v2865 = vunpack.c.l.b16 %v1636
  %v2866 = vunpack.c.l.b16 %v1637
  %v2867 = vunpack.c.h.b16 %v1637
  %v2868 = vunpack.c.l.b16 %v1638
  %v2869 = vunpack.c.h.b16 %v1638
  %v2870 = vunpack.c.l.b16 %v1639
  %v2871 = vunpack.c.l.b16 %v1640
  %v2872 = vunpack.c.h.b16 %v1640
  %v2873 = vunpack.c.l.b16 %v1641
  %v2874 = vunpack.c.h.b16 %v1641
  %v2875 = vunpack.c.l.b16 %v1642
  %v2876 = vunpack.c.l.b16 %v1643
  %v2877 = vunpack.c.h.b16 %v1643
  %v2878 = vunpack.c.l.b16 %v1644
  %v2879 = vunpack.c.h.b16 %v1644
  %v2880 = vunpack.c.l.b16 %v1645
  %v2881 = vunpack.c.l.b16 %v1646
  %v2882 = vunpack.c.h.b16 %v1646
  %v2883 = vunpack.c.l.b16 %v1647
  %v2884 = vunpack.c.h.b16 %v1647
  %v2885 = vunpack.c.l.b16 %v1648
  %v2886 = vunpack.c.l.b16 %v1649
  %v2887 = vunpack.c.h.b16 %v1649
  %v2888 = vunpack.c.l.b16 %v1650
  %v2889 = vunpack.c.h.b16 %v1650
  %v2890 = vunpack.c.l.b16 %v1651
  %v2891 = vunpack.c.l.b16 %v1652
  %v2892 = vunpack.c.h.b16 %v1652
  %v2893 = vunpack.c.l.b16 %v1653
  %v2894 = vunpack.c.h.b16 %v1653
  %v2895 = vunpack.c.l.b16 %v1654
  %v2896 = vunpack.c.l.b16 %v1655
  %v2897 = vunpack.c.h.b16 %v1655
  %v2898 = vunpack.c.l.b16 %v1656
  %v2899 = vunpack.c.h.b16 %v1656
  %v2900 = vunpack.c.l.b16 %v1657
  %v2901 = vunpack.c.l.b16 %v1658
  %v2902 = vunpack.c.h.b16 %v1658
  %v2903 = vunpack.c.l.b16 %v1659
  %v2904 = vunpack.c.h.b16 %v1659
  %v2905 = vunpack.c.l.b16 %v1660
  %v2906 = vunpack.c.l.b16 %v1661
  %v2907 = vunpack.c.h.b16 %v1661
  %v2908 = vunpack.c.l.b16 %v1662
  %v2909 = vunpack.c.h.b16 %v1662
  %v2910 = vunpack.c.l.b16 %v1663
  %v2911 = vunpack.c.l.b16 %v1664
  %v2912 = vunpack.c.h.b16 %v1664
  %v2913 = vunpack.c.l.b16 %v1665
  %v2914 = vunpack.c.h.b16 %v1665
  %v2915 = vunpack.c.l.b16 %v1666
  %v2916 = vunpack.c.l.b16 %v1667
  %v2917 = vunpack.c.h.b16 %v1667
  %v2918 = vunpack.c.l.b16 %v1668
  %v2919 = vunpack.c.h.b16 %v1668
  %v2920 = vunpack.c.l.b16 %v1669
  %v2921 = vunpack.c.l.b16 %v1670
  %v2922 = vunpack.c.h.b16 %v1670
  %v2923 = vunpack.c.l.b16 %v1671
  %v2924 = vunpack.c.h.b16 %v1671
  %v2925 = vunpack.c.l.b16 %v1672
  %v2926 = vunpack.c.l.b16 %v1673
  %v2927 = vunpack.c.h.b16 %v1673
  %v2928 = vunpack.c.l.b16 %v1674
  %v2929 = vunpack.c.h.b16 %v1674
  %v2930 = vunpack.c.l.b16 %v1675
  %v2931 = vunpack.c.l.b16 %v1676
  %v2932 = vunpack.c.h.b16 %v1676
  %v2933 = vunpack.c.l.b16 %v1677
  %v2934 = vunpack.c.h.b16 %v1677
  %v2935 = vunpack.c.l.b16 %v1678
  %v2936 = vunpack.c.l.b16 %v1679
  %v2937 = vunpack.c.h.b16 %v1679
  %v2938 = vunpack.c.l.b16 %v1680
  %v2939 = vunpack.c.h.b16 %v1680
  %v2940 = vunpack.c.l.b16 %v1681
  %v2941 = vunpack.c.l.b16 %v1682
  %v2942 = vunpack.c.h.b16 %v1682
  %v2943 = vunpack.c.l.b16 %v1683
  %v2944 = vunpack.c.h.b16 %v1683
  %v2945 = vunpack.c.l.b16 %v1684
  %v2946 = vunpack.c.l.b16 %v1685
  %v2947 = vunpack.c.h.b16 %v1685
  %v2948 = vunpack.c.l.b16 %v1686
  %v2949 = vunpack.c.h.b16 %v1686
  %v2950 = vunpack.c.l.b16 %v1687
  %v2951 = vunpack.c.l.b16 %v1688
  %v2952 = vunpack.c.h.b16 %v1688
  %v2953 = vunpack.c.l.b16 %v1689
  %v2954 = vunpack.c.h.b16 %v1689
  %v2955 = vunpack.c.l.b16 %v1690
  %v2956 = vunpack.c.l.b16 %v1691
  %v2957 = vunpack.c.h.b16 %v1691
  %v2958 = vunpack.c.l.b16 %v1692
  %v2959 = vunpack.c.h.b16 %v1692
  %v2960 = vunpack.c.l.b16 %v1693
  %v2961 = vunpack.c.l.b16 %v1694
  %v2962 = vunpack.c.h.b16 %v1694
  %v2963 = vunpack.c.l.b16 %v1695
  %v2964 = vunpack.c.h.b16 %v1695
  %v2965 = vunpack.c.l.b16 %v1696
  %v2966 = vunpack.c.l.b16 %v1697
  %v2967 = vunpack.c.h.b16 %v1697
  %v2968 = vunpack.c.l.b16 %v1698
  %v2969 = vunpack.c.h.b16 %v1698
  %v2970 = vunpack.c.l.b16 %v1699
  %v2971 = vunpack.c.l.b16 %v1700
  %v2972 = vunpack.c.h.b16 %v1700
  %v2973 = vunpack.c.l.b16 %v1701
  %v2974 = vunpack.c.h.b16 %v1701
  %v2975 = vunpack.c.l.b16 %v1702
  %v2976 = vunpack.c.l.b16 %v1703
  %v2977 = vunpack.c.h.b16 %v1703
  %v2978 = vunpack.c.l.b16 %v1704
  %v2979 = vunpack.c.h.b16 %v1704
  %v2980 = vunpack.c.l.b16 %v1705
  %v2981 = vunpack.c.l.b16 %v1706
  %v2982 = vunpack.c.h.b16 %v1706
  %v2983 = vunpack.c.l.b16 %v1707
  %v2984 = vunpack.c.h.b16 %v1707
  %v2985 = vunpack.c.l.b16 %v1708
  %v2986 = vunpack.c.l.b16 %v1709
  %v2987 = vunpack.c.h.b16 %v1709
  %v2988 = vunpack.c.l.b16 %v1710
  %v2989 = vunpack.c.h.b16 %v1710
  %v2990 = vunpack.c.l.b16 %v1711
  %v2991 = vunpack.c.l.b16 %v1712
  %v2992 = vunpack.c.h.b16 %v1712
  %v2993 = vunpack.c.l.b16 %v1713
  %v2994 = vunpack.c.h.b16 %v1713
  %v2995 = vunpack.c.l.b16 %v1714
  %v2996 = vunpack.c.l.b16 %v1715
  %v2997 = vunpack.c.h.b16 %v1715
  %v2998 = vunpack.c.l.b16 %v1716
  %v2999 = vunpack.c.h.b16 %v1716
  %v3000 = vunpack.c.l.b16 %v1717
  %v3001 = vunpack.c.l.b16 %v1718
  %v3002 = vunpack.c.h.b16 %v1718
  %v3003 = vunpack.c.l.b16 %v1719
  %v3004 = vunpack.c.h.b16 %v1719
  %v3005 = vunpack.c.l.b16 %v1720
  %v3006 = vunpack.c.l.b16 %v1721
  %v3007 = vunpack.c.h.b16 %v1721
  %v3008 = vunpack.c.l.b16 %v1722
  %v3009 = vunpack.c.h.b16 %v1722
  %v3010 = vunpack.c.l.b16 %v1723
  %v3011 = vunpack.c.l.b16 %v1724
  %v3012 = vunpack.c.h.b16 %v1724
  %v3013 = vunpack.c.l.b16 %v1725
  %v3014 = vunpack.c.h.b16 %v1725
  %v3015 = vunpack.c.l.b16 %v1726
  %v3016 = vunpack.c.l.b16 %v1727
  %v3017 = vunpack.c.h.b16 %v1727
  %v3018 = vunpack.c.l.b16 %v1728
  %v3019 = vunpack.c.h.b16 %v1728
  %v3020 = vunpack.c.l.b16 %v1729
  %v3021 = vunpack.c.l.b16 %v1730
  %v3022 = vunpack.c.h.b16 %v1730
  %v3023 = vunpack.c.l.b16 %v1731
  %v3024 = vunpack.c.h.b16 %v1731
  %v3025 = vunpack.c.l.b16 %v1732
  %v3026 = vunpack.c.l.b16 %v1733
  %v3027 = vunpack.c.h.b16 %v1733
  %v3028 = vunpack.c.l.b16 %v1734
  %v3029 = vunpack.c.h.b16 %v1734
  %v3030 = vunpack.c.l.b16 %v1735
  %v3031 = vunpack.c.l.b16 %v1736
  %v3032 = vunpack.c.h.b16 %v1736
  %v3033 = vunpack.c.l.b16 %v1737
  %v3034 = vunpack.c.h.b16 %v1737
  %v3035 = vunpack.c.l.b16 %v1738
  %v3036 = vunpack.c.l.b16 %v1739
  %v3037 = vunpack.c.h.b16 %v1739
  %v3038 = vunpack.c.l.b16 %v1740
  %v3039 = vunpack.c.h.b16 %v1740
  %v3040 = vunpack.c.l.b16 %v1741
  %v3041 = vunpack.c.l.b16 %v1742
  %v3042 = vunpack.c.h.b16 %v1742
  %v3043 = vunpack.c.l.b16 %v1743
  %v3044 = vunpack.c.h.b16 %v1743
  %v3045 = vunpack.c.l.b16 %v1744
  %v3046 = vunpack.c.l.b16 %v1745
  %v3047 = vunpack.c.h.b16 %v1745
  %v3048 = vunpack.c.l.b16 %v1746
  %v3049 = vunpack.c.h.b16 %v1746
  %v3050 = vunpack.c.l.b16 %v1747
  %v3051 = vunpack.c.l.b16 %v1748
  %v3052 = vunpack.c.h.b16 %v1748
  %v3053 = vunpack.c.l.b16 %v1749
  %v3054 = vunpack.c.h.b16 %v1749
  %v3055 = vunpack.c.l.b16 %v1750
  %v3056 = vunpack.c.l.b16 %v1751
  %v3057 = vunpack.c.h.b16 %v1751
  %v3058 = vunpack.c.l.b16 %v1752
  %v3059 = vunpack.c.h.b16 %v1752
  %v3060 = vunpack.c.l.b16 %v1753
  %v3061 = vpack.c.b16 %v2266, %v2261
  %v3062 = vpack.c.b16 %v2267, %v2262
  %v3063 = vpack.c.b16 %v2268, %v2263
  %v3064 = vpack.c.b16 %v2269, %v2264
  %v3065 = vpack.c.b16 %v2270, %v2265
  %v3066 = vpack.c.b16 %v2276, %v2271
  %v3067 = vpack.c.b16 %v2277, %v2272
  %v3068 = vpack.c.b16 %v2278, %v2273
  %v3069 = vpack.c.b16 %v2279, %v2274
  %v3070 = vpack.c.b16 %v2280, %v2275
  %v3071 = vpack.c.b16 %v2286, %v2281
  %v3072 = vpack.c.b16 %v2287, %v2282
  %v3073 = vpack.c.b16 %v2288, %v2283
  %v3074 = vpack.c.b16 %v2289, %v2284
  %v3075 = vpack.c.b16 %v2290, %v2285
  %v3076 = vpack.c.b16 %v2296, %v2291
  %v3077 = vpack.c.b16 %v2297, %v2292
  %v3078 = vpack.c.b16 %v2298, %v2293
  %v3079 = vpack.c.b16 %v2299, %v2294
  %v3080 = vpack.c.b16 %v2300, %v2295
  %v3081 = vpack.c.b16 %v2306, %v2301
  %v3082 = vpack.c.b16 %v2307, %v2302
  %v3083 = vpack.c.b16 %v2308, %v2303
  %v3084 = vpack.c.b16 %v2309, %v2304
  %v3085 = vpack.c.b16 %v2310, %v2305
  %v3086 = vpack.c.b16 %v2316, %v2311
  %v3087 = vpack.c.b16 %v2317, %v2312
  %v3088 = vpack.c.b16 %v2318, %v2313
  %v3089 = vpack.c.b16 %v2319, %v2314
  %v3090 = vpack.c.b16 %v2320, %v2315
  %v3091 = vpack.c.b16 %v2326, %v2321
  %v3092 = vpack.c.b16 %v2327, %v2322
  %v3093 = vpack.c.b16 %v2328, %v2323
  %v3094 = vpack.c.b16 %v2329, %v2324
  %v3095 = vpack.c.b16 %v2330, %v2325
  %v3096 = vpack.c.b16 %v2336, %v2331
  %v3097 = vpack.c.b16 %v2337, %v2332
  %v3098 = vpack.c.b16 %v2338, %v2333
  %v3099 = vpack.c.b16 %v2339, %v2334
  %v3100 = vpack.c.b16 %v2340, %v2335
  %v3101 = vpack.c.b16 %v2346, %v2341
  %v3102 = vpack.c.b16 %v2347, %v2342
  %v3103 = vpack.c.b16 %v2348, %v2343
  %v3104 = vpack.c.b16 %v2349, %v2344
  %v3105 = vpack.c.b16 %v2350, %v2345
  %v3106 = vpack.c.b16 %v2356, %v2351
  %v3107 = vpack.c.b16 %v2357, %v2352
  %v3108 = vpack.c.b16 %v2358, %v2353
  %v3109 = vpack.c.b16 %v2359, %v2354
  %v3110 = vpack.c.b16 %v2360, %v2355
  %v3111 = vpack.c.b16 %v2366, %v2361
  %v3112 = vpack.c.b16 %v2367, %v2362
  %v3113 = vpack.c.b16 %v2368, %v2363
  %v3114 = vpack.c.b16 %v2369, %v2364
  %v3115 = vpack.c.b16 %v2370, %v2365
  %v3116 = vpack.c.b16 %v2376, %v2371
  %v3117 = vpack.c.b16 %v2377, %v2372
  %v3118 = vpack.c.b16 %v2378, %v2373
  %v3119 = vpack.c.b16 %v2379, %v2374
  %v3120 = vpack.c.b16 %v2380, %v2375
  %v3121 = vpack.c.b16 %v2386, %v2381
  %v3122 = vpack.c.b16 %v2387, %v2382
  %v3123 = vpack.c.b16 %v2388, %v2383
  %v3124 = vpack.c.b16 %v2389, %v2384
  %v3125 = vpack.c.b16 %v2390, %v2385
  %v3126 = vpack.c.b16 %v2396, %v2391
  %v3127 = vpack.c.b16 %v2397, %v2392
  %v3128 = vpack.c.b16 %v2398, %v2393
  %v3129 = vpack.c.b16 %v2399, %v2394
  %v3130 = vpack.c.b16 %v2400, %v2395
  %v3131 = vpack.c.b16 %v2406, %v2401
  %v3132 = vpack.c.b16 %v2407, %v2402
  %v3133 = vpack.c.b16 %v2408, %v2403
  %v3134 = vpack.c.b16 %v2409, %v2404
  %v3135 = vpack.c.b16 %v2410, %v2405
  %v3136 = vpack.c.b16 %v2416, %v2411
  %v3137 = vpack.c.b16 %v2417, %v2412
  %v3138 = vpack.c.b16 %v2418, %v2413
  %v3139 = vpack.c.b16 %v2419, %v2414
  %v3140 = vpack.c.b16 %v2420, %v2415
  %v3141 = vpack.c.b16 %v2426, %v2421
  %v3142 = vpack.c.b16 %v2427, %v2422
  %v3143 = vpack.c.b16 %v2428, %v2423
  %v3144 = vpack.c.b16 %v2429, %v2424
  %v3145 = vpack.c.b16 %v2430, %v2425
  %v3146 = vpack.c.b16 %v2436, %v2431
  %v3147 = vpack.c.b16 %v2437, %v2432
  %v3148 = vpack.c.b16 %v2438, %v2433
  %v3149 = vpack.c.b16 %v2439, %v2434
  %v3150 = vpack.c.b16 %v2440, %v2435
  %v3151 = vpack.c.b16 %v2446, %v2441
  %v3152 = vpack.c.b16 %v2447, %v2442
  %v3153 = vpack.c.b16 %v2448, %v2443
  %v3154 = vpack.c.b16 %v2449, %v2444
  %v3155 = vpack.c.b16 %v2450, %v2445
  %v3156 = vpack.c.b16 %v2456, %v2451
  %v3157 = vpack.c.b16 %v2457, %v2452
  %v3158 = vpack.c.b16 %v2458, %v2453
  %v3159 = vpack.c.b16 %v2459, %v2454
  %v3160 = vpack.c.b16 %v2460, %v2455
  %v3161 = vpack.c.b16 %v2466, %v2461
  %v3162 = vpack.c.b16 %v2467, %v2462
  %v3163 = vpack.c.b16 %v2468, %v2463
  %v3164 = vpack.c.b16 %v2469, %v2464
  %v3165 = vpack.c.b16 %v2470, %v2465
  %v3166 = vpack.c.b16 %v2476, %v2471
  %v3167 = vpack.c.b16 %v2477, %v2472
  %v3168 = vpack.c.b16 %v2478, %v2473
  %v3169 = vpack.c.b16 %v2479, %v2474
  %v3170 = vpack.c.b16 %v2480, %v2475
  %v3171 = vpack.c.b16 %v2486, %v2481
  %v3172 = vpack.c.b16 %v2487, %v2482
  %v3173 = vpack.c.b16 %v2488, %v2483
  %v3174 = vpack.c.b16 %v2489, %v2484
  %v3175 = vpack.c.b16 %v2490, %v2485
  %v3176 = vpack.c.b16 %v2496, %v2491
  %v3177 = vpack.c.b16 %v2497, %v2492
  %v3178 = vpack.c.b16 %v2498, %v2493
  %v3179 = vpack.c.b16 %v2499, %v2494
  %v3180 = vpack.c.b16 %v2500, %v2495
  %v3181 = vpack.c.b16 %v2506, %v2501
  %v3182 = vpack.c.b16 %v2507, %v2502
  %v3183 = vpack.c.b16 %v2508, %v2503
  %v3184 = vpack.c.b16 %v2509, %v2504
  %v3185 = vpack.c.b16 %v2510, %v2505
  %v3186 = vpack.c.b16 %v2516, %v2511
  %v3187 = vpack.c.b16 %v2517, %v2512
  %v3188 = vpack.c.b16 %v2518, %v2513
  %v3189 = vpack.c.b16 %v2519, %v2514
  %v3190 = vpack.c.b16 %v2520, %v2515
  %v3191 = vpack.c.b16 %v2526, %v2521
  %v3192 = vpack.c.b16 %v2527, %v2522
  %v3193 = vpack.c.b16 %v2528, %v2523
  %v3194 = vpack.c.b16 %v2529, %v2524
  %v3195 = vpack.c.b16 %v2530, %v2525
  %v3196 = vpack.c.b16 %v2536, %v2531
  %v3197 = vpack.c.b16 %v2537, %v2532
  %v3198 = vpack.c.b16 %v2538, %v2533
  %v3199 = vpack.c.b16 %v2539, %v2534
  %v3200 = vpack.c.b16 %v2540, %v2535
  %v3201 = vpack.c.b16 %v2546, %v2541
  %v3202 = vpack.c.b16 %v2547, %v2542
  %v3203 = vpack.c.b16 %v2548, %v2543
  %v3204 = vpack.c.b16 %v2549, %v2544
  %v3205 = vpack.c.b16 %v2550, %v2545
  %v3206 = vpack.c.b16 %v2556, %v2551
  %v3207 = vpack.c.b16 %v2557, %v2552
  %v3208 = vpack.c.b16 %v2558, %v2553
  %v3209 = vpack.c.b16 %v2559, %v2554
  %v3210 = vpack.c.b16 %v2560, %v2555
  %v3211 = vpack.c.b16 %v2566, %v2561
  %v3212 = vpack.c.b16 %v2567, %v2562
  %v3213 = vpack.c.b16 %v2568, %v2563
  %v3214 = vpack.c.b16 %v2569, %v2564
  %v3215 = vpack.c.b16 %v2570, %v2565
  %v3216 = vpack.c.b16 %v2576, %v2571
  %v3217 = vpack.c.b16 %v2577, %v2572
  %v3218 = vpack.c.b16 %v2578, %v2573
  %v3219 = vpack.c.b16 %v2579, %v2574
  %v3220 = vpack.c.b16 %v2580, %v2575
  %v3221 = vpack.c.b16 %v2586, %v2581
  %v3222 = vpack.c.b16 %v2587, %v2582
  %v3223 = vpack.c.b16 %v2588, %v2583
  %v3224 = vpack.c.b16 %v2589, %v2584
  %v3225 = vpack.c.b16 %v2590, %v2585
  %v3226 = vpack.c.b16 %v2596, %v2591
  %v3227 = vpack.c.b16 %v2597, %v2592
  %v3228 = vpack.c.b16 %v2598, %v2593
  %v3229 = vpack.c.b16 %v2599, %v2594
  %v3230 = vpack.c.b16 %v2600, %v2595
  %v3231 = vpack.c.b16 %v2606, %v2601
  %v3232 = vpack.c.b16 %v2607, %v2602
  %v3233 = vpack.c.b16 %v2608, %v2603
  %v3234 = vpack.c.b16 %v2609, %v2604
  %v3235 = vpack.c.b16 %v2610, %v2605
  %v3236 = vpack.c.b16 %v2616, %v2611
  %v3237 = vpack.c.b16 %v2617, %v2612
  %v3238 = vpack.c.b16 %v2618, %v2613
  %v3239 = vpack.c.b16 %v2619, %v2614
  %v3240 = vpack.c.b16 %v2620, %v2615
  %v3241 = vpack.c.b16 %v2626, %v2621
  %v3242 = vpack.c.b16 %v2627, %v2622
  %v3243 = vpack.c.b16 %v2628, %v2623
  %v3244 = vpack.c.b16 %v2629, %v2624
  %v3245 = vpack.c.b16 %v2630, %v2625
  %v3246 = vpack.c.b16 %v2636, %v2631
  %v3247 = vpack.c.b16 %v2637, %v2632
  %v3248 = vpack.c.b16 %v2638, %v2633
  %v3249 = vpack.c.b16 %v2639, %v2634
  %v3250 = vpack.c.b16 %v2640, %v2635
  %v3251 = vpack.c.b16 %v2646, %v2641
  %v3252 = vpack.c.b16 %v2647, %v2642
  %v3253 = vpack.c.b16 %v2648, %v2643
  %v3254 = vpack.c.b16 %v2649, %v2644
  %v3255 = vpack.c.b16 %v2650, %v2645
  %v3256 = vpack.c.b16 %v2656, %v2651
  %v3257 = vpack.c.b16 %v2657, %v2652
  %v3258 = vpack.c.b16 %v2658, %v2653
  %v3259 = vpack.c.b16 %v2659, %v2654
  %v3260 = vpack.c.b16 %v2660, %v2655
  %v3261 = vpack.c.b16 %v2666, %v2661
  %v3262 = vpack.c.b16 %v2667, %v2662
  %v3263 = vpack.c.b16 %v2668, %v2663
  %v3264 = vpack.c.b16 %v2669, %v2664
  %v3265 = vpack.c.b16 %v2670, %v2665
  %v3266 = vpack.c.b16 %v2676, %v2671
  %v3267 = vpack.c.b16 %v2677, %v2672
  %v3268 = vpack.c.b16 %v2678, %v2673
  %v3269 = vpack.c.b16 %v2679, %v2674
  %v3270 = vpack.c.b16 %v2680, %v2675
  %v3271 = vpack.c.b16 %v2686, %v2681
  %v3272 = vpack.c.b16 %v2687, %v2682
  %v3273 = vpack.c.b16 %v2688, %v2683
  %v3274 = vpack.c.b16 %v2689, %v2684
  %v3275 = vpack.c.b16 %v2690, %v2685
  %v3276 = vpack.c.b16 %v2696, %v2691
  %v3277 = vpack.c.b16 %v2697, %v2692
  %v3278 = vpack.c.b16 %v2698, %v2693
  %v3279 = vpack.c.b16 %v2699, %v2694
  %v3280 = vpack.c.b16 %v2700, %v2695
  %v3281 = vpack.c.b16 %v2706, %v2701
  %v3282 = vpack.c.b16 %v2707, %v2702
  %v3283 = vpack.c.b16 %v2708, %v2703
  %v3284 = vpack.c.b16 %v2709, %v2704
  %v3285 = vpack.c.b16 %v2710, %v2705
  %v3286 = vpack.c.b16 %v2716, %v2711
  %v3287 = vpack.c.b16 %v2717, %v2712
  %v3288 = vpack.c.b16 %v2718, %v2713
  %v3289 = vpack.c.b16 %v2719, %v2714
  %v3290 = vpack.c.b16 %v2720, %v2715
  %v3291 = vpack.c.b16 %v2726, %v2721
  %v3292 = vpack.c.b16 %v2727, %v2722
  %v3293 = vpack.c.b16 %v2728, %v2723
  %v3294 = vpack.c.b16 %v2729, %v2724
  %v3295 = vpack.c.b16 %v2730, %v2725
  %v3296 = vpack.c.b16 %v2736, %v2731
  %v3297 = vpack.c.b16 %v2737, %v2732
  %v3298 = vpack.c.b16 %v2738, %v2733
  %v3299 = vpack.c.b16 %v2739, %v2734
  %v3300 = vpack.c.b16 %v2740, %v2735
  %v3301 = vpack.c.b16 %v2746, %v2741
  %v3302 = vpack.c.b16 %v2747, %v2742
  %v3303 = vpack.c.b16 %v2748, %v2743
  %v3304 = vpack.c.b16 %v2749, %v2744
  %v3305 = vpack.c.b16 %v2750, %v2745
  %v3306 = vpack.c.b16 %v2756, %v2751
  %v3307 = vpack.c.b16 %v2757, %v2752
  %v3308 = vpack.c.b16 %v2758, %v2753
  %v3309 = vpack.c.b16 %v2759, %v2754
  %v3310 = vpack.c.b16 %v2760, %v2755
  %v3311 = vpack.c.b16 %v2766, %v2761
  %v3312 = vpack.c.b16 %v2767, %v2762
  %v3313 = vpack.c.b16 %v2768, %v2763
  %v3314 = vpack.c.b16 %v2769, %v2764
  %v3315 = vpack.c.b16 %v2770, %v2765
  %v3316 = vpack.c.b16 %v2776, %v2771
  %v3317 = vpack.c.b16 %v2777, %v2772
  %v3318 = vpack.c.b16 %v2778, %v2773
  %v3319 = vpack.c.b16 %v2779, %v2774
  %v3320 = vpack.c.b16 %v2780, %v2775
  %v3321 = vpack.c.b16 %v2786, %v2781
  %v3322 = vpack.c.b16 %v2787, %v2782
  %v3323 = vpack.c.b16 %v2788, %v2783
  %v3324 = vpack.c.b16 %v2789, %v2784
  %v3325 = vpack.c.b16 %v2790, %v2785
  %v3326 = vpack.c.b16 %v2796, %v2791
  %v3327 = vpack.c.b16 %v2797, %v2792
  %v3328 = vpack.c.b16 %v2798, %v2793
  %v3329 = vpack.c.b16 %v2799, %v2794
  %v3330 = vpack.c.b16 %v2800, %v2795
  %v3331 = vpack.c.b16 %v2806, %v2801
  %v3332 = vpack.c.b16 %v2807, %v2802
  %v3333 = vpack.c.b16 %v2808, %v2803
  %v3334 = vpack.c.b16 %v2809, %v2804
  %v3335 = vpack.c.b16 %v2810, %v2805
  %v3336 = vpack.c.b16 %v2816, %v2811
  %v3337 = vpack.c.b16 %v2817, %v2812
  %v3338 = vpack.c.b16 %v2818, %v2813
  %v3339 = vpack.c.b16 %v2819, %v2814
  %v3340 = vpack.c.b16 %v2820, %v2815
  %v3341 = vpack.c.b16 %v2826, %v2821
  %v3342 = vpack.c.b16 %v2827, %v2822
  %v3343 = vpack.c.b16 %v2828, %v2823
  %v3344 = vpack.c.b16 %v2829, %v2824
  %v3345 = vpack.c.b16 %v2830, %v2825
  %v3346 = vpack.c.b16 %v2836, %v2831
  %v3347 = vpack.c.b16 %v2837, %v2832
  %v3348 = vpack.c.b16 %v2838, %v2833
  %v3349 = vpack.c.b16 %v2839, %v2834
  %v3350 = vpack.c.b16 %v2840, %v2835
  %v3351 = vpack.c.b16 %v2846, %v2841
  %v3352 = vpack.c.b16 %v2847, %v2842
  %v3353 = vpack.c.b16 %v2848, %v2843
  %v3354 = vpack.c.b16 %v2849, %v2844
  %v3355 = vpack.c.b16 %v2850, %v2845
  %v3356 = vpack.c.b16 %v2856, %v2851
  %v3357 = vpack.c.b16 %v2857, %v2852
  %v3358 = vpack.c.b16 %v2858, %v2853
  %v3359 = vpack.c.b16 %v2859, %v2854
  %v3360 = vpack.c.b16 %v2860, %v2855
  %v3361 = vpack.c.b16 %v2866, %v2861
  %v3362 = vpack.c.b16 %v2867, %v2862
  %v3363 = vpack.c.b16 %v2868, %v2863
  %v3364 = vpack.c.b16 %v2869, %v2864
  %v3365 = vpack.c.b16 %v2870, %v2865
  %v3366 = vpack.c.b16 %v2876, %v2871
  %v3367 = vpack.c.b16 %v2877, %v2872
  %v3368 = vpack.c.b16 %v2878, %v2873
  %v3369 = vpack.c.b16 %v2879, %v2874
  %v3370 = vpack.c.b16 %v2880, %v2875
  %v3371 = vpack.c.b16 %v2886, %v2881
  %v3372 = vpack.c.b16 %v2887, %v2882
  %v3373 = vpack.c.b16 %v2888, %v2883
  %v3374 = vpack.c.b16 %v2889, %v2884
  %v3375 = vpack.c.b16 %v2890, %v2885
  %v3376 = vpack.c.b16 %v2896, %v2891
  %v3377 = vpack.c.b16 %v2897, %v2892
  %v3378 = vpack.c.b16 %v2898, %v2893
  %v3379 = vpack.c.b16 %v2899, %v2894
  %v3380 = vpack.c.b16 %v2900, %v2895
  %v3381 = vpack.c.b16 %v2906, %v2901
  %v3382 = vpack.c.b16 %v2907, %v2902
  %v3383 = vpack.c.b16 %v2908, %v2903
  %v3384 = vpack.c.b16 %v2909, %v2904
  %v3385 = vpack.c.b16 %v2910, %v2905
  %v3386 = vpack.c.b16 %v2916, %v2911
  %v3387 = vpack.c.b16 %v2917, %v2912
  %v3388 = vpack.c.b16 %v2918, %v2913
  %v3389 = vpack.c.b16 %v2919, %v2914
  %v3390 = vpack.c.b16 %v2920, %v2915
  %v3391 = vpack.c.b16 %v2926, %v2921
  %v3392 = vpack.c.b16 %v2927, %v2922
  %v3393 = vpack.c.b16 %v2928, %v2923
  %v3394 = vpack.c.b16 %v2929, %v2924
  %v3395 = vpack.c.b16 %v2930, %v2925
  %v3396 = vpack.c.b16 %v2936, %v2931
  %v3397 = vpack.c.b16 %v2937, %v2932
  %v3398 = vpack.c.b16 %v2938, %v2933
  %v3399 = vpack.c.b16 %v2939, %v2934
  %v3400 = vpack.c.b16 %v2940, %v2935
  %v3401 = vpack.c.b16 %v2946, %v2941
  %v3402 = vpack.c.b16 %v2947, %v2942
  %v3403 = vpack.c.b16 %v2948, %v2943
  %v3404 = vpack.c.b16 %v2949, %v2944
  %v3405 = vpack.c.b16 %v2950, %v2945
  %v3406 = vpack.c.b16 %v2956, %v2951
  %v3407 = vpack.c.b16 %v2957, %v2952
  %v3408 = vpack.c.b16 %v2958, %v2953
  %v3409 = vpack.c.b16 %v2959, %v2954
  %v3410 = vpack.c.b16 %v2960, %v2955
  %v3411 = vpack.c.b16 %v2966, %v2961
  %v3412 = vpack.c.b16 %v2967, %v2962
  %v3413 = vpack.c.b16 %v2968, %v2963
  %v3414 = vpack.c.b16 %v2969, %v2964
  %v3415 = vpack.c.b16 %v2970, %v2965
  %v3416 = vpack.c.b16 %v2976, %v2971
  %v3417 = vpack.c.b16 %v2977, %v2972
  %v3418 = vpack.c.b16 %v2978, %v2973
  %v3419 = vpack.c.b16 %v2979, %v2974
  %v3420 = vpack.c.b16 %v2980, %v2975
  %v3421 = vpack.c.b16 %v2986, %v2981
  %v3422 = vpack.c.b16 %v2987, %v2982
  %v3423 = vpack.c.b16 %v2988, %v2983
  %v3424 = vpack.c.b16 %v2989, %v2984
  %v3425 = vpack.c.b16 %v2990, %v2985
  %v3426 = vpack.c.b16 %v2996, %v2991
  %v3427 = vpack.c.b16 %v2997, %v2992
  %v3428 = vpack.c.b16 %v2998, %v2993
  %v3429 = vpack.c.b16 %v2999, %v2994
  %v3430 = vpack.c.b16 %v3000, %v2995
  %v3431 = vpack.c.b16 %v3006, %v3001
  %v3432 = vpack.c.b16 %v3007, %v3002
  %v3433 = vpack.c.b16 %v3008, %v3003
  %v3434 = vpack.c.b16 %v3009, %v3004
  %v3435 = vpack.c.b16 %v3010, %v3005
  %v3436 = vpack.c.b16 %v3016, %v3011
  %v3437 = vpack.c.b16 %v3017, %v3012
  %v3438 = vpack.c.b16 %v3018, %v3013
  %v3439 = vpack.c.b16 %v3019, %v3014
  %v3440 = vpack.c.b16 %v3020, %v3015
  %v3441 = vpack.c.b16 %v3026, %v3021
  %v3442 = vpack.c.b16 %v3027, %v3022
  %v3443 = vpack.c.b16 %v3028, %v3023
  %v3444 = vpack.c.b16 %v3029, %v3024
  %v3445 = vpack.c.b16 %v3030, %v3025
  %v3446 = vpack.c.b16 %v3036, %v3031
  %v3447 = vpack.c.b16 %v3037, %v3032
  %v3448 = vpack.c.b16 %v3038, %v3033
  %v3449 = vpack.c.b16 %v3039, %v3034
  %v3450 = vpack.c.b16 %v3040, %v3035
  %v3451 = vpack.c.b16 %v3046, %v3041
  %v3452 = vpack.c.b16 %v3047, %v3042
  %v3453 = vpack.c.b16 %v3048, %v3043
  %v3454 = vpack.c.b16 %v3049, %v3044
  %v3455 = vpack.c.b16 %v3050, %v3045
  %v3456 = vpack.c.b16 %v3056, %v3051
  %v3457 = vpack.c.b16 %v3057, %v3052
  %v3458 = vpack.c.b16 %v3058, %v3053
  %v3459 = vpack.c.b16 %v3059, %v3054
  %v3460 = vpack.c.b16 %v3060, %v3055
  %3861 = vmatprep.subr.bf16.mxu0 %v3062
  %3862 = vmatpush1.bf16.msra.mxu0 %v3061
  %3863 = vmatprep.subr.bf16.mxu0 %v3067
  %3864 = vmatpush1.bf16.msra.mxu0 %v3066
  %3865 = vmatprep.subr.bf16.mxu0 %v3072
  %3866 = vmatpush1.bf16.msra.mxu0 %v3071
  %3867 = vmatprep.subr.bf16.mxu0 %v3077
  %3868 = vmatpush1.bf16.msra.mxu0 %v3076
  %3869 = vmatprep.subr.bf16.mxu0 %v3082
  %3870 = vmatpush1.bf16.msra.mxu0 %v3081
  %3871 = vmatprep.subr.bf16.mxu0 %v3087
  %3872 = vmatpush1.bf16.msra.mxu0 %v3086
  %3873 = vmatprep.subr.bf16.mxu0 %v3092
  %3874 = vmatpush1.bf16.msra.mxu0 %v3091
  %3875 = vmatprep.subr.bf16.mxu0 %v3097
  %3876 = vmatpush1.bf16.msra.mxu0 %v3096
  %3877 = vmatprep.subr.bf16.mxu0 %v3102
  %3878 = vmatpush1.bf16.msra.mxu0 %v3101
  %3879 = vmatprep.subr.bf16.mxu0 %v3107
  %3880 = vmatpush1.bf16.msra.mxu0 %v3106
  %3881 = vmatprep.subr.bf16.mxu0 %v3112
  %3882 = vmatpush1.bf16.msra.mxu0 %v3111
  %3883 = vmatprep.subr.bf16.mxu0 %v3117
  %3884 = vmatpush1.bf16.msra.mxu0 %v3116
  %3885 = vmatprep.subr.bf16.mxu0 %v3122
  %3886 = vmatpush1.bf16.msra.mxu0 %v3121
  %3887 = vmatprep.subr.bf16.mxu0 %v3127
  %3888 = vmatpush1.bf16.msra.mxu0 %v3126
  %3889 = vmatprep.subr.bf16.mxu0 %v3132
  %3890 = vmatpush1.bf16.msra.mxu0 %v3131
  %3891 = vmatprep.subr.bf16.mxu0 %v3137
  %3892 = vmatpush1.bf16.msra.mxu0 %v3136
  %3893 = vmatprep.mubr.bf16.mxu0 %v1265
  %3894 = vmatmul.mubr.bf16.gmra.mrb[0].mxu0 %v1264
  %v3895 = vpop.f32.mrb[0].mxu0
  %v3896 = vadd.f32 %v1759, %v3895
  %v3897 = vpop.f32.mrb[0].mxu0
  %v3898 = vadd.f32 %v1763, %v3897
  %v3899 = vpop.f32.mrb[0].mxu0
  %v3900 = vpop.f32.mrb[0].mxu0
  %3901 = vdwg.mxu0
  %3902 = vmatprep.subr.bf16.mxu0 %v3142
  %3903 = vmatpush1.bf16.msra.mxu0 %v3141
  %3904 = vmatprep.subr.bf16.mxu0 %v3147
  %3905 = vmatpush1.bf16.msra.mxu0 %v3146
  %3906 = vmatprep.subr.bf16.mxu0 %v3152
  %3907 = vmatpush1.bf16.msra.mxu0 %v3151
  %3908 = vmatprep.subr.bf16.mxu0 %v3157
  %3909 = vmatpush1.bf16.msra.mxu0 %v3156
  %3910 = vmatprep.subr.bf16.mxu0 %v3162
  %3911 = vmatpush1.bf16.msra.mxu0 %v3161
  %3912 = vmatprep.subr.bf16.mxu0 %v3167
  %3913 = vmatpush1.bf16.msra.mxu0 %v3166
  %3914 = vmatprep.subr.bf16.mxu0 %v3172
  %3915 = vmatpush1.bf16.msra.mxu0 %v3171
  %3916 = vmatprep.subr.bf16.mxu0 %v3177
  %3917 = vmatpush1.bf16.msra.mxu0 %v3176
  %3918 = vmatprep.subr.bf16.mxu0 %v3182
  %3919 = vmatpush1.bf16.msra.mxu0 %v3181
  %3920 = vmatprep.subr.bf16.mxu0 %v3187
  %3921 = vmatpush1.bf16.msra.mxu0 %v3186
  %3922 = vmatprep.subr.bf16.mxu0 %v3192
  %3923 = vmatpush1.bf16.msra.mxu0 %v3191
  %3924 = vmatprep.subr.bf16.mxu0 %v3197
  %3925 = vmatpush1.bf16.msra.mxu0 %v3196
  %3926 = vmatprep.subr.bf16.mxu0 %v3202
  %3927 = vmatpush1.bf16.msra.mxu0 %v3201
  %3928 = vmatprep.subr.bf16.mxu0 %v3207
  %3929 = vmatpush1.bf16.msra.mxu0 %v3206
  %3930 = vmatprep.subr.bf16.mxu0 %v3212
  %3931 = vmatpush1.bf16.msra.mxu0 %v3211
  %3932 = vmatprep.subr.bf16.mxu0 %v3217
  %3933 = vmatpush1.bf16.msra.mxu0 %v3216
  %3934 = vmatprep.mubr.bf16.mxu0 %v1267
  %3935 = vmatmul.mubr.bf16.gmra.mrb[0].mxu0 %v1266
  %v3936 = vpop.f32.mrb[0].mxu0
  %v3937 = vadd.f32 %v3896, %v3936
  %v3938 = vpop.f32.mrb[0].mxu0
  %v3939 = vadd.f32 %v3898, %v3938
  %v3940 = vpop.f32.mrb[0].mxu0
  %v3941 = vpop.f32.mrb[0].mxu0
  %3942 = vdwg.mxu0
  %3943 = vmatprep.subr.bf16.mxu0 %v3222
  %3944 = vmatpush1.bf16.msra.mxu0 %v3221
  %3945 = vmatprep.subr.bf16.mxu0 %v3227
  %3946 = vmatpush1.bf16.msra.mxu0 %v3226
  %3947 = vmatprep.subr.bf16.mxu0 %v3232
  %3948 = vmatpush1.bf16.msra.mxu0 %v3231
  %3949 = vmatprep.subr.bf16.mxu0 %v3237
  %3950 = vmatpush1.bf16.msra.mxu0 %v3236
  %3951 = vmatprep.subr.bf16.mxu0 %v3242
  %3952 = vmatpush1.bf16.msra.mxu0 %v3241
  %3953 = vmatprep.subr.bf16.mxu0 %v3247
  %3954 = vmatpush1.bf16.msra.mxu0 %v3246
  %3955 = vmatprep.subr.bf16.mxu0 %v3252
  %3956 = vmatpush1.bf16.msra.mxu0 %v3251
  %3957 = vmatprep.subr.bf16.mxu0 %v3257
  %3958 = vmatpush1.bf16.msra.mxu0 %v3256
  %3959 = vmatprep.subr.bf16.mxu0 %v3262
  %3960 = vmatpush1.bf16.msra.mxu0 %v3261
  %3961 = vmatprep.subr.bf16.mxu0 %v3267
  %3962 = vmatpush1.bf16.msra.mxu0 %v3266
  %3963 = vmatprep.subr.bf16.mxu0 %v3272
  %3964 = vmatpush1.bf16.msra.mxu0 %v3271
  %3965 = vmatprep.subr.bf16.mxu0 %v3277
  %3966 = vmatpush1.bf16.msra.mxu0 %v3276
  %3967 = vmatprep.subr.bf16.mxu0 %v3282
  %3968 = vmatpush1.bf16.msra.mxu0 %v3281
  %3969 = vmatprep.subr.bf16.mxu0 %v3287
  %3970 = vmatpush1.bf16.msra.mxu0 %v3286
  %3971 = vmatprep.subr.bf16.mxu0 %v3292
  %3972 = vmatpush1.bf16.msra.mxu0 %v3291
  %3973 = vmatprep.subr.bf16.mxu0 %v3297
  %3974 = vmatpush1.bf16.msra.mxu0 %v3296
  %3975 = vmatprep.mubr.bf16.mxu0 %v1269
  %3976 = vmatmul.mubr.bf16.gmra.mrb[0].mxu0 %v1268
  %v3977 = vpop.f32.mrb[0].mxu0
  %v3978 = vadd.f32 %v3937, %v3977
  %v3979 = vpop.f32.mrb[0].mxu0
  %v3980 = vadd.f32 %v3939, %v3979
  %v3981 = vpop.f32.mrb[0].mxu0
  %v3982 = vpop.f32.mrb[0].mxu0
  %3983 = vdwg.mxu0
  %3984 = vmatprep.subr.bf16.mxu0 %v3302
  %3985 = vmatpush1.bf16.msra.mxu0 %v3301
  %3986 = vmatprep.subr.bf16.mxu0 %v3307
  %3987 = vmatpush1.bf16.msra.mxu0 %v3306
  %3988 = vmatprep.subr.bf16.mxu0 %v3312
  %3989 = vmatpush1.bf16.msra.mxu0 %v3311
  %3990 = vmatprep.subr.bf16.mxu0 %v3317
  %3991 = vmatpush1.bf16.msra.mxu0 %v3316
  %3992 = vmatprep.subr.bf16.mxu0 %v3322
  %3993 = vmatpush1.bf16.msra.mxu0 %v3321
  %3994 = vmatprep.subr.bf16.mxu0 %v3327
  %3995 = vmatpush1.bf16.msra.mxu0 %v3326
  %3996 = vmatprep.subr.bf16.mxu0 %v3332
  %3997 = vmatpush1.bf16.msra.mxu0 %v3331
  %3998 = vmatprep.subr.bf16.mxu0 %v3337
  %3999 = vmatpush1.bf16.msra.mxu0 %v3336
  %4000 = vmatprep.subr.bf16.mxu0 %v3342
  %4001 = vmatpush1.bf16.msra.mxu0 %v3341
  %4002 = vmatprep.subr.bf16.mxu0 %v3347
  %4003 = vmatpush1.bf16.msra.mxu0 %v3346
  %4004 = vmatprep.subr.bf16.mxu0 %v3352
  %4005 = vmatpush1.bf16.msra.mxu0 %v3351
  %4006 = vmatprep.subr.bf16.mxu0 %v3357
  %4007 = vmatpush1.bf16.msra.mxu0 %v3356
  %4008 = vmatprep.subr.bf16.mxu0 %v3362
  %4009 = vmatpush1.bf16.msra.mxu0 %v3361
  %4010 = vmatprep.subr.bf16.mxu0 %v3367
  %4011 = vmatpush1.bf16.msra.mxu0 %v3366
  %4012 = vmatprep.subr.bf16.mxu0 %v3372
  %4013 = vmatpush1.bf16.msra.mxu0 %v3371
  %4014 = vmatprep.subr.bf16.mxu0 %v3377
  %4015 = vmatpush1.bf16.msra.mxu0 %v3376
  %4016 = vmatprep.mubr.bf16.mxu0 %v1271
  %4017 = vmatmul.mubr.bf16.gmra.mrb[0].mxu0 %v1270
  %v4018 = vpop.f32.mrb[0].mxu0
  %v4019 = vadd.f32 %v3978, %v4018
  %v4020 = vpop.f32.mrb[0].mxu0
  %v4021 = vadd.f32 %v3980, %v4020
  %v4022 = vpop.f32.mrb[0].mxu0
  %v4023 = vpop.f32.mrb[0].mxu0
  %4024 = vdwg.mxu0
  %4025 = vmatprep.subr.bf16.mxu0 %v3382
  %4026 = vmatpush1.bf16.msra.mxu0 %v3381
  %4027 = vmatprep.subr.bf16.mxu0 %v3387
  %4028 = vmatpush1.bf16.msra.mxu0 %v3386
  %4029 = vmatprep.subr.bf16.mxu0 %v3392
  %4030 = vmatpush1.bf16.msra.mxu0 %v3391
  %4031 = vmatprep.subr.bf16.mxu0 %v3397
  %4032 = vmatpush1.bf16.msra.mxu0 %v3396
  %4033 = vmatprep.subr.bf16.mxu0 %v3402
  %4034 = vmatpush1.bf16.msra.mxu0 %v3401
  %4035 = vmatprep.subr.bf16.mxu0 %v3407
  %4036 = vmatpush1.bf16.msra.mxu0 %v3406
  %4037 = vmatprep.subr.bf16.mxu0 %v3412
  %4038 = vmatpush1.bf16.msra.mxu0 %v3411
  %4039 = vmatprep.subr.bf16.mxu0 %v3417
  %4040 = vmatpush1.bf16.msra.mxu0 %v3416
  %4041 = vmatprep.subr.bf16.mxu0 %v3422
  %4042 = vmatpush1.bf16.msra.mxu0 %v3421
  %4043 = vmatprep.subr.bf16.mxu0 %v3427
  %4044 = vmatpush1.bf16.msra.mxu0 %v3426
  %4045 = vmatprep.subr.bf16.mxu0 %v3432
  %4046 = vmatpush1.bf16.msra.mxu0 %v3431
  %4047 = vmatprep.subr.bf16.mxu0 %v3437
  %4048 = vmatpush1.bf16.msra.mxu0 %v3436
  %4049 = vmatprep.subr.bf16.mxu0 %v3442
  %4050 = vmatpush1.bf16.msra.mxu0 %v3441
  %4051 = vmatprep.subr.bf16.mxu0 %v3447
  %4052 = vmatpush1.bf16.msra.mxu0 %v3446
  %4053 = vmatprep.subr.bf16.mxu0 %v3452
  %4054 = vmatpush1.bf16.msra.mxu0 %v3451
  %4055 = vmatprep.subr.bf16.mxu0 %v3457
  %4056 = vmatpush1.bf16.msra.mxu0 %v3456
  %4057 = vmatprep.mubr.bf16.mxu0 %v1273
  %4058 = vmatmul.mubr.bf16.gmra.mrb[0].mxu0 %v1272
  %v4059 = vpop.f32.mrb[0].mxu0
  %v4060 = vadd.f32 %v4019, %v4059
  %v4061 = vpop.f32.mrb[0].mxu0
  %v4062 = vadd.f32 %v4021, %v4061
  %v4063 = vpop.f32.mrb[0].mxu0
  %v4064 = vpop.f32.mrb[0].mxu0
  %4065 = vdwg.mxu0
  %4066 = vmatprep.subr.bf16.mxu0 %v3064
  %4067 = vmatpush1.bf16.msra.mxu0 %v3063
  %4068 = vmatprep.subr.bf16.mxu0 %v3069
  %4069 = vmatpush1.bf16.msra.mxu0 %v3068
  %4070 = vmatprep.subr.bf16.mxu0 %v3074
  %4071 = vmatpush1.bf16.msra.mxu0 %v3073
  %4072 = vmatprep.subr.bf16.mxu0 %v3079
  %4073 = vmatpush1.bf16.msra.mxu0 %v3078
  %4074 = vmatprep.subr.bf16.mxu0 %v3084
  %4075 = vmatpush1.bf16.msra.mxu0 %v3083
  %4076 = vmatprep.subr.bf16.mxu0 %v3089
  %4077 = vmatpush1.bf16.msra.mxu0 %v3088
  %4078 = vmatprep.subr.bf16.mxu0 %v3094
  %4079 = vmatpush1.bf16.msra.mxu0 %v3093
  %4080 = vmatprep.subr.bf16.mxu0 %v3099
  %4081 = vmatpush1.bf16.msra.mxu0 %v3098
  %4082 = vmatprep.subr.bf16.mxu0 %v3104
  %4083 = vmatpush1.bf16.msra.mxu0 %v3103
  %4084 = vmatprep.subr.bf16.mxu0 %v3109
  %4085 = vmatpush1.bf16.msra.mxu0 %v3108
  %4086 = vmatprep.subr.bf16.mxu0 %v3114
  %4087 = vmatpush1.bf16.msra.mxu0 %v3113
  %4088 = vmatprep.subr.bf16.mxu0 %v3119
  %4089 = vmatpush1.bf16.msra.mxu0 %v3118
  %4090 = vmatprep.subr.bf16.mxu0 %v3124
  %4091 = vmatpush1.bf16.msra.mxu0 %v3123
  %4092 = vmatprep.subr.bf16.mxu0 %v3129
  %4093 = vmatpush1.bf16.msra.mxu0 %v3128
  %4094 = vmatprep.subr.bf16.mxu0 %v3134
  %4095 = vmatpush1.bf16.msra.mxu0 %v3133
  %4096 = vmatprep.subr.bf16.mxu0 %v3139
  %4097 = vmatpush1.bf16.msra.mxu0 %v3138
  %4098 = vmatprep.mubr.bf16.mxu0 %v1265
  %4099 = vmatmul.mubr.bf16.gmra.mrb[0].mxu0 %v1264
  %v4100 = vpop.f32.mrb[0].mxu0
  %v4101 = vadd.f32 %v1767, %v4100
  %v4102 = vpop.f32.mrb[0].mxu0
  %v4103 = vadd.f32 %v1771, %v4102
  %v4104 = vpop.f32.mrb[0].mxu0
  %v4105 = vpop.f32.mrb[0].mxu0
  %4106 = vdwg.mxu0
  %4107 = vmatprep.subr.bf16.mxu0 %v3144
  %4108 = vmatpush1.bf16.msra.mxu0 %v3143
  %4109 = vmatprep.subr.bf16.mxu0 %v3149
  %4110 = vmatpush1.bf16.msra.mxu0 %v3148
  %4111 = vmatprep.subr.bf16.mxu0 %v3154
  %4112 = vmatpush1.bf16.msra.mxu0 %v3153
  %4113 = vmatprep.subr.bf16.mxu0 %v3159
  %4114 = vmatpush1.bf16.msra.mxu0 %v3158
  %4115 = vmatprep.subr.bf16.mxu0 %v3164
  %4116 = vmatpush1.bf16.msra.mxu0 %v3163
  %4117 = vmatprep.subr.bf16.mxu0 %v3169
  %4118 = vmatpush1.bf16.msra.mxu0 %v3168
  %4119 = vmatprep.subr.bf16.mxu0 %v3174
  %4120 = vmatpush1.bf16.msra.mxu0 %v3173
  %4121 = vmatprep.subr.bf16.mxu0 %v3179
  %4122 = vmatpush1.bf16.msra.mxu0 %v3178
  %4123 = vmatprep.subr.bf16.mxu0 %v3184
  %4124 = vmatpush1.bf16.msra.mxu0 %v3183
  %4125 = vmatprep.subr.bf16.mxu0 %v3189
  %4126 = vmatpush1.bf16.msra.mxu0 %v3188
  %4127 = vmatprep.subr.bf16.mxu0 %v3194
  %4128 = vmatpush1.bf16.msra.mxu0 %v3193
  %4129 = vmatprep.subr.bf16.mxu0 %v3199
  %4130 = vmatpush1.bf16.msra.mxu0 %v3198
  %4131 = vmatprep.subr.bf16.mxu0 %v3204
  %4132 = vmatpush1.bf16.msra.mxu0 %v3203
  %4133 = vmatprep.subr.bf16.mxu0 %v3209
  %4134 = vmatpush1.bf16.msra.mxu0 %v3208
  %4135 = vmatprep.subr.bf16.mxu0 %v3214
  %4136 = vmatpush1.bf16.msra.mxu0 %v3213
  %4137 = vmatprep.subr.bf16.mxu0 %v3219
  %4138 = vmatpush1.bf16.msra.mxu0 %v3218
  %4139 = vmatprep.mubr.bf16.mxu0 %v1267
  %4140 = vmatmul.mubr.bf16.gmra.mrb[0].mxu0 %v1266
  %v4141 = vpop.f32.mrb[0].mxu0
  %v4142 = vadd.f32 %v4101, %v4141
  %v4143 = vpop.f32.mrb[0].mxu0
  %v4144 = vadd.f32 %v4103, %v4143
  %v4145 = vpop.f32.mrb[0].mxu0
  %v4146 = vpop.f32.mrb[0].mxu0
  %4147 = vdwg.mxu0
  %4148 = vmatprep.subr.bf16.mxu0 %v3224
  %4149 = vmatpush1.bf16.msra.mxu0 %v3223
  %4150 = vmatprep.subr.bf16.mxu0 %v3229
  %4151 = vmatpush1.bf16.msra.mxu0 %v3228
  %4152 = vmatprep.subr.bf16.mxu0 %v3234
  %4153 = vmatpush1.bf16.msra.mxu0 %v3233
  %4154 = vmatprep.subr.bf16.mxu0 %v3239
  %4155 = vmatpush1.bf16.msra.mxu0 %v3238
  %4156 = vmatprep.subr.bf16.mxu0 %v3244
  %4157 = vmatpush1.bf16.msra.mxu0 %v3243
  %4158 = vmatprep.subr.bf16.mxu0 %v3249
  %4159 = vmatpush1.bf16.msra.mxu0 %v3248
  %4160 = vmatprep.subr.bf16.mxu0 %v3254
  %4161 = vmatpush1.bf16.msra.mxu0 %v3253
  %4162 = vmatprep.subr.bf16.mxu0 %v3259
  %4163 = vmatpush1.bf16.msra.mxu0 %v3258
  %4164 = vmatprep.subr.bf16.mxu0 %v3264
  %4165 = vmatpush1.bf16.msra.mxu0 %v3263
  %4166 = vmatprep.subr.bf16.mxu0 %v3269
  %4167 = vmatpush1.bf16.msra.mxu0 %v3268
  %4168 = vmatprep.subr.bf16.mxu0 %v3274
  %4169 = vmatpush1.bf16.msra.mxu0 %v3273
  %4170 = vmatprep.subr.bf16.mxu0 %v3279
  %4171 = vmatpush1.bf16.msra.mxu0 %v3278
  %4172 = vmatprep.subr.bf16.mxu0 %v3284
  %4173 = vmatpush1.bf16.msra.mxu0 %v3283
  %4174 = vmatprep.subr.bf16.mxu0 %v3289
  %4175 = vmatpush1.bf16.msra.mxu0 %v3288
  %4176 = vmatprep.subr.bf16.mxu0 %v3294
  %4177 = vmatpush1.bf16.msra.mxu0 %v3293
  %4178 = vmatprep.subr.bf16.mxu0 %v3299
  %4179 = vmatpush1.bf16.msra.mxu0 %v3298
  %4180 = vmatprep.mubr.bf16.mxu0 %v1269
  %4181 = vmatmul.mubr.bf16.gmra.mrb[0].mxu0 %v1268
  %v4182 = vpop.f32.mrb[0].mxu0
  %v4183 = vadd.f32 %v4142, %v4182
  %v4184 = vpop.f32.mrb[0].mxu0
  %v4185 = vadd.f32 %v4144, %v4184
  %v4186 = vpop.f32.mrb[0].mxu0
  %v4187 = vpop.f32.mrb[0].mxu0
  %4188 = vdwg.mxu0
  %4189 = vmatprep.subr.bf16.mxu0 %v3304
  %4190 = vmatpush1.bf16.msra.mxu0 %v3303
  %4191 = vmatprep.subr.bf16.mxu0 %v3309
  %4192 = vmatpush1.bf16.msra.mxu0 %v3308
  %4193 = vmatprep.subr.bf16.mxu0 %v3314
  %4194 = vmatpush1.bf16.msra.mxu0 %v3313
  %4195 = vmatprep.subr.bf16.mxu0 %v3319
  %4196 = vmatpush1.bf16.msra.mxu0 %v3318
  %4197 = vmatprep.subr.bf16.mxu0 %v3324
  %4198 = vmatpush1.bf16.msra.mxu0 %v3323
  %4199 = vmatprep.subr.bf16.mxu0 %v3329
  %4200 = vmatpush1.bf16.msra.mxu0 %v3328
  %4201 = vmatprep.subr.bf16.mxu0 %v3334
  %4202 = vmatpush1.bf16.msra.mxu0 %v3333
  %4203 = vmatprep.subr.bf16.mxu0 %v3339
  %4204 = vmatpush1.bf16.msra.mxu0 %v3338
  %4205 = vmatprep.subr.bf16.mxu0 %v3344
  %4206 = vmatpush1.bf16.msra.mxu0 %v3343
  %4207 = vmatprep.subr.bf16.mxu0 %v3349
  %4208 = vmatpush1.bf16.msra.mxu0 %v3348
  %4209 = vmatprep.subr.bf16.mxu0 %v3354
  %4210 = vmatpush1.bf16.msra.mxu0 %v3353
  %4211 = vmatprep.subr.bf16.mxu0 %v3359
  %4212 = vmatpush1.bf16.msra.mxu0 %v3358
  %4213 = vmatprep.subr.bf16.mxu0 %v3364
  %4214 = vmatpush1.bf16.msra.mxu0 %v3363
  %4215 = vmatprep.subr.bf16.mxu0 %v3369
  %4216 = vmatpush1.bf16.msra.mxu0 %v3368
  %4217 = vmatprep.subr.bf16.mxu0 %v3374
  %4218 = vmatpush1.bf16.msra.mxu0 %v3373
  %4219 = vmatprep.subr.bf16.mxu0 %v3379
  %4220 = vmatpush1.bf16.msra.mxu0 %v3378
  %4221 = vmatprep.mubr.bf16.mxu0 %v1271
  %4222 = vmatmul.mubr.bf16.gmra.mrb[0].mxu0 %v1270
  %v4223 = vpop.f32.mrb[0].mxu0
  %v4224 = vadd.f32 %v4183, %v4223
  %v4225 = vpop.f32.mrb[0].mxu0
  %v4226 = vadd.f32 %v4185, %v4225
  %v4227 = vpop.f32.mrb[0].mxu0
  %v4228 = vpop.f32.mrb[0].mxu0
  %4229 = vdwg.mxu0
  %4230 = vmatprep.subr.bf16.mxu0 %v3384
  %4231 = vmatpush1.bf16.msra.mxu0 %v3383
  %4232 = vmatprep.subr.bf16.mxu0 %v3389
  %4233 = vmatpush1.bf16.msra.mxu0 %v3388
  %4234 = vmatprep.subr.bf16.mxu0 %v3394
  %4235 = vmatpush1.bf16.msra.mxu0 %v3393
  %4236 = vmatprep.subr.bf16.mxu0 %v3399
  %4237 = vmatpush1.bf16.msra.mxu0 %v3398
  %4238 = vmatprep.subr.bf16.mxu0 %v3404
  %4239 = vmatpush1.bf16.msra.mxu0 %v3403
  %4240 = vmatprep.subr.bf16.mxu0 %v3409
  %4241 = vmatpush1.bf16.msra.mxu0 %v3408
  %4242 = vmatprep.subr.bf16.mxu0 %v3414
  %4243 = vmatpush1.bf16.msra.mxu0 %v3413
  %4244 = vmatprep.subr.bf16.mxu0 %v3419
  %4245 = vmatpush1.bf16.msra.mxu0 %v3418
  %4246 = vmatprep.subr.bf16.mxu0 %v3424
  %4247 = vmatpush1.bf16.msra.mxu0 %v3423
  %4248 = vmatprep.subr.bf16.mxu0 %v3429
  %4249 = vmatpush1.bf16.msra.mxu0 %v3428
  %4250 = vmatprep.subr.bf16.mxu0 %v3434
  %4251 = vmatpush1.bf16.msra.mxu0 %v3433
  %4252 = vmatprep.subr.bf16.mxu0 %v3439
  %4253 = vmatpush1.bf16.msra.mxu0 %v3438
  %4254 = vmatprep.subr.bf16.mxu0 %v3444
  %4255 = vmatpush1.bf16.msra.mxu0 %v3443
  %4256 = vmatprep.subr.bf16.mxu0 %v3449
  %4257 = vmatpush1.bf16.msra.mxu0 %v3448
  %4258 = vmatprep.subr.bf16.mxu0 %v3454
  %4259 = vmatpush1.bf16.msra.mxu0 %v3453
  %4260 = vmatprep.subr.bf16.mxu0 %v3459
  %4261 = vmatpush1.bf16.msra.mxu0 %v3458
  %4262 = vmatprep.mubr.bf16.mxu0 %v1273
  %4263 = vmatmul.mubr.bf16.gmra.mrb[0].mxu0 %v1272
  %v4264 = vpop.f32.mrb[0].mxu0
  %v4265 = vadd.f32 %v4224, %v4264
  %v4266 = vpop.f32.mrb[0].mxu0
  %v4267 = vadd.f32 %v4226, %v4266
  %v4268 = vpop.f32.mrb[0].mxu0
  %v4269 = vpop.f32.mrb[0].mxu0
  %4270 = vdwg.mxu0
  %4271 = vmatprep.subr.bf16.mxu0 0
  %4272 = vmatpush1.bf16.msra.mxu0 %v3065
  %4273 = vmatprep.subr.bf16.mxu0 0
  %4274 = vmatpush1.bf16.msra.mxu0 %v3070
  %4275 = vmatprep.subr.bf16.mxu0 0
  %4276 = vmatpush1.bf16.msra.mxu0 %v3075
  %4277 = vmatprep.subr.bf16.mxu0 0
  %4278 = vmatpush1.bf16.msra.mxu0 %v3080
  %4279 = vmatprep.subr.bf16.mxu0 0
  %4280 = vmatpush1.bf16.msra.mxu0 %v3085
  %4281 = vmatprep.subr.bf16.mxu0 0
  %4282 = vmatpush1.bf16.msra.mxu0 %v3090
  %4283 = vmatprep.subr.bf16.mxu0 0
  %4284 = vmatpush1.bf16.msra.mxu0 %v3095
  %4285 = vmatprep.subr.bf16.mxu0 0
  %4286 = vmatpush1.bf16.msra.mxu0 %v3100
  %4287 = vmatprep.subr.bf16.mxu0 0
  %4288 = vmatpush1.bf16.msra.mxu0 %v3105
  %4289 = vmatprep.subr.bf16.mxu0 0
  %4290 = vmatpush1.bf16.msra.mxu0 %v3110
  %4291 = vmatprep.subr.bf16.mxu0 0
  %4292 = vmatpush1.bf16.msra.mxu0 %v3115
  %4293 = vmatprep.subr.bf16.mxu0 0
  %4294 = vmatpush1.bf16.msra.mxu0 %v3120
  %4295 = vmatprep.subr.bf16.mxu0 0
  %4296 = vmatpush1.bf16.msra.mxu0 %v3125
  %4297 = vmatprep.subr.bf16.mxu0 0
  %4298 = vmatpush1.bf16.msra.mxu0 %v3130
  %4299 = vmatprep.subr.bf16.mxu0 0
  %4300 = vmatpush1.bf16.msra.mxu0 %v3135
  %4301 = vmatprep.subr.bf16.mxu0 0
  %4302 = vmatpush1.bf16.msra.mxu0 %v3140
  %4303 = vmatprep.mubr.bf16.mxu0 %v1265
  %4304 = vmatmul.mubr.bf16.gmra.mrb[0].mxu0 %v1264
  %v4305 = vpop.f32.mrb[0].mxu0
  %v4306 = vadd.f32 %v1775, %v4305
  %v4307 = vpop.f32.mrb[0].mxu0
  %v4308 = vpop.f32.mrb[0].mxu0
  %v4309 = vpop.f32.mrb[0].mxu0
  %4310 = vdwg.mxu0
  %4311 = vmatprep.subr.bf16.mxu0 0
  %4312 = vmatpush1.bf16.msra.mxu0 %v3145
  %4313 = vmatprep.subr.bf16.mxu0 0
  %4314 = vmatpush1.bf16.msra.mxu0 %v3150
  %4315 = vmatprep.subr.bf16.mxu0 0
  %4316 = vmatpush1.bf16.msra.mxu0 %v3155
  %4317 = vmatprep.subr.bf16.mxu0 0
  %4318 = vmatpush1.bf16.msra.mxu0 %v3160
  %4319 = vmatprep.subr.bf16.mxu0 0
  %4320 = vmatpush1.bf16.msra.mxu0 %v3165
  %4321 = vmatprep.subr.bf16.mxu0 0
  %4322 = vmatpush1.bf16.msra.mxu0 %v3170
  %4323 = vmatprep.subr.bf16.mxu0 0
  %4324 = vmatpush1.bf16.msra.mxu0 %v3175
  %4325 = vmatprep.subr.bf16.mxu0 0
  %4326 = vmatpush1.bf16.msra.mxu0 %v3180
  %4327 = vmatprep.subr.bf16.mxu0 0
  %4328 = vmatpush1.bf16.msra.mxu0 %v3185
  %4329 = vmatprep.subr.bf16.mxu0 0
  %4330 = vmatpush1.bf16.msra.mxu0 %v3190
  %4331 = vmatprep.subr.bf16.mxu0 0
  %4332 = vmatpush1.bf16.msra.mxu0 %v3195
  %4333 = vmatprep.subr.bf16.mxu0 0
  %4334 = vmatpush1.bf16.msra.mxu0 %v3200
  %4335 = vmatprep.subr.bf16.mxu0 0
  %4336 = vmatpush1.bf16.msra.mxu0 %v3205
  %4337 = vmatprep.subr.bf16.mxu0 0
  %4338 = vmatpush1.bf16.msra.mxu0 %v3210
  %4339 = vmatprep.subr.bf16.mxu0 0
  %4340 = vmatpush1.bf16.msra.mxu0 %v3215
  %4341 = vmatprep.subr.bf16.mxu0 0
  %4342 = vmatpush1.bf16.msra.mxu0 %v3220
  %4343 = vmatprep.mubr.bf16.mxu0 %v1267
  %4344 = vmatmul.mubr.bf16.gmra.mrb[0].mxu0 %v1266
  %v4345 = vpop.f32.mrb[0].mxu0
  %v4346 = vadd.f32 %v4306, %v4345
  %v4347 = vpop.f32.mrb[0].mxu0
  %v4348 = vpop.f32.mrb[0].mxu0
  %v4349 = vpop.f32.mrb[0].mxu0
  %4350 = vdwg.mxu0
  %4351 = vmatprep.subr.bf16.mxu0 0
  %4352 = vmatpush1.bf16.msra.mxu0 %v3225
  %4353 = vmatprep.subr.bf16.mxu0 0
  %4354 = vmatpush1.bf16.msra.mxu0 %v3230
  %4355 = vmatprep.subr.bf16.mxu0 0
  %4356 = vmatpush1.bf16.msra.mxu0 %v3235
  %4357 = vmatprep.subr.bf16.mxu0 0
  %4358 = vmatpush1.bf16.msra.mxu0 %v3240
  %4359 = vmatprep.subr.bf16.mxu0 0
  %4360 = vmatpush1.bf16.msra.mxu0 %v3245
  %4361 = vmatprep.subr.bf16.mxu0 0
  %4362 = vmatpush1.bf16.msra.mxu0 %v3250
  %4363 = vmatprep.subr.bf16.mxu0 0
  %4364 = vmatpush1.bf16.msra.mxu0 %v3255
  %4365 = vmatprep.subr.bf16.mxu0 0
  %4366 = vmatpush1.bf16.msra.mxu0 %v3260
  %4367 = vmatprep.subr.bf16.mxu0 0
  %4368 = vmatpush1.bf16.msra.mxu0 %v3265
  %4369 = vmatprep.subr.bf16.mxu0 0
  %4370 = vmatpush1.bf16.msra.mxu0 %v3270
  %4371 = vmatprep.subr.bf16.mxu0 0
  %4372 = vmatpush1.bf16.msra.mxu0 %v3275
  %4373 = vmatprep.subr.bf16.mxu0 0
  %4374 = vmatpush1.bf16.msra.mxu0 %v3280
  %4375 = vmatprep.subr.bf16.mxu0 0
  %4376 = vmatpush1.bf16.msra.mxu0 %v3285
  %4377 = vmatprep.subr.bf16.mxu0 0
  %4378 = vmatpush1.bf16.msra.mxu0 %v3290
  %4379 = vmatprep.subr.bf16.mxu0 0
  %4380 = vmatpush1.bf16.msra.mxu0 %v3295
  %4381 = vmatprep.subr.bf16.mxu0 0
  %4382 = vmatpush1.bf16.msra.mxu0 %v3300
  %4383 = vmatprep.mubr.bf16.mxu0 %v1269
  %4384 = vmatmul.mubr.bf16.gmra.mrb[0].mxu0 %v1268
  %v4385 = vpop.f32.mrb[0].mxu0
  %v4386 = vadd.f32 %v4346, %v4385
  %v4387 = vpop.f32.mrb[0].mxu0
  %v4388 = vpop.f32.mrb[0].mxu0
  %v4389 = vpop.f32.mrb[0].mxu0
  %4390 = vdwg.mxu0
  %4391 = vmatprep.subr.bf16.mxu0 0
  %4392 = vmatpush1.bf16.msra.mxu0 %v3305
  %4393 = vmatprep.subr.bf16.mxu0 0
  %4394 = vmatpush1.bf16.msra.mxu0 %v3310
  %4395 = vmatprep.subr.bf16.mxu0 0
  %4396 = vmatpush1.bf16.msra.mxu0 %v3315
  %4397 = vmatprep.subr.bf16.mxu0 0
  %4398 = vmatpush1.bf16.msra.mxu0 %v3320
  %4399 = vmatprep.subr.bf16.mxu0 0
  %4400 = vmatpush1.bf16.msra.mxu0 %v3325
  %4401 = vmatprep.subr.bf16.mxu0 0
  %4402 = vmatpush1.bf16.msra.mxu0 %v3330
  %4403 = vmatprep.subr.bf16.mxu0 0
  %4404 = vmatpush1.bf16.msra.mxu0 %v3335
  %4405 = vmatprep.subr.bf16.mxu0 0
  %4406 = vmatpush1.bf16.msra.mxu0 %v3340
  %4407 = vmatprep.subr.bf16.mxu0 0
  %4408 = vmatpush1.bf16.msra.mxu0 %v3345
  %4409 = vmatprep.subr.bf16.mxu0 0
  %4410 = vmatpush1.bf16.msra.mxu0 %v3350
  %4411 = vmatprep.subr.bf16.mxu0 0
  %4412 = vmatpush1.bf16.msra.mxu0 %v3355
  %4413 = vmatprep.subr.bf16.mxu0 0
  %4414 = vmatpush1.bf16.msra.mxu0 %v3360
  %4415 = vmatprep.subr.bf16.mxu0 0
  %4416 = vmatpush1.bf16.msra.mxu0 %v3365
  %4417 = vmatprep.subr.bf16.mxu0 0
  %4418 = vmatpush1.bf16.msra.mxu0 %v3370
  %4419 = vmatprep.subr.bf16.mxu0 0
  %4420 = vmatpush1.bf16.msra.mxu0 %v3375
  %4421 = vmatprep.subr.bf16.mxu0 0
  %4422 = vmatpush1.bf16.msra.mxu0 %v3380
  %4423 = vmatprep.mubr.bf16.mxu0 %v1271
  %4424 = vmatmul.mubr.bf16.gmra.mrb[0].mxu0 %v1270
  %v4425 = vpop.f32.mrb[0].mxu0
  %v4426 = vadd.f32 %v4386, %v4425
  %v4427 = vpop.f32.mrb[0].mxu0
  %v4428 = vpop.f32.mrb[0].mxu0
  %v4429 = vpop.f32.mrb[0].mxu0
  %4430 = vdwg.mxu0
  %4431 = vmatprep.subr.bf16.mxu0 0
  %4432 = vmatpush1.bf16.msra.mxu0 %v3385
  %4433 = vmatprep.subr.bf16.mxu0 0
  %4434 = vmatpush1.bf16.msra.mxu0 %v3390
  %4435 = vmatprep.subr.bf16.mxu0 0
  %4436 = vmatpush1.bf16.msra.mxu0 %v3395
  %4437 = vmatprep.subr.bf16.mxu0 0
  %4438 = vmatpush1.bf16.msra.mxu0 %v3400
  %4439 = vmatprep.subr.bf16.mxu0 0
  %4440 = vmatpush1.bf16.msra.mxu0 %v3405
  %4441 = vmatprep.subr.bf16.mxu0 0
  %4442 = vmatpush1.bf16.msra.mxu0 %v3410
  %4443 = vmatprep.subr.bf16.mxu0 0
  %4444 = vmatpush1.bf16.msra.mxu0 %v3415
  %4445 = vmatprep.subr.bf16.mxu0 0
  %4446 = vmatpush1.bf16.msra.mxu0 %v3420
  %4447 = vmatprep.subr.bf16.mxu0 0
  %4448 = vmatpush1.bf16.msra.mxu0 %v3425
  %4449 = vmatprep.subr.bf16.mxu0 0
  %4450 = vmatpush1.bf16.msra.mxu0 %v3430
  %4451 = vmatprep.subr.bf16.mxu0 0
  %4452 = vmatpush1.bf16.msra.mxu0 %v3435
  %4453 = vmatprep.subr.bf16.mxu0 0
  %4454 = vmatpush1.bf16.msra.mxu0 %v3440
  %4455 = vmatprep.subr.bf16.mxu0 0
  %4456 = vmatpush1.bf16.msra.mxu0 %v3445
  %4457 = vmatprep.subr.bf16.mxu0 0
  %4458 = vmatpush1.bf16.msra.mxu0 %v3450
  %4459 = vmatprep.subr.bf16.mxu0 0
  %4460 = vmatpush1.bf16.msra.mxu0 %v3455
  %4461 = vmatprep.subr.bf16.mxu0 0
  %4462 = vmatpush1.bf16.msra.mxu0 %v3460
  %4463 = vmatprep.mubr.bf16.mxu0 %v1273
  %4464 = vmatmul.mubr.bf16.gmra.mrb[0].mxu0 %v1272
  %v4465 = vpop.f32.mrb[0].mxu0
  %v4466 = vadd.f32 %v4426, %v4465
  %v4467 = vpop.f32.mrb[0].mxu0
  %v4468 = vpop.f32.mrb[0].mxu0
  %v4469 = vpop.f32.mrb[0].mxu0
  %4470 = vdwg.mxu0
  %v4471 = vmax.f32 %v4060, 0.0
  %v4472 = vmax.f32 %v4062, 0.0
  %v4473 = vmax.f32 %v4265, 0.0
  %v4474 = vmax.f32 %v4267, 0.0
  %v4475 = vmax.f32 %v4466, 0.0
  %v4476 = vpack.c.bf16 %v4471, %v4471
  %v4477 = vpack.c.bf16 %v4472, %v4472
  %v4478 = vpack.c.bf16 %v4473, %v4473
  %v4479 = vpack.c.bf16 %v4474, %v4474
  %v4480 = vpack.c.bf16 %v4475, %v4475
  %v4481 = vld [vmem:[%s5] sm:$0xff]
  %v4482 = vld [vmem:[%s5 + $0x8] sm:$0xff]
  %v4483 = vld [vmem:[%s5 + $0x10] sm:$0xff]
  %v4484 = vld [vmem:[%s5 + $0x18] sm:$0xff]
  %v4485 = vld [vmem:[%s5 + $0x20] sm:$0xff]
  %v4486 = vld [vmem:[%s5 + $0x28] sm:$0xff]
  %v4487 = vld [vmem:[%s5 + $0x30] sm:$0xff]
  %v4488 = vld [vmem:[%s5 + $0x38] sm:$0xff]
  %v4489 = vld [vmem:[%s5 + $0x40] sm:$0xff]
  %v4490 = vld [vmem:[%s5 + $0x48] sm:$0xff]
  %v4491 = vld [vmem:[%s5 + $0x50] sm:$0xff]
  %v4492 = vld [vmem:[%s5 + $0x58] sm:$0xff]
  %v4493 = vld [vmem:[%s5 + $0x60] sm:$0xff]
  %v4494 = vld [vmem:[%s5 + $0x68] sm:$0xff]
  %v4495 = vld [vmem:[%s5 + $0x70] sm:$0xff]
  %v4496 = vld [vmem:[%s5 + $0x78] sm:$0xff]
  %v4497 = vld [vmem:[%s5 + $0x80] sm:$0xff]
  %v4498 = vld [vmem:[%s5 + $0x88] sm:$0xff]
  %v4499 = vld [vmem:[%s5 + $0x90] sm:$0xff]
  %v4500 = vld [vmem:[%s5 + $0x98] sm:$0xff]
  %v4501 = vld [vmem:[%s5 + $0xa0] sm:$0xff]
  %v4502 = vld [vmem:[%s5 + $0xa8] sm:$0xff]
  %v4503 = vld [vmem:[%s5 + $0xb0] sm:$0xff]
  %v4504 = vld [vmem:[%s5 + $0xb8] sm:$0xff]
  %v4505 = vld [vmem:[%s5 + $0xc0] sm:$0xff]
  %v4506 = vld [vmem:[%s5 + $0xc8] sm:$0xff]
  %v4507 = vld [vmem:[%s5 + $0xd0] sm:$0xff]
  %v4508 = vld [vmem:[%s5 + $0xd8] sm:$0xff]
  %v4509 = vld [vmem:[%s5 + $0xe0] sm:$0xff]
  %v4510 = vld [vmem:[%s5 + $0xe8] sm:$0xff]
  %v4511 = vld [vmem:[%s5 + $0xf0] sm:$0xff]
  %v4512 = vld [vmem:[%s5 + $0xf8] sm:$0xff]
  %v4513 = vld [vmem:[%s5 + $0x100] sm:$0xff]
  %v4514 = vld [vmem:[%s5 + $0x108] sm:$0xff]
  %v4515 = vld [vmem:[%s5 + $0x110] sm:$0xff]
  %v4516 = vld [vmem:[%s5 + $0x118] sm:$0xff]
  %v4517 = vld [vmem:[%s5 + $0x120] sm:$0xff]
  %v4518 = vld [vmem:[%s5 + $0x128] sm:$0xff]
  %v4519 = vld [vmem:[%s5 + $0x130] sm:$0xff]
  %v4520 = vld [vmem:[%s5 + $0x138] sm:$0xff]
  %v4521 = vld [vmem:[%s5 + $0x140] sm:$0xff]
  %v4522 = vld [vmem:[%s5 + $0x148] sm:$0xff]
  %v4523 = vld [vmem:[%s5 + $0x150] sm:$0xff]
  %v4524 = vld [vmem:[%s5 + $0x158] sm:$0xff]
  %v4525 = vld [vmem:[%s5 + $0x160] sm:$0xff]
  %v4526 = vld [vmem:[%s5 + $0x168] sm:$0xff]
  %v4527 = vld [vmem:[%s5 + $0x170] sm:$0xff]
  %v4528 = vld [vmem:[%s5 + $0x178] sm:$0xff]
  %v4529 = vld [vmem:[%s5 + $0x180] sm:$0xff]
  %v4530 = vld [vmem:[%s5 + $0x188] sm:$0xff]
  %v4531 = vld [vmem:[%s5 + $0x190] sm:$0xff]
  %v4532 = vld [vmem:[%s5 + $0x198] sm:$0xff]
  %v4533 = vld [vmem:[%s5 + $0x1a0] sm:$0xff]
  %v4534 = vld [vmem:[%s5 + $0x1a8] sm:$0xff]
  %v4535 = vld [vmem:[%s5 + $0x1b0] sm:$0xff]
  %v4536 = vld [vmem:[%s5 + $0x1b8] sm:$0xff]
  %v4537 = vld [vmem:[%s5 + $0x1c0] sm:$0xff]
  %v4538 = vld [vmem:[%s5 + $0x1c8] sm:$0xff]
  %v4539 = vld [vmem:[%s5 + $0x1d0] sm:$0xff]
  %v4540 = vld [vmem:[%s5 + $0x1d8] sm:$0xff]
  %v4541 = vld [vmem:[%s5 + $0x1e0] sm:$0xff]
  %v4542 = vld [vmem:[%s5 + $0x1e8] sm:$0xff]
  %v4543 = vld [vmem:[%s5 + $0x1f0] sm:$0xff]
  %v4544 = vld [vmem:[%s5 + $0x1f8] sm:$0xff]
  %v4545 = vld [vmem:[%s5 + $0x200] sm:$0xff]
  %v4546 = vld [vmem:[%s5 + $0x208] sm:$0xff]
  %v4547 = vld [vmem:[%s5 + $0x210] sm:$0xff]
  %v4548 = vld [vmem:[%s5 + $0x218] sm:$0xff]
  %v4549 = vld [vmem:[%s5 + $0x220] sm:$0xff]
  %v4550 = vld [vmem:[%s5 + $0x228] sm:$0xff]
  %v4551 = vld [vmem:[%s5 + $0x230] sm:$0xff]
  %v4552 = vld [vmem:[%s5 + $0x238] sm:$0xff]
  %v4553 = vld [vmem:[%s5 + $0x240] sm:$0xff]
  %v4554 = vld [vmem:[%s5 + $0x248] sm:$0xff]
  %v4555 = vld [vmem:[%s5 + $0x250] sm:$0xff]
  %v4556 = vld [vmem:[%s5 + $0x258] sm:$0xff]
  %v4557 = vld [vmem:[%s5 + $0x260] sm:$0xff]
  %v4558 = vld [vmem:[%s5 + $0x268] sm:$0xff]
  %v4559 = vld [vmem:[%s5 + $0x270] sm:$0xff]
  %v4560 = vld [vmem:[%s5 + $0x278] sm:$0xff]
  %v4561 = vld [vmem:[%s6] sm:$0x3]
  %v4563 = vlaneseq
  %v4564 = vshrl.u32 %v4563, 7
  %v4565 = vsub.s32 0, %v4564
  %v4566 = vrot.slane %v4561, %v4565
  %v4567 = vlaneseq
  %v4568 = vshrl.u32 %v4567, 7
  %v4569 = vsub.s32 1, %v4568
  %v4570 = vrot.slane %v4561, %v4569
  %v4653 = vunpack.c.l.b16 %v4481
  %v4654 = vunpack.c.h.b16 %v4481
  %v4655 = vunpack.c.l.b16 %v4482
  %v4656 = vunpack.c.h.b16 %v4482
  %v4657 = vunpack.c.l.b16 %v4483
  %v4658 = vunpack.c.h.b16 %v4483
  %v4659 = vunpack.c.l.b16 %v4484
  %v4660 = vunpack.c.h.b16 %v4484
  %v4661 = vunpack.c.l.b16 %v4485
  %v4662 = vunpack.c.h.b16 %v4485
  %v4663 = vunpack.c.l.b16 %v4486
  %v4664 = vunpack.c.h.b16 %v4486
  %v4665 = vunpack.c.l.b16 %v4487
  %v4666 = vunpack.c.h.b16 %v4487
  %v4667 = vunpack.c.l.b16 %v4488
  %v4668 = vunpack.c.h.b16 %v4488
  %v4669 = vunpack.c.l.b16 %v4489
  %v4670 = vunpack.c.h.b16 %v4489
  %v4671 = vunpack.c.l.b16 %v4490
  %v4672 = vunpack.c.h.b16 %v4490
  %v4673 = vunpack.c.l.b16 %v4491
  %v4674 = vunpack.c.h.b16 %v4491
  %v4675 = vunpack.c.l.b16 %v4492
  %v4676 = vunpack.c.h.b16 %v4492
  %v4677 = vunpack.c.l.b16 %v4493
  %v4678 = vunpack.c.h.b16 %v4493
  %v4679 = vunpack.c.l.b16 %v4494
  %v4680 = vunpack.c.h.b16 %v4494
  %v4681 = vunpack.c.l.b16 %v4495
  %v4682 = vunpack.c.h.b16 %v4495
  %v4683 = vunpack.c.l.b16 %v4496
  %v4684 = vunpack.c.h.b16 %v4496
  %v4685 = vunpack.c.l.b16 %v4497
  %v4686 = vunpack.c.h.b16 %v4497
  %v4687 = vunpack.c.l.b16 %v4498
  %v4688 = vunpack.c.h.b16 %v4498
  %v4689 = vunpack.c.l.b16 %v4499
  %v4690 = vunpack.c.h.b16 %v4499
  %v4691 = vunpack.c.l.b16 %v4500
  %v4692 = vunpack.c.h.b16 %v4500
  %v4693 = vunpack.c.l.b16 %v4501
  %v4694 = vunpack.c.h.b16 %v4501
  %v4695 = vunpack.c.l.b16 %v4502
  %v4696 = vunpack.c.h.b16 %v4502
  %v4697 = vunpack.c.l.b16 %v4503
  %v4698 = vunpack.c.h.b16 %v4503
  %v4699 = vunpack.c.l.b16 %v4504
  %v4700 = vunpack.c.h.b16 %v4504
  %v4701 = vunpack.c.l.b16 %v4505
  %v4702 = vunpack.c.h.b16 %v4505
  %v4703 = vunpack.c.l.b16 %v4506
  %v4704 = vunpack.c.h.b16 %v4506
  %v4705 = vunpack.c.l.b16 %v4507
  %v4706 = vunpack.c.h.b16 %v4507
  %v4707 = vunpack.c.l.b16 %v4508
  %v4708 = vunpack.c.h.b16 %v4508
  %v4709 = vunpack.c.l.b16 %v4509
  %v4710 = vunpack.c.h.b16 %v4509
  %v4711 = vunpack.c.l.b16 %v4510
  %v4712 = vunpack.c.h.b16 %v4510
  %v4713 = vunpack.c.l.b16 %v4511
  %v4714 = vunpack.c.h.b16 %v4511
  %v4715 = vunpack.c.l.b16 %v4512
  %v4716 = vunpack.c.h.b16 %v4512
  %v4717 = vunpack.c.l.b16 %v4513
  %v4718 = vunpack.c.h.b16 %v4513
  %v4719 = vunpack.c.l.b16 %v4514
  %v4720 = vunpack.c.h.b16 %v4514
  %v4721 = vunpack.c.l.b16 %v4515
  %v4722 = vunpack.c.h.b16 %v4515
  %v4723 = vunpack.c.l.b16 %v4516
  %v4724 = vunpack.c.h.b16 %v4516
  %v4725 = vunpack.c.l.b16 %v4517
  %v4726 = vunpack.c.h.b16 %v4517
  %v4727 = vunpack.c.l.b16 %v4518
  %v4728 = vunpack.c.h.b16 %v4518
  %v4729 = vunpack.c.l.b16 %v4519
  %v4730 = vunpack.c.h.b16 %v4519
  %v4731 = vunpack.c.l.b16 %v4520
  %v4732 = vunpack.c.h.b16 %v4520
  %v4733 = vunpack.c.l.b16 %v4521
  %v4734 = vunpack.c.h.b16 %v4521
  %v4735 = vunpack.c.l.b16 %v4522
  %v4736 = vunpack.c.h.b16 %v4522
  %v4737 = vunpack.c.l.b16 %v4523
  %v4738 = vunpack.c.h.b16 %v4523
  %v4739 = vunpack.c.l.b16 %v4524
  %v4740 = vunpack.c.h.b16 %v4524
  %v4741 = vunpack.c.l.b16 %v4525
  %v4742 = vunpack.c.h.b16 %v4525
  %v4743 = vunpack.c.l.b16 %v4526
  %v4744 = vunpack.c.h.b16 %v4526
  %v4745 = vunpack.c.l.b16 %v4527
  %v4746 = vunpack.c.h.b16 %v4527
  %v4747 = vunpack.c.l.b16 %v4528
  %v4748 = vunpack.c.h.b16 %v4528
  %v4749 = vunpack.c.l.b16 %v4529
  %v4750 = vunpack.c.h.b16 %v4529
  %v4751 = vunpack.c.l.b16 %v4530
  %v4752 = vunpack.c.h.b16 %v4530
  %v4753 = vunpack.c.l.b16 %v4531
  %v4754 = vunpack.c.h.b16 %v4531
  %v4755 = vunpack.c.l.b16 %v4532
  %v4756 = vunpack.c.h.b16 %v4532
  %v4757 = vunpack.c.l.b16 %v4533
  %v4758 = vunpack.c.h.b16 %v4533
  %v4759 = vunpack.c.l.b16 %v4534
  %v4760 = vunpack.c.h.b16 %v4534
  %v4761 = vunpack.c.l.b16 %v4535
  %v4762 = vunpack.c.h.b16 %v4535
  %v4763 = vunpack.c.l.b16 %v4536
  %v4764 = vunpack.c.h.b16 %v4536
  %v4765 = vunpack.c.l.b16 %v4537
  %v4766 = vunpack.c.h.b16 %v4537
  %v4767 = vunpack.c.l.b16 %v4538
  %v4768 = vunpack.c.h.b16 %v4538
  %v4769 = vunpack.c.l.b16 %v4539
  %v4770 = vunpack.c.h.b16 %v4539
  %v4771 = vunpack.c.l.b16 %v4540
  %v4772 = vunpack.c.h.b16 %v4540
  %v4773 = vunpack.c.l.b16 %v4541
  %v4774 = vunpack.c.h.b16 %v4541
  %v4775 = vunpack.c.l.b16 %v4542
  %v4776 = vunpack.c.h.b16 %v4542
  %v4777 = vunpack.c.l.b16 %v4543
  %v4778 = vunpack.c.h.b16 %v4543
  %v4779 = vunpack.c.l.b16 %v4544
  %v4780 = vunpack.c.h.b16 %v4544
  %v4781 = vunpack.c.l.b16 %v4545
  %v4782 = vunpack.c.h.b16 %v4545
  %v4783 = vunpack.c.l.b16 %v4546
  %v4784 = vunpack.c.h.b16 %v4546
  %v4785 = vunpack.c.l.b16 %v4547
  %v4786 = vunpack.c.h.b16 %v4547
  %v4787 = vunpack.c.l.b16 %v4548
  %v4788 = vunpack.c.h.b16 %v4548
  %v4789 = vunpack.c.l.b16 %v4549
  %v4790 = vunpack.c.h.b16 %v4549
  %v4791 = vunpack.c.l.b16 %v4550
  %v4792 = vunpack.c.h.b16 %v4550
  %v4793 = vunpack.c.l.b16 %v4551
  %v4794 = vunpack.c.h.b16 %v4551
  %v4795 = vunpack.c.l.b16 %v4552
  %v4796 = vunpack.c.h.b16 %v4552
  %v4797 = vunpack.c.l.b16 %v4553
  %v4798 = vunpack.c.h.b16 %v4553
  %v4799 = vunpack.c.l.b16 %v4554
  %v4800 = vunpack.c.h.b16 %v4554
  %v4801 = vunpack.c.l.b16 %v4555
  %v4802 = vunpack.c.h.b16 %v4555
  %v4803 = vunpack.c.l.b16 %v4556
  %v4804 = vunpack.c.h.b16 %v4556
  %v4805 = vunpack.c.l.b16 %v4557
  %v4806 = vunpack.c.h.b16 %v4557
  %v4807 = vunpack.c.l.b16 %v4558
  %v4808 = vunpack.c.h.b16 %v4558
  %v4809 = vunpack.c.l.b16 %v4559
  %v4810 = vunpack.c.h.b16 %v4559
  %v4811 = vunpack.c.l.b16 %v4560
  %v4812 = vunpack.c.h.b16 %v4560
  %v4813 = vpack.c.b16 %v4655, %v4653
  %v4814 = vpack.c.b16 %v4656, %v4654
  %v4815 = vpack.c.b16 %v4659, %v4657
  %v4816 = vpack.c.b16 %v4660, %v4658
  %v4817 = vpack.c.b16 %v4663, %v4661
  %v4818 = vpack.c.b16 %v4664, %v4662
  %v4819 = vpack.c.b16 %v4667, %v4665
  %v4820 = vpack.c.b16 %v4668, %v4666
  %v4821 = vpack.c.b16 %v4671, %v4669
  %v4822 = vpack.c.b16 %v4672, %v4670
  %v4823 = vpack.c.b16 %v4675, %v4673
  %v4824 = vpack.c.b16 %v4676, %v4674
  %v4825 = vpack.c.b16 %v4679, %v4677
  %v4826 = vpack.c.b16 %v4680, %v4678
  %v4827 = vpack.c.b16 %v4683, %v4681
  %v4828 = vpack.c.b16 %v4684, %v4682
  %v4829 = vpack.c.b16 %v4687, %v4685
  %v4830 = vpack.c.b16 %v4688, %v4686
  %v4831 = vpack.c.b16 %v4691, %v4689
  %v4832 = vpack.c.b16 %v4692, %v4690
  %v4833 = vpack.c.b16 %v4695, %v4693
  %v4834 = vpack.c.b16 %v4696, %v4694
  %v4835 = vpack.c.b16 %v4699, %v4697
  %v4836 = vpack.c.b16 %v4700, %v4698
  %v4837 = vpack.c.b16 %v4703, %v4701
  %v4838 = vpack.c.b16 %v4704, %v4702
  %v4839 = vpack.c.b16 %v4707, %v4705
  %v4840 = vpack.c.b16 %v4708, %v4706
  %v4841 = vpack.c.b16 %v4711, %v4709
  %v4842 = vpack.c.b16 %v4712, %v4710
  %v4843 = vpack.c.b16 %v4715, %v4713
  %v4844 = vpack.c.b16 %v4716, %v4714
  %v4845 = vpack.c.b16 %v4719, %v4717
  %v4846 = vpack.c.b16 %v4720, %v4718
  %v4847 = vpack.c.b16 %v4723, %v4721
  %v4848 = vpack.c.b16 %v4724, %v4722
  %v4849 = vpack.c.b16 %v4727, %v4725
  %v4850 = vpack.c.b16 %v4728, %v4726
  %v4851 = vpack.c.b16 %v4731, %v4729
  %v4852 = vpack.c.b16 %v4732, %v4730
  %v4853 = vpack.c.b16 %v4735, %v4733
  %v4854 = vpack.c.b16 %v4736, %v4734
  %v4855 = vpack.c.b16 %v4739, %v4737
  %v4856 = vpack.c.b16 %v4740, %v4738
  %v4857 = vpack.c.b16 %v4743, %v4741
  %v4858 = vpack.c.b16 %v4744, %v4742
  %v4859 = vpack.c.b16 %v4747, %v4745
  %v4860 = vpack.c.b16 %v4748, %v4746
  %v4861 = vpack.c.b16 %v4751, %v4749
  %v4862 = vpack.c.b16 %v4752, %v4750
  %v4863 = vpack.c.b16 %v4755, %v4753
  %v4864 = vpack.c.b16 %v4756, %v4754
  %v4865 = vpack.c.b16 %v4759, %v4757
  %v4866 = vpack.c.b16 %v4760, %v4758
  %v4867 = vpack.c.b16 %v4763, %v4761
  %v4868 = vpack.c.b16 %v4764, %v4762
  %v4869 = vpack.c.b16 %v4767, %v4765
  %v4870 = vpack.c.b16 %v4768, %v4766
  %v4871 = vpack.c.b16 %v4771, %v4769
  %v4872 = vpack.c.b16 %v4772, %v4770
  %v4873 = vpack.c.b16 %v4775, %v4773
  %v4874 = vpack.c.b16 %v4776, %v4774
  %v4875 = vpack.c.b16 %v4779, %v4777
  %v4876 = vpack.c.b16 %v4780, %v4778
  %v4877 = vpack.c.b16 %v4783, %v4781
  %v4878 = vpack.c.b16 %v4784, %v4782
  %v4879 = vpack.c.b16 %v4787, %v4785
  %v4880 = vpack.c.b16 %v4788, %v4786
  %v4881 = vpack.c.b16 %v4791, %v4789
  %v4882 = vpack.c.b16 %v4792, %v4790
  %v4883 = vpack.c.b16 %v4795, %v4793
  %v4884 = vpack.c.b16 %v4796, %v4794
  %v4885 = vpack.c.b16 %v4799, %v4797
  %v4886 = vpack.c.b16 %v4800, %v4798
  %v4887 = vpack.c.b16 %v4803, %v4801
  %v4888 = vpack.c.b16 %v4804, %v4802
  %v4889 = vpack.c.b16 %v4807, %v4805
  %v4890 = vpack.c.b16 %v4808, %v4806
  %v4891 = vpack.c.b16 %v4811, %v4809
  %v4892 = vpack.c.b16 %v4812, %v4810
  %4973 = vmatprep.subr.bf16.mxu0 %v4814
  %4974 = vmatpush1.bf16.msra.mxu0 %v4813
  %4975 = vmatprep.subr.bf16.mxu0 %v4816
  %4976 = vmatpush1.bf16.msra.mxu0 %v4815
  %4977 = vmatprep.subr.bf16.mxu0 %v4818
  %4978 = vmatpush1.bf16.msra.mxu0 %v4817
  %4979 = vmatprep.subr.bf16.mxu0 %v4820
  %4980 = vmatpush1.bf16.msra.mxu0 %v4819
  %4981 = vmatprep.subr.bf16.mxu0 %v4822
  %4982 = vmatpush1.bf16.msra.mxu0 %v4821
  %4983 = vmatprep.subr.bf16.mxu0 %v4824
  %4984 = vmatpush1.bf16.msra.mxu0 %v4823
  %4985 = vmatprep.subr.bf16.mxu0 %v4826
  %4986 = vmatpush1.bf16.msra.mxu0 %v4825
  %4987 = vmatprep.subr.bf16.mxu0 %v4828
  %4988 = vmatpush1.bf16.msra.mxu0 %v4827
  %4989 = vmatprep.subr.bf16.mxu0 %v4830
  %4990 = vmatpush1.bf16.msra.mxu0 %v4829
  %4991 = vmatprep.subr.bf16.mxu0 %v4832
  %4992 = vmatpush1.bf16.msra.mxu0 %v4831
  %4993 = vmatprep.subr.bf16.mxu0 %v4834
  %4994 = vmatpush1.bf16.msra.mxu0 %v4833
  %4995 = vmatprep.subr.bf16.mxu0 %v4836
  %4996 = vmatpush1.bf16.msra.mxu0 %v4835
  %4997 = vmatprep.subr.bf16.mxu0 %v4838
  %4998 = vmatpush1.bf16.msra.mxu0 %v4837
  %4999 = vmatprep.subr.bf16.mxu0 %v4840
  %5000 = vmatpush1.bf16.msra.mxu0 %v4839
  %5001 = vmatprep.subr.bf16.mxu0 %v4842
  %5002 = vmatpush1.bf16.msra.mxu0 %v4841
  %5003 = vmatprep.subr.bf16.mxu0 %v4844
  %5004 = vmatpush1.bf16.msra.mxu0 %v4843
  %5005 = vmatprep.mubr.bf16.mxu0 %v4477
  %5006 = vmatmul.mubr.bf16.gmra.mrb[0].mxu0 %v4476
  %v5007 = vpop.f32.mrb[0].mxu0
  %v5008 = vadd.f32 %v4566, %v5007
  %v5009 = vpop.f32.mrb[0].mxu0
  %v5010 = vadd.f32 %v4570, %v5009
  %v5011 = vpop.f32.mrb[0].mxu0
  %v5012 = vpop.f32.mrb[0].mxu0
  %5013 = vdwg.mxu0
  %5014 = vmatprep.subr.bf16.mxu0 %v4846
  %5015 = vmatpush1.bf16.msra.mxu0 %v4845
  %5016 = vmatprep.subr.bf16.mxu0 %v4848
  %5017 = vmatpush1.bf16.msra.mxu0 %v4847
  %5018 = vmatprep.subr.bf16.mxu0 %v4850
  %5019 = vmatpush1.bf16.msra.mxu0 %v4849
  %5020 = vmatprep.subr.bf16.mxu0 %v4852
  %5021 = vmatpush1.bf16.msra.mxu0 %v4851
  %5022 = vmatprep.subr.bf16.mxu0 %v4854
  %5023 = vmatpush1.bf16.msra.mxu0 %v4853
  %5024 = vmatprep.subr.bf16.mxu0 %v4856
  %5025 = vmatpush1.bf16.msra.mxu0 %v4855
  %5026 = vmatprep.subr.bf16.mxu0 %v4858
  %5027 = vmatpush1.bf16.msra.mxu0 %v4857
  %5028 = vmatprep.subr.bf16.mxu0 %v4860
  %5029 = vmatpush1.bf16.msra.mxu0 %v4859
  %5030 = vmatprep.subr.bf16.mxu0 %v4862
  %5031 = vmatpush1.bf16.msra.mxu0 %v4861
  %5032 = vmatprep.subr.bf16.mxu0 %v4864
  %5033 = vmatpush1.bf16.msra.mxu0 %v4863
  %5034 = vmatprep.subr.bf16.mxu0 %v4866
  %5035 = vmatpush1.bf16.msra.mxu0 %v4865
  %5036 = vmatprep.subr.bf16.mxu0 %v4868
  %5037 = vmatpush1.bf16.msra.mxu0 %v4867
  %5038 = vmatprep.subr.bf16.mxu0 %v4870
  %5039 = vmatpush1.bf16.msra.mxu0 %v4869
  %5040 = vmatprep.subr.bf16.mxu0 %v4872
  %5041 = vmatpush1.bf16.msra.mxu0 %v4871
  %5042 = vmatprep.subr.bf16.mxu0 %v4874
  %5043 = vmatpush1.bf16.msra.mxu0 %v4873
  %5044 = vmatprep.subr.bf16.mxu0 %v4876
  %5045 = vmatpush1.bf16.msra.mxu0 %v4875
  %5046 = vmatprep.mubr.bf16.mxu0 %v4479
  %5047 = vmatmul.mubr.bf16.gmra.mrb[0].mxu0 %v4478
  %v5048 = vpop.f32.mrb[0].mxu0
  %v5049 = vadd.f32 %v5008, %v5048
  %v5050 = vpop.f32.mrb[0].mxu0
  %v5051 = vadd.f32 %v5010, %v5050
  %v5052 = vpop.f32.mrb[0].mxu0
  %v5053 = vpop.f32.mrb[0].mxu0
  %5054 = vdwg.mxu0
  %5055 = vmatprep.subr.bf16.mxu0 %v4878
  %5056 = vmatpush1.bf16.msra.mxu0 %v4877
  %5057 = vmatprep.subr.bf16.mxu0 %v4880
  %5058 = vmatpush1.bf16.msra.mxu0 %v4879
  %5059 = vmatprep.subr.bf16.mxu0 %v4882
  %5060 = vmatpush1.bf16.msra.mxu0 %v4881
  %5061 = vmatprep.subr.bf16.mxu0 %v4884
  %5062 = vmatpush1.bf16.msra.mxu0 %v4883
  %5063 = vmatprep.subr.bf16.mxu0 %v4886
  %5064 = vmatpush1.bf16.msra.mxu0 %v4885
  %5065 = vmatprep.subr.bf16.mxu0 %v4888
  %5066 = vmatpush1.bf16.msra.mxu0 %v4887
  %5067 = vmatprep.subr.bf16.mxu0 %v4890
  %5068 = vmatpush1.bf16.msra.mxu0 %v4889
  %5069 = vmatprep.subr.bf16.mxu0 %v4892
  %5070 = vmatpush1.bf16.msra.mxu0 %v4891
  %5071 = vmatprep.subr.bf16.mxu0 0
  %5072 = vmatpush1.bf16.msra.mxu0 0
  %5073 = vmatprep.subr.bf16.mxu0 0
  %5074 = vmatpush1.bf16.msra.mxu0 0
  %5075 = vmatprep.subr.bf16.mxu0 0
  %5076 = vmatpush1.bf16.msra.mxu0 0
  %5077 = vmatprep.subr.bf16.mxu0 0
  %5078 = vmatpush1.bf16.msra.mxu0 0
  %5079 = vmatprep.subr.bf16.mxu0 0
  %5080 = vmatpush1.bf16.msra.mxu0 0
  %5081 = vmatprep.subr.bf16.mxu0 0
  %5082 = vmatpush1.bf16.msra.mxu0 0
  %5083 = vmatprep.subr.bf16.mxu0 0
  %5084 = vmatpush1.bf16.msra.mxu0 0
  %5085 = vmatprep.subr.bf16.mxu0 0
  %5086 = vmatpush1.bf16.msra.mxu0 0
  %5087 = vmatprep.mubr.bf16.mxu0 0
  %5088 = vmatmul.mubr.bf16.gmra.mrb[0].mxu0 %v4480
  %v5089 = vpop.f32.mrb[0].mxu0
  %v5090 = vadd.f32 %v5049, %v5089
  %v5091 = vpop.f32.mrb[0].mxu0
  %v5092 = vadd.f32 %v5051, %v5091
  %v5093 = vpop.f32.mrb[0].mxu0
  %v5094 = vpop.f32.mrb[0].mxu0
  %5095 = vdwg.mxu0
  %5096 = vst [vmem:[%s7] sm:$0xff] %v5090
  %5097 = vst [vmem:[%s7 + $0x8] sm:$0xff] %v5092
  // Predicated region
  $region30: #{cnn_forward.3} parent=0 // pred_check
    _
  $region31: #{cnn_forward.3} parent=0 // pred_check_branch
    %5099 = sbr.rel (0) target = $region33
  $region32: #{cnn_forward.3} parent=0 // pred_region
    _
  $region33: #{cnn_forward.3} parent=0 // pred_fallthru
    _
  // Predicated region
  $region34: #{cnn_forward.3} parent=0 // pred_check
    _
  $region35: #{cnn_forward.3} parent=0 // pred_check_branch
    %5101 = sbr.rel (0) target = $region37
  $region36: #{cnn_forward.3} parent=0 // pred_region
    _
  $region37: #{cnn_forward.3} parent=0 // pred_fallthru
    _

// kernel: cnn_forward.2
$region0: #{cnn_forward.2}
  #allocation0 [shape = 'u32[]', space=smem, size = 0x4, offset = 0x4, fixed_abs, tag = 'smem constant byte address 0x4 - core index']
  #allocation1 [shape = 'u32[144,128]{1,0:T(1,128)}', space=vmem, size = 0x12000, scoped, tag = 'internal scratch']
  #allocation2 [shape = 'f32[1064,128]{1,0:T(8,128)}', space=vmem, size = 0x85000, scoped, tag = 'scratch operand']
  #allocation3 [shape = 'f32[232,128]{1,0:T(8,128)}', space=vmem, size = 0x1d000, scoped, tag = 'scratch operand']
  #allocation4 [shape = 'f32[8,256]{1,0:T(8,128)}', space=vmem, size = 0x2000, scoped, tag = 'scratch operand']
  %s0 = inlined_call_operand.vmem [shape: bf16[8,1024,32], index: 0, kind: input, shape index: {}]
  %s1 = inlined_call_operand.vmem [shape: bf16[32,128], index: 1, kind: input, shape index: {}]
  %s2 = inlined_call_operand.vmem [shape: f32[1,128], index: 2, kind: input, shape index: {}]
  %s3 = inlined_call_operand.vmem [shape: bf16[232,1024], index: 3, kind: input, shape index: {}]
  %s4 = inlined_call_operand.vmem [shape: bf16[512,128], index: 4, kind: input, shape index: {}]
  %s5 = inlined_call_operand.vmem [shape: f32[1,128], index: 5, kind: input, shape index: {}]
  %s6 = inlined_call_operand.vmem [shape: bf16[56,210], index: 6, kind: input, shape index: {}]
  %s7 = inlined_call_operand.vmem [shape: bf16[512,128], index: 7, kind: input, shape index: {}]
  %s8 = inlined_call_operand.vmem [shape: f32[1,128], index: 8, kind: input, shape index: {}]
  %s9 = inlined_call_operand.vmem [shape: bf16[16,42], index: 9, kind: input, shape index: {}]
  %s10 = inlined_call_operand.vmem [shape: bf16[512,256], index: 10, kind: input, shape index: {}]
  %s11 = inlined_call_operand.vmem [shape: f32[1,256], index: 11, kind: input, shape index: {}]
  %s12 = inlined_call_operand.vmem [shape: bf16[8,256], index: 12, kind: output, shape index: {}]
  %s13 = sld [smem:[#allocation0]]
  $region65: #{cnn_forward.2} parent=0
    _
  %s15 = ssub.s32 1, %s13
  %s16 = scalar_select 0, %s15, %s13
  // Predicated region
  $region2: #{cnn_forward.2} parent=0 // pred_check
    _
  $region3: #{cnn_forward.2} parent=0 // pred_check_branch
    %18 = sbr.rel (0) target = $region5
  $region4: #{cnn_forward.2} parent=0 // pred_region
    _
  $region5: #{cnn_forward.2} parent=0 // pred_fallthru
    _
  // Predicated region
  $region6: #{cnn_forward.2} parent=0 // pred_check
    _
  $region7: #{cnn_forward.2} parent=0 // pred_check_branch
    %20 = sbr.rel (0) target = $region9
  $region8: #{cnn_forward.2} parent=0 // pred_region
    _
  $region9: #{cnn_forward.2} parent=0 // pred_fallthru
    _
  // Predicated region
  $region10: #{cnn_forward.2} parent=0 // pred_check
    _
  $region11: #{cnn_forward.2} parent=0 // pred_check_branch
    %22 = sbr.rel (0) target = $region13
  $region12: #{cnn_forward.2} parent=0 // pred_region
    _
  $region13: #{cnn_forward.2} parent=0 // pred_fallthru
    _
  // Predicated region
  $region14: #{cnn_forward.2} parent=0 // pred_check
    _
  $region15: #{cnn_forward.2} parent=0 // pred_check_branch
    %24 = sbr.rel (0) target = $region17
  $region16: #{cnn_forward.2} parent=0 // pred_region
    _
  $region17: #{cnn_forward.2} parent=0 // pred_fallthru
    _
  // Predicated region
  $region18: #{cnn_forward.2} parent=0 // pred_check
    _
  $region19: #{cnn_forward.2} parent=0 // pred_check_branch
    %26 = sbr.rel (0) target = $region21
  $region20: #{cnn_forward.2} parent=0 // pred_region
    _
  $region21: #{cnn_forward.2} parent=0 // pred_fallthru
    _
  // Predicated region
  $region22: #{cnn_forward.2} parent=0 // pred_check
    _
  $region23: #{cnn_forward.2} parent=0 // pred_check_branch
    %28 = sbr.rel (0) target = $region25
  $region24: #{cnn_forward.2} parent=0 // pred_region
    _
  $region25: #{cnn_forward.2} parent=0 // pred_fallthru
    _
  // Predicated region
  $region26: #{cnn_forward.2} parent=0 // pred_check
    _
  $region27: #{cnn_forward.2} parent=0 // pred_check_branch
    %30 = sbr.rel (0) target = $region29
  $region28: #{cnn_forward.2} parent=0 // pred_region
    _
  $region29: #{cnn_forward.2} parent=0 // pred_fallthru
    _
  // Predicated region
  $region30: #{cnn_forward.2} parent=0 // pred_check
    _
  $region31: #{cnn_forward.2} parent=0 // pred_check_branch
    %32 = sbr.rel (0) target = $region33
  $region32: #{cnn_forward.2} parent=0 // pred_region
    _
  $region33: #{cnn_forward.2} parent=0 // pred_fallthru
    _
  // Predicated region
  $region34: #{cnn_forward.2} parent=0 // pred_check
    _
  $region35: #{cnn_forward.2} parent=0 // pred_check_branch
    %34 = sbr.rel (0) target = $region37
  $region36: #{cnn_forward.2} parent=0 // pred_region
    _
  $region37: #{cnn_forward.2} parent=0 // pred_fallthru
    _
  // Predicated region
  $region38: #{cnn_forward.2} parent=0 // pred_check
    _
  $region39: #{cnn_forward.2} parent=0 // pred_check_branch
    %36 = sbr.rel (0) target = $region41
  $region40: #{cnn_forward.2} parent=0 // pred_region
    _
  $region41: #{cnn_forward.2} parent=0 // pred_fallthru
    _
  // Predicated region
  $region42: #{cnn_forward.2} parent=0 // pred_check
    _
  $region43: #{cnn_forward.2} parent=0 // pred_check_branch
    %38 = sbr.rel (0) target = $region45
  $region44: #{cnn_forward.2} parent=0 // pred_region
    _
  $region45: #{cnn_forward.2} parent=0 // pred_fallthru
    _
  // Predicated region
  $region46: #{cnn_forward.2} parent=0 // pred_check
    _
  $region47: #{cnn_forward.2} parent=0 // pred_check_branch
    %40 = sbr.rel (0) target = $region49
  $region48: #{cnn_forward.2} parent=0 // pred_region
    _
  $region49: #{cnn_forward.2} parent=0 // pred_fallthru
    _
  loop: start=0, step=1, limit=8
  $region50: #{cnn_forward.2} parent=0 // loop_pre_header
    _
  $region51: #{cnn_forward.2} parent=0 // loop_header
    %s43 = sphi 0, %s47
    %p44 = scmp.ge.s32.totalorder %s43, 8
  $region52: #{cnn_forward.2} parent=0 // loop_header_branch
    %46 = sbr.rel (%p44) target = $region56
  $region53: #{cnn_forward.2} parent=0 // loop_body
    %s48 = smul.u32 %s43, 128
    %s49 = smul.addr %s48, 4
    %s50 = scalar_lea.vmem %s0, %s49
    %v51 = vld [vmem:[%s50] sm:$0xf]
    %v52 = vld [vmem:[%s50 + $0x4] sm:$0xf]
    %v53 = vld [vmem:[%s50 + $0x8] sm:$0xf]
    %v54 = vld [vmem:[%s50 + $0xc] sm:$0xf]
    %v55 = vld [vmem:[%s50 + $0x10] sm:$0xf]
    %v56 = vld [vmem:[%s50 + $0x14] sm:$0xf]
    %v57 = vld [vmem:[%s50 + $0x18] sm:$0xf]
    %v58 = vld [vmem:[%s50 + $0x1c] sm:$0xf]
    %v59 = vld [vmem:[%s50 + $0x20] sm:$0xf]
    %v60 = vld [vmem:[%s50 + $0x24] sm:$0xf]
    %v61 = vld [vmem:[%s50 + $0x28] sm:$0xf]
    %v62 = vld [vmem:[%s50 + $0x2c] sm:$0xf]
    %v63 = vld [vmem:[%s50 + $0x30] sm:$0xf]
    %v64 = vld [vmem:[%s50 + $0x34] sm:$0xf]
    %v65 = vld [vmem:[%s50 + $0x38] sm:$0xf]
    %v66 = vld [vmem:[%s50 + $0x3c] sm:$0xf]
    %v67 = vld [vmem:[%s50 + $0x40] sm:$0xf]
    %v68 = vld [vmem:[%s50 + $0x44] sm:$0xf]
    %v69 = vld [vmem:[%s50 + $0x48] sm:$0xf]
    %v70 = vld [vmem:[%s50 + $0x4c] sm:$0xf]
    %v71 = vld [vmem:[%s50 + $0x50] sm:$0xf]
    %v72 = vld [vmem:[%s50 + $0x54] sm:$0xf]
    %v73 = vld [vmem:[%s50 + $0x58] sm:$0xf]
    %v74 = vld [vmem:[%s50 + $0x5c] sm:$0xf]
    %v75 = vld [vmem:[%s50 + $0x60] sm:$0xf]
    %v76 = vld [vmem:[%s50 + $0x64] sm:$0xf]
    %v77 = vld [vmem:[%s50 + $0x68] sm:$0xf]
    %v78 = vld [vmem:[%s50 + $0x6c] sm:$0xf]
    %v79 = vld [vmem:[%s50 + $0x70] sm:$0xf]
    %v80 = vld [vmem:[%s50 + $0x74] sm:$0xf]
    %v81 = vld [vmem:[%s50 + $0x78] sm:$0xf]
    %v82 = vld [vmem:[%s50 + $0x7c] sm:$0xf]
    %v83 = vld [vmem:[%s50 + $0x80] sm:$0xf]
    %v84 = vld [vmem:[%s50 + $0x84] sm:$0xf]
    %v85 = vld [vmem:[%s50 + $0x88] sm:$0xf]
    %v86 = vld [vmem:[%s50 + $0x8c] sm:$0xf]
    %v87 = vld [vmem:[%s50 + $0x90] sm:$0xf]
    %v88 = vld [vmem:[%s50 + $0x94] sm:$0xf]
    %v89 = vld [vmem:[%s50 + $0x98] sm:$0xf]
    %v90 = vld [vmem:[%s50 + $0x9c] sm:$0xf]
    %v91 = vld [vmem:[%s50 + $0xa0] sm:$0xf]
    %v92 = vld [vmem:[%s50 + $0xa4] sm:$0xf]
    %v93 = vld [vmem:[%s50 + $0xa8] sm:$0xf]
    %v94 = vld [vmem:[%s50 + $0xac] sm:$0xf]
    %v95 = vld [vmem:[%s50 + $0xb0] sm:$0xf]
    %v96 = vld [vmem:[%s50 + $0xb4] sm:$0xf]
    %v97 = vld [vmem:[%s50 + $0xb8] sm:$0xf]
    %v98 = vld [vmem:[%s50 + $0xbc] sm:$0xf]
    %v99 = vld [vmem:[%s50 + $0xc0] sm:$0xf]
    %v100 = vld [vmem:[%s50 + $0xc4] sm:$0xf]
    %v101 = vld [vmem:[%s50 + $0xc8] sm:$0xf]
    %v102 = vld [vmem:[%s50 + $0xcc] sm:$0xf]
    %v103 = vld [vmem:[%s50 + $0xd0] sm:$0xf]
    %v104 = vld [vmem:[%s50 + $0xd4] sm:$0xf]
    %v105 = vld [vmem:[%s50 + $0xd8] sm:$0xf]
    %v106 = vld [vmem:[%s50 + $0xdc] sm:$0xf]
    %v107 = vld [vmem:[%s50 + $0xe0] sm:$0xf]
    %v108 = vld [vmem:[%s50 + $0xe4] sm:$0xf]
    %v109 = vld [vmem:[%s50 + $0xe8] sm:$0xf]
    %v110 = vld [vmem:[%s50 + $0xec] sm:$0xf]
    %v111 = vld [vmem:[%s50 + $0xf0] sm:$0xf]
    %v112 = vld [vmem:[%s50 + $0xf4] sm:$0xf]
    %v113 = vld [vmem:[%s50 + $0xf8] sm:$0xf]
    %v114 = vld [vmem:[%s50 + $0xfc] sm:$0xf]
    %v115 = vld [vmem:[%s50 + $0x100] sm:$0xf]
    %v116 = vld [vmem:[%s50 + $0x104] sm:$0xf]
    %v117 = vld [vmem:[%s50 + $0x108] sm:$0xf]
    %v118 = vld [vmem:[%s50 + $0x10c] sm:$0xf]
    %v119 = vld [vmem:[%s50 + $0x110] sm:$0xf]
    %v120 = vld [vmem:[%s50 + $0x114] sm:$0xf]
    %v121 = vld [vmem:[%s50 + $0x118] sm:$0xf]
    %v122 = vld [vmem:[%s50 + $0x11c] sm:$0xf]
    %v123 = vld [vmem:[%s50 + $0x120] sm:$0xf]
    %v124 = vld [vmem:[%s50 + $0x124] sm:$0xf]
    %v125 = vld [vmem:[%s50 + $0x128] sm:$0xf]
    %v126 = vld [vmem:[%s50 + $0x12c] sm:$0xf]
    %v127 = vld [vmem:[%s50 + $0x130] sm:$0xf]
    %v128 = vld [vmem:[%s50 + $0x134] sm:$0xf]
    %v129 = vld [vmem:[%s50 + $0x138] sm:$0xf]
    %v130 = vld [vmem:[%s50 + $0x13c] sm:$0xf]
    %v131 = vld [vmem:[%s50 + $0x140] sm:$0xf]
    %v132 = vld [vmem:[%s50 + $0x144] sm:$0xf]
    %v133 = vld [vmem:[%s50 + $0x148] sm:$0xf]
    %v134 = vld [vmem:[%s50 + $0x14c] sm:$0xf]
    %v135 = vld [vmem:[%s50 + $0x150] sm:$0xf]
    %v136 = vld [vmem:[%s50 + $0x154] sm:$0xf]
    %v137 = vld [vmem:[%s50 + $0x158] sm:$0xf]
    %v138 = vld [vmem:[%s50 + $0x15c] sm:$0xf]
    %v139 = vld [vmem:[%s50 + $0x160] sm:$0xf]
    %v140 = vld [vmem:[%s50 + $0x164] sm:$0xf]
    %v141 = vld [vmem:[%s50 + $0x168] sm:$0xf]
    %v142 = vld [vmem:[%s50 + $0x16c] sm:$0xf]
    %v143 = vld [vmem:[%s50 + $0x170] sm:$0xf]
    %v144 = vld [vmem:[%s50 + $0x174] sm:$0xf]
    %v145 = vld [vmem:[%s50 + $0x178] sm:$0xf]
    %v146 = vld [vmem:[%s50 + $0x17c] sm:$0xf]
    %v147 = vld [vmem:[%s50 + $0x180] sm:$0xf]
    %v148 = vld [vmem:[%s50 + $0x184] sm:$0xf]
    %v149 = vld [vmem:[%s50 + $0x188] sm:$0xf]
    %v150 = vld [vmem:[%s50 + $0x18c] sm:$0xf]
    %v151 = vld [vmem:[%s50 + $0x190] sm:$0xf]
    %v152 = vld [vmem:[%s50 + $0x194] sm:$0xf]
    %v153 = vld [vmem:[%s50 + $0x198] sm:$0xf]
    %v154 = vld [vmem:[%s50 + $0x19c] sm:$0xf]
    %v155 = vld [vmem:[%s50 + $0x1a0] sm:$0xf]
    %v156 = vld [vmem:[%s50 + $0x1a4] sm:$0xf]
    %v157 = vld [vmem:[%s50 + $0x1a8] sm:$0xf]
    %v158 = vld [vmem:[%s50 + $0x1ac] sm:$0xf]
    %v159 = vld [vmem:[%s50 + $0x1b0] sm:$0xf]
    %v160 = vld [vmem:[%s50 + $0x1b4] sm:$0xf]
    %v161 = vld [vmem:[%s50 + $0x1b8] sm:$0xf]
    %v162 = vld [vmem:[%s50 + $0x1bc] sm:$0xf]
    %v163 = vld [vmem:[%s50 + $0x1c0] sm:$0xf]
    %v164 = vld [vmem:[%s50 + $0x1c4] sm:$0xf]
    %v165 = vld [vmem:[%s50 + $0x1c8] sm:$0xf]
    %v166 = vld [vmem:[%s50 + $0x1cc] sm:$0xf]
    %v167 = vld [vmem:[%s50 + $0x1d0] sm:$0xf]
    %v168 = vld [vmem:[%s50 + $0x1d4] sm:$0xf]
    %v169 = vld [vmem:[%s50 + $0x1d8] sm:$0xf]
    %v170 = vld [vmem:[%s50 + $0x1dc] sm:$0xf]
    %v171 = vld [vmem:[%s50 + $0x1e0] sm:$0xf]
    %v172 = vld [vmem:[%s50 + $0x1e4] sm:$0xf]
    %v173 = vld [vmem:[%s50 + $0x1e8] sm:$0xf]
    %v174 = vld [vmem:[%s50 + $0x1ec] sm:$0xf]
    %v175 = vld [vmem:[%s50 + $0x1f0] sm:$0xf]
    %v176 = vld [vmem:[%s50 + $0x1f4] sm:$0xf]
    %v177 = vld [vmem:[%s50 + $0x1f8] sm:$0xf]
    %v178 = vld [vmem:[%s50 + $0x1fc] sm:$0xf]
    %v179 = vld [vmem:[%s1] sm:$0xf]
    %v180 = vld [vmem:[%s1 + $0x4] sm:$0xf]
    %v181 = vld [vmem:[%s1 + $0x8] sm:$0xf]
    %v182 = vld [vmem:[%s1 + $0xc] sm:$0xf]
    %v183 = vld [vmem:[%s2] sm:$0x1]
    %v185 = vlaneseq
    %v186 = vshrl.u32 %v185, 7
    %v187 = vsub.s32 0, %v186
    %v188 = vrot.slane %v183, %v187
    %v318 = vunpack.c.l.b16 %v51
    %v319 = vunpack.c.l.b16 %v52
    %v320 = vunpack.c.l.b16 %v53
    %v321 = vunpack.c.l.b16 %v54
    %v322 = vunpack.c.l.b16 %v55
    %v323 = vunpack.c.l.b16 %v56
    %v324 = vunpack.c.l.b16 %v57
    %v325 = vunpack.c.l.b16 %v58
    %v326 = vunpack.c.l.b16 %v59
    %v327 = vunpack.c.l.b16 %v60
    %v328 = vunpack.c.l.b16 %v61
    %v329 = vunpack.c.l.b16 %v62
    %v330 = vunpack.c.l.b16 %v63
    %v331 = vunpack.c.l.b16 %v64
    %v332 = vunpack.c.l.b16 %v65
    %v333 = vunpack.c.l.b16 %v66
    %v334 = vunpack.c.l.b16 %v67
    %v335 = vunpack.c.l.b16 %v68
    %v336 = vunpack.c.l.b16 %v69
    %v337 = vunpack.c.l.b16 %v70
    %v338 = vunpack.c.l.b16 %v71
    %v339 = vunpack.c.l.b16 %v72
    %v340 = vunpack.c.l.b16 %v73
    %v341 = vunpack.c.l.b16 %v74
    %v342 = vunpack.c.l.b16 %v75
    %v343 = vunpack.c.l.b16 %v76
    %v344 = vunpack.c.l.b16 %v77
    %v345 = vunpack.c.l.b16 %v78
    %v346 = vunpack.c.l.b16 %v79
    %v347 = vunpack.c.l.b16 %v80
    %v348 = vunpack.c.l.b16 %v81
    %v349 = vunpack.c.l.b16 %v82
    %v350 = vunpack.c.l.b16 %v83
    %v351 = vunpack.c.l.b16 %v84
    %v352 = vunpack.c.l.b16 %v85
    %v353 = vunpack.c.l.b16 %v86
    %v354 = vunpack.c.l.b16 %v87
    %v355 = vunpack.c.l.b16 %v88
    %v356 = vunpack.c.l.b16 %v89
    %v357 = vunpack.c.l.b16 %v90
    %v358 = vunpack.c.l.b16 %v91
    %v359 = vunpack.c.l.b16 %v92
    %v360 = vunpack.c.l.b16 %v93
    %v361 = vunpack.c.l.b16 %v94
    %v362 = vunpack.c.l.b16 %v95
    %v363 = vunpack.c.l.b16 %v96
    %v364 = vunpack.c.l.b16 %v97
    %v365 = vunpack.c.l.b16 %v98
    %v366 = vunpack.c.l.b16 %v99
    %v367 = vunpack.c.l.b16 %v100
    %v368 = vunpack.c.l.b16 %v101
    %v369 = vunpack.c.l.b16 %v102
    %v370 = vunpack.c.l.b16 %v103
    %v371 = vunpack.c.l.b16 %v104
    %v372 = vunpack.c.l.b16 %v105
    %v373 = vunpack.c.l.b16 %v106
    %v374 = vunpack.c.l.b16 %v107
    %v375 = vunpack.c.l.b16 %v108
    %v376 = vunpack.c.l.b16 %v109
    %v377 = vunpack.c.l.b16 %v110
    %v378 = vunpack.c.l.b16 %v111
    %v379 = vunpack.c.l.b16 %v112
    %v380 = vunpack.c.l.b16 %v113
    %v381 = vunpack.c.l.b16 %v114
    %v382 = vunpack.c.l.b16 %v115
    %v383 = vunpack.c.l.b16 %v116
    %v384 = vunpack.c.l.b16 %v117
    %v385 = vunpack.c.l.b16 %v118
    %v386 = vunpack.c.l.b16 %v119
    %v387 = vunpack.c.l.b16 %v120
    %v388 = vunpack.c.l.b16 %v121
    %v389 = vunpack.c.l.b16 %v122
    %v390 = vunpack.c.l.b16 %v123
    %v391 = vunpack.c.l.b16 %v124
    %v392 = vunpack.c.l.b16 %v125
    %v393 = vunpack.c.l.b16 %v126
    %v394 = vunpack.c.l.b16 %v127
    %v395 = vunpack.c.l.b16 %v128
    %v396 = vunpack.c.l.b16 %v129
    %v397 = vunpack.c.l.b16 %v130
    %v398 = vunpack.c.l.b16 %v131
    %v399 = vunpack.c.l.b16 %v132
    %v400 = vunpack.c.l.b16 %v133
    %v401 = vunpack.c.l.b16 %v134
    %v402 = vunpack.c.l.b16 %v135
    %v403 = vunpack.c.l.b16 %v136
    %v404 = vunpack.c.l.b16 %v137
    %v405 = vunpack.c.l.b16 %v138
    %v406 = vunpack.c.l.b16 %v139
    %v407 = vunpack.c.l.b16 %v140
    %v408 = vunpack.c.l.b16 %v141
    %v409 = vunpack.c.l.b16 %v142
    %v410 = vunpack.c.l.b16 %v143
    %v411 = vunpack.c.l.b16 %v144
    %v412 = vunpack.c.l.b16 %v145
    %v413 = vunpack.c.l.b16 %v146
    %v414 = vunpack.c.l.b16 %v147
    %v415 = vunpack.c.l.b16 %v148
    %v416 = vunpack.c.l.b16 %v149
    %v417 = vunpack.c.l.b16 %v150
    %v418 = vunpack.c.l.b16 %v151
    %v419 = vunpack.c.l.b16 %v152
    %v420 = vunpack.c.l.b16 %v153
    %v421 = vunpack.c.l.b16 %v154
    %v422 = vunpack.c.l.b16 %v155
    %v423 = vunpack.c.l.b16 %v156
    %v424 = vunpack.c.l.b16 %v157
    %v425 = vunpack.c.l.b16 %v158
    %v426 = vunpack.c.l.b16 %v159
    %v427 = vunpack.c.l.b16 %v160
    %v428 = vunpack.c.l.b16 %v161
    %v429 = vunpack.c.l.b16 %v162
    %v430 = vunpack.c.l.b16 %v163
    %v431 = vunpack.c.l.b16 %v164
    %v432 = vunpack.c.l.b16 %v165
    %v433 = vunpack.c.l.b16 %v166
    %v434 = vunpack.c.l.b16 %v167
    %v435 = vunpack.c.l.b16 %v168
    %v436 = vunpack.c.l.b16 %v169
    %v437 = vunpack.c.l.b16 %v170
    %v438 = vunpack.c.l.b16 %v171
    %v439 = vunpack.c.l.b16 %v172
    %v440 = vunpack.c.l.b16 %v173
    %v441 = vunpack.c.l.b16 %v174
    %v442 = vunpack.c.l.b16 %v175
    %v443 = vunpack.c.l.b16 %v176
    %v444 = vunpack.c.l.b16 %v177
    %v445 = vunpack.c.l.b16 %v178
    %v446 = vpack.c.b16 %v319, %v318
    %v447 = vpack.c.b16 %v321, %v320
    %v448 = vpack.c.b16 %v323, %v322
    %v449 = vpack.c.b16 %v325, %v324
    %v450 = vpack.c.b16 %v327, %v326
    %v451 = vpack.c.b16 %v329, %v328
    %v452 = vpack.c.b16 %v331, %v330
    %v453 = vpack.c.b16 %v333, %v332
    %v454 = vpack.c.b16 %v335, %v334
    %v455 = vpack.c.b16 %v337, %v336
    %v456 = vpack.c.b16 %v339, %v338
    %v457 = vpack.c.b16 %v341, %v340
    %v458 = vpack.c.b16 %v343, %v342
    %v459 = vpack.c.b16 %v345, %v344
    %v460 = vpack.c.b16 %v347, %v346
    %v461 = vpack.c.b16 %v349, %v348
    %v462 = vpack.c.b16 %v351, %v350
    %v463 = vpack.c.b16 %v353, %v352
    %v464 = vpack.c.b16 %v355, %v354
    %v465 = vpack.c.b16 %v357, %v356
    %v466 = vpack.c.b16 %v359, %v358
    %v467 = vpack.c.b16 %v361, %v360
    %v468 = vpack.c.b16 %v363, %v362
    %v469 = vpack.c.b16 %v365, %v364
    %v470 = vpack.c.b16 %v367, %v366
    %v471 = vpack.c.b16 %v369, %v368
    %v472 = vpack.c.b16 %v371, %v370
    %v473 = vpack.c.b16 %v373, %v372
    %v474 = vpack.c.b16 %v375, %v374
    %v475 = vpack.c.b16 %v377, %v376
    %v476 = vpack.c.b16 %v379, %v378
    %v477 = vpack.c.b16 %v381, %v380
    %v478 = vpack.c.b16 %v383, %v382
    %v479 = vpack.c.b16 %v385, %v384
    %v480 = vpack.c.b16 %v387, %v386
    %v481 = vpack.c.b16 %v389, %v388
    %v482 = vpack.c.b16 %v391, %v390
    %v483 = vpack.c.b16 %v393, %v392
    %v484 = vpack.c.b16 %v395, %v394
    %v485 = vpack.c.b16 %v397, %v396
    %v486 = vpack.c.b16 %v399, %v398
    %v487 = vpack.c.b16 %v401, %v400
    %v488 = vpack.c.b16 %v403, %v402
    %v489 = vpack.c.b16 %v405, %v404
    %v490 = vpack.c.b16 %v407, %v406
    %v491 = vpack.c.b16 %v409, %v408
    %v492 = vpack.c.b16 %v411, %v410
    %v493 = vpack.c.b16 %v413, %v412
    %v494 = vpack.c.b16 %v415, %v414
    %v495 = vpack.c.b16 %v417, %v416
    %v496 = vpack.c.b16 %v419, %v418
    %v497 = vpack.c.b16 %v421, %v420
    %v498 = vpack.c.b16 %v423, %v422
    %v499 = vpack.c.b16 %v425, %v424
    %v500 = vpack.c.b16 %v427, %v426
    %v501 = vpack.c.b16 %v429, %v428
    %v502 = vpack.c.b16 %v431, %v430
    %v503 = vpack.c.b16 %v433, %v432
    %v504 = vpack.c.b16 %v435, %v434
    %v505 = vpack.c.b16 %v437, %v436
    %v506 = vpack.c.b16 %v439, %v438
    %v507 = vpack.c.b16 %v441, %v440
    %v508 = vpack.c.b16 %v443, %v442
    %v509 = vpack.c.b16 %v445, %v444
    %v514 = vunpack.c.l.b16 %v179
    %v515 = vunpack.c.l.b16 %v180
    %v516 = vunpack.c.l.b16 %v181
    %v517 = vunpack.c.l.b16 %v182
    %v518 = vpack.c.b16 %v515, %v514
    %v519 = vpack.c.b16 %v517, %v516
    %vm522 = vcmask 261120
    %v524 = vsel %vm522, %v446, 0
    %v527 = vsel %vm522, %v447, 0
    %v530 = vsel %vm522, %v448, 0
    %v533 = vsel %vm522, %v449, 0
    %v536 = vsel %vm522, %v450, 0
    %v539 = vsel %vm522, %v451, 0
    %v542 = vsel %vm522, %v452, 0
    %v545 = vsel %vm522, %v453, 0
    %v548 = vsel %vm522, %v454, 0
    %v551 = vsel %vm522, %v455, 0
    %v554 = vsel %vm522, %v456, 0
    %v557 = vsel %vm522, %v457, 0
    %v560 = vsel %vm522, %v458, 0
    %v563 = vsel %vm522, %v459, 0
    %v566 = vsel %vm522, %v460, 0
    %v569 = vsel %vm522, %v461, 0
    %v572 = vsel %vm522, %v462, 0
    %v575 = vsel %vm522, %v463, 0
    %v578 = vsel %vm522, %v464, 0
    %v581 = vsel %vm522, %v465, 0
    %v584 = vsel %vm522, %v466, 0
    %v587 = vsel %vm522, %v467, 0
    %v590 = vsel %vm522, %v468, 0
    %v593 = vsel %vm522, %v469, 0
    %v596 = vsel %vm522, %v470, 0
    %v599 = vsel %vm522, %v471, 0
    %v602 = vsel %vm522, %v472, 0
    %v605 = vsel %vm522, %v473, 0
    %v608 = vsel %vm522, %v474, 0
    %v611 = vsel %vm522, %v475, 0
    %v614 = vsel %vm522, %v476, 0
    %v617 = vsel %vm522, %v477, 0
    %v620 = vsel %vm522, %v478, 0
    %v623 = vsel %vm522, %v479, 0
    %v626 = vsel %vm522, %v480, 0
    %v629 = vsel %vm522, %v481, 0
    %v632 = vsel %vm522, %v482, 0
    %v635 = vsel %vm522, %v483, 0
    %v638 = vsel %vm522, %v484, 0
    %v641 = vsel %vm522, %v485, 0
    %v644 = vsel %vm522, %v486, 0
    %v647 = vsel %vm522, %v487, 0
    %v650 = vsel %vm522, %v488, 0
    %v653 = vsel %vm522, %v489, 0
    %v656 = vsel %vm522, %v490, 0
    %v659 = vsel %vm522, %v491, 0
    %v662 = vsel %vm522, %v492, 0
    %v665 = vsel %vm522, %v493, 0
    %v668 = vsel %vm522, %v494, 0
    %v671 = vsel %vm522, %v495, 0
    %v674 = vsel %vm522, %v496, 0
    %v677 = vsel %vm522, %v497, 0
    %v680 = vsel %vm522, %v498, 0
    %v683 = vsel %vm522, %v499, 0
    %v686 = vsel %vm522, %v500, 0
    %v689 = vsel %vm522, %v501, 0
    %v692 = vsel %vm522, %v502, 0
    %v695 = vsel %vm522, %v503, 0
    %v698 = vsel %vm522, %v504, 0
    %v701 = vsel %vm522, %v505, 0
    %v704 = vsel %vm522, %v506, 0
    %v707 = vsel %vm522, %v507, 0
    %v710 = vsel %vm522, %v508, 0
    %v713 = vsel %vm522, %v509, 0
    %715 = vmatprep.subr.bf16.mxu0 0
    %716 = vmatpush1.bf16.msra.mxu0 %v518
    %717 = vmatprep.subr.bf16.mxu0 0
    %718 = vmatpush1.bf16.msra.mxu0 %v519
    %719 = vmatprep.subr.bf16.mxu0 0
    %720 = vmatpush1.bf16.msra.mxu0 0
    %721 = vmatprep.subr.bf16.mxu0 0
    %722 = vmatpush1.bf16.msra.mxu0 0
    %723 = vmatprep.subr.bf16.mxu0 0
    %724 = vmatpush1.bf16.msra.mxu0 0
    %725 = vmatprep.subr.bf16.mxu0 0
    %726 = vmatpush1.bf16.msra.mxu0 0
    %727 = vmatprep.subr.bf16.mxu0 0
    %728 = vmatpush1.bf16.msra.mxu0 0
    %729 = vmatprep.subr.bf16.mxu0 0
    %730 = vmatpush1.bf16.msra.mxu0 0
    %731 = vmatprep.subr.bf16.mxu0 0
    %732 = vmatpush1.bf16.msra.mxu0 0
    %733 = vmatprep.subr.bf16.mxu0 0
    %734 = vmatpush1.bf16.msra.mxu0 0
    %735 = vmatprep.subr.bf16.mxu0 0
    %736 = vmatpush1.bf16.msra.mxu0 0
    %737 = vmatprep.subr.bf16.mxu0 0
    %738 = vmatpush1.bf16.msra.mxu0 0
    %739 = vmatprep.subr.bf16.mxu0 0
    %740 = vmatpush1.bf16.msra.mxu0 0
    %741 = vmatprep.subr.bf16.mxu0 0
    %742 = vmatpush1.bf16.msra.mxu0 0
    %743 = vmatprep.subr.bf16.mxu0 0
    %744 = vmatpush1.bf16.msra.mxu0 0
    %745 = vmatprep.subr.bf16.mxu0 0
    %746 = vmatpush1.bf16.msra.mxu0 0
    %747 = vmatprep.mubr.bf16.mxu0 0
    %748 = vmatmul.mubr.bf16.gmra.mrb[0].mxu0 %v524
    %v749 = vpop.f32.mrb[0].mxu0
    %v750 = vadd.f32 %v188, %v749
    %v751 = vpop.f32.mrb[0].mxu0
    %v752 = vpop.f32.mrb[0].mxu0
    %v753 = vadd.f32 %v188, %v752
    %v754 = vpop.f32.mrb[0].mxu0
    %755 = vmatprep.mubr.bf16.mxu0 0
    %756 = vmatmul.mubr.bf16.gmra.mrb[0].mxu0 %v527
    %v757 = vpop.f32.mrb[0].mxu0
    %v758 = vadd.f32 %v188, %v757
    %v759 = vpop.f32.mrb[0].mxu0
    %v760 = vpop.f32.mrb[0].mxu0
    %v761 = vadd.f32 %v188, %v760
    %v762 = vpop.f32.mrb[0].mxu0
    %763 = vmatprep.mubr.bf16.mxu0 0
    %764 = vmatmul.mubr.bf16.gmra.mrb[0].mxu0 %v530
    %v765 = vpop.f32.mrb[0].mxu0
    %v766 = vadd.f32 %v188, %v765
    %v767 = vpop.f32.mrb[0].mxu0
    %v768 = vpop.f32.mrb[0].mxu0
    %v769 = vadd.f32 %v188, %v768
    %v770 = vpop.f32.mrb[0].mxu0
    %771 = vmatprep.mubr.bf16.mxu0 0
    %772 = vmatmul.mubr.bf16.gmra.mrb[0].mxu0 %v533
    %v773 = vpop.f32.mrb[0].mxu0
    %v774 = vadd.f32 %v188, %v773
    %v775 = vpop.f32.mrb[0].mxu0
    %v776 = vpop.f32.mrb[0].mxu0
    %v777 = vadd.f32 %v188, %v776
    %v778 = vpop.f32.mrb[0].mxu0
    %779 = vmatprep.mubr.bf16.mxu0 0
    %780 = vmatmul.mubr.bf16.gmra.mrb[0].mxu0 %v536
    %v781 = vpop.f32.mrb[0].mxu0
    %v782 = vadd.f32 %v188, %v781
    %v783 = vpop.f32.mrb[0].mxu0
    %v784 = vpop.f32.mrb[0].mxu0
    %v785 = vadd.f32 %v188, %v784
    %v786 = vpop.f32.mrb[0].mxu0
    %787 = vmatprep.mubr.bf16.mxu0 0
    %788 = vmatmul.mubr.bf16.gmra.mrb[0].mxu0 %v539
    %v789 = vpop.f32.mrb[0].mxu0
    %v790 = vadd.f32 %v188, %v789
    %v791 = vpop.f32.mrb[0].mxu0
    %v792 = vpop.f32.mrb[0].mxu0
    %v793 = vadd.f32 %v188, %v792
    %v794 = vpop.f32.mrb[0].mxu0
    %795 = vmatprep.mubr.bf16.mxu0 0
    %796 = vmatmul.mubr.bf16.gmra.mrb[0].mxu0 %v542
    %v797 = vpop.f32.mrb[0].mxu0
    %v798 = vadd.f32 %v188, %v797
    %v799 = vpop.f32.mrb[0].mxu0
    %v800 = vpop.f32.mrb[0].mxu0
    %v801 = vadd.f32 %v188, %v800
    %v802 = vpop.f32.mrb[0].mxu0
    %803 = vmatprep.mubr.bf16.mxu0 0
    %804 = vmatmul.mubr.bf16.gmra.mrb[0].mxu0 %v545
    %v805 = vpop.f32.mrb[0].mxu0
    %v806 = vadd.f32 %v188, %v805
    %v807 = vpop.f32.mrb[0].mxu0
    %v808 = vpop.f32.mrb[0].mxu0
    %v809 = vadd.f32 %v188, %v808
    %v810 = vpop.f32.mrb[0].mxu0
    %811 = vmatprep.mubr.bf16.mxu0 0
    %812 = vmatmul.mubr.bf16.gmra.mrb[0].mxu0 %v548
    %v813 = vpop.f32.mrb[0].mxu0
    %v814 = vadd.f32 %v188, %v813
    %v815 = vpop.f32.mrb[0].mxu0
    %v816 = vpop.f32.mrb[0].mxu0
    %v817 = vadd.f32 %v188, %v816
    %v818 = vpop.f32.mrb[0].mxu0
    %819 = vmatprep.mubr.bf16.mxu0 0
    %820 = vmatmul.mubr.bf16.gmra.mrb[0].mxu0 %v551
    %v821 = vpop.f32.mrb[0].mxu0
    %v822 = vadd.f32 %v188, %v821
    %v823 = vpop.f32.mrb[0].mxu0
    %v824 = vpop.f32.mrb[0].mxu0
    %v825 = vadd.f32 %v188, %v824
    %v826 = vpop.f32.mrb[0].mxu0
    %827 = vmatprep.mubr.bf16.mxu0 0
    %828 = vmatmul.mubr.bf16.gmra.mrb[0].mxu0 %v554
    %v829 = vpop.f32.mrb[0].mxu0
    %v830 = vadd.f32 %v188, %v829
    %v831 = vpop.f32.mrb[0].mxu0
    %v832 = vpop.f32.mrb[0].mxu0
    %v833 = vadd.f32 %v188, %v832
    %v834 = vpop.f32.mrb[0].mxu0
    %835 = vmatprep.mubr.bf16.mxu0 0
    %836 = vmatmul.mubr.bf16.gmra.mrb[0].mxu0 %v557
    %v837 = vpop.f32.mrb[0].mxu0
    %v838 = vadd.f32 %v188, %v837
    %v839 = vpop.f32.mrb[0].mxu0
    %v840 = vpop.f32.mrb[0].mxu0
    %v841 = vadd.f32 %v188, %v840
    %v842 = vpop.f32.mrb[0].mxu0
    %843 = vmatprep.mubr.bf16.mxu0 0
    %844 = vmatmul.mubr.bf16.gmra.mrb[0].mxu0 %v560
    %v845 = vpop.f32.mrb[0].mxu0
    %v846 = vadd.f32 %v188, %v845
    %v847 = vpop.f32.mrb[0].mxu0
    %v848 = vpop.f32.mrb[0].mxu0
    %v849 = vadd.f32 %v188, %v848
    %v850 = vpop.f32.mrb[0].mxu0
    %851 = vmatprep.mubr.bf16.mxu0 0
    %852 = vmatmul.mubr.bf16.gmra.mrb[0].mxu0 %v563
    %v853 = vpop.f32.mrb[0].mxu0
    %v854 = vadd.f32 %v188, %v853
    %v855 = vpop.f32.mrb[0].mxu0
    %v856 = vpop.f32.mrb[0].mxu0
    %v857 = vadd.f32 %v188, %v856
    %v858 = vpop.f32.mrb[0].mxu0
    %859 = vmatprep.mubr.bf16.mxu0 0
    %860 = vmatmul.mubr.bf16.gmra.mrb[0].mxu0 %v566
    %v861 = vpop.f32.mrb[0].mxu0
    %v862 = vadd.f32 %v188, %v861
    %v863 = vpop.f32.mrb[0].mxu0
    %v864 = vpop.f32.mrb[0].mxu0
    %v865 = vadd.f32 %v188, %v864
    %v866 = vpop.f32.mrb[0].mxu0
    %867 = vmatprep.mubr.bf16.mxu0 0
    %868 = vmatmul.mubr.bf16.gmra.mrb[0].mxu0 %v569
    %v869 = vpop.f32.mrb[0].mxu0
    %v870 = vadd.f32 %v188, %v869
    %v871 = vpop.f32.mrb[0].mxu0
    %v872 = vpop.f32.mrb[0].mxu0
    %v873 = vadd.f32 %v188, %v872
    %v874 = vpop.f32.mrb[0].mxu0
    %875 = vmatprep.mubr.bf16.mxu0 0
    %876 = vmatmul.mubr.bf16.gmra.mrb[0].mxu0 %v572
    %v877 = vpop.f32.mrb[0].mxu0
    %v878 = vadd.f32 %v188, %v877
    %v879 = vpop.f32.mrb[0].mxu0
    %v880 = vpop.f32.mrb[0].mxu0
    %v881 = vadd.f32 %v188, %v880
    %v882 = vpop.f32.mrb[0].mxu0
    %883 = vmatprep.mubr.bf16.mxu0 0
    %884 = vmatmul.mubr.bf16.gmra.mrb[0].mxu0 %v575
    %v885 = vpop.f32.mrb[0].mxu0
    %v886 = vadd.f32 %v188, %v885
    %v887 = vpop.f32.mrb[0].mxu0
    %v888 = vpop.f32.mrb[0].mxu0
    %v889 = vadd.f32 %v188, %v888
    %v890 = vpop.f32.mrb[0].mxu0
    %891 = vmatprep.mubr.bf16.mxu0 0
    %892 = vmatmul.mubr.bf16.gmra.mrb[0].mxu0 %v578
    %v893 = vpop.f32.mrb[0].mxu0
    %v894 = vadd.f32 %v188, %v893
    %v895 = vpop.f32.mrb[0].mxu0
    %v896 = vpop.f32.mrb[0].mxu0
    %v897 = vadd.f32 %v188, %v896
    %v898 = vpop.f32.mrb[0].mxu0
    %899 = vmatprep.mubr.bf16.mxu0 0
    %900 = vmatmul.mubr.bf16.gmra.mrb[0].mxu0 %v581
    %v901 = vpop.f32.mrb[0].mxu0
    %v902 = vadd.f32 %v188, %v901
    %v903 = vpop.f32.mrb[0].mxu0
    %v904 = vpop.f32.mrb[0].mxu0
    %v905 = vadd.f32 %v188, %v904
    %v906 = vpop.f32.mrb[0].mxu0
    %907 = vmatprep.mubr.bf16.mxu0 0
    %908 = vmatmul.mubr.bf16.gmra.mrb[0].mxu0 %v584
    %v909 = vpop.f32.mrb[0].mxu0
    %v910 = vadd.f32 %v188, %v909
    %v911 = vpop.f32.mrb[0].mxu0
    %v912 = vpop.f32.mrb[0].mxu0
    %v913 = vadd.f32 %v188, %v912
    %v914 = vpop.f32.mrb[0].mxu0
    %915 = vmatprep.mubr.bf16.mxu0 0
    %916 = vmatmul.mubr.bf16.gmra.mrb[0].mxu0 %v587
    %v917 = vpop.f32.mrb[0].mxu0
    %v918 = vadd.f32 %v188, %v917
    %v919 = vpop.f32.mrb[0].mxu0
    %v920 = vpop.f32.mrb[0].mxu0
    %v921 = vadd.f32 %v188, %v920
    %v922 = vpop.f32.mrb[0].mxu0
    %923 = vmatprep.mubr.bf16.mxu0 0
    %924 = vmatmul.mubr.bf16.gmra.mrb[0].mxu0 %v590
    %v925 = vpop.f32.mrb[0].mxu0
    %v926 = vadd.f32 %v188, %v925
    %v927 = vpop.f32.mrb[0].mxu0
    %v928 = vpop.f32.mrb[0].mxu0
    %v929 = vadd.f32 %v188, %v928
    %v930 = vpop.f32.mrb[0].mxu0
    %931 = vmatprep.mubr.bf16.mxu0 0
    %932 = vmatmul.mubr.bf16.gmra.mrb[0].mxu0 %v593
    %v933 = vpop.f32.mrb[0].mxu0
    %v934 = vadd.f32 %v188, %v933
    %v935 = vpop.f32.mrb[0].mxu0
    %v936 = vpop.f32.mrb[0].mxu0
    %v937 = vadd.f32 %v188, %v936
    %v938 = vpop.f32.mrb[0].mxu0
    %939 = vmatprep.mubr.bf16.mxu0 0
    %940 = vmatmul.mubr.bf16.gmra.mrb[0].mxu0 %v596
    %v941 = vpop.f32.mrb[0].mxu0
    %v942 = vadd.f32 %v188, %v941
    %v943 = vpop.f32.mrb[0].mxu0
    %v944 = vpop.f32.mrb[0].mxu0
    %v945 = vadd.f32 %v188, %v944
    %v946 = vpop.f32.mrb[0].mxu0
    %947 = vmatprep.mubr.bf16.mxu0 0
    %948 = vmatmul.mubr.bf16.gmra.mrb[0].mxu0 %v599
    %v949 = vpop.f32.mrb[0].mxu0
    %v950 = vadd.f32 %v188, %v949
    %v951 = vpop.f32.mrb[0].mxu0
    %v952 = vpop.f32.mrb[0].mxu0
    %v953 = vadd.f32 %v188, %v952
    %v954 = vpop.f32.mrb[0].mxu0
    %955 = vmatprep.mubr.bf16.mxu0 0
    %956 = vmatmul.mubr.bf16.gmra.mrb[0].mxu0 %v602
    %v957 = vpop.f32.mrb[0].mxu0
    %v958 = vadd.f32 %v188, %v957
    %v959 = vpop.f32.mrb[0].mxu0
    %v960 = vpop.f32.mrb[0].mxu0
    %v961 = vadd.f32 %v188, %v960
    %v962 = vpop.f32.mrb[0].mxu0
    %963 = vmatprep.mubr.bf16.mxu0 0
    %964 = vmatmul.mubr.bf16.gmra.mrb[0].mxu0 %v605
    %v965 = vpop.f32.mrb[0].mxu0
    %v966 = vadd.f32 %v188, %v965
    %v967 = vpop.f32.mrb[0].mxu0
    %v968 = vpop.f32.mrb[0].mxu0
    %v969 = vadd.f32 %v188, %v968
    %v970 = vpop.f32.mrb[0].mxu0
    %971 = vmatprep.mubr.bf16.mxu0 0
    %972 = vmatmul.mubr.bf16.gmra.mrb[0].mxu0 %v608
    %v973 = vpop.f32.mrb[0].mxu0
    %v974 = vadd.f32 %v188, %v973
    %v975 = vpop.f32.mrb[0].mxu0
    %v976 = vpop.f32.mrb[0].mxu0
    %v977 = vadd.f32 %v188, %v976
    %v978 = vpop.f32.mrb[0].mxu0
    %979 = vmatprep.mubr.bf16.mxu0 0
    %980 = vmatmul.mubr.bf16.gmra.mrb[0].mxu0 %v611
    %v981 = vpop.f32.mrb[0].mxu0
    %v982 = vadd.f32 %v188, %v981
    %v983 = vpop.f32.mrb[0].mxu0
    %v984 = vpop.f32.mrb[0].mxu0
    %v985 = vadd.f32 %v188, %v984
    %v986 = vpop.f32.mrb[0].mxu0
    %987 = vmatprep.mubr.bf16.mxu0 0
    %988 = vmatmul.mubr.bf16.gmra.mrb[0].mxu0 %v614
    %v989 = vpop.f32.mrb[0].mxu0
    %v990 = vadd.f32 %v188, %v989
    %v991 = vpop.f32.mrb[0].mxu0
    %v992 = vpop.f32.mrb[0].mxu0
    %v993 = vadd.f32 %v188, %v992
    %v994 = vpop.f32.mrb[0].mxu0
    %995 = vmatprep.mubr.bf16.mxu0 0
    %996 = vmatmul.mubr.bf16.gmra.mrb[0].mxu0 %v617
    %v997 = vpop.f32.mrb[0].mxu0
    %v998 = vadd.f32 %v188, %v997
    %v999 = vpop.f32.mrb[0].mxu0
    %v1000 = vpop.f32.mrb[0].mxu0
    %v1001 = vadd.f32 %v188, %v1000
    %v1002 = vpop.f32.mrb[0].mxu0
    %1003 = vmatprep.mubr.bf16.mxu0 0
    %1004 = vmatmul.mubr.bf16.gmra.mrb[0].mxu0 %v620
    %v1005 = vpop.f32.mrb[0].mxu0
    %v1006 = vadd.f32 %v188, %v1005
    %v1007 = vpop.f32.mrb[0].mxu0
    %v1008 = vpop.f32.mrb[0].mxu0
    %v1009 = vadd.f32 %v188, %v1008
    %v1010 = vpop.f32.mrb[0].mxu0
    %1011 = vmatprep.mubr.bf16.mxu0 0
    %1012 = vmatmul.mubr.bf16.gmra.mrb[0].mxu0 %v623
    %v1013 = vpop.f32.mrb[0].mxu0
    %v1014 = vadd.f32 %v188, %v1013
    %v1015 = vpop.f32.mrb[0].mxu0
    %v1016 = vpop.f32.mrb[0].mxu0
    %v1017 = vadd.f32 %v188, %v1016
    %v1018 = vpop.f32.mrb[0].mxu0
    %1019 = vmatprep.mubr.bf16.mxu0 0
    %1020 = vmatmul.mubr.bf16.gmra.mrb[0].mxu0 %v626
    %v1021 = vpop.f32.mrb[0].mxu0
    %v1022 = vadd.f32 %v188, %v1021
    %v1023 = vpop.f32.mrb[0].mxu0
    %v1024 = vpop.f32.mrb[0].mxu0
    %v1025 = vadd.f32 %v188, %v1024
    %v1026 = vpop.f32.mrb[0].mxu0
    %1027 = vmatprep.mubr.bf16.mxu0 0
    %1028 = vmatmul.mubr.bf16.gmra.mrb[0].mxu0 %v629
    %v1029 = vpop.f32.mrb[0].mxu0
    %v1030 = vadd.f32 %v188, %v1029
    %v1031 = vpop.f32.mrb[0].mxu0
    %v1032 = vpop.f32.mrb[0].mxu0
    %v1033 = vadd.f32 %v188, %v1032
    %v1034 = vpop.f32.mrb[0].mxu0
    %1035 = vmatprep.mubr.bf16.mxu0 0
    %1036 = vmatmul.mubr.bf16.gmra.mrb[0].mxu0 %v632
    %v1037 = vpop.f32.mrb[0].mxu0
    %v1038 = vadd.f32 %v188, %v1037
    %v1039 = vpop.f32.mrb[0].mxu0
    %v1040 = vpop.f32.mrb[0].mxu0
    %v1041 = vadd.f32 %v188, %v1040
    %v1042 = vpop.f32.mrb[0].mxu0
    %1043 = vmatprep.mubr.bf16.mxu0 0
    %1044 = vmatmul.mubr.bf16.gmra.mrb[0].mxu0 %v635
    %v1045 = vpop.f32.mrb[0].mxu0
    %v1046 = vadd.f32 %v188, %v1045
    %v1047 = vpop.f32.mrb[0].mxu0
    %v1048 = vpop.f32.mrb[0].mxu0
    %v1049 = vadd.f32 %v188, %v1048
    %v1050 = vpop.f32.mrb[0].mxu0
    %1051 = vmatprep.mubr.bf16.mxu0 0
    %1052 = vmatmul.mubr.bf16.gmra.mrb[0].mxu0 %v638
    %v1053 = vpop.f32.mrb[0].mxu0
    %v1054 = vadd.f32 %v188, %v1053
    %v1055 = vpop.f32.mrb[0].mxu0
    %v1056 = vpop.f32.mrb[0].mxu0
    %v1057 = vadd.f32 %v188, %v1056
    %v1058 = vpop.f32.mrb[0].mxu0
    %1059 = vmatprep.mubr.bf16.mxu0 0
    %1060 = vmatmul.mubr.bf16.gmra.mrb[0].mxu0 %v641
    %v1061 = vpop.f32.mrb[0].mxu0
    %v1062 = vadd.f32 %v188, %v1061
    %v1063 = vpop.f32.mrb[0].mxu0
    %v1064 = vpop.f32.mrb[0].mxu0
    %v1065 = vadd.f32 %v188, %v1064
    %v1066 = vpop.f32.mrb[0].mxu0
    %1067 = vmatprep.mubr.bf16.mxu0 0
    %1068 = vmatmul.mubr.bf16.gmra.mrb[0].mxu0 %v644
    %v1069 = vpop.f32.mrb[0].mxu0
    %v1070 = vadd.f32 %v188, %v1069
    %v1071 = vpop.f32.mrb[0].mxu0
    %v1072 = vpop.f32.mrb[0].mxu0
    %v1073 = vadd.f32 %v188, %v1072
    %v1074 = vpop.f32.mrb[0].mxu0
    %1075 = vmatprep.mubr.bf16.mxu0 0
    %1076 = vmatmul.mubr.bf16.gmra.mrb[0].mxu0 %v647
    %v1077 = vpop.f32.mrb[0].mxu0
    %v1078 = vadd.f32 %v188, %v1077
    %v1079 = vpop.f32.mrb[0].mxu0
    %v1080 = vpop.f32.mrb[0].mxu0
    %v1081 = vadd.f32 %v188, %v1080
    %v1082 = vpop.f32.mrb[0].mxu0
    %1083 = vmatprep.mubr.bf16.mxu0 0
    %1084 = vmatmul.mubr.bf16.gmra.mrb[0].mxu0 %v650
    %v1085 = vpop.f32.mrb[0].mxu0
    %v1086 = vadd.f32 %v188, %v1085
    %v1087 = vpop.f32.mrb[0].mxu0
    %v1088 = vpop.f32.mrb[0].mxu0
    %v1089 = vadd.f32 %v188, %v1088
    %v1090 = vpop.f32.mrb[0].mxu0
    %1091 = vmatprep.mubr.bf16.mxu0 0
    %1092 = vmatmul.mubr.bf16.gmra.mrb[0].mxu0 %v653
    %v1093 = vpop.f32.mrb[0].mxu0
    %v1094 = vadd.f32 %v188, %v1093
    %v1095 = vpop.f32.mrb[0].mxu0
    %v1096 = vpop.f32.mrb[0].mxu0
    %v1097 = vadd.f32 %v188, %v1096
    %v1098 = vpop.f32.mrb[0].mxu0
    %1099 = vmatprep.mubr.bf16.mxu0 0
    %1100 = vmatmul.mubr.bf16.gmra.mrb[0].mxu0 %v656
    %v1101 = vpop.f32.mrb[0].mxu0
    %v1102 = vadd.f32 %v188, %v1101
    %v1103 = vpop.f32.mrb[0].mxu0
    %v1104 = vpop.f32.mrb[0].mxu0
    %v1105 = vadd.f32 %v188, %v1104
    %v1106 = vpop.f32.mrb[0].mxu0
    %1107 = vmatprep.mubr.bf16.mxu0 0
    %1108 = vmatmul.mubr.bf16.gmra.mrb[0].mxu0 %v659
    %v1109 = vpop.f32.mrb[0].mxu0
    %v1110 = vadd.f32 %v188, %v1109
    %v1111 = vpop.f32.mrb[0].mxu0
    %v1112 = vpop.f32.mrb[0].mxu0
    %v1113 = vadd.f32 %v188, %v1112
    %v1114 = vpop.f32.mrb[0].mxu0
    %1115 = vmatprep.mubr.bf16.mxu0 0
    %1116 = vmatmul.mubr.bf16.gmra.mrb[0].mxu0 %v662
    %v1117 = vpop.f32.mrb[0].mxu0
    %v1118 = vadd.f32 %v188, %v1117
    %v1119 = vpop.f32.mrb[0].mxu0
    %v1120 = vpop.f32.mrb[0].mxu0
    %v1121 = vadd.f32 %v188, %v1120
    %v1122 = vpop.f32.mrb[0].mxu0
    %1123 = vmatprep.mubr.bf16.mxu0 0
    %1124 = vmatmul.mubr.bf16.gmra.mrb[0].mxu0 %v665
    %v1125 = vpop.f32.mrb[0].mxu0
    %v1126 = vadd.f32 %v188, %v1125
    %v1127 = vpop.f32.mrb[0].mxu0
    %v1128 = vpop.f32.mrb[0].mxu0
    %v1129 = vadd.f32 %v188, %v1128
    %v1130 = vpop.f32.mrb[0].mxu0
    %1131 = vmatprep.mubr.bf16.mxu0 0
    %1132 = vmatmul.mubr.bf16.gmra.mrb[0].mxu0 %v668
    %v1133 = vpop.f32.mrb[0].mxu0
    %v1134 = vadd.f32 %v188, %v1133
    %v1135 = vpop.f32.mrb[0].mxu0
    %v1136 = vpop.f32.mrb[0].mxu0
    %v1137 = vadd.f32 %v188, %v1136
    %v1138 = vpop.f32.mrb[0].mxu0
    %1139 = vmatprep.mubr.bf16.mxu0 0
    %1140 = vmatmul.mubr.bf16.gmra.mrb[0].mxu0 %v671
    %v1141 = vpop.f32.mrb[0].mxu0
    %v1142 = vadd.f32 %v188, %v1141
    %v1143 = vpop.f32.mrb[0].mxu0
    %v1144 = vpop.f32.mrb[0].mxu0
    %v1145 = vadd.f32 %v188, %v1144
    %v1146 = vpop.f32.mrb[0].mxu0
    %1147 = vmatprep.mubr.bf16.mxu0 0
    %1148 = vmatmul.mubr.bf16.gmra.mrb[0].mxu0 %v674
    %v1149 = vpop.f32.mrb[0].mxu0
    %v1150 = vadd.f32 %v188, %v1149
    %v1151 = vpop.f32.mrb[0].mxu0
    %v1152 = vpop.f32.mrb[0].mxu0
    %v1153 = vadd.f32 %v188, %v1152
    %v1154 = vpop.f32.mrb[0].mxu0
    %1155 = vmatprep.mubr.bf16.mxu0 0
    %1156 = vmatmul.mubr.bf16.gmra.mrb[0].mxu0 %v677
    %v1157 = vpop.f32.mrb[0].mxu0
    %v1158 = vadd.f32 %v188, %v1157
    %v1159 = vpop.f32.mrb[0].mxu0
    %v1160 = vpop.f32.mrb[0].mxu0
    %v1161 = vadd.f32 %v188, %v1160
    %v1162 = vpop.f32.mrb[0].mxu0
    %1163 = vmatprep.mubr.bf16.mxu0 0
    %1164 = vmatmul.mubr.bf16.gmra.mrb[0].mxu0 %v680
    %v1165 = vpop.f32.mrb[0].mxu0
    %v1166 = vadd.f32 %v188, %v1165
    %v1167 = vpop.f32.mrb[0].mxu0
    %v1168 = vpop.f32.mrb[0].mxu0
    %v1169 = vadd.f32 %v188, %v1168
    %v1170 = vpop.f32.mrb[0].mxu0
    %1171 = vmatprep.mubr.bf16.mxu0 0
    %1172 = vmatmul.mubr.bf16.gmra.mrb[0].mxu0 %v683
    %v1173 = vpop.f32.mrb[0].mxu0
    %v1174 = vadd.f32 %v188, %v1173
    %v1175 = vpop.f32.mrb[0].mxu0
    %v1176 = vpop.f32.mrb[0].mxu0
    %v1177 = vadd.f32 %v188, %v1176
    %v1178 = vpop.f32.mrb[0].mxu0
    %1179 = vmatprep.mubr.bf16.mxu0 0
    %1180 = vmatmul.mubr.bf16.gmra.mrb[0].mxu0 %v686
    %v1181 = vpop.f32.mrb[0].mxu0
    %v1182 = vadd.f32 %v188, %v1181
    %v1183 = vpop.f32.mrb[0].mxu0
    %v1184 = vpop.f32.mrb[0].mxu0
    %v1185 = vadd.f32 %v188, %v1184
    %v1186 = vpop.f32.mrb[0].mxu0
    %1187 = vmatprep.mubr.bf16.mxu0 0
    %1188 = vmatmul.mubr.bf16.gmra.mrb[0].mxu0 %v689
    %v1189 = vpop.f32.mrb[0].mxu0
    %v1190 = vadd.f32 %v188, %v1189
    %v1191 = vpop.f32.mrb[0].mxu0
    %v1192 = vpop.f32.mrb[0].mxu0
    %v1193 = vadd.f32 %v188, %v1192
    %v1194 = vpop.f32.mrb[0].mxu0
    %1195 = vmatprep.mubr.bf16.mxu0 0
    %1196 = vmatmul.mubr.bf16.gmra.mrb[0].mxu0 %v692
    %v1197 = vpop.f32.mrb[0].mxu0
    %v1198 = vadd.f32 %v188, %v1197
    %v1199 = vpop.f32.mrb[0].mxu0
    %v1200 = vpop.f32.mrb[0].mxu0
    %v1201 = vadd.f32 %v188, %v1200
    %v1202 = vpop.f32.mrb[0].mxu0
    %1203 = vmatprep.mubr.bf16.mxu0 0
    %1204 = vmatmul.mubr.bf16.gmra.mrb[0].mxu0 %v695
    %v1205 = vpop.f32.mrb[0].mxu0
    %v1206 = vadd.f32 %v188, %v1205
    %v1207 = vpop.f32.mrb[0].mxu0
    %v1208 = vpop.f32.mrb[0].mxu0
    %v1209 = vadd.f32 %v188, %v1208
    %v1210 = vpop.f32.mrb[0].mxu0
    %1211 = vmatprep.mubr.bf16.mxu0 0
    %1212 = vmatmul.mubr.bf16.gmra.mrb[0].mxu0 %v698
    %v1213 = vpop.f32.mrb[0].mxu0
    %v1214 = vadd.f32 %v188, %v1213
    %v1215 = vpop.f32.mrb[0].mxu0
    %v1216 = vpop.f32.mrb[0].mxu0
    %v1217 = vadd.f32 %v188, %v1216
    %v1218 = vpop.f32.mrb[0].mxu0
    %1219 = vmatprep.mubr.bf16.mxu0 0
    %1220 = vmatmul.mubr.bf16.gmra.mrb[0].mxu0 %v701
    %v1221 = vpop.f32.mrb[0].mxu0
    %v1222 = vadd.f32 %v188, %v1221
    %v1223 = vpop.f32.mrb[0].mxu0
    %v1224 = vpop.f32.mrb[0].mxu0
    %v1225 = vadd.f32 %v188, %v1224
    %v1226 = vpop.f32.mrb[0].mxu0
    %1227 = vmatprep.mubr.bf16.mxu0 0
    %1228 = vmatmul.mubr.bf16.gmra.mrb[0].mxu0 %v704
    %v1229 = vpop.f32.mrb[0].mxu0
    %v1230 = vadd.f32 %v188, %v1229
    %v1231 = vpop.f32.mrb[0].mxu0
    %v1232 = vpop.f32.mrb[0].mxu0
    %v1233 = vadd.f32 %v188, %v1232
    %v1234 = vpop.f32.mrb[0].mxu0
    %1235 = vmatprep.mubr.bf16.mxu0 0
    %1236 = vmatmul.mubr.bf16.gmra.mrb[0].mxu0 %v707
    %v1237 = vpop.f32.mrb[0].mxu0
    %v1238 = vadd.f32 %v188, %v1237
    %v1239 = vpop.f32.mrb[0].mxu0
    %v1240 = vpop.f32.mrb[0].mxu0
    %v1241 = vadd.f32 %v188, %v1240
    %v1242 = vpop.f32.mrb[0].mxu0
    %1243 = vmatprep.mubr.bf16.mxu0 0
    %1244 = vmatmul.mubr.bf16.gmra.mrb[0].mxu0 %v710
    %v1245 = vpop.f32.mrb[0].mxu0
    %v1246 = vadd.f32 %v188, %v1245
    %v1247 = vpop.f32.mrb[0].mxu0
    %v1248 = vpop.f32.mrb[0].mxu0
    %v1249 = vadd.f32 %v188, %v1248
    %v1250 = vpop.f32.mrb[0].mxu0
    %1251 = vmatprep.mubr.bf16.mxu0 0
    %1252 = vmatmul.mubr.bf16.gmra.mrb[0].mxu0 %v713
    %v1253 = vpop.f32.mrb[0].mxu0
    %v1254 = vadd.f32 %v188, %v1253
    %v1255 = vpop.f32.mrb[0].mxu0
    %v1256 = vpop.f32.mrb[0].mxu0
    %v1257 = vadd.f32 %v188, %v1256
    %v1258 = vpop.f32.mrb[0].mxu0
    %1259 = vdwg.mxu0
    %v1260 = vmax.f32 %v750, 0.0
    %v1261 = vmax.f32 %v753, 0.0
    %v1262 = vmax.f32 %v758, 0.0
    %v1263 = vmax.f32 %v761, 0.0
    %v1264 = vmax.f32 %v766, 0.0
    %v1265 = vmax.f32 %v769, 0.0
    %v1266 = vmax.f32 %v774, 0.0
    %v1267 = vmax.f32 %v777, 0.0
    %v1268 = vmax.f32 %v782, 0.0
    %v1269 = vmax.f32 %v785, 0.0
    %v1270 = vmax.f32 %v790, 0.0
    %v1271 = vmax.f32 %v793, 0.0
    %v1272 = vmax.f32 %v798, 0.0
    %v1273 = vmax.f32 %v801, 0.0
    %v1274 = vmax.f32 %v806, 0.0
    %v1275 = vmax.f32 %v809, 0.0
    %v1276 = vmax.f32 %v814, 0.0
    %v1277 = vmax.f32 %v817, 0.0
    %v1278 = vmax.f32 %v822, 0.0
    %v1279 = vmax.f32 %v825, 0.0
    %v1280 = vmax.f32 %v830, 0.0
    %v1281 = vmax.f32 %v833, 0.0
    %v1282 = vmax.f32 %v838, 0.0
    %v1283 = vmax.f32 %v841, 0.0
    %v1284 = vmax.f32 %v846, 0.0
    %v1285 = vmax.f32 %v849, 0.0
    %v1286 = vmax.f32 %v854, 0.0
    %v1287 = vmax.f32 %v857, 0.0
    %v1288 = vmax.f32 %v862, 0.0
    %v1289 = vmax.f32 %v865, 0.0
    %v1290 = vmax.f32 %v870, 0.0
    %v1291 = vmax.f32 %v873, 0.0
    %v1292 = vmax.f32 %v878, 0.0
    %v1293 = vmax.f32 %v881, 0.0
    %v1294 = vmax.f32 %v886, 0.0
    %v1295 = vmax.f32 %v889, 0.0
    %v1296 = vmax.f32 %v894, 0.0
    %v1297 = vmax.f32 %v897, 0.0
    %v1298 = vmax.f32 %v902, 0.0
    %v1299 = vmax.f32 %v905, 0.0
    %v1300 = vmax.f32 %v910, 0.0
    %v1301 = vmax.f32 %v913, 0.0
    %v1302 = vmax.f32 %v918, 0.0
    %v1303 = vmax.f32 %v921, 0.0
    %v1304 = vmax.f32 %v926, 0.0
    %v1305 = vmax.f32 %v929, 0.0
    %v1306 = vmax.f32 %v934, 0.0
    %v1307 = vmax.f32 %v937, 0.0
    %v1308 = vmax.f32 %v942, 0.0
    %v1309 = vmax.f32 %v945, 0.0
    %v1310 = vmax.f32 %v950, 0.0
    %v1311 = vmax.f32 %v953, 0.0
    %v1312 = vmax.f32 %v958, 0.0
    %v1313 = vmax.f32 %v961, 0.0
    %v1314 = vmax.f32 %v966, 0.0
    %v1315 = vmax.f32 %v969, 0.0
    %v1316 = vmax.f32 %v974, 0.0
    %v1317 = vmax.f32 %v977, 0.0
    %v1318 = vmax.f32 %v982, 0.0
    %v1319 = vmax.f32 %v985, 0.0
    %v1320 = vmax.f32 %v990, 0.0
    %v1321 = vmax.f32 %v993, 0.0
    %v1322 = vmax.f32 %v998, 0.0
    %v1323 = vmax.f32 %v1001, 0.0
    %v1324 = vmax.f32 %v1006, 0.0
    %v1325 = vmax.f32 %v1009, 0.0
    %v1326 = vmax.f32 %v1014, 0.0
    %v1327 = vmax.f32 %v1017, 0.0
    %v1328 = vmax.f32 %v1022, 0.0
    %v1329 = vmax.f32 %v1025, 0.0
    %v1330 = vmax.f32 %v1030, 0.0
    %v1331 = vmax.f32 %v1033, 0.0
    %v1332 = vmax.f32 %v1038, 0.0
    %v1333 = vmax.f32 %v1041, 0.0
    %v1334 = vmax.f32 %v1046, 0.0
    %v1335 = vmax.f32 %v1049, 0.0
    %v1336 = vmax.f32 %v1054, 0.0
    %v1337 = vmax.f32 %v1057, 0.0
    %v1338 = vmax.f32 %v1062, 0.0
    %v1339 = vmax.f32 %v1065, 0.0
    %v1340 = vmax.f32 %v1070, 0.0
    %v1341 = vmax.f32 %v1073, 0.0
    %v1342 = vmax.f32 %v1078, 0.0
    %v1343 = vmax.f32 %v1081, 0.0
    %v1344 = vmax.f32 %v1086, 0.0
    %v1345 = vmax.f32 %v1089, 0.0
    %v1346 = vmax.f32 %v1094, 0.0
    %v1347 = vmax.f32 %v1097, 0.0
    %v1348 = vmax.f32 %v1102, 0.0
    %v1349 = vmax.f32 %v1105, 0.0
    %v1350 = vmax.f32 %v1110, 0.0
    %v1351 = vmax.f32 %v1113, 0.0
    %v1352 = vmax.f32 %v1118, 0.0
    %v1353 = vmax.f32 %v1121, 0.0
    %v1354 = vmax.f32 %v1126, 0.0
    %v1355 = vmax.f32 %v1129, 0.0
    %v1356 = vmax.f32 %v1134, 0.0
    %v1357 = vmax.f32 %v1137, 0.0
    %v1358 = vmax.f32 %v1142, 0.0
    %v1359 = vmax.f32 %v1145, 0.0
    %v1360 = vmax.f32 %v1150, 0.0
    %v1361 = vmax.f32 %v1153, 0.0
    %v1362 = vmax.f32 %v1158, 0.0
    %v1363 = vmax.f32 %v1161, 0.0
    %v1364 = vmax.f32 %v1166, 0.0
    %v1365 = vmax.f32 %v1169, 0.0
    %v1366 = vmax.f32 %v1174, 0.0
    %v1367 = vmax.f32 %v1177, 0.0
    %v1368 = vmax.f32 %v1182, 0.0
    %v1369 = vmax.f32 %v1185, 0.0
    %v1370 = vmax.f32 %v1190, 0.0
    %v1371 = vmax.f32 %v1193, 0.0
    %v1372 = vmax.f32 %v1198, 0.0
    %v1373 = vmax.f32 %v1201, 0.0
    %v1374 = vmax.f32 %v1206, 0.0
    %v1375 = vmax.f32 %v1209, 0.0
    %v1376 = vmax.f32 %v1214, 0.0
    %v1377 = vmax.f32 %v1217, 0.0
    %v1378 = vmax.f32 %v1222, 0.0
    %v1379 = vmax.f32 %v1225, 0.0
    %v1380 = vmax.f32 %v1230, 0.0
    %v1381 = vmax.f32 %v1233, 0.0
    %v1382 = vmax.f32 %v1238, 0.0
    %v1383 = vmax.f32 %v1241, 0.0
    %v1384 = vmax.f32 %v1246, 0.0
    %v1385 = vmax.f32 %v1249, 0.0
    %v1386 = vmax.f32 %v1254, 0.0
    %v1387 = vmax.f32 %v1257, 0.0
    %1388 = vst [vmem:[#allocation2] sm:$0xff] %v1260
    %1389 = vst [vmem:[#allocation2 + $0x8] sm:$0xff] %v1261
    %1390 = vst [vmem:[#allocation2 + $0x10] sm:$0xff] %v1262
    %1391 = vst [vmem:[#allocation2 + $0x18] sm:$0xff] %v1263
    %1392 = vst [vmem:[#allocation2 + $0x20] sm:$0xff] %v1264
    %1393 = vst [vmem:[#allocation2 + $0x28] sm:$0xff] %v1265
    %1394 = vst [vmem:[#allocation2 + $0x30] sm:$0xff] %v1266
    %1395 = vst [vmem:[#allocation2 + $0x38] sm:$0xff] %v1267
    %1396 = vst [vmem:[#allocation2 + $0x40] sm:$0xff] %v1268
    %1397 = vst [vmem:[#allocation2 + $0x48] sm:$0xff] %v1269
    %1398 = vst [vmem:[#allocation2 + $0x50] sm:$0xff] %v1270
    %1399 = vst [vmem:[#allocation2 + $0x58] sm:$0xff] %v1271
    %1400 = vst [vmem:[#allocation2 + $0x60] sm:$0xff] %v1272
    %1401 = vst [vmem:[#allocation2 + $0x68] sm:$0xff] %v1273
    %1402 = vst [vmem:[#allocation2 + $0x70] sm:$0xff] %v1274
    %1403 = vst [vmem:[#allocation2 + $0x78] sm:$0xff] %v1275
    %1404 = vst [vmem:[#allocation2 + $0x80] sm:$0xff] %v1276
    %1405 = vst [vmem:[#allocation2 + $0x88] sm:$0xff] %v1277
    %1406 = vst [vmem:[#allocation2 + $0x90] sm:$0xff] %v1278
    %1407 = vst [vmem:[#allocation2 + $0x98] sm:$0xff] %v1279
    %1408 = vst [vmem:[#allocation2 + $0xa0] sm:$0xff] %v1280
    %1409 = vst [vmem:[#allocation2 + $0xa8] sm:$0xff] %v1281
    %1410 = vst [vmem:[#allocation2 + $0xb0] sm:$0xff] %v1282
    %1411 = vst [vmem:[#allocation2 + $0xb8] sm:$0xff] %v1283
    %1412 = vst [vmem:[#allocation2 + $0xc0] sm:$0xff] %v1284
    %1413 = vst [vmem:[#allocation2 + $0xc8] sm:$0xff] %v1285
    %1414 = vst [vmem:[#allocation2 + $0xd0] sm:$0xff] %v1286
    %1415 = vst [vmem:[#allocation2 + $0xd8] sm:$0xff] %v1287
    %1416 = vst [vmem:[#allocation2 + $0xe0] sm:$0xff] %v1288
    %1417 = vst [vmem:[#allocation2 + $0xe8] sm:$0xff] %v1289
    %1418 = vst [vmem:[#allocation2 + $0xf0] sm:$0xff] %v1290
    %1419 = vst [vmem:[#allocation2 + $0xf8] sm:$0xff] %v1291
    %1420 = vst [vmem:[#allocation2 + $0x100] sm:$0xff] %v1292
    %1421 = vst [vmem:[#allocation2 + $0x108] sm:$0xff] %v1293
    %1422 = vst [vmem:[#allocation2 + $0x110] sm:$0xff] %v1294
    %1423 = vst [vmem:[#allocation2 + $0x118] sm:$0xff] %v1295
    %1424 = vst [vmem:[#allocation2 + $0x120] sm:$0xff] %v1296
    %1425 = vst [vmem:[#allocation2 + $0x128] sm:$0xff] %v1297
    %1426 = vst [vmem:[#allocation2 + $0x130] sm:$0xff] %v1298
    %1427 = vst [vmem:[#allocation2 + $0x138] sm:$0xff] %v1299
    %1428 = vst [vmem:[#allocation2 + $0x140] sm:$0xff] %v1300
    %1429 = vst [vmem:[#allocation2 + $0x148] sm:$0xff] %v1301
    %1430 = vst [vmem:[#allocation2 + $0x150] sm:$0xff] %v1302
    %1431 = vst [vmem:[#allocation2 + $0x158] sm:$0xff] %v1303
    %1432 = vst [vmem:[#allocation2 + $0x160] sm:$0xff] %v1304
    %1433 = vst [vmem:[#allocation2 + $0x168] sm:$0xff] %v1305
    %1434 = vst [vmem:[#allocation2 + $0x170] sm:$0xff] %v1306
    %1435 = vst [vmem:[#allocation2 + $0x178] sm:$0xff] %v1307
    %1436 = vst [vmem:[#allocation2 + $0x180] sm:$0xff] %v1308
    %1437 = vst [vmem:[#allocation2 + $0x188] sm:$0xff] %v1309
    %1438 = vst [vmem:[#allocation2 + $0x190] sm:$0xff] %v1310
    %1439 = vst [vmem:[#allocation2 + $0x198] sm:$0xff] %v1311
    %1440 = vst [vmem:[#allocation2 + $0x1a0] sm:$0xff] %v1312
    %1441 = vst [vmem:[#allocation2 + $0x1a8] sm:$0xff] %v1313
    %1442 = vst [vmem:[#allocation2 + $0x1b0] sm:$0xff] %v1314
    %1443 = vst [vmem:[#allocation2 + $0x1b8] sm:$0xff] %v1315
    %1444 = vst [vmem:[#allocation2 + $0x1c0] sm:$0xff] %v1316
    %1445 = vst [vmem:[#allocation2 + $0x1c8] sm:$0xff] %v1317
    %1446 = vst [vmem:[#allocation2 + $0x1d0] sm:$0xff] %v1318
    %1447 = vst [vmem:[#allocation2 + $0x1d8] sm:$0xff] %v1319
    %1448 = vst [vmem:[#allocation2 + $0x1e0] sm:$0xff] %v1320
    %1449 = vst [vmem:[#allocation2 + $0x1e8] sm:$0xff] %v1321
    %1450 = vst [vmem:[#allocation2 + $0x1f0] sm:$0xff] %v1322
    %1451 = vst [vmem:[#allocation2 + $0x1f8] sm:$0xff] %v1323
    %1452 = vst [vmem:[#allocation2 + $0x200] sm:$0xff] %v1324
    %1453 = vst [vmem:[#allocation2 + $0x208] sm:$0xff] %v1325
    %1454 = vst [vmem:[#allocation2 + $0x210] sm:$0xff] %v1326
    %1455 = vst [vmem:[#allocation2 + $0x218] sm:$0xff] %v1327
    %1456 = vst [vmem:[#allocation2 + $0x220] sm:$0xff] %v1328
    %1457 = vst [vmem:[#allocation2 + $0x228] sm:$0xff] %v1329
    %1458 = vst [vmem:[#allocation2 + $0x230] sm:$0xff] %v1330
    %1459 = vst [vmem:[#allocation2 + $0x238] sm:$0xff] %v1331
    %1460 = vst [vmem:[#allocation2 + $0x240] sm:$0xff] %v1332
    %1461 = vst [vmem:[#allocation2 + $0x248] sm:$0xff] %v1333
    %1462 = vst [vmem:[#allocation2 + $0x250] sm:$0xff] %v1334
    %1463 = vst [vmem:[#allocation2 + $0x258] sm:$0xff] %v1335
    %1464 = vst [vmem:[#allocation2 + $0x260] sm:$0xff] %v1336
    %1465 = vst [vmem:[#allocation2 + $0x268] sm:$0xff] %v1337
    %1466 = vst [vmem:[#allocation2 + $0x270] sm:$0xff] %v1338
    %1467 = vst [vmem:[#allocation2 + $0x278] sm:$0xff] %v1339
    %1468 = vst [vmem:[#allocation2 + $0x280] sm:$0xff] %v1340
    %1469 = vst [vmem:[#allocation2 + $0x288] sm:$0xff] %v1341
    %1470 = vst [vmem:[#allocation2 + $0x290] sm:$0xff] %v1342
    %1471 = vst [vmem:[#allocation2 + $0x298] sm:$0xff] %v1343
    %1472 = vst [vmem:[#allocation2 + $0x2a0] sm:$0xff] %v1344
    %1473 = vst [vmem:[#allocation2 + $0x2a8] sm:$0xff] %v1345
    %1474 = vst [vmem:[#allocation2 + $0x2b0] sm:$0xff] %v1346
    %1475 = vst [vmem:[#allocation2 + $0x2b8] sm:$0xff] %v1347
    %1476 = vst [vmem:[#allocation2 + $0x2c0] sm:$0xff] %v1348
    %1477 = vst [vmem:[#allocation2 + $0x2c8] sm:$0xff] %v1349
    %1478 = vst [vmem:[#allocation2 + $0x2d0] sm:$0xff] %v1350
    %1479 = vst [vmem:[#allocation2 + $0x2d8] sm:$0xff] %v1351
    %1480 = vst [vmem:[#allocation2 + $0x2e0] sm:$0xff] %v1352
    %1481 = vst [vmem:[#allocation2 + $0x2e8] sm:$0xff] %v1353
    %1482 = vst [vmem:[#allocation2 + $0x2f0] sm:$0xff] %v1354
    %1483 = vst [vmem:[#allocation2 + $0x2f8] sm:$0xff] %v1355
    %1484 = vst [vmem:[#allocation2 + $0x300] sm:$0xff] %v1356
    %1485 = vst [vmem:[#allocation2 + $0x308] sm:$0xff] %v1357
    %1486 = vst [vmem:[#allocation2 + $0x310] sm:$0xff] %v1358
    %1487 = vst [vmem:[#allocation2 + $0x318] sm:$0xff] %v1359
    %1488 = vst [vmem:[#allocation2 + $0x320] sm:$0xff] %v1360
    %1489 = vst [vmem:[#allocation2 + $0x328] sm:$0xff] %v1361
    %1490 = vst [vmem:[#allocation2 + $0x330] sm:$0xff] %v1362
    %1491 = vst [vmem:[#allocation2 + $0x338] sm:$0xff] %v1363
    %1492 = vst [vmem:[#allocation2 + $0x340] sm:$0xff] %v1364
    %1493 = vst [vmem:[#allocation2 + $0x348] sm:$0xff] %v1365
    %1494 = vst [vmem:[#allocation2 + $0x350] sm:$0xff] %v1366
    %1495 = vst [vmem:[#allocation2 + $0x358] sm:$0xff] %v1367
    %1496 = vst [vmem:[#allocation2 + $0x360] sm:$0xff] %v1368
    %1497 = vst [vmem:[#allocation2 + $0x368] sm:$0xff] %v1369
    %1498 = vst [vmem:[#allocation2 + $0x370] sm:$0xff] %v1370
    %1499 = vst [vmem:[#allocation2 + $0x378] sm:$0xff] %v1371
    %1500 = vst [vmem:[#allocation2 + $0x380] sm:$0xff] %v1372
    %1501 = vst [vmem:[#allocation2 + $0x388] sm:$0xff] %v1373
    %1502 = vst [vmem:[#allocation2 + $0x390] sm:$0xff] %v1374
    %1503 = vst [vmem:[#allocation2 + $0x398] sm:$0xff] %v1375
    %1504 = vst [vmem:[#allocation2 + $0x3a0] sm:$0xff] %v1376
    %1505 = vst [vmem:[#allocation2 + $0x3a8] sm:$0xff] %v1377
    %1506 = vst [vmem:[#allocation2 + $0x3b0] sm:$0xff] %v1378
    %1507 = vst [vmem:[#allocation2 + $0x3b8] sm:$0xff] %v1379
    %1508 = vst [vmem:[#allocation2 + $0x3c0] sm:$0xff] %v1380
    %1509 = vst [vmem:[#allocation2 + $0x3c8] sm:$0xff] %v1381
    %1510 = vst [vmem:[#allocation2 + $0x3d0] sm:$0xff] %v1382
    %1511 = vst [vmem:[#allocation2 + $0x3d8] sm:$0xff] %v1383
    %1512 = vst [vmem:[#allocation2 + $0x3e0] sm:$0xff] %v1384
    %1513 = vst [vmem:[#allocation2 + $0x3e8] sm:$0xff] %v1385
    %1514 = vst [vmem:[#allocation2 + $0x3f0] sm:$0xff] %v1386
    %1515 = vst [vmem:[#allocation2 + $0x3f8] sm:$0xff] %v1387
    %1516 = vst [vmem:[#allocation2 + $0x400] sm:$0xff] 0.0
    %1517 = vst [vmem:[#allocation2 + $0x408] sm:$0xff] 0.0
    %1518 = vst [vmem:[#allocation2 + $0x410] sm:$0xff] 0.0
    %1519 = vst [vmem:[#allocation2 + $0x418] sm:$0xff] 0.0
    %1520 = vst [vmem:[#allocation2 + $0x420] sm:$0xff] 0.0
    %v1521 = vld [vmem:[#allocation2 + $0x1] sm:$0xff]
    %v1522 = vld [vmem:[#allocation2 + $0x9] sm:$0xff]
    %v1523 = vld [vmem:[#allocation2 + $0x11] sm:$0xff]
    %v1524 = vld [vmem:[#allocation2 + $0x19] sm:$0xff]
    %v1525 = vld [vmem:[#allocation2 + $0x21] sm:$0xff]
    %v1526 = vld [vmem:[#allocation2 + $0x29] sm:$0xff]
    %v1527 = vld [vmem:[#allocation2 + $0x31] sm:$0xff]
    %v1528 = vld [vmem:[#allocation2 + $0x39] sm:$0xff]
    %v1529 = vld [vmem:[#allocation2 + $0x41] sm:$0xff]
    %v1530 = vld [vmem:[#allocation2 + $0x49] sm:$0xff]
    %v1531 = vld [vmem:[#allocation2 + $0x51] sm:$0xff]
    %v1532 = vld [vmem:[#allocation2 + $0x59] sm:$0xff]
    %v1533 = vld [vmem:[#allocation2 + $0x61] sm:$0xff]
    %v1534 = vld [vmem:[#allocation2 + $0x69] sm:$0xff]
    %v1535 = vld [vmem:[#allocation2 + $0x71] sm:$0xff]
    %v1536 = vld [vmem:[#allocation2 + $0x79] sm:$0xff]
    %v1537 = vld [vmem:[#allocation2 + $0x81] sm:$0xff]
    %v1538 = vld [vmem:[#allocation2 + $0x89] sm:$0xff]
    %v1539 = vld [vmem:[#allocation2 + $0x91] sm:$0xff]
    %v1540 = vld [vmem:[#allocation2 + $0x99] sm:$0xff]
    %v1541 = vld [vmem:[#allocation2 + $0xa1] sm:$0xff]
    %v1542 = vld [vmem:[#allocation2 + $0xa9] sm:$0xff]
    %v1543 = vld [vmem:[#allocation2 + $0xb1] sm:$0xff]
    %v1544 = vld [vmem:[#allocation2 + $0xb9] sm:$0xff]
    %v1545 = vld [vmem:[#allocation2 + $0xc1] sm:$0xff]
    %v1546 = vld [vmem:[#allocation2 + $0xc9] sm:$0xff]
    %v1547 = vld [vmem:[#allocation2 + $0xd1] sm:$0xff]
    %v1548 = vld [vmem:[#allocation2 + $0xd9] sm:$0xff]
    %v1549 = vld [vmem:[#allocation2 + $0xe1] sm:$0xff]
    %v1550 = vld [vmem:[#allocation2 + $0xe9] sm:$0xff]
    %v1551 = vld [vmem:[#allocation2 + $0xf1] sm:$0xff]
    %v1552 = vld [vmem:[#allocation2 + $0xf9] sm:$0xff]
    %v1553 = vld [vmem:[#allocation2 + $0x101] sm:$0xff]
    %v1554 = vld [vmem:[#allocation2 + $0x109] sm:$0xff]
    %v1555 = vld [vmem:[#allocation2 + $0x111] sm:$0xff]
    %v1556 = vld [vmem:[#allocation2 + $0x119] sm:$0xff]
    %v1557 = vld [vmem:[#allocation2 + $0x121] sm:$0xff]
    %v1558 = vld [vmem:[#allocation2 + $0x129] sm:$0xff]
    %v1559 = vld [vmem:[#allocation2 + $0x131] sm:$0xff]
    %v1560 = vld [vmem:[#allocation2 + $0x139] sm:$0xff]
    %v1561 = vld [vmem:[#allocation2 + $0x141] sm:$0xff]
    %v1562 = vld [vmem:[#allocation2 + $0x149] sm:$0xff]
    %v1563 = vld [vmem:[#allocation2 + $0x151] sm:$0xff]
    %v1564 = vld [vmem:[#allocation2 + $0x159] sm:$0xff]
    %v1565 = vld [vmem:[#allocation2 + $0x161] sm:$0xff]
    %v1566 = vld [vmem:[#allocation2 + $0x169] sm:$0xff]
    %v1567 = vld [vmem:[#allocation2 + $0x171] sm:$0xff]
    %v1568 = vld [vmem:[#allocation2 + $0x179] sm:$0xff]
    %v1569 = vld [vmem:[#allocation2 + $0x181] sm:$0xff]
    %v1570 = vld [vmem:[#allocation2 + $0x189] sm:$0xff]
    %v1571 = vld [vmem:[#allocation2 + $0x191] sm:$0xff]
    %v1572 = vld [vmem:[#allocation2 + $0x199] sm:$0xff]
    %v1573 = vld [vmem:[#allocation2 + $0x1a1] sm:$0xff]
    %v1574 = vld [vmem:[#allocation2 + $0x1a9] sm:$0xff]
    %v1575 = vld [vmem:[#allocation2 + $0x1b1] sm:$0xff]
    %v1576 = vld [vmem:[#allocation2 + $0x1b9] sm:$0xff]
    %v1577 = vld [vmem:[#allocation2 + $0x1c1] sm:$0xff]
    %v1578 = vld [vmem:[#allocation2 + $0x1c9] sm:$0xff]
    %v1579 = vld [vmem:[#allocation2 + $0x1d1] sm:$0xff]
    %v1580 = vld [vmem:[#allocation2 + $0x1d9] sm:$0xff]
    %v1581 = vld [vmem:[#allocation2 + $0x1e1] sm:$0xff]
    %v1582 = vld [vmem:[#allocation2 + $0x1e9] sm:$0xff]
    %v1583 = vld [vmem:[#allocation2 + $0x1f1] sm:$0xff]
    %v1584 = vld [vmem:[#allocation2 + $0x1f9] sm:$0xff]
    %v1585 = vld [vmem:[#allocation2 + $0x201] sm:$0xff]
    %v1586 = vld [vmem:[#allocation2 + $0x209] sm:$0xff]
    %v1587 = vld [vmem:[#allocation2 + $0x211] sm:$0xff]
    %v1588 = vld [vmem:[#allocation2 + $0x219] sm:$0xff]
    %v1589 = vld [vmem:[#allocation2 + $0x221] sm:$0xff]
    %v1590 = vld [vmem:[#allocation2 + $0x229] sm:$0xff]
    %v1591 = vld [vmem:[#allocation2 + $0x231] sm:$0xff]
    %v1592 = vld [vmem:[#allocation2 + $0x239] sm:$0xff]
    %v1593 = vld [vmem:[#allocation2 + $0x241] sm:$0xff]
    %v1594 = vld [vmem:[#allocation2 + $0x249] sm:$0xff]
    %v1595 = vld [vmem:[#allocation2 + $0x251] sm:$0xff]
    %v1596 = vld [vmem:[#allocation2 + $0x259] sm:$0xff]
    %v1597 = vld [vmem:[#allocation2 + $0x261] sm:$0xff]
    %v1598 = vld [vmem:[#allocation2 + $0x269] sm:$0xff]
    %v1599 = vld [vmem:[#allocation2 + $0x271] sm:$0xff]
    %v1600 = vld [vmem:[#allocation2 + $0x279] sm:$0xff]
    %v1601 = vld [vmem:[#allocation2 + $0x281] sm:$0xff]
    %v1602 = vld [vmem:[#allocation2 + $0x289] sm:$0xff]
    %v1603 = vld [vmem:[#allocation2 + $0x291] sm:$0xff]
    %v1604 = vld [vmem:[#allocation2 + $0x299] sm:$0xff]
    %v1605 = vld [vmem:[#allocation2 + $0x2a1] sm:$0xff]
    %v1606 = vld [vmem:[#allocation2 + $0x2a9] sm:$0xff]
    %v1607 = vld [vmem:[#allocation2 + $0x2b1] sm:$0xff]
    %v1608 = vld [vmem:[#allocation2 + $0x2b9] sm:$0xff]
    %v1609 = vld [vmem:[#allocation2 + $0x2c1] sm:$0xff]
    %v1610 = vld [vmem:[#allocation2 + $0x2c9] sm:$0xff]
    %v1611 = vld [vmem:[#allocation2 + $0x2d1] sm:$0xff]
    %v1612 = vld [vmem:[#allocation2 + $0x2d9] sm:$0xff]
    %v1613 = vld [vmem:[#allocation2 + $0x2e1] sm:$0xff]
    %v1614 = vld [vmem:[#allocation2 + $0x2e9] sm:$0xff]
    %v1615 = vld [vmem:[#allocation2 + $0x2f1] sm:$0xff]
    %v1616 = vld [vmem:[#allocation2 + $0x2f9] sm:$0xff]
    %v1617 = vld [vmem:[#allocation2 + $0x301] sm:$0xff]
    %v1618 = vld [vmem:[#allocation2 + $0x309] sm:$0xff]
    %v1619 = vld [vmem:[#allocation2 + $0x311] sm:$0xff]
    %v1620 = vld [vmem:[#allocation2 + $0x319] sm:$0xff]
    %v1621 = vld [vmem:[#allocation2 + $0x321] sm:$0xff]
    %v1622 = vld [vmem:[#allocation2 + $0x329] sm:$0xff]
    %v1623 = vld [vmem:[#allocation2 + $0x331] sm:$0xff]
    %v1624 = vld [vmem:[#allocation2 + $0x339] sm:$0xff]
    %v1625 = vld [vmem:[#allocation2 + $0x341] sm:$0xff]
    %v1626 = vld [vmem:[#allocation2 + $0x349] sm:$0xff]
    %v1627 = vld [vmem:[#allocation2 + $0x351] sm:$0xff]
    %v1628 = vld [vmem:[#allocation2 + $0x359] sm:$0xff]
    %v1629 = vld [vmem:[#allocation2 + $0x361] sm:$0xff]
    %v1630 = vld [vmem:[#allocation2 + $0x369] sm:$0xff]
    %v1631 = vld [vmem:[#allocation2 + $0x371] sm:$0xff]
    %v1632 = vld [vmem:[#allocation2 + $0x379] sm:$0xff]
    %v1633 = vld [vmem:[#allocation2 + $0x381] sm:$0xff]
    %v1634 = vld [vmem:[#allocation2 + $0x389] sm:$0xff]
    %v1635 = vld [vmem:[#allocation2 + $0x391] sm:$0xff]
    %v1636 = vld [vmem:[#allocation2 + $0x399] sm:$0xff]
    %v1637 = vld [vmem:[#allocation2 + $0x3a1] sm:$0xff]
    %v1638 = vld [vmem:[#allocation2 + $0x3a9] sm:$0xff]
    %v1639 = vld [vmem:[#allocation2 + $0x3b1] sm:$0xff]
    %v1640 = vld [vmem:[#allocation2 + $0x3b9] sm:$0xff]
    %v1641 = vld [vmem:[#allocation2 + $0x3c1] sm:$0xff]
    %v1642 = vld [vmem:[#allocation2 + $0x3c9] sm:$0xff]
    %v1643 = vld [vmem:[#allocation2 + $0x3d1] sm:$0xff]
    %v1644 = vld [vmem:[#allocation2 + $0x3d9] sm:$0xff]
    %v1645 = vld [vmem:[#allocation2 + $0x3e1] sm:$0xff]
    %v1646 = vld [vmem:[#allocation2 + $0x3e9] sm:$0xff]
    %v1647 = vld [vmem:[#allocation2 + $0x3f1] sm:$0xff]
    %v1648 = vld [vmem:[#allocation2 + $0x3f9] sm:$0xff]
    %v1649 = vmax.f32 %v1260, %v1521
    %v1650 = vmax.f32 %v1261, %v1522
    %v1651 = vmax.f32 %v1262, %v1523
    %v1652 = vmax.f32 %v1263, %v1524
    %v1653 = vmax.f32 %v1264, %v1525
    %v1654 = vmax.f32 %v1265, %v1526
    %v1655 = vmax.f32 %v1266, %v1527
    %v1656 = vmax.f32 %v1267, %v1528
    %v1657 = vmax.f32 %v1268, %v1529
    %v1658 = vmax.f32 %v1269, %v1530
    %v1659 = vmax.f32 %v1270, %v1531
    %v1660 = vmax.f32 %v1271, %v1532
    %v1661 = vmax.f32 %v1272, %v1533
    %v1662 = vmax.f32 %v1273, %v1534
    %v1663 = vmax.f32 %v1274, %v1535
    %v1664 = vmax.f32 %v1275, %v1536
    %v1665 = vmax.f32 %v1276, %v1537
    %v1666 = vmax.f32 %v1277, %v1538
    %v1667 = vmax.f32 %v1278, %v1539
    %v1668 = vmax.f32 %v1279, %v1540
    %v1669 = vmax.f32 %v1280, %v1541
    %v1670 = vmax.f32 %v1281, %v1542
    %v1671 = vmax.f32 %v1282, %v1543
    %v1672 = vmax.f32 %v1283, %v1544
    %v1673 = vmax.f32 %v1284, %v1545
    %v1674 = vmax.f32 %v1285, %v1546
    %v1675 = vmax.f32 %v1286, %v1547
    %v1676 = vmax.f32 %v1287, %v1548
    %v1677 = vmax.f32 %v1288, %v1549
    %v1678 = vmax.f32 %v1289, %v1550
    %v1679 = vmax.f32 %v1290, %v1551
    %v1680 = vmax.f32 %v1291, %v1552
    %v1681 = vmax.f32 %v1292, %v1553
    %v1682 = vmax.f32 %v1293, %v1554
    %v1683 = vmax.f32 %v1294, %v1555
    %v1684 = vmax.f32 %v1295, %v1556
    %v1685 = vmax.f32 %v1296, %v1557
    %v1686 = vmax.f32 %v1297, %v1558
    %v1687 = vmax.f32 %v1298, %v1559
    %v1688 = vmax.f32 %v1299, %v1560
    %v1689 = vmax.f32 %v1300, %v1561
    %v1690 = vmax.f32 %v1301, %v1562
    %v1691 = vmax.f32 %v1302, %v1563
    %v1692 = vmax.f32 %v1303, %v1564
    %v1693 = vmax.f32 %v1304, %v1565
    %v1694 = vmax.f32 %v1305, %v1566
    %v1695 = vmax.f32 %v1306, %v1567
    %v1696 = vmax.f32 %v1307, %v1568
    %v1697 = vmax.f32 %v1308, %v1569
    %v1698 = vmax.f32 %v1309, %v1570
    %v1699 = vmax.f32 %v1310, %v1571
    %v1700 = vmax.f32 %v1311, %v1572
    %v1701 = vmax.f32 %v1312, %v1573
    %v1702 = vmax.f32 %v1313, %v1574
    %v1703 = vmax.f32 %v1314, %v1575
    %v1704 = vmax.f32 %v1315, %v1576
    %v1705 = vmax.f32 %v1316, %v1577
    %v1706 = vmax.f32 %v1317, %v1578
    %v1707 = vmax.f32 %v1318, %v1579
    %v1708 = vmax.f32 %v1319, %v1580
    %v1709 = vmax.f32 %v1320, %v1581
    %v1710 = vmax.f32 %v1321, %v1582
    %v1711 = vmax.f32 %v1322, %v1583
    %v1712 = vmax.f32 %v1323, %v1584
    %v1713 = vmax.f32 %v1324, %v1585
    %v1714 = vmax.f32 %v1325, %v1586
    %v1715 = vmax.f32 %v1326, %v1587
    %v1716 = vmax.f32 %v1327, %v1588
    %v1717 = vmax.f32 %v1328, %v1589
    %v1718 = vmax.f32 %v1329, %v1590
    %v1719 = vmax.f32 %v1330, %v1591
    %v1720 = vmax.f32 %v1331, %v1592
    %v1721 = vmax.f32 %v1332, %v1593
    %v1722 = vmax.f32 %v1333, %v1594
    %v1723 = vmax.f32 %v1334, %v1595
    %v1724 = vmax.f32 %v1335, %v1596
    %v1725 = vmax.f32 %v1336, %v1597
    %v1726 = vmax.f32 %v1337, %v1598
    %v1727 = vmax.f32 %v1338, %v1599
    %v1728 = vmax.f32 %v1339, %v1600
    %v1729 = vmax.f32 %v1340, %v1601
    %v1730 = vmax.f32 %v1341, %v1602
    %v1731 = vmax.f32 %v1342, %v1603
    %v1732 = vmax.f32 %v1343, %v1604
    %v1733 = vmax.f32 %v1344, %v1605
    %v1734 = vmax.f32 %v1345, %v1606
    %v1735 = vmax.f32 %v1346, %v1607
    %v1736 = vmax.f32 %v1347, %v1608
    %v1737 = vmax.f32 %v1348, %v1609
    %v1738 = vmax.f32 %v1349, %v1610
    %v1739 = vmax.f32 %v1350, %v1611
    %v1740 = vmax.f32 %v1351, %v1612
    %v1741 = vmax.f32 %v1352, %v1613
    %v1742 = vmax.f32 %v1353, %v1614
    %v1743 = vmax.f32 %v1354, %v1615
    %v1744 = vmax.f32 %v1355, %v1616
    %v1745 = vmax.f32 %v1356, %v1617
    %v1746 = vmax.f32 %v1357, %v1618
    %v1747 = vmax.f32 %v1358, %v1619
    %v1748 = vmax.f32 %v1359, %v1620
    %v1749 = vmax.f32 %v1360, %v1621
    %v1750 = vmax.f32 %v1361, %v1622
    %v1751 = vmax.f32 %v1362, %v1623
    %v1752 = vmax.f32 %v1363, %v1624
    %v1753 = vmax.f32 %v1364, %v1625
    %v1754 = vmax.f32 %v1365, %v1626
    %v1755 = vmax.f32 %v1366, %v1627
    %v1756 = vmax.f32 %v1367, %v1628
    %v1757 = vmax.f32 %v1368, %v1629
    %v1758 = vmax.f32 %v1369, %v1630
    %v1759 = vmax.f32 %v1370, %v1631
    %v1760 = vmax.f32 %v1371, %v1632
    %v1761 = vmax.f32 %v1372, %v1633
    %v1762 = vmax.f32 %v1373, %v1634
    %v1763 = vmax.f32 %v1374, %v1635
    %v1764 = vmax.f32 %v1375, %v1636
    %v1765 = vmax.f32 %v1376, %v1637
    %v1766 = vmax.f32 %v1377, %v1638
    %v1767 = vmax.f32 %v1378, %v1639
    %v1768 = vmax.f32 %v1379, %v1640
    %v1769 = vmax.f32 %v1380, %v1641
    %v1770 = vmax.f32 %v1381, %v1642
    %v1771 = vmax.f32 %v1382, %v1643
    %v1772 = vmax.f32 %v1383, %v1644
    %v1773 = vmax.f32 %v1384, %v1645
    %v1774 = vmax.f32 %v1385, %v1646
    %v1775 = vmax.f32 %v1386, %v1647
    %v1776 = vmax.f32 %v1387, %v1648
    %v1777 = vld [vmem:[#allocation2 + $0x22] sm:$0xff]
    %v1778 = vld [vmem:[#allocation2 + $0x2a] sm:$0xff]
    %v1779 = vld [vmem:[#allocation2 + $0x32] sm:$0xff]
    %v1780 = vld [vmem:[#allocation2 + $0x3a] sm:$0xff]
    %v1781 = vld [vmem:[#allocation2 + $0x42] sm:$0xff]
    %v1782 = vld [vmem:[#allocation2 + $0x4a] sm:$0xff]
    %v1783 = vld [vmem:[#allocation2 + $0x52] sm:$0xff]
    %v1784 = vld [vmem:[#allocation2 + $0x5a] sm:$0xff]
    %v1785 = vld [vmem:[#allocation2 + $0x62] sm:$0xff]
    %v1786 = vld [vmem:[#allocation2 + $0x6a] sm:$0xff]
    %v1787 = vld [vmem:[#allocation2 + $0x72] sm:$0xff]
    %v1788 = vld [vmem:[#allocation2 + $0x7a] sm:$0xff]
    %v1789 = vld [vmem:[#allocation2 + $0x82] sm:$0xff]
    %v1790 = vld [vmem:[#allocation2 + $0x8a] sm:$0xff]
    %v1791 = vld [vmem:[#allocation2 + $0x92] sm:$0xff]
    %v1792 = vld [vmem:[#allocation2 + $0x9a] sm:$0xff]
    %v1793 = vld [vmem:[#allocation2 + $0xa2] sm:$0xff]
    %v1794 = vld [vmem:[#allocation2 + $0xaa] sm:$0xff]
    %v1795 = vld [vmem:[#allocation2 + $0xb2] sm:$0xff]
    %v1796 = vld [vmem:[#allocation2 + $0xba] sm:$0xff]
    %v1797 = vld [vmem:[#allocation2 + $0xc2] sm:$0xff]
    %v1798 = vld [vmem:[#allocation2 + $0xca] sm:$0xff]
    %v1799 = vld [vmem:[#allocation2 + $0xd2] sm:$0xff]
    %v1800 = vld [vmem:[#allocation2 + $0xda] sm:$0xff]
    %v1801 = vld [vmem:[#allocation2 + $0xe2] sm:$0xff]
    %v1802 = vld [vmem:[#allocation2 + $0xea] sm:$0xff]
    %v1803 = vld [vmem:[#allocation2 + $0xf2] sm:$0xff]
    %v1804 = vld [vmem:[#allocation2 + $0xfa] sm:$0xff]
    %v1805 = vld [vmem:[#allocation2 + $0x102] sm:$0xff]
    %v1806 = vld [vmem:[#allocation2 + $0x10a] sm:$0xff]
    %v1807 = vld [vmem:[#allocation2 + $0x112] sm:$0xff]
    %v1808 = vld [vmem:[#allocation2 + $0x11a] sm:$0xff]
    %v1809 = vld [vmem:[#allocation2 + $0x122] sm:$0xff]
    %v1810 = vld [vmem:[#allocation2 + $0x12a] sm:$0xff]
    %v1811 = vld [vmem:[#allocation2 + $0x132] sm:$0xff]
    %v1812 = vld [vmem:[#allocation2 + $0x13a] sm:$0xff]
    %v1813 = vld [vmem:[#allocation2 + $0x142] sm:$0xff]
    %v1814 = vld [vmem:[#allocation2 + $0x14a] sm:$0xff]
    %v1815 = vld [vmem:[#allocation2 + $0x152] sm:$0xff]
    %v1816 = vld [vmem:[#allocation2 + $0x15a] sm:$0xff]
    %v1817 = vld [vmem:[#allocation2 + $0x162] sm:$0xff]
    %v1818 = vld [vmem:[#allocation2 + $0x16a] sm:$0xff]
    %v1819 = vld [vmem:[#allocation2 + $0x172] sm:$0xff]
    %v1820 = vld [vmem:[#allocation2 + $0x17a] sm:$0xff]
    %v1821 = vld [vmem:[#allocation2 + $0x182] sm:$0xff]
    %v1822 = vld [vmem:[#allocation2 + $0x18a] sm:$0xff]
    %v1823 = vld [vmem:[#allocation2 + $0x192] sm:$0xff]
    %v1824 = vld [vmem:[#allocation2 + $0x19a] sm:$0xff]
    %v1825 = vld [vmem:[#allocation2 + $0x1a2] sm:$0xff]
    %v1826 = vld [vmem:[#allocation2 + $0x1aa] sm:$0xff]
    %v1827 = vld [vmem:[#allocation2 + $0x1b2] sm:$0xff]
    %v1828 = vld [vmem:[#allocation2 + $0x1ba] sm:$0xff]
    %v1829 = vld [vmem:[#allocation2 + $0x1c2] sm:$0xff]
    %v1830 = vld [vmem:[#allocation2 + $0x1ca] sm:$0xff]
    %v1831 = vld [vmem:[#allocation2 + $0x1d2] sm:$0xff]
    %v1832 = vld [vmem:[#allocation2 + $0x1da] sm:$0xff]
    %v1833 = vld [vmem:[#allocation2 + $0x1e2] sm:$0xff]
    %v1834 = vld [vmem:[#allocation2 + $0x1ea] sm:$0xff]
    %v1835 = vld [vmem:[#allocation2 + $0x1f2] sm:$0xff]
    %v1836 = vld [vmem:[#allocation2 + $0x1fa] sm:$0xff]
    %v1837 = vld [vmem:[#allocation2 + $0x202] sm:$0xff]
    %v1838 = vld [vmem:[#allocation2 + $0x20a] sm:$0xff]
    %v1839 = vld [vmem:[#allocation2 + $0x212] sm:$0xff]
    %v1840 = vld [vmem:[#allocation2 + $0x21a] sm:$0xff]
    %v1841 = vld [vmem:[#allocation2 + $0x222] sm:$0xff]
    %v1842 = vld [vmem:[#allocation2 + $0x22a] sm:$0xff]
    %v1843 = vld [vmem:[#allocation2 + $0x232] sm:$0xff]
    %v1844 = vld [vmem:[#allocation2 + $0x23a] sm:$0xff]
    %v1845 = vld [vmem:[#allocation2 + $0x242] sm:$0xff]
    %v1846 = vld [vmem:[#allocation2 + $0x24a] sm:$0xff]
    %v1847 = vld [vmem:[#allocation2 + $0x252] sm:$0xff]
    %v1848 = vld [vmem:[#allocation2 + $0x25a] sm:$0xff]
    %v1849 = vld [vmem:[#allocation2 + $0x262] sm:$0xff]
    %v1850 = vld [vmem:[#allocation2 + $0x26a] sm:$0xff]
    %v1851 = vld [vmem:[#allocation2 + $0x272] sm:$0xff]
    %v1852 = vld [vmem:[#allocation2 + $0x27a] sm:$0xff]
    %v1853 = vld [vmem:[#allocation2 + $0x282] sm:$0xff]
    %v1854 = vld [vmem:[#allocation2 + $0x28a] sm:$0xff]
    %v1855 = vld [vmem:[#allocation2 + $0x292] sm:$0xff]
    %v1856 = vld [vmem:[#allocation2 + $0x29a] sm:$0xff]
    %v1857 = vld [vmem:[#allocation2 + $0x2a2] sm:$0xff]
    %v1858 = vld [vmem:[#allocation2 + $0x2aa] sm:$0xff]
    %v1859 = vld [vmem:[#allocation2 + $0x2b2] sm:$0xff]
    %v1860 = vld [vmem:[#allocation2 + $0x2ba] sm:$0xff]
    %v1861 = vld [vmem:[#allocation2 + $0x2c2] sm:$0xff]
    %v1862 = vld [vmem:[#allocation2 + $0x2ca] sm:$0xff]
    %v1863 = vld [vmem:[#allocation2 + $0x2d2] sm:$0xff]
    %v1864 = vld [vmem:[#allocation2 + $0x2da] sm:$0xff]
    %v1865 = vld [vmem:[#allocation2 + $0x2e2] sm:$0xff]
    %v1866 = vld [vmem:[#allocation2 + $0x2ea] sm:$0xff]
    %v1867 = vld [vmem:[#allocation2 + $0x2f2] sm:$0xff]
    %v1868 = vld [vmem:[#allocation2 + $0x2fa] sm:$0xff]
    %v1869 = vld [vmem:[#allocation2 + $0x302] sm:$0xff]
    %v1870 = vld [vmem:[#allocation2 + $0x30a] sm:$0xff]
    %v1871 = vld [vmem:[#allocation2 + $0x312] sm:$0xff]
    %v1872 = vld [vmem:[#allocation2 + $0x31a] sm:$0xff]
    %v1873 = vld [vmem:[#allocation2 + $0x322] sm:$0xff]
    %v1874 = vld [vmem:[#allocation2 + $0x32a] sm:$0xff]
    %v1875 = vld [vmem:[#allocation2 + $0x332] sm:$0xff]
    %v1876 = vld [vmem:[#allocation2 + $0x33a] sm:$0xff]
    %v1877 = vld [vmem:[#allocation2 + $0x342] sm:$0xff]
    %v1878 = vld [vmem:[#allocation2 + $0x34a] sm:$0xff]
    %v1879 = vld [vmem:[#allocation2 + $0x352] sm:$0xff]
    %v1880 = vld [vmem:[#allocation2 + $0x35a] sm:$0xff]
    %v1881 = vld [vmem:[#allocation2 + $0x362] sm:$0xff]
    %v1882 = vld [vmem:[#allocation2 + $0x36a] sm:$0xff]
    %v1883 = vld [vmem:[#allocation2 + $0x372] sm:$0xff]
    %v1884 = vld [vmem:[#allocation2 + $0x37a] sm:$0xff]
    %v1885 = vld [vmem:[#allocation2 + $0x382] sm:$0xff]
    %v1886 = vld [vmem:[#allocation2 + $0x38a] sm:$0xff]
    %v1887 = vld [vmem:[#allocation2 + $0x392] sm:$0xff]
    %v1888 = vld [vmem:[#allocation2 + $0x39a] sm:$0xff]
    %v1889 = vld [vmem:[#allocation2 + $0x3a2] sm:$0xff]
    %v1890 = vld [vmem:[#allocation2 + $0x3aa] sm:$0xff]
    %v1891 = vld [vmem:[#allocation2 + $0x3b2] sm:$0xff]
    %v1892 = vld [vmem:[#allocation2 + $0x3ba] sm:$0xff]
    %v1893 = vld [vmem:[#allocation2 + $0x3c2] sm:$0xff]
    %v1894 = vld [vmem:[#allocation2 + $0x3ca] sm:$0xff]
    %v1895 = vld [vmem:[#allocation2 + $0x3d2] sm:$0xff]
    %v1896 = vld [vmem:[#allocation2 + $0x3da] sm:$0xff]
    %v1897 = vld [vmem:[#allocation2 + $0x3e2] sm:$0xff]
    %v1898 = vld [vmem:[#allocation2 + $0x3ea] sm:$0xff]
    %v1899 = vld [vmem:[#allocation2 + $0x3f2] sm:$0xff]
    %v1900 = vld [vmem:[#allocation2 + $0x3fa] sm:$0xff]
    %v1901 = vld [vmem:[#allocation2 + $0x402] sm:$0xff]
    %v1902 = vld [vmem:[#allocation2 + $0x40a] sm:$0xff]
    %v1903 = vld [vmem:[#allocation2 + $0x412] sm:$0xff]
    %v1904 = vld [vmem:[#allocation2 + $0x41a] sm:$0xff]
    %v1905 = vld [vmem:[#allocation2 + $0x23] sm:$0xff]
    %v1906 = vld [vmem:[#allocation2 + $0x2b] sm:$0xff]
    %v1907 = vld [vmem:[#allocation2 + $0x33] sm:$0xff]
    %v1908 = vld [vmem:[#allocation2 + $0x3b] sm:$0xff]
    %v1909 = vld [vmem:[#allocation2 + $0x43] sm:$0xff]
    %v1910 = vld [vmem:[#allocation2 + $0x4b] sm:$0xff]
    %v1911 = vld [vmem:[#allocation2 + $0x53] sm:$0xff]
    %v1912 = vld [vmem:[#allocation2 + $0x5b] sm:$0xff]
    %v1913 = vld [vmem:[#allocation2 + $0x63] sm:$0xff]
    %v1914 = vld [vmem:[#allocation2 + $0x6b] sm:$0xff]
    %v1915 = vld [vmem:[#allocation2 + $0x73] sm:$0xff]
    %v1916 = vld [vmem:[#allocation2 + $0x7b] sm:$0xff]
    %v1917 = vld [vmem:[#allocation2 + $0x83] sm:$0xff]
    %v1918 = vld [vmem:[#allocation2 + $0x8b] sm:$0xff]
    %v1919 = vld [vmem:[#allocation2 + $0x93] sm:$0xff]
    %v1920 = vld [vmem:[#allocation2 + $0x9b] sm:$0xff]
    %v1921 = vld [vmem:[#allocation2 + $0xa3] sm:$0xff]
    %v1922 = vld [vmem:[#allocation2 + $0xab] sm:$0xff]
    %v1923 = vld [vmem:[#allocation2 + $0xb3] sm:$0xff]
    %v1924 = vld [vmem:[#allocation2 + $0xbb] sm:$0xff]
    %v1925 = vld [vmem:[#allocation2 + $0xc3] sm:$0xff]
    %v1926 = vld [vmem:[#allocation2 + $0xcb] sm:$0xff]
    %v1927 = vld [vmem:[#allocation2 + $0xd3] sm:$0xff]
    %v1928 = vld [vmem:[#allocation2 + $0xdb] sm:$0xff]
    %v1929 = vld [vmem:[#allocation2 + $0xe3] sm:$0xff]
    %v1930 = vld [vmem:[#allocation2 + $0xeb] sm:$0xff]
    %v1931 = vld [vmem:[#allocation2 + $0xf3] sm:$0xff]
    %v1932 = vld [vmem:[#allocation2 + $0xfb] sm:$0xff]
    %v1933 = vld [vmem:[#allocation2 + $0x103] sm:$0xff]
    %v1934 = vld [vmem:[#allocation2 + $0x10b] sm:$0xff]
    %v1935 = vld [vmem:[#allocation2 + $0x113] sm:$0xff]
    %v1936 = vld [vmem:[#allocation2 + $0x11b] sm:$0xff]
    %v1937 = vld [vmem:[#allocation2 + $0x123] sm:$0xff]
    %v1938 = vld [vmem:[#allocation2 + $0x12b] sm:$0xff]
    %v1939 = vld [vmem:[#allocation2 + $0x133] sm:$0xff]
    %v1940 = vld [vmem:[#allocation2 + $0x13b] sm:$0xff]
    %v1941 = vld [vmem:[#allocation2 + $0x143] sm:$0xff]
    %v1942 = vld [vmem:[#allocation2 + $0x14b] sm:$0xff]
    %v1943 = vld [vmem:[#allocation2 + $0x153] sm:$0xff]
    %v1944 = vld [vmem:[#allocation2 + $0x15b] sm:$0xff]
    %v1945 = vld [vmem:[#allocation2 + $0x163] sm:$0xff]
    %v1946 = vld [vmem:[#allocation2 + $0x16b] sm:$0xff]
    %v1947 = vld [vmem:[#allocation2 + $0x173] sm:$0xff]
    %v1948 = vld [vmem:[#allocation2 + $0x17b] sm:$0xff]
    %v1949 = vld [vmem:[#allocation2 + $0x183] sm:$0xff]
    %v1950 = vld [vmem:[#allocation2 + $0x18b] sm:$0xff]
    %v1951 = vld [vmem:[#allocation2 + $0x193] sm:$0xff]
    %v1952 = vld [vmem:[#allocation2 + $0x19b] sm:$0xff]
    %v1953 = vld [vmem:[#allocation2 + $0x1a3] sm:$0xff]
    %v1954 = vld [vmem:[#allocation2 + $0x1ab] sm:$0xff]
    %v1955 = vld [vmem:[#allocation2 + $0x1b3] sm:$0xff]
    %v1956 = vld [vmem:[#allocation2 + $0x1bb] sm:$0xff]
    %v1957 = vld [vmem:[#allocation2 + $0x1c3] sm:$0xff]
    %v1958 = vld [vmem:[#allocation2 + $0x1cb] sm:$0xff]
    %v1959 = vld [vmem:[#allocation2 + $0x1d3] sm:$0xff]
    %v1960 = vld [vmem:[#allocation2 + $0x1db] sm:$0xff]
    %v1961 = vld [vmem:[#allocation2 + $0x1e3] sm:$0xff]
    %v1962 = vld [vmem:[#allocation2 + $0x1eb] sm:$0xff]
    %v1963 = vld [vmem:[#allocation2 + $0x1f3] sm:$0xff]
    %v1964 = vld [vmem:[#allocation2 + $0x1fb] sm:$0xff]
    %v1965 = vld [vmem:[#allocation2 + $0x203] sm:$0xff]
    %v1966 = vld [vmem:[#allocation2 + $0x20b] sm:$0xff]
    %v1967 = vld [vmem:[#allocation2 + $0x213] sm:$0xff]
    %v1968 = vld [vmem:[#allocation2 + $0x21b] sm:$0xff]
    %v1969 = vld [vmem:[#allocation2 + $0x223] sm:$0xff]
    %v1970 = vld [vmem:[#allocation2 + $0x22b] sm:$0xff]
    %v1971 = vld [vmem:[#allocation2 + $0x233] sm:$0xff]
    %v1972 = vld [vmem:[#allocation2 + $0x23b] sm:$0xff]
    %v1973 = vld [vmem:[#allocation2 + $0x243] sm:$0xff]
    %v1974 = vld [vmem:[#allocation2 + $0x24b] sm:$0xff]
    %v1975 = vld [vmem:[#allocation2 + $0x253] sm:$0xff]
    %v1976 = vld [vmem:[#allocation2 + $0x25b] sm:$0xff]
    %v1977 = vld [vmem:[#allocation2 + $0x263] sm:$0xff]
    %v1978 = vld [vmem:[#allocation2 + $0x26b] sm:$0xff]
    %v1979 = vld [vmem:[#allocation2 + $0x273] sm:$0xff]
    %v1980 = vld [vmem:[#allocation2 + $0x27b] sm:$0xff]
    %v1981 = vld [vmem:[#allocation2 + $0x283] sm:$0xff]
    %v1982 = vld [vmem:[#allocation2 + $0x28b] sm:$0xff]
    %v1983 = vld [vmem:[#allocation2 + $0x293] sm:$0xff]
    %v1984 = vld [vmem:[#allocation2 + $0x29b] sm:$0xff]
    %v1985 = vld [vmem:[#allocation2 + $0x2a3] sm:$0xff]
    %v1986 = vld [vmem:[#allocation2 + $0x2ab] sm:$0xff]
    %v1987 = vld [vmem:[#allocation2 + $0x2b3] sm:$0xff]
    %v1988 = vld [vmem:[#allocation2 + $0x2bb] sm:$0xff]
    %v1989 = vld [vmem:[#allocation2 + $0x2c3] sm:$0xff]
    %v1990 = vld [vmem:[#allocation2 + $0x2cb] sm:$0xff]
    %v1991 = vld [vmem:[#allocation2 + $0x2d3] sm:$0xff]
    %v1992 = vld [vmem:[#allocation2 + $0x2db] sm:$0xff]
    %v1993 = vld [vmem:[#allocation2 + $0x2e3] sm:$0xff]
    %v1994 = vld [vmem:[#allocation2 + $0x2eb] sm:$0xff]
    %v1995 = vld [vmem:[#allocation2 + $0x2f3] sm:$0xff]
    %v1996 = vld [vmem:[#allocation2 + $0x2fb] sm:$0xff]
    %v1997 = vld [vmem:[#allocation2 + $0x303] sm:$0xff]
    %v1998 = vld [vmem:[#allocation2 + $0x30b] sm:$0xff]
    %v1999 = vld [vmem:[#allocation2 + $0x313] sm:$0xff]
    %v2000 = vld [vmem:[#allocation2 + $0x31b] sm:$0xff]
    %v2001 = vld [vmem:[#allocation2 + $0x323] sm:$0xff]
    %v2002 = vld [vmem:[#allocation2 + $0x32b] sm:$0xff]
    %v2003 = vld [vmem:[#allocation2 + $0x333] sm:$0xff]
    %v2004 = vld [vmem:[#allocation2 + $0x33b] sm:$0xff]
    %v2005 = vld [vmem:[#allocation2 + $0x343] sm:$0xff]
    %v2006 = vld [vmem:[#allocation2 + $0x34b] sm:$0xff]
    %v2007 = vld [vmem:[#allocation2 + $0x353] sm:$0xff]
    %v2008 = vld [vmem:[#allocation2 + $0x35b] sm:$0xff]
    %v2009 = vld [vmem:[#allocation2 + $0x363] sm:$0xff]
    %v2010 = vld [vmem:[#allocation2 + $0x36b] sm:$0xff]
    %v2011 = vld [vmem:[#allocation2 + $0x373] sm:$0xff]
    %v2012 = vld [vmem:[#allocation2 + $0x37b] sm:$0xff]
    %v2013 = vld [vmem:[#allocation2 + $0x383] sm:$0xff]
    %v2014 = vld [vmem:[#allocation2 + $0x38b] sm:$0xff]
    %v2015 = vld [vmem:[#allocation2 + $0x393] sm:$0xff]
    %v2016 = vld [vmem:[#allocation2 + $0x39b] sm:$0xff]
    %v2017 = vld [vmem:[#allocation2 + $0x3a3] sm:$0xff]
    %v2018 = vld [vmem:[#allocation2 + $0x3ab] sm:$0xff]
    %v2019 = vld [vmem:[#allocation2 + $0x3b3] sm:$0xff]
    %v2020 = vld [vmem:[#allocation2 + $0x3bb] sm:$0xff]
    %v2021 = vld [vmem:[#allocation2 + $0x3c3] sm:$0xff]
    %v2022 = vld [vmem:[#allocation2 + $0x3cb] sm:$0xff]
    %v2023 = vld [vmem:[#allocation2 + $0x3d3] sm:$0xff]
    %v2024 = vld [vmem:[#allocation2 + $0x3db] sm:$0xff]
    %v2025 = vld [vmem:[#allocation2 + $0x3e3] sm:$0xff]
    %v2026 = vld [vmem:[#allocation2 + $0x3eb] sm:$0xff]
    %v2027 = vld [vmem:[#allocation2 + $0x3f3] sm:$0xff]
    %v2028 = vld [vmem:[#allocation2 + $0x3fb] sm:$0xff]
    %v2029 = vld [vmem:[#allocation2 + $0x403] sm:$0xff]
    %v2030 = vld [vmem:[#allocation2 + $0x40b] sm:$0xff]
    %v2031 = vld [vmem:[#allocation2 + $0x413] sm:$0xff]
    %v2032 = vld [vmem:[#allocation2 + $0x41b] sm:$0xff]
    %v2033 = vmax.f32 %v1777, %v1905
    %v2034 = vmax.f32 %v1778, %v1906
    %v2035 = vmax.f32 %v1779, %v1907
    %v2036 = vmax.f32 %v1780, %v1908
    %v2037 = vmax.f32 %v1781, %v1909
    %v2038 = vmax.f32 %v1782, %v1910
    %v2039 = vmax.f32 %v1783, %v1911
    %v2040 = vmax.f32 %v1784, %v1912
    %v2041 = vmax.f32 %v1785, %v1913
    %v2042 = vmax.f32 %v1786, %v1914
    %v2043 = vmax.f32 %v1787, %v1915
    %v2044 = vmax.f32 %v1788, %v1916
    %v2045 = vmax.f32 %v1789, %v1917
    %v2046 = vmax.f32 %v1790, %v1918
    %v2047 = vmax.f32 %v1791, %v1919
    %v2048 = vmax.f32 %v1792, %v1920
    %v2049 = vmax.f32 %v1793, %v1921
    %v2050 = vmax.f32 %v1794, %v1922
    %v2051 = vmax.f32 %v1795, %v1923
    %v2052 = vmax.f32 %v1796, %v1924
    %v2053 = vmax.f32 %v1797, %v1925
    %v2054 = vmax.f32 %v1798, %v1926
    %v2055 = vmax.f32 %v1799, %v1927
    %v2056 = vmax.f32 %v1800, %v1928
    %v2057 = vmax.f32 %v1801, %v1929
    %v2058 = vmax.f32 %v1802, %v1930
    %v2059 = vmax.f32 %v1803, %v1931
    %v2060 = vmax.f32 %v1804, %v1932
    %v2061 = vmax.f32 %v1805, %v1933
    %v2062 = vmax.f32 %v1806, %v1934
    %v2063 = vmax.f32 %v1807, %v1935
    %v2064 = vmax.f32 %v1808, %v1936
    %v2065 = vmax.f32 %v1809, %v1937
    %v2066 = vmax.f32 %v1810, %v1938
    %v2067 = vmax.f32 %v1811, %v1939
    %v2068 = vmax.f32 %v1812, %v1940
    %v2069 = vmax.f32 %v1813, %v1941
    %v2070 = vmax.f32 %v1814, %v1942
    %v2071 = vmax.f32 %v1815, %v1943
    %v2072 = vmax.f32 %v1816, %v1944
    %v2073 = vmax.f32 %v1817, %v1945
    %v2074 = vmax.f32 %v1818, %v1946
    %v2075 = vmax.f32 %v1819, %v1947
    %v2076 = vmax.f32 %v1820, %v1948
    %v2077 = vmax.f32 %v1821, %v1949
    %v2078 = vmax.f32 %v1822, %v1950
    %v2079 = vmax.f32 %v1823, %v1951
    %v2080 = vmax.f32 %v1824, %v1952
    %v2081 = vmax.f32 %v1825, %v1953
    %v2082 = vmax.f32 %v1826, %v1954
    %v2083 = vmax.f32 %v1827, %v1955
    %v2084 = vmax.f32 %v1828, %v1956
    %v2085 = vmax.f32 %v1829, %v1957
    %v2086 = vmax.f32 %v1830, %v1958
    %v2087 = vmax.f32 %v1831, %v1959
    %v2088 = vmax.f32 %v1832, %v1960
    %v2089 = vmax.f32 %v1833, %v1961
    %v2090 = vmax.f32 %v1834, %v1962
    %v2091 = vmax.f32 %v1835, %v1963
    %v2092 = vmax.f32 %v1836, %v1964
    %v2093 = vmax.f32 %v1837, %v1965
    %v2094 = vmax.f32 %v1838, %v1966
    %v2095 = vmax.f32 %v1839, %v1967
    %v2096 = vmax.f32 %v1840, %v1968
    %v2097 = vmax.f32 %v1841, %v1969
    %v2098 = vmax.f32 %v1842, %v1970
    %v2099 = vmax.f32 %v1843, %v1971
    %v2100 = vmax.f32 %v1844, %v1972
    %v2101 = vmax.f32 %v1845, %v1973
    %v2102 = vmax.f32 %v1846, %v1974
    %v2103 = vmax.f32 %v1847, %v1975
    %v2104 = vmax.f32 %v1848, %v1976
    %v2105 = vmax.f32 %v1849, %v1977
    %v2106 = vmax.f32 %v1850, %v1978
    %v2107 = vmax.f32 %v1851, %v1979
    %v2108 = vmax.f32 %v1852, %v1980
    %v2109 = vmax.f32 %v1853, %v1981
    %v2110 = vmax.f32 %v1854, %v1982
    %v2111 = vmax.f32 %v1855, %v1983
    %v2112 = vmax.f32 %v1856, %v1984
    %v2113 = vmax.f32 %v1857, %v1985
    %v2114 = vmax.f32 %v1858, %v1986
    %v2115 = vmax.f32 %v1859, %v1987
    %v2116 = vmax.f32 %v1860, %v1988
    %v2117 = vmax.f32 %v1861, %v1989
    %v2118 = vmax.f32 %v1862, %v1990
    %v2119 = vmax.f32 %v1863, %v1991
    %v2120 = vmax.f32 %v1864, %v1992
    %v2121 = vmax.f32 %v1865, %v1993
    %v2122 = vmax.f32 %v1866, %v1994
    %v2123 = vmax.f32 %v1867, %v1995
    %v2124 = vmax.f32 %v1868, %v1996
    %v2125 = vmax.f32 %v1869, %v1997
    %v2126 = vmax.f32 %v1870, %v1998
    %v2127 = vmax.f32 %v1871, %v1999
    %v2128 = vmax.f32 %v1872, %v2000
    %v2129 = vmax.f32 %v1873, %v2001
    %v2130 = vmax.f32 %v1874, %v2002
    %v2131 = vmax.f32 %v1875, %v2003
    %v2132 = vmax.f32 %v1876, %v2004
    %v2133 = vmax.f32 %v1877, %v2005
    %v2134 = vmax.f32 %v1878, %v2006
    %v2135 = vmax.f32 %v1879, %v2007
    %v2136 = vmax.f32 %v1880, %v2008
    %v2137 = vmax.f32 %v1881, %v2009
    %v2138 = vmax.f32 %v1882, %v2010
    %v2139 = vmax.f32 %v1883, %v2011
    %v2140 = vmax.f32 %v1884, %v2012
    %v2141 = vmax.f32 %v1885, %v2013
    %v2142 = vmax.f32 %v1886, %v2014
    %v2143 = vmax.f32 %v1887, %v2015
    %v2144 = vmax.f32 %v1888, %v2016
    %v2145 = vmax.f32 %v1889, %v2017
    %v2146 = vmax.f32 %v1890, %v2018
    %v2147 = vmax.f32 %v1891, %v2019
    %v2148 = vmax.f32 %v1892, %v2020
    %v2149 = vmax.f32 %v1893, %v2021
    %v2150 = vmax.f32 %v1894, %v2022
    %v2151 = vmax.f32 %v1895, %v2023
    %v2152 = vmax.f32 %v1896, %v2024
    %v2153 = vmax.f32 %v1897, %v2025
    %v2154 = vmax.f32 %v1898, %v2026
    %v2155 = vmax.f32 %v1899, %v2027
    %v2156 = vmax.f32 %v1900, %v2028
    %v2157 = vmax.f32 %v1901, %v2029
    %v2158 = vmax.f32 %v1902, %v2030
    %v2159 = vmax.f32 %v1903, %v2031
    %v2160 = vmax.f32 %v1904, %v2032
    %v2161 = vmax.f32 %v1649, %v2033
    %v2162 = vmax.f32 %v1650, %v2034
    %v2163 = vmax.f32 %v1651, %v2035
    %v2164 = vmax.f32 %v1652, %v2036
    %v2165 = vmax.f32 %v1653, %v2037
    %v2166 = vmax.f32 %v1654, %v2038
    %v2167 = vmax.f32 %v1655, %v2039
    %v2168 = vmax.f32 %v1656, %v2040
    %v2169 = vmax.f32 %v1657, %v2041
    %v2170 = vmax.f32 %v1658, %v2042
    %v2171 = vmax.f32 %v1659, %v2043
    %v2172 = vmax.f32 %v1660, %v2044
    %v2173 = vmax.f32 %v1661, %v2045
    %v2174 = vmax.f32 %v1662, %v2046
    %v2175 = vmax.f32 %v1663, %v2047
    %v2176 = vmax.f32 %v1664, %v2048
    %v2177 = vmax.f32 %v1665, %v2049
    %v2178 = vmax.f32 %v1666, %v2050
    %v2179 = vmax.f32 %v1667, %v2051
    %v2180 = vmax.f32 %v1668, %v2052
    %v2181 = vmax.f32 %v1669, %v2053
    %v2182 = vmax.f32 %v1670, %v2054
    %v2183 = vmax.f32 %v1671, %v2055
    %v2184 = vmax.f32 %v1672, %v2056
    %v2185 = vmax.f32 %v1673, %v2057
    %v2186 = vmax.f32 %v1674, %v2058
    %v2187 = vmax.f32 %v1675, %v2059
    %v2188 = vmax.f32 %v1676, %v2060
    %v2189 = vmax.f32 %v1677, %v2061
    %v2190 = vmax.f32 %v1678, %v2062
    %v2191 = vmax.f32 %v1679, %v2063
    %v2192 = vmax.f32 %v1680, %v2064
    %v2193 = vmax.f32 %v1681, %v2065
    %v2194 = vmax.f32 %v1682, %v2066
    %v2195 = vmax.f32 %v1683, %v2067
    %v2196 = vmax.f32 %v1684, %v2068
    %v2197 = vmax.f32 %v1685, %v2069
    %v2198 = vmax.f32 %v1686, %v2070
    %v2199 = vmax.f32 %v1687, %v2071
    %v2200 = vmax.f32 %v1688, %v2072
    %v2201 = vmax.f32 %v1689, %v2073
    %v2202 = vmax.f32 %v1690, %v2074
    %v2203 = vmax.f32 %v1691, %v2075
    %v2204 = vmax.f32 %v1692, %v2076
    %v2205 = vmax.f32 %v1693, %v2077
    %v2206 = vmax.f32 %v1694, %v2078
    %v2207 = vmax.f32 %v1695, %v2079
    %v2208 = vmax.f32 %v1696, %v2080
    %v2209 = vmax.f32 %v1697, %v2081
    %v2210 = vmax.f32 %v1698, %v2082
    %v2211 = vmax.f32 %v1699, %v2083
    %v2212 = vmax.f32 %v1700, %v2084
    %v2213 = vmax.f32 %v1701, %v2085
    %v2214 = vmax.f32 %v1702, %v2086
    %v2215 = vmax.f32 %v1703, %v2087
    %v2216 = vmax.f32 %v1704, %v2088
    %v2217 = vmax.f32 %v1705, %v2089
    %v2218 = vmax.f32 %v1706, %v2090
    %v2219 = vmax.f32 %v1707, %v2091
    %v2220 = vmax.f32 %v1708, %v2092
    %v2221 = vmax.f32 %v1709, %v2093
    %v2222 = vmax.f32 %v1710, %v2094
    %v2223 = vmax.f32 %v1711, %v2095
    %v2224 = vmax.f32 %v1712, %v2096
    %v2225 = vmax.f32 %v1713, %v2097
    %v2226 = vmax.f32 %v1714, %v2098
    %v2227 = vmax.f32 %v1715, %v2099
    %v2228 = vmax.f32 %v1716, %v2100
    %v2229 = vmax.f32 %v1717, %v2101
    %v2230 = vmax.f32 %v1718, %v2102
    %v2231 = vmax.f32 %v1719, %v2103
    %v2232 = vmax.f32 %v1720, %v2104
    %v2233 = vmax.f32 %v1721, %v2105
    %v2234 = vmax.f32 %v1722, %v2106
    %v2235 = vmax.f32 %v1723, %v2107
    %v2236 = vmax.f32 %v1724, %v2108
    %v2237 = vmax.f32 %v1725, %v2109
    %v2238 = vmax.f32 %v1726, %v2110
    %v2239 = vmax.f32 %v1727, %v2111
    %v2240 = vmax.f32 %v1728, %v2112
    %v2241 = vmax.f32 %v1729, %v2113
    %v2242 = vmax.f32 %v1730, %v2114
    %v2243 = vmax.f32 %v1731, %v2115
    %v2244 = vmax.f32 %v1732, %v2116
    %v2245 = vmax.f32 %v1733, %v2117
    %v2246 = vmax.f32 %v1734, %v2118
    %v2247 = vmax.f32 %v1735, %v2119
    %v2248 = vmax.f32 %v1736, %v2120
    %v2249 = vmax.f32 %v1737, %v2121
    %v2250 = vmax.f32 %v1738, %v2122
    %v2251 = vmax.f32 %v1739, %v2123
    %v2252 = vmax.f32 %v1740, %v2124
    %v2253 = vmax.f32 %v1741, %v2125
    %v2254 = vmax.f32 %v1742, %v2126
    %v2255 = vmax.f32 %v1743, %v2127
    %v2256 = vmax.f32 %v1744, %v2128
    %v2257 = vmax.f32 %v1745, %v2129
    %v2258 = vmax.f32 %v1746, %v2130
    %v2259 = vmax.f32 %v1747, %v2131
    %v2260 = vmax.f32 %v1748, %v2132
    %v2261 = vmax.f32 %v1749, %v2133
    %v2262 = vmax.f32 %v1750, %v2134
    %v2263 = vmax.f32 %v1751, %v2135
    %v2264 = vmax.f32 %v1752, %v2136
    %v2265 = vmax.f32 %v1753, %v2137
    %v2266 = vmax.f32 %v1754, %v2138
    %v2267 = vmax.f32 %v1755, %v2139
    %v2268 = vmax.f32 %v1756, %v2140
    %v2269 = vmax.f32 %v1757, %v2141
    %v2270 = vmax.f32 %v1758, %v2142
    %v2271 = vmax.f32 %v1759, %v2143
    %v2272 = vmax.f32 %v1760, %v2144
    %v2273 = vmax.f32 %v1761, %v2145
    %v2274 = vmax.f32 %v1762, %v2146
    %v2275 = vmax.f32 %v1763, %v2147
    %v2276 = vmax.f32 %v1764, %v2148
    %v2277 = vmax.f32 %v1765, %v2149
    %v2278 = vmax.f32 %v1766, %v2150
    %v2279 = vmax.f32 %v1767, %v2151
    %v2280 = vmax.f32 %v1768, %v2152
    %v2281 = vmax.f32 %v1769, %v2153
    %v2282 = vmax.f32 %v1770, %v2154
    %v2283 = vmax.f32 %v1771, %v2155
    %v2284 = vmax.f32 %v1772, %v2156
    %v2285 = vmax.f32 %v1773, %v2157
    %v2286 = vmax.f32 %v1774, %v2158
    %v2287 = vmax.f32 %v1775, %v2159
    %v2288 = vmax.f32 %v1776, %v2160
    %v2289 = vld [vmem:[%s3] sm:$0xff]
    %v2290 = vld [vmem:[%s3 + $0x8] sm:$0xff]
    %v2291 = vld [vmem:[%s3 + $0x10] sm:$0xff]
    %v2292 = vld [vmem:[%s3 + $0x18] sm:$0xff]
    %v2293 = vld [vmem:[%s3 + $0x20] sm:$0xff]
    %v2294 = vld [vmem:[%s3 + $0x28] sm:$0xff]
    %v2295 = vld [vmem:[%s3 + $0x30] sm:$0xff]
    %v2296 = vld [vmem:[%s3 + $0x38] sm:$0xff]
    %v2297 = vld [vmem:[%s3 + $0x40] sm:$0xff]
    %v2298 = vld [vmem:[%s3 + $0x48] sm:$0xff]
    %v2299 = vld [vmem:[%s3 + $0x50] sm:$0xff]
    %v2300 = vld [vmem:[%s3 + $0x58] sm:$0xff]
    %v2301 = vld [vmem:[%s3 + $0x60] sm:$0xff]
    %v2302 = vld [vmem:[%s3 + $0x68] sm:$0xff]
    %v2303 = vld [vmem:[%s3 + $0x70] sm:$0xff]
    %v2304 = vld [vmem:[%s3 + $0x78] sm:$0xff]
    %v2305 = vld [vmem:[%s3 + $0x80] sm:$0xff]
    %v2306 = vld [vmem:[%s3 + $0x88] sm:$0xff]
    %v2307 = vld [vmem:[%s3 + $0x90] sm:$0xff]
    %v2308 = vld [vmem:[%s3 + $0x98] sm:$0xff]
    %v2309 = vld [vmem:[%s3 + $0xa0] sm:$0xff]
    %v2310 = vld [vmem:[%s3 + $0xa8] sm:$0xff]
    %v2311 = vld [vmem:[%s3 + $0xb0] sm:$0xff]
    %v2312 = vld [vmem:[%s3 + $0xb8] sm:$0xff]
    %v2313 = vld [vmem:[%s3 + $0xc0] sm:$0xff]
    %v2314 = vld [vmem:[%s3 + $0xc8] sm:$0xff]
    %v2315 = vld [vmem:[%s3 + $0xd0] sm:$0xff]
    %v2316 = vld [vmem:[%s3 + $0xd8] sm:$0xff]
    %v2317 = vld [vmem:[%s3 + $0xe0] sm:$0xff]
    %v2318 = vld [vmem:[%s3 + $0xe8] sm:$0xff]
    %v2319 = vld [vmem:[%s3 + $0xf0] sm:$0xff]
    %v2320 = vld [vmem:[%s3 + $0xf8] sm:$0xff]
    %v2321 = vld [vmem:[%s3 + $0x100] sm:$0xff]
    %v2322 = vld [vmem:[%s3 + $0x108] sm:$0xff]
    %v2323 = vld [vmem:[%s3 + $0x110] sm:$0xff]
    %v2324 = vld [vmem:[%s3 + $0x118] sm:$0xff]
    %v2325 = vld [vmem:[%s3 + $0x120] sm:$0xff]
    %v2326 = vld [vmem:[%s3 + $0x128] sm:$0xff]
    %v2327 = vld [vmem:[%s3 + $0x130] sm:$0xff]
    %v2328 = vld [vmem:[%s3 + $0x138] sm:$0xff]
    %v2329 = vld [vmem:[%s3 + $0x140] sm:$0xff]
    %v2330 = vld [vmem:[%s3 + $0x148] sm:$0xff]
    %v2331 = vld [vmem:[%s3 + $0x150] sm:$0xff]
    %v2332 = vld [vmem:[%s3 + $0x158] sm:$0xff]
    %v2333 = vld [vmem:[%s3 + $0x160] sm:$0xff]
    %v2334 = vld [vmem:[%s3 + $0x168] sm:$0xff]
    %v2335 = vld [vmem:[%s3 + $0x170] sm:$0xff]
    %v2336 = vld [vmem:[%s3 + $0x178] sm:$0xff]
    %v2337 = vld [vmem:[%s3 + $0x180] sm:$0xff]
    %v2338 = vld [vmem:[%s3 + $0x188] sm:$0xff]
    %v2339 = vld [vmem:[%s3 + $0x190] sm:$0xff]
    %v2340 = vld [vmem:[%s3 + $0x198] sm:$0xff]
    %v2341 = vld [vmem:[%s3 + $0x1a0] sm:$0xff]
    %v2342 = vld [vmem:[%s3 + $0x1a8] sm:$0xff]
    %v2343 = vld [vmem:[%s3 + $0x1b0] sm:$0xff]
    %v2344 = vld [vmem:[%s3 + $0x1b8] sm:$0xff]
    %v2345 = vld [vmem:[%s3 + $0x1c0] sm:$0xff]
    %v2346 = vld [vmem:[%s3 + $0x1c8] sm:$0xff]
    %v2347 = vld [vmem:[%s3 + $0x1d0] sm:$0xff]
    %v2348 = vld [vmem:[%s3 + $0x1d8] sm:$0xff]
    %v2349 = vld [vmem:[%s3 + $0x1e0] sm:$0xff]
    %v2350 = vld [vmem:[%s3 + $0x1e8] sm:$0xff]
    %v2351 = vld [vmem:[%s3 + $0x1f0] sm:$0xff]
    %v2352 = vld [vmem:[%s3 + $0x1f8] sm:$0xff]
    %v2353 = vld [vmem:[%s3 + $0x200] sm:$0xff]
    %v2354 = vld [vmem:[%s3 + $0x208] sm:$0xff]
    %v2355 = vld [vmem:[%s3 + $0x210] sm:$0xff]
    %v2356 = vld [vmem:[%s3 + $0x218] sm:$0xff]
    %v2357 = vld [vmem:[%s3 + $0x220] sm:$0xff]
    %v2358 = vld [vmem:[%s3 + $0x228] sm:$0xff]
    %v2359 = vld [vmem:[%s3 + $0x230] sm:$0xff]
    %v2360 = vld [vmem:[%s3 + $0x238] sm:$0xff]
    %v2361 = vld [vmem:[%s3 + $0x240] sm:$0xff]
    %v2362 = vld [vmem:[%s3 + $0x248] sm:$0xff]
    %v2363 = vld [vmem:[%s3 + $0x250] sm:$0xff]
    %v2364 = vld [vmem:[%s3 + $0x258] sm:$0xff]
    %v2365 = vld [vmem:[%s3 + $0x260] sm:$0xff]
    %v2366 = vld [vmem:[%s3 + $0x268] sm:$0xff]
    %v2367 = vld [vmem:[%s3 + $0x270] sm:$0xff]
    %v2368 = vld [vmem:[%s3 + $0x278] sm:$0xff]
    %v2369 = vld [vmem:[%s3 + $0x280] sm:$0xff]
    %v2370 = vld [vmem:[%s3 + $0x288] sm:$0xff]
    %v2371 = vld [vmem:[%s3 + $0x290] sm:$0xff]
    %v2372 = vld [vmem:[%s3 + $0x298] sm:$0xff]
    %v2373 = vld [vmem:[%s3 + $0x2a0] sm:$0xff]
    %v2374 = vld [vmem:[%s3 + $0x2a8] sm:$0xff]
    %v2375 = vld [vmem:[%s3 + $0x2b0] sm:$0xff]
    %v2376 = vld [vmem:[%s3 + $0x2b8] sm:$0xff]
    %v2377 = vld [vmem:[%s3 + $0x2c0] sm:$0xff]
    %v2378 = vld [vmem:[%s3 + $0x2c8] sm:$0xff]
    %v2379 = vld [vmem:[%s3 + $0x2d0] sm:$0xff]
    %v2380 = vld [vmem:[%s3 + $0x2d8] sm:$0xff]
    %v2381 = vld [vmem:[%s3 + $0x2e0] sm:$0xff]
    %v2382 = vld [vmem:[%s3 + $0x2e8] sm:$0xff]
    %v2383 = vld [vmem:[%s3 + $0x2f0] sm:$0xff]
    %v2384 = vld [vmem:[%s3 + $0x2f8] sm:$0xff]
    %v2385 = vld [vmem:[%s3 + $0x300] sm:$0xff]
    %v2386 = vld [vmem:[%s3 + $0x308] sm:$0xff]
    %v2387 = vld [vmem:[%s3 + $0x310] sm:$0xff]
    %v2388 = vld [vmem:[%s3 + $0x318] sm:$0xff]
    %v2389 = vld [vmem:[%s3 + $0x320] sm:$0xff]
    %v2390 = vld [vmem:[%s3 + $0x328] sm:$0xff]
    %v2391 = vld [vmem:[%s3 + $0x330] sm:$0xff]
    %v2392 = vld [vmem:[%s3 + $0x338] sm:$0xff]
    %v2393 = vld [vmem:[%s3 + $0x340] sm:$0xff]
    %v2394 = vld [vmem:[%s3 + $0x348] sm:$0xff]
    %v2395 = vld [vmem:[%s3 + $0x350] sm:$0xff]
    %v2396 = vld [vmem:[%s3 + $0x358] sm:$0xff]
    %v2397 = vld [vmem:[%s3 + $0x360] sm:$0xff]
    %v2398 = vld [vmem:[%s3 + $0x368] sm:$0xff]
    %v2399 = vld [vmem:[%s3 + $0x370] sm:$0xff]
    %v2400 = vld [vmem:[%s3 + $0x378] sm:$0xff]
    %v2401 = vld [vmem:[%s3 + $0x380] sm:$0xff]
    %v2402 = vld [vmem:[%s3 + $0x388] sm:$0xff]
    %v2403 = vld [vmem:[%s3 + $0x390] sm:$0xff]
    %v2404 = vld [vmem:[%s3 + $0x398] sm:$0xff]
    %v2405 = vpack.c.bf16 %v2162, %v2161
    %v2406 = vpack.c.bf16 %v2164, %v2163
    %v2407 = vpack.c.bf16 %v2166, %v2165
    %v2408 = vpack.c.bf16 %v2168, %v2167
    %v2409 = vpack.c.bf16 %v2170, %v2169
    %v2410 = vpack.c.bf16 %v2172, %v2171
    %v2411 = vpack.c.bf16 %v2174, %v2173
    %v2412 = vpack.c.bf16 %v2176, %v2175
    %v2413 = vpack.c.bf16 %v2178, %v2177
    %v2414 = vpack.c.bf16 %v2180, %v2179
    %v2415 = vpack.c.bf16 %v2182, %v2181
    %v2416 = vpack.c.bf16 %v2184, %v2183
    %v2417 = vpack.c.bf16 %v2186, %v2185
    %v2418 = vpack.c.bf16 %v2188, %v2187
    %v2419 = vpack.c.bf16 %v2190, %v2189
    %v2420 = vpack.c.bf16 %v2192, %v2191
    %v2421 = vpack.c.bf16 %v2194, %v2193
    %v2422 = vpack.c.bf16 %v2196, %v2195
    %v2423 = vpack.c.bf16 %v2198, %v2197
    %v2424 = vpack.c.bf16 %v2200, %v2199
    %v2425 = vpack.c.bf16 %v2202, %v2201
    %v2426 = vpack.c.bf16 %v2204, %v2203
    %v2427 = vpack.c.bf16 %v2206, %v2205
    %v2428 = vpack.c.bf16 %v2208, %v2207
    %v2429 = vpack.c.bf16 %v2210, %v2209
    %v2430 = vpack.c.bf16 %v2212, %v2211
    %v2431 = vpack.c.bf16 %v2214, %v2213
    %v2432 = vpack.c.bf16 %v2216, %v2215
    %v2433 = vpack.c.bf16 %v2218, %v2217
    %v2434 = vpack.c.bf16 %v2220, %v2219
    %v2435 = vpack.c.bf16 %v2222, %v2221
    %v2436 = vpack.c.bf16 %v2224, %v2223
    %v2437 = vpack.c.bf16 %v2226, %v2225
    %v2438 = vpack.c.bf16 %v2228, %v2227
    %v2439 = vpack.c.bf16 %v2230, %v2229
    %v2440 = vpack.c.bf16 %v2232, %v2231
    %v2441 = vpack.c.bf16 %v2234, %v2233
    %v2442 = vpack.c.bf16 %v2236, %v2235
    %v2443 = vpack.c.bf16 %v2238, %v2237
    %v2444 = vpack.c.bf16 %v2240, %v2239
    %v2445 = vpack.c.bf16 %v2242, %v2241
    %v2446 = vpack.c.bf16 %v2244, %v2243
    %v2447 = vpack.c.bf16 %v2246, %v2245
    %v2448 = vpack.c.bf16 %v2248, %v2247
    %v2449 = vpack.c.bf16 %v2250, %v2249
    %v2450 = vpack.c.bf16 %v2252, %v2251
    %v2451 = vpack.c.bf16 %v2254, %v2253
    %v2452 = vpack.c.bf16 %v2256, %v2255
    %v2453 = vpack.c.bf16 %v2258, %v2257
    %v2454 = vpack.c.bf16 %v2260, %v2259
    %v2455 = vpack.c.bf16 %v2262, %v2261
    %v2456 = vpack.c.bf16 %v2264, %v2263
    %v2457 = vpack.c.bf16 %v2266, %v2265
    %v2458 = vpack.c.bf16 %v2268, %v2267
    %v2459 = vpack.c.bf16 %v2270, %v2269
    %v2460 = vpack.c.bf16 %v2272, %v2271
    %v2461 = vpack.c.bf16 %v2274, %v2273
    %v2462 = vpack.c.bf16 %v2276, %v2275
    %v2463 = vpack.c.bf16 %v2278, %v2277
    %v2464 = vpack.c.bf16 %v2280, %v2279
    %v2465 = vpack.c.bf16 %v2282, %v2281
    %v2466 = vpack.c.bf16 %v2284, %v2283
    %v2467 = vpack.c.bf16 %v2286, %v2285
    %v2468 = vpack.c.bf16 %v2288, %v2287
    %v2585 = vunpack.c.l.b16 %v2289
    %v2586 = vunpack.c.h.b16 %v2289
    %v2587 = vunpack.c.l.b16 %v2290
    %v2588 = vunpack.c.h.b16 %v2290
    %v2589 = vunpack.c.l.b16 %v2291
    %v2590 = vunpack.c.h.b16 %v2291
    %v2591 = vunpack.c.l.b16 %v2292
    %v2592 = vunpack.c.h.b16 %v2292
    %v2593 = vunpack.c.l.b16 %v2293
    %v2594 = vunpack.c.h.b16 %v2293
    %v2595 = vunpack.c.l.b16 %v2294
    %v2596 = vunpack.c.h.b16 %v2294
    %v2597 = vunpack.c.l.b16 %v2295
    %v2598 = vunpack.c.h.b16 %v2295
    %v2599 = vunpack.c.l.b16 %v2296
    %v2600 = vunpack.c.h.b16 %v2296
    %v2601 = vunpack.c.l.b16 %v2297
    %v2602 = vunpack.c.h.b16 %v2297
    %v2603 = vunpack.c.l.b16 %v2298
    %v2604 = vunpack.c.h.b16 %v2298
    %v2605 = vunpack.c.l.b16 %v2299
    %v2606 = vunpack.c.h.b16 %v2299
    %v2607 = vunpack.c.l.b16 %v2300
    %v2608 = vunpack.c.h.b16 %v2300
    %v2609 = vunpack.c.l.b16 %v2301
    %v2610 = vunpack.c.h.b16 %v2301
    %v2611 = vunpack.c.l.b16 %v2302
    %v2612 = vunpack.c.h.b16 %v2302
    %v2613 = vunpack.c.l.b16 %v2303
    %v2614 = vunpack.c.h.b16 %v2303
    %v2615 = vunpack.c.l.b16 %v2304
    %v2616 = vunpack.c.h.b16 %v2304
    %v2617 = vunpack.c.l.b16 %v2305
    %v2618 = vunpack.c.h.b16 %v2305
    %v2619 = vunpack.c.l.b16 %v2306
    %v2620 = vunpack.c.h.b16 %v2306
    %v2621 = vunpack.c.l.b16 %v2307
    %v2622 = vunpack.c.h.b16 %v2307
    %v2623 = vunpack.c.l.b16 %v2308
    %v2624 = vunpack.c.h.b16 %v2308
    %v2625 = vunpack.c.l.b16 %v2309
    %v2626 = vunpack.c.h.b16 %v2309
    %v2627 = vunpack.c.l.b16 %v2310
    %v2628 = vunpack.c.h.b16 %v2310
    %v2629 = vunpack.c.l.b16 %v2311
    %v2630 = vunpack.c.h.b16 %v2311
    %v2631 = vunpack.c.l.b16 %v2312
    %v2632 = vunpack.c.h.b16 %v2312
    %v2633 = vunpack.c.l.b16 %v2313
    %v2634 = vunpack.c.h.b16 %v2313
    %v2635 = vunpack.c.l.b16 %v2314
    %v2636 = vunpack.c.h.b16 %v2314
    %v2637 = vunpack.c.l.b16 %v2315
    %v2638 = vunpack.c.h.b16 %v2315
    %v2639 = vunpack.c.l.b16 %v2316
    %v2640 = vunpack.c.h.b16 %v2316
    %v2641 = vunpack.c.l.b16 %v2317
    %v2642 = vunpack.c.h.b16 %v2317
    %v2643 = vunpack.c.l.b16 %v2318
    %v2644 = vunpack.c.h.b16 %v2318
    %v2645 = vunpack.c.l.b16 %v2319
    %v2646 = vunpack.c.h.b16 %v2319
    %v2647 = vunpack.c.l.b16 %v2320
    %v2648 = vunpack.c.h.b16 %v2320
    %v2649 = vunpack.c.l.b16 %v2321
    %v2650 = vunpack.c.h.b16 %v2321
    %v2651 = vunpack.c.l.b16 %v2322
    %v2652 = vunpack.c.h.b16 %v2322
    %v2653 = vunpack.c.l.b16 %v2323
    %v2654 = vunpack.c.h.b16 %v2323
    %v2655 = vunpack.c.l.b16 %v2324
    %v2656 = vunpack.c.h.b16 %v2324
    %v2657 = vunpack.c.l.b16 %v2325
    %v2658 = vunpack.c.h.b16 %v2325
    %v2659 = vunpack.c.l.b16 %v2326
    %v2660 = vunpack.c.h.b16 %v2326
    %v2661 = vunpack.c.l.b16 %v2327
    %v2662 = vunpack.c.h.b16 %v2327
    %v2663 = vunpack.c.l.b16 %v2328
    %v2664 = vunpack.c.h.b16 %v2328
    %v2665 = vunpack.c.l.b16 %v2329
    %v2666 = vunpack.c.h.b16 %v2329
    %v2667 = vunpack.c.l.b16 %v2330
    %v2668 = vunpack.c.h.b16 %v2330
    %v2669 = vunpack.c.l.b16 %v2331
    %v2670 = vunpack.c.h.b16 %v2331
    %v2671 = vunpack.c.l.b16 %v2332
    %v2672 = vunpack.c.h.b16 %v2332
    %v2673 = vunpack.c.l.b16 %v2333
    %v2674 = vunpack.c.h.b16 %v2333
    %v2675 = vunpack.c.l.b16 %v2334
    %v2676 = vunpack.c.h.b16 %v2334
    %v2677 = vunpack.c.l.b16 %v2335
    %v2678 = vunpack.c.h.b16 %v2335
    %v2679 = vunpack.c.l.b16 %v2336
    %v2680 = vunpack.c.h.b16 %v2336
    %v2681 = vunpack.c.l.b16 %v2337
    %v2682 = vunpack.c.h.b16 %v2337
    %v2683 = vunpack.c.l.b16 %v2338
    %v2684 = vunpack.c.h.b16 %v2338
    %v2685 = vunpack.c.l.b16 %v2339
    %v2686 = vunpack.c.h.b16 %v2339
    %v2687 = vunpack.c.l.b16 %v2340
    %v2688 = vunpack.c.h.b16 %v2340
    %v2689 = vunpack.c.l.b16 %v2341
    %v2690 = vunpack.c.h.b16 %v2341
    %v2691 = vunpack.c.l.b16 %v2342
    %v2692 = vunpack.c.h.b16 %v2342
    %v2693 = vunpack.c.l.b16 %v2343
    %v2694 = vunpack.c.h.b16 %v2343
    %v2695 = vunpack.c.l.b16 %v2344
    %v2696 = vunpack.c.h.b16 %v2344
    %v2697 = vunpack.c.l.b16 %v2345
    %v2698 = vunpack.c.h.b16 %v2345
    %v2699 = vunpack.c.l.b16 %v2346
    %v2700 = vunpack.c.h.b16 %v2346
    %v2701 = vunpack.c.l.b16 %v2347
    %v2702 = vunpack.c.h.b16 %v2347
    %v2703 = vunpack.c.l.b16 %v2348
    %v2704 = vunpack.c.h.b16 %v2348
    %v2705 = vunpack.c.l.b16 %v2349
    %v2706 = vunpack.c.h.b16 %v2349
    %v2707 = vunpack.c.l.b16 %v2350
    %v2708 = vunpack.c.h.b16 %v2350
    %v2709 = vunpack.c.l.b16 %v2351
    %v2710 = vunpack.c.h.b16 %v2351
    %v2711 = vunpack.c.l.b16 %v2352
    %v2712 = vunpack.c.h.b16 %v2352
    %v2713 = vunpack.c.l.b16 %v2353
    %v2714 = vunpack.c.h.b16 %v2353
    %v2715 = vunpack.c.l.b16 %v2354
    %v2716 = vunpack.c.h.b16 %v2354
    %v2717 = vunpack.c.l.b16 %v2355
    %v2718 = vunpack.c.h.b16 %v2355
    %v2719 = vunpack.c.l.b16 %v2356
    %v2720 = vunpack.c.h.b16 %v2356
    %v2721 = vunpack.c.l.b16 %v2357
    %v2722 = vunpack.c.h.b16 %v2357
    %v2723 = vunpack.c.l.b16 %v2358
    %v2724 = vunpack.c.h.b16 %v2358
    %v2725 = vunpack.c.l.b16 %v2359
    %v2726 = vunpack.c.h.b16 %v2359
    %v2727 = vunpack.c.l.b16 %v2360
    %v2728 = vunpack.c.h.b16 %v2360
    %v2729 = vunpack.c.l.b16 %v2361
    %v2730 = vunpack.c.h.b16 %v2361
    %v2731 = vunpack.c.l.b16 %v2362
    %v2732 = vunpack.c.h.b16 %v2362
    %v2733 = vunpack.c.l.b16 %v2363
    %v2734 = vunpack.c.h.b16 %v2363
    %v2735 = vunpack.c.l.b16 %v2364
    %v2736 = vunpack.c.h.b16 %v2364
    %v2737 = vunpack.c.l.b16 %v2365
    %v2738 = vunpack.c.h.b16 %v2365
    %v2739 = vunpack.c.l.b16 %v2366
    %v2740 = vunpack.c.h.b16 %v2366
    %v2741 = vunpack.c.l.b16 %v2367
    %v2742 = vunpack.c.h.b16 %v2367
    %v2743 = vunpack.c.l.b16 %v2368
    %v2744 = vunpack.c.h.b16 %v2368
    %v2745 = vunpack.c.l.b16 %v2369
    %v2746 = vunpack.c.h.b16 %v2369
    %v2747 = vunpack.c.l.b16 %v2370
    %v2748 = vunpack.c.h.b16 %v2370
    %v2749 = vunpack.c.l.b16 %v2371
    %v2750 = vunpack.c.h.b16 %v2371
    %v2751 = vunpack.c.l.b16 %v2372
    %v2752 = vunpack.c.h.b16 %v2372
    %v2753 = vunpack.c.l.b16 %v2373
    %v2754 = vunpack.c.h.b16 %v2373
    %v2755 = vunpack.c.l.b16 %v2374
    %v2756 = vunpack.c.h.b16 %v2374
    %v2757 = vunpack.c.l.b16 %v2375
    %v2758 = vunpack.c.h.b16 %v2375
    %v2759 = vunpack.c.l.b16 %v2376
    %v2760 = vunpack.c.h.b16 %v2376
    %v2761 = vunpack.c.l.b16 %v2377
    %v2762 = vunpack.c.h.b16 %v2377
    %v2763 = vunpack.c.l.b16 %v2378
    %v2764 = vunpack.c.h.b16 %v2378
    %v2765 = vunpack.c.l.b16 %v2379
    %v2766 = vunpack.c.h.b16 %v2379
    %v2767 = vunpack.c.l.b16 %v2380
    %v2768 = vunpack.c.h.b16 %v2380
    %v2769 = vunpack.c.l.b16 %v2381
    %v2770 = vunpack.c.h.b16 %v2381
    %v2771 = vunpack.c.l.b16 %v2382
    %v2772 = vunpack.c.h.b16 %v2382
    %v2773 = vunpack.c.l.b16 %v2383
    %v2774 = vunpack.c.h.b16 %v2383
    %v2775 = vunpack.c.l.b16 %v2384
    %v2776 = vunpack.c.h.b16 %v2384
    %v2777 = vunpack.c.l.b16 %v2385
    %v2778 = vunpack.c.h.b16 %v2385
    %v2779 = vunpack.c.l.b16 %v2386
    %v2780 = vunpack.c.h.b16 %v2386
    %v2781 = vunpack.c.l.b16 %v2387
    %v2782 = vunpack.c.h.b16 %v2387
    %v2783 = vunpack.c.l.b16 %v2388
    %v2784 = vunpack.c.h.b16 %v2388
    %v2785 = vunpack.c.l.b16 %v2389
    %v2786 = vunpack.c.h.b16 %v2389
    %v2787 = vunpack.c.l.b16 %v2390
    %v2788 = vunpack.c.h.b16 %v2390
    %v2789 = vunpack.c.l.b16 %v2391
    %v2790 = vunpack.c.h.b16 %v2391
    %v2791 = vunpack.c.l.b16 %v2392
    %v2792 = vunpack.c.h.b16 %v2392
    %v2793 = vunpack.c.l.b16 %v2393
    %v2794 = vunpack.c.h.b16 %v2393
    %v2795 = vunpack.c.l.b16 %v2394
    %v2796 = vunpack.c.h.b16 %v2394
    %v2797 = vunpack.c.l.b16 %v2395
    %v2798 = vunpack.c.h.b16 %v2395
    %v2799 = vunpack.c.l.b16 %v2396
    %v2800 = vunpack.c.h.b16 %v2396
    %v2801 = vunpack.c.l.b16 %v2397
    %v2802 = vunpack.c.h.b16 %v2397
    %v2803 = vunpack.c.l.b16 %v2398
    %v2804 = vunpack.c.h.b16 %v2398
    %v2805 = vunpack.c.l.b16 %v2399
    %v2806 = vunpack.c.h.b16 %v2399
    %v2807 = vunpack.c.l.b16 %v2400
    %v2808 = vunpack.c.h.b16 %v2400
    %v2809 = vunpack.c.l.b16 %v2401
    %v2810 = vunpack.c.h.b16 %v2401
    %v2811 = vunpack.c.l.b16 %v2402
    %v2812 = vunpack.c.h.b16 %v2402
    %v2813 = vunpack.c.l.b16 %v2403
    %v2814 = vunpack.c.h.b16 %v2403
    %v2815 = vunpack.c.l.b16 %v2404
    %v2816 = vunpack.c.h.b16 %v2404
    %v2817 = vpack.c.b16 %v2593, %v2585
    %v2818 = vpack.c.b16 %v2594, %v2586
    %v2819 = vpack.c.b16 %v2595, %v2587
    %v2820 = vpack.c.b16 %v2596, %v2588
    %v2821 = vpack.c.b16 %v2597, %v2589
    %v2822 = vpack.c.b16 %v2598, %v2590
    %v2823 = vpack.c.b16 %v2599, %v2591
    %v2824 = vpack.c.b16 %v2600, %v2592
    %v2825 = vpack.c.b16 %v2609, %v2601
    %v2826 = vpack.c.b16 %v2610, %v2602
    %v2827 = vpack.c.b16 %v2611, %v2603
    %v2828 = vpack.c.b16 %v2612, %v2604
    %v2829 = vpack.c.b16 %v2613, %v2605
    %v2830 = vpack.c.b16 %v2614, %v2606
    %v2831 = vpack.c.b16 %v2615, %v2607
    %v2832 = vpack.c.b16 %v2616, %v2608
    %v2833 = vpack.c.b16 %v2625, %v2617
    %v2834 = vpack.c.b16 %v2626, %v2618
    %v2835 = vpack.c.b16 %v2627, %v2619
    %v2836 = vpack.c.b16 %v2628, %v2620
    %v2837 = vpack.c.b16 %v2629, %v2621
    %v2838 = vpack.c.b16 %v2630, %v2622
    %v2839 = vpack.c.b16 %v2631, %v2623
    %v2840 = vpack.c.b16 %v2632, %v2624
    %v2841 = vpack.c.b16 %v2641, %v2633
    %v2842 = vpack.c.b16 %v2642, %v2634
    %v2843 = vpack.c.b16 %v2643, %v2635
    %v2844 = vpack.c.b16 %v2644, %v2636
    %v2845 = vpack.c.b16 %v2645, %v2637
    %v2846 = vpack.c.b16 %v2646, %v2638
    %v2847 = vpack.c.b16 %v2647, %v2639
    %v2848 = vpack.c.b16 %v2648, %v2640
    %v2849 = vpack.c.b16 %v2657, %v2649
    %v2850 = vpack.c.b16 %v2658, %v2650
    %v2851 = vpack.c.b16 %v2659, %v2651
    %v2852 = vpack.c.b16 %v2660, %v2652
    %v2853 = vpack.c.b16 %v2661, %v2653
    %v2854 = vpack.c.b16 %v2662, %v2654
    %v2855 = vpack.c.b16 %v2663, %v2655
    %v2856 = vpack.c.b16 %v2664, %v2656
    %v2857 = vpack.c.b16 %v2673, %v2665
    %v2858 = vpack.c.b16 %v2674, %v2666
    %v2859 = vpack.c.b16 %v2675, %v2667
    %v2860 = vpack.c.b16 %v2676, %v2668
    %v2861 = vpack.c.b16 %v2677, %v2669
    %v2862 = vpack.c.b16 %v2678, %v2670
    %v2863 = vpack.c.b16 %v2679, %v2671
    %v2864 = vpack.c.b16 %v2680, %v2672
    %v2865 = vpack.c.b16 %v2689, %v2681
    %v2866 = vpack.c.b16 %v2690, %v2682
    %v2867 = vpack.c.b16 %v2691, %v2683
    %v2868 = vpack.c.b16 %v2692, %v2684
    %v2869 = vpack.c.b16 %v2693, %v2685
    %v2870 = vpack.c.b16 %v2694, %v2686
    %v2871 = vpack.c.b16 %v2695, %v2687
    %v2872 = vpack.c.b16 %v2696, %v2688
    %v2873 = vpack.c.b16 %v2705, %v2697
    %v2874 = vpack.c.b16 %v2706, %v2698
    %v2875 = vpack.c.b16 %v2707, %v2699
    %v2876 = vpack.c.b16 %v2708, %v2700
    %v2877 = vpack.c.b16 %v2709, %v2701
    %v2878 = vpack.c.b16 %v2710, %v2702
    %v2879 = vpack.c.b16 %v2711, %v2703
    %v2880 = vpack.c.b16 %v2712, %v2704
    %v2881 = vpack.c.b16 %v2721, %v2713
    %v2882 = vpack.c.b16 %v2722, %v2714
    %v2883 = vpack.c.b16 %v2723, %v2715
    %v2884 = vpack.c.b16 %v2724, %v2716
    %v2885 = vpack.c.b16 %v2725, %v2717
    %v2886 = vpack.c.b16 %v2726, %v2718
    %v2887 = vpack.c.b16 %v2727, %v2719
    %v2888 = vpack.c.b16 %v2728, %v2720
    %v2889 = vpack.c.b16 %v2737, %v2729
    %v2890 = vpack.c.b16 %v2738, %v2730
    %v2891 = vpack.c.b16 %v2739, %v2731
    %v2892 = vpack.c.b16 %v2740, %v2732
    %v2893 = vpack.c.b16 %v2741, %v2733
    %v2894 = vpack.c.b16 %v2742, %v2734
    %v2895 = vpack.c.b16 %v2743, %v2735
    %v2896 = vpack.c.b16 %v2744, %v2736
    %v2897 = vpack.c.b16 %v2753, %v2745
    %v2898 = vpack.c.b16 %v2754, %v2746
    %v2899 = vpack.c.b16 %v2755, %v2747
    %v2900 = vpack.c.b16 %v2756, %v2748
    %v2901 = vpack.c.b16 %v2757, %v2749
    %v2902 = vpack.c.b16 %v2758, %v2750
    %v2903 = vpack.c.b16 %v2759, %v2751
    %v2904 = vpack.c.b16 %v2760, %v2752
    %v2905 = vpack.c.b16 %v2769, %v2761
    %v2906 = vpack.c.b16 %v2770, %v2762
    %v2907 = vpack.c.b16 %v2771, %v2763
    %v2908 = vpack.c.b16 %v2772, %v2764
    %v2909 = vpack.c.b16 %v2773, %v2765
    %v2910 = vpack.c.b16 %v2774, %v2766
    %v2911 = vpack.c.b16 %v2775, %v2767
    %v2912 = vpack.c.b16 %v2776, %v2768
    %v2913 = vpack.c.b16 %v2785, %v2777
    %v2914 = vpack.c.b16 %v2786, %v2778
    %v2915 = vpack.c.b16 %v2787, %v2779
    %v2916 = vpack.c.b16 %v2788, %v2780
    %v2917 = vpack.c.b16 %v2789, %v2781
    %v2918 = vpack.c.b16 %v2790, %v2782
    %v2919 = vpack.c.b16 %v2791, %v2783
    %v2920 = vpack.c.b16 %v2792, %v2784
    %v2921 = vpack.c.b16 %v2801, %v2793
    %v2922 = vpack.c.b16 %v2802, %v2794
    %v2923 = vpack.c.b16 %v2803, %v2795
    %v2924 = vpack.c.b16 %v2804, %v2796
    %v2925 = vpack.c.b16 %v2805, %v2797
    %v2926 = vpack.c.b16 %v2806, %v2798
    %v2927 = vpack.c.b16 %v2807, %v2799
    %v2928 = vpack.c.b16 %v2808, %v2800
    %v2929 = vpack.c.b16 %v2809, %v2809
    %v2930 = vpack.c.b16 %v2810, %v2810
    %v2931 = vpack.c.b16 %v2811, %v2811
    %v2932 = vpack.c.b16 %v2812, %v2812
    %v2933 = vpack.c.b16 %v2813, %v2813
    %v2934 = vpack.c.b16 %v2814, %v2814
    %v2935 = vpack.c.b16 %v2815, %v2815
    %v2936 = vpack.c.b16 %v2816, %v2816
    %3057 = vmatprep.subr.bf16.mxu0 0
    %3058 = vmatpush1.bf16.msra.mxu0 %v2405
    %3059 = vmatprep.subr.bf16.mxu0 0
    %3060 = vmatpush1.bf16.msra.mxu0 %v2406
    %3061 = vmatprep.subr.bf16.mxu0 0
    %3062 = vmatpush1.bf16.msra.mxu0 %v2407
    %3063 = vmatprep.subr.bf16.mxu0 0
    %3064 = vmatpush1.bf16.msra.mxu0 %v2408
    %3065 = vmatprep.subr.bf16.mxu0 0
    %3066 = vmatpush1.bf16.msra.mxu0 %v2409
    %3067 = vmatprep.subr.bf16.mxu0 0
    %3068 = vmatpush1.bf16.msra.mxu0 %v2410
    %3069 = vmatprep.subr.bf16.mxu0 0
    %3070 = vmatpush1.bf16.msra.mxu0 %v2411
    %3071 = vmatprep.subr.bf16.mxu0 0
    %3072 = vmatpush1.bf16.msra.mxu0 %v2412
    %3073 = vmatprep.subr.bf16.mxu0 0
    %3074 = vmatpush1.bf16.msra.mxu0 %v2413
    %3075 = vmatprep.subr.bf16.mxu0 0
    %3076 = vmatpush1.bf16.msra.mxu0 %v2414
    %3077 = vmatprep.subr.bf16.mxu0 0
    %3078 = vmatpush1.bf16.msra.mxu0 %v2415
    %3079 = vmatprep.subr.bf16.mxu0 0
    %3080 = vmatpush1.bf16.msra.mxu0 %v2416
    %3081 = vmatprep.subr.bf16.mxu0 0
    %3082 = vmatpush1.bf16.msra.mxu0 %v2417
    %3083 = vmatprep.subr.bf16.mxu0 0
    %3084 = vmatpush1.bf16.msra.mxu0 %v2418
    %3085 = vmatprep.subr.bf16.mxu0 0
    %3086 = vmatpush1.bf16.msra.mxu0 %v2419
    %3087 = vmatprep.subr.bf16.mxu0 0
    %3088 = vmatpush1.bf16.msra.mxu0 %v2420
    %3089 = vmatprep.mubr.bf16.mxu0 %v2818
    %3090 = vmatmul.mubr.bf16.gmra.mrb[0].mxu0 %v2817
    %v3091 = vpop.f32.mrb[0].mxu0
    %v3092 = vadd.f32 0.0, %v3091
    %v3093 = vpop.f32.mrb[0].mxu0
    %v3094 = vpop.f32.mrb[0].mxu0
    %v3095 = vadd.f32 0.0, %v3094
    %v3096 = vpop.f32.mrb[0].mxu0
    %3097 = vmatprep.mubr.bf16.mxu0 %v2826
    %3098 = vmatmul.mubr.bf16.gmra.mrb[0].mxu0 %v2825
    %v3099 = vpop.f32.mrb[0].mxu0
    %v3100 = vadd.f32 0.0, %v3099
    %v3101 = vpop.f32.mrb[0].mxu0
    %v3102 = vpop.f32.mrb[0].mxu0
    %v3103 = vadd.f32 0.0, %v3102
    %v3104 = vpop.f32.mrb[0].mxu0
    %3105 = vmatprep.mubr.bf16.mxu0 %v2834
    %3106 = vmatmul.mubr.bf16.gmra.mrb[0].mxu0 %v2833
    %v3107 = vpop.f32.mrb[0].mxu0
    %v3108 = vadd.f32 0.0, %v3107
    %v3109 = vpop.f32.mrb[0].mxu0
    %v3110 = vpop.f32.mrb[0].mxu0
    %v3111 = vadd.f32 0.0, %v3110
    %v3112 = vpop.f32.mrb[0].mxu0
    %3113 = vmatprep.mubr.bf16.mxu0 %v2842
    %3114 = vmatmul.mubr.bf16.gmra.mrb[0].mxu0 %v2841
    %v3115 = vpop.f32.mrb[0].mxu0
    %v3116 = vadd.f32 0.0, %v3115
    %v3117 = vpop.f32.mrb[0].mxu0
    %v3118 = vpop.f32.mrb[0].mxu0
    %v3119 = vadd.f32 0.0, %v3118
    %v3120 = vpop.f32.mrb[0].mxu0
    %3121 = vmatprep.mubr.bf16.mxu0 %v2850
    %3122 = vmatmul.mubr.bf16.gmra.mrb[0].mxu0 %v2849
    %v3123 = vpop.f32.mrb[0].mxu0
    %v3124 = vadd.f32 0.0, %v3123
    %v3125 = vpop.f32.mrb[0].mxu0
    %v3126 = vpop.f32.mrb[0].mxu0
    %v3127 = vadd.f32 0.0, %v3126
    %v3128 = vpop.f32.mrb[0].mxu0
    %3129 = vmatprep.mubr.bf16.mxu0 %v2858
    %3130 = vmatmul.mubr.bf16.gmra.mrb[0].mxu0 %v2857
    %v3131 = vpop.f32.mrb[0].mxu0
    %v3132 = vadd.f32 0.0, %v3131
    %v3133 = vpop.f32.mrb[0].mxu0
    %v3134 = vpop.f32.mrb[0].mxu0
    %v3135 = vadd.f32 0.0, %v3134
    %v3136 = vpop.f32.mrb[0].mxu0
    %3137 = vmatprep.mubr.bf16.mxu0 %v2866
    %3138 = vmatmul.mubr.bf16.gmra.mrb[0].mxu0 %v2865
    %v3139 = vpop.f32.mrb[0].mxu0
    %v3140 = vadd.f32 0.0, %v3139
    %v3141 = vpop.f32.mrb[0].mxu0
    %v3142 = vpop.f32.mrb[0].mxu0
    %v3143 = vadd.f32 0.0, %v3142
    %v3144 = vpop.f32.mrb[0].mxu0
    %3145 = vmatprep.mubr.bf16.mxu0 %v2874
    %3146 = vmatmul.mubr.bf16.gmra.mrb[0].mxu0 %v2873
    %v3147 = vpop.f32.mrb[0].mxu0
    %v3148 = vadd.f32 0.0, %v3147
    %v3149 = vpop.f32.mrb[0].mxu0
    %v3150 = vpop.f32.mrb[0].mxu0
    %v3151 = vadd.f32 0.0, %v3150
    %v3152 = vpop.f32.mrb[0].mxu0
    %3153 = vmatprep.mubr.bf16.mxu0 %v2882
    %3154 = vmatmul.mubr.bf16.gmra.mrb[0].mxu0 %v2881
    %v3155 = vpop.f32.mrb[0].mxu0
    %v3156 = vadd.f32 0.0, %v3155
    %v3157 = vpop.f32.mrb[0].mxu0
    %v3158 = vpop.f32.mrb[0].mxu0
    %v3159 = vadd.f32 0.0, %v3158
    %v3160 = vpop.f32.mrb[0].mxu0
    %3161 = vmatprep.mubr.bf16.mxu0 %v2890
    %3162 = vmatmul.mubr.bf16.gmra.mrb[0].mxu0 %v2889
    %v3163 = vpop.f32.mrb[0].mxu0
    %v3164 = vadd.f32 0.0, %v3163
    %v3165 = vpop.f32.mrb[0].mxu0
    %v3166 = vpop.f32.mrb[0].mxu0
    %v3167 = vadd.f32 0.0, %v3166
    %v3168 = vpop.f32.mrb[0].mxu0
    %3169 = vmatprep.mubr.bf16.mxu0 %v2898
    %3170 = vmatmul.mubr.bf16.gmra.mrb[0].mxu0 %v2897
    %v3171 = vpop.f32.mrb[0].mxu0
    %v3172 = vadd.f32 0.0, %v3171
    %v3173 = vpop.f32.mrb[0].mxu0
    %v3174 = vpop.f32.mrb[0].mxu0
    %v3175 = vadd.f32 0.0, %v3174
    %v3176 = vpop.f32.mrb[0].mxu0
    %3177 = vmatprep.mubr.bf16.mxu0 %v2906
    %3178 = vmatmul.mubr.bf16.gmra.mrb[0].mxu0 %v2905
    %v3179 = vpop.f32.mrb[0].mxu0
    %v3180 = vadd.f32 0.0, %v3179
    %v3181 = vpop.f32.mrb[0].mxu0
    %v3182 = vpop.f32.mrb[0].mxu0
    %v3183 = vadd.f32 0.0, %v3182
    %v3184 = vpop.f32.mrb[0].mxu0
    %3185 = vmatprep.mubr.bf16.mxu0 %v2914
    %3186 = vmatmul.mubr.bf16.gmra.mrb[0].mxu0 %v2913
    %v3187 = vpop.f32.mrb[0].mxu0
    %v3188 = vadd.f32 0.0, %v3187
    %v3189 = vpop.f32.mrb[0].mxu0
    %v3190 = vpop.f32.mrb[0].mxu0
    %v3191 = vadd.f32 0.0, %v3190
    %v3192 = vpop.f32.mrb[0].mxu0
    %3193 = vmatprep.mubr.bf16.mxu0 %v2922
    %3194 = vmatmul.mubr.bf16.gmra.mrb[0].mxu0 %v2921
    %v3195 = vpop.f32.mrb[0].mxu0
    %v3196 = vadd.f32 0.0, %v3195
    %v3197 = vpop.f32.mrb[0].mxu0
    %v3198 = vpop.f32.mrb[0].mxu0
    %v3199 = vadd.f32 0.0, %v3198
    %v3200 = vpop.f32.mrb[0].mxu0
    %3201 = vmatprep.mubr.bf16.mxu0 %v2930
    %3202 = vmatmul.mubr.bf16.gmra.mrb[0].mxu0 %v2929
    %v3203 = vpop.f32.mrb[0].mxu0
    %v3204 = vadd.f32 0.0, %v3203
    %v3205 = vpop.f32.mrb[0].mxu0
    %v3206 = vpop.f32.mrb[0].mxu0
    %v3207 = vpop.f32.mrb[0].mxu0
    %3208 = vdwg.mxu0
    %3209 = vmatprep.subr.bf16.mxu0 0
    %3210 = vmatpush1.bf16.msra.mxu0 %v2421
    %3211 = vmatprep.subr.bf16.mxu0 0
    %3212 = vmatpush1.bf16.msra.mxu0 %v2422
    %3213 = vmatprep.subr.bf16.mxu0 0
    %3214 = vmatpush1.bf16.msra.mxu0 %v2423
    %3215 = vmatprep.subr.bf16.mxu0 0
    %3216 = vmatpush1.bf16.msra.mxu0 %v2424
    %3217 = vmatprep.subr.bf16.mxu0 0
    %3218 = vmatpush1.bf16.msra.mxu0 %v2425
    %3219 = vmatprep.subr.bf16.mxu0 0
    %3220 = vmatpush1.bf16.msra.mxu0 %v2426
    %3221 = vmatprep.subr.bf16.mxu0 0
    %3222 = vmatpush1.bf16.msra.mxu0 %v2427
    %3223 = vmatprep.subr.bf16.mxu0 0
    %3224 = vmatpush1.bf16.msra.mxu0 %v2428
    %3225 = vmatprep.subr.bf16.mxu0 0
    %3226 = vmatpush1.bf16.msra.mxu0 %v2429
    %3227 = vmatprep.subr.bf16.mxu0 0
    %3228 = vmatpush1.bf16.msra.mxu0 %v2430
    %3229 = vmatprep.subr.bf16.mxu0 0
    %3230 = vmatpush1.bf16.msra.mxu0 %v2431
    %3231 = vmatprep.subr.bf16.mxu0 0
    %3232 = vmatpush1.bf16.msra.mxu0 %v2432
    %3233 = vmatprep.subr.bf16.mxu0 0
    %3234 = vmatpush1.bf16.msra.mxu0 %v2433
    %3235 = vmatprep.subr.bf16.mxu0 0
    %3236 = vmatpush1.bf16.msra.mxu0 %v2434
    %3237 = vmatprep.subr.bf16.mxu0 0
    %3238 = vmatpush1.bf16.msra.mxu0 %v2435
    %3239 = vmatprep.subr.bf16.mxu0 0
    %3240 = vmatpush1.bf16.msra.mxu0 %v2436
    %3241 = vmatprep.mubr.bf16.mxu0 %v2820
    %3242 = vmatmul.mubr.bf16.gmra.mrb[0].mxu0 %v2819
    %v3243 = vpop.f32.mrb[0].mxu0
    %v3244 = vadd.f32 %v3092, %v3243
    %v3245 = vpop.f32.mrb[0].mxu0
    %v3246 = vpop.f32.mrb[0].mxu0
    %v3247 = vadd.f32 %v3095, %v3246
    %v3248 = vpop.f32.mrb[0].mxu0
    %3249 = vmatprep.mubr.bf16.mxu0 %v2828
    %3250 = vmatmul.mubr.bf16.gmra.mrb[0].mxu0 %v2827
    %v3251 = vpop.f32.mrb[0].mxu0
    %v3252 = vadd.f32 %v3100, %v3251
    %v3253 = vpop.f32.mrb[0].mxu0
    %v3254 = vpop.f32.mrb[0].mxu0
    %v3255 = vadd.f32 %v3103, %v3254
    %v3256 = vpop.f32.mrb[0].mxu0
    %3257 = vmatprep.mubr.bf16.mxu0 %v2836
    %3258 = vmatmul.mubr.bf16.gmra.mrb[0].mxu0 %v2835
    %v3259 = vpop.f32.mrb[0].mxu0
    %v3260 = vadd.f32 %v3108, %v3259
    %v3261 = vpop.f32.mrb[0].mxu0
    %v3262 = vpop.f32.mrb[0].mxu0
    %v3263 = vadd.f32 %v3111, %v3262
    %v3264 = vpop.f32.mrb[0].mxu0
    %3265 = vmatprep.mubr.bf16.mxu0 %v2844
    %3266 = vmatmul.mubr.bf16.gmra.mrb[0].mxu0 %v2843
    %v3267 = vpop.f32.mrb[0].mxu0
    %v3268 = vadd.f32 %v3116, %v3267
    %v3269 = vpop.f32.mrb[0].mxu0
    %v3270 = vpop.f32.mrb[0].mxu0
    %v3271 = vadd.f32 %v3119, %v3270
    %v3272 = vpop.f32.mrb[0].mxu0
    %3273 = vmatprep.mubr.bf16.mxu0 %v2852
    %3274 = vmatmul.mubr.bf16.gmra.mrb[0].mxu0 %v2851
    %v3275 = vpop.f32.mrb[0].mxu0
    %v3276 = vadd.f32 %v3124, %v3275
    %v3277 = vpop.f32.mrb[0].mxu0
    %v3278 = vpop.f32.mrb[0].mxu0
    %v3279 = vadd.f32 %v3127, %v3278
    %v3280 = vpop.f32.mrb[0].mxu0
    %3281 = vmatprep.mubr.bf16.mxu0 %v2860
    %3282 = vmatmul.mubr.bf16.gmra.mrb[0].mxu0 %v2859
    %v3283 = vpop.f32.mrb[0].mxu0
    %v3284 = vadd.f32 %v3132, %v3283
    %v3285 = vpop.f32.mrb[0].mxu0
    %v3286 = vpop.f32.mrb[0].mxu0
    %v3287 = vadd.f32 %v3135, %v3286
    %v3288 = vpop.f32.mrb[0].mxu0
    %3289 = vmatprep.mubr.bf16.mxu0 %v2868
    %3290 = vmatmul.mubr.bf16.gmra.mrb[0].mxu0 %v2867
    %v3291 = vpop.f32.mrb[0].mxu0
    %v3292 = vadd.f32 %v3140, %v3291
    %v3293 = vpop.f32.mrb[0].mxu0
    %v3294 = vpop.f32.mrb[0].mxu0
    %v3295 = vadd.f32 %v3143, %v3294
    %v3296 = vpop.f32.mrb[0].mxu0
    %3297 = vmatprep.mubr.bf16.mxu0 %v2876
    %3298 = vmatmul.mubr.bf16.gmra.mrb[0].mxu0 %v2875
    %v3299 = vpop.f32.mrb[0].mxu0
    %v3300 = vadd.f32 %v3148, %v3299
    %v3301 = vpop.f32.mrb[0].mxu0
    %v3302 = vpop.f32.mrb[0].mxu0
    %v3303 = vadd.f32 %v3151, %v3302
    %v3304 = vpop.f32.mrb[0].mxu0
    %3305 = vmatprep.mubr.bf16.mxu0 %v2884
    %3306 = vmatmul.mubr.bf16.gmra.mrb[0].mxu0 %v2883
    %v3307 = vpop.f32.mrb[0].mxu0
    %v3308 = vadd.f32 %v3156, %v3307
    %v3309 = vpop.f32.mrb[0].mxu0
    %v3310 = vpop.f32.mrb[0].mxu0
    %v3311 = vadd.f32 %v3159, %v3310
    %v3312 = vpop.f32.mrb[0].mxu0
    %3313 = vmatprep.mubr.bf16.mxu0 %v2892
    %3314 = vmatmul.mubr.bf16.gmra.mrb[0].mxu0 %v2891
    %v3315 = vpop.f32.mrb[0].mxu0
    %v3316 = vadd.f32 %v3164, %v3315
    %v3317 = vpop.f32.mrb[0].mxu0
    %v3318 = vpop.f32.mrb[0].mxu0
    %v3319 = vadd.f32 %v3167, %v3318
    %v3320 = vpop.f32.mrb[0].mxu0
    %3321 = vmatprep.mubr.bf16.mxu0 %v2900
    %3322 = vmatmul.mubr.bf16.gmra.mrb[0].mxu0 %v2899
    %v3323 = vpop.f32.mrb[0].mxu0
    %v3324 = vadd.f32 %v3172, %v3323
    %v3325 = vpop.f32.mrb[0].mxu0
    %v3326 = vpop.f32.mrb[0].mxu0
    %v3327 = vadd.f32 %v3175, %v3326
    %v3328 = vpop.f32.mrb[0].mxu0
    %3329 = vmatprep.mubr.bf16.mxu0 %v2908
    %3330 = vmatmul.mubr.bf16.gmra.mrb[0].mxu0 %v2907
    %v3331 = vpop.f32.mrb[0].mxu0
    %v3332 = vadd.f32 %v3180, %v3331
    %v3333 = vpop.f32.mrb[0].mxu0
    %v3334 = vpop.f32.mrb[0].mxu0
    %v3335 = vadd.f32 %v3183, %v3334
    %v3336 = vpop.f32.mrb[0].mxu0
    %3337 = vmatprep.mubr.bf16.mxu0 %v2916
    %3338 = vmatmul.mubr.bf16.gmra.mrb[0].mxu0 %v2915
    %v3339 = vpop.f32.mrb[0].mxu0
    %v3340 = vadd.f32 %v3188, %v3339
    %v3341 = vpop.f32.mrb[0].mxu0
    %v3342 = vpop.f32.mrb[0].mxu0
    %v3343 = vadd.f32 %v3191, %v3342
    %v3344 = vpop.f32.mrb[0].mxu0
    %3345 = vmatprep.mubr.bf16.mxu0 %v2924
    %3346 = vmatmul.mubr.bf16.gmra.mrb[0].mxu0 %v2923
    %v3347 = vpop.f32.mrb[0].mxu0
    %v3348 = vadd.f32 %v3196, %v3347
    %v3349 = vpop.f32.mrb[0].mxu0
    %v3350 = vpop.f32.mrb[0].mxu0
    %v3351 = vadd.f32 %v3199, %v3350
    %v3352 = vpop.f32.mrb[0].mxu0
    %3353 = vmatprep.mubr.bf16.mxu0 %v2932
    %3354 = vmatmul.mubr.bf16.gmra.mrb[0].mxu0 %v2931
    %v3355 = vpop.f32.mrb[0].mxu0
    %v3356 = vadd.f32 %v3204, %v3355
    %v3357 = vpop.f32.mrb[0].mxu0
    %v3358 = vpop.f32.mrb[0].mxu0
    %v3359 = vpop.f32.mrb[0].mxu0
    %3360 = vdwg.mxu0
    %3361 = vmatprep.subr.bf16.mxu0 0
    %3362 = vmatpush1.bf16.msra.mxu0 %v2437
    %3363 = vmatprep.subr.bf16.mxu0 0
    %3364 = vmatpush1.bf16.msra.mxu0 %v2438
    %3365 = vmatprep.subr.bf16.mxu0 0
    %3366 = vmatpush1.bf16.msra.mxu0 %v2439
    %3367 = vmatprep.subr.bf16.mxu0 0
    %3368 = vmatpush1.bf16.msra.mxu0 %v2440
    %3369 = vmatprep.subr.bf16.mxu0 0
    %3370 = vmatpush1.bf16.msra.mxu0 %v2441
    %3371 = vmatprep.subr.bf16.mxu0 0
    %3372 = vmatpush1.bf16.msra.mxu0 %v2442
    %3373 = vmatprep.subr.bf16.mxu0 0
    %3374 = vmatpush1.bf16.msra.mxu0 %v2443
    %3375 = vmatprep.subr.bf16.mxu0 0
    %3376 = vmatpush1.bf16.msra.mxu0 %v2444
    %3377 = vmatprep.subr.bf16.mxu0 0
    %3378 = vmatpush1.bf16.msra.mxu0 %v2445
    %3379 = vmatprep.subr.bf16.mxu0 0
    %3380 = vmatpush1.bf16.msra.mxu0 %v2446
    %3381 = vmatprep.subr.bf16.mxu0 0
    %3382 = vmatpush1.bf16.msra.mxu0 %v2447
    %3383 = vmatprep.subr.bf16.mxu0 0
    %3384 = vmatpush1.bf16.msra.mxu0 %v2448
    %3385 = vmatprep.subr.bf16.mxu0 0
    %3386 = vmatpush1.bf16.msra.mxu0 %v2449
    %3387 = vmatprep.subr.bf16.mxu0 0
    %3388 = vmatpush1.bf16.msra.mxu0 %v2450
    %3389 = vmatprep.subr.bf16.mxu0 0
    %3390 = vmatpush1.bf16.msra.mxu0 %v2451
    %3391 = vmatprep.subr.bf16.mxu0 0
    %3392 = vmatpush1.bf16.msra.mxu0 %v2452
    %3393 = vmatprep.mubr.bf16.mxu0 %v2822
    %3394 = vmatmul.mubr.bf16.gmra.mrb[0].mxu0 %v2821
    %v3395 = vpop.f32.mrb[0].mxu0
    %v3396 = vadd.f32 %v3244, %v3395
    %v3397 = vpop.f32.mrb[0].mxu0
    %v3398 = vpop.f32.mrb[0].mxu0
    %v3399 = vadd.f32 %v3247, %v3398
    %v3400 = vpop.f32.mrb[0].mxu0
    %3401 = vmatprep.mubr.bf16.mxu0 %v2830
    %3402 = vmatmul.mubr.bf16.gmra.mrb[0].mxu0 %v2829
    %v3403 = vpop.f32.mrb[0].mxu0
    %v3404 = vadd.f32 %v3252, %v3403
    %v3405 = vpop.f32.mrb[0].mxu0
    %v3406 = vpop.f32.mrb[0].mxu0
    %v3407 = vadd.f32 %v3255, %v3406
    %v3408 = vpop.f32.mrb[0].mxu0
    %3409 = vmatprep.mubr.bf16.mxu0 %v2838
    %3410 = vmatmul.mubr.bf16.gmra.mrb[0].mxu0 %v2837
    %v3411 = vpop.f32.mrb[0].mxu0
    %v3412 = vadd.f32 %v3260, %v3411
    %v3413 = vpop.f32.mrb[0].mxu0
    %v3414 = vpop.f32.mrb[0].mxu0
    %v3415 = vadd.f32 %v3263, %v3414
    %v3416 = vpop.f32.mrb[0].mxu0
    %3417 = vmatprep.mubr.bf16.mxu0 %v2846
    %3418 = vmatmul.mubr.bf16.gmra.mrb[0].mxu0 %v2845
    %v3419 = vpop.f32.mrb[0].mxu0
    %v3420 = vadd.f32 %v3268, %v3419
    %v3421 = vpop.f32.mrb[0].mxu0
    %v3422 = vpop.f32.mrb[0].mxu0
    %v3423 = vadd.f32 %v3271, %v3422
    %v3424 = vpop.f32.mrb[0].mxu0
    %3425 = vmatprep.mubr.bf16.mxu0 %v2854
    %3426 = vmatmul.mubr.bf16.gmra.mrb[0].mxu0 %v2853
    %v3427 = vpop.f32.mrb[0].mxu0
    %v3428 = vadd.f32 %v3276, %v3427
    %v3429 = vpop.f32.mrb[0].mxu0
    %v3430 = vpop.f32.mrb[0].mxu0
    %v3431 = vadd.f32 %v3279, %v3430
    %v3432 = vpop.f32.mrb[0].mxu0
    %3433 = vmatprep.mubr.bf16.mxu0 %v2862
    %3434 = vmatmul.mubr.bf16.gmra.mrb[0].mxu0 %v2861
    %v3435 = vpop.f32.mrb[0].mxu0
    %v3436 = vadd.f32 %v3284, %v3435
    %v3437 = vpop.f32.mrb[0].mxu0
    %v3438 = vpop.f32.mrb[0].mxu0
    %v3439 = vadd.f32 %v3287, %v3438
    %v3440 = vpop.f32.mrb[0].mxu0
    %3441 = vmatprep.mubr.bf16.mxu0 %v2870
    %3442 = vmatmul.mubr.bf16.gmra.mrb[0].mxu0 %v2869
    %v3443 = vpop.f32.mrb[0].mxu0
    %v3444 = vadd.f32 %v3292, %v3443
    %v3445 = vpop.f32.mrb[0].mxu0
    %v3446 = vpop.f32.mrb[0].mxu0
    %v3447 = vadd.f32 %v3295, %v3446
    %v3448 = vpop.f32.mrb[0].mxu0
    %3449 = vmatprep.mubr.bf16.mxu0 %v2878
    %3450 = vmatmul.mubr.bf16.gmra.mrb[0].mxu0 %v2877
    %v3451 = vpop.f32.mrb[0].mxu0
    %v3452 = vadd.f32 %v3300, %v3451
    %v3453 = vpop.f32.mrb[0].mxu0
    %v3454 = vpop.f32.mrb[0].mxu0
    %v3455 = vadd.f32 %v3303, %v3454
    %v3456 = vpop.f32.mrb[0].mxu0
    %3457 = vmatprep.mubr.bf16.mxu0 %v2886
    %3458 = vmatmul.mubr.bf16.gmra.mrb[0].mxu0 %v2885
    %v3459 = vpop.f32.mrb[0].mxu0
    %v3460 = vadd.f32 %v3308, %v3459
    %v3461 = vpop.f32.mrb[0].mxu0
    %v3462 = vpop.f32.mrb[0].mxu0
    %v3463 = vadd.f32 %v3311, %v3462
    %v3464 = vpop.f32.mrb[0].mxu0
    %3465 = vmatprep.mubr.bf16.mxu0 %v2894
    %3466 = vmatmul.mubr.bf16.gmra.mrb[0].mxu0 %v2893
    %v3467 = vpop.f32.mrb[0].mxu0
    %v3468 = vadd.f32 %v3316, %v3467
    %v3469 = vpop.f32.mrb[0].mxu0
    %v3470 = vpop.f32.mrb[0].mxu0
    %v3471 = vadd.f32 %v3319, %v3470
    %v3472 = vpop.f32.mrb[0].mxu0
    %3473 = vmatprep.mubr.bf16.mxu0 %v2902
    %3474 = vmatmul.mubr.bf16.gmra.mrb[0].mxu0 %v2901
    %v3475 = vpop.f32.mrb[0].mxu0
    %v3476 = vadd.f32 %v3324, %v3475
    %v3477 = vpop.f32.mrb[0].mxu0
    %v3478 = vpop.f32.mrb[0].mxu0
    %v3479 = vadd.f32 %v3327, %v3478
    %v3480 = vpop.f32.mrb[0].mxu0
    %3481 = vmatprep.mubr.bf16.mxu0 %v2910
    %3482 = vmatmul.mubr.bf16.gmra.mrb[0].mxu0 %v2909
    %v3483 = vpop.f32.mrb[0].mxu0
    %v3484 = vadd.f32 %v3332, %v3483
    %v3485 = vpop.f32.mrb[0].mxu0
    %v3486 = vpop.f32.mrb[0].mxu0
    %v3487 = vadd.f32 %v3335, %v3486
    %v3488 = vpop.f32.mrb[0].mxu0
    %3489 = vmatprep.mubr.bf16.mxu0 %v2918
    %3490 = vmatmul.mubr.bf16.gmra.mrb[0].mxu0 %v2917
    %v3491 = vpop.f32.mrb[0].mxu0
    %v3492 = vadd.f32 %v3340, %v3491
    %v3493 = vpop.f32.mrb[0].mxu0
    %v3494 = vpop.f32.mrb[0].mxu0
    %v3495 = vadd.f32 %v3343, %v3494
    %v3496 = vpop.f32.mrb[0].mxu0
    %3497 = vmatprep.mubr.bf16.mxu0 %v2926
    %3498 = vmatmul.mubr.bf16.gmra.mrb[0].mxu0 %v2925
    %v3499 = vpop.f32.mrb[0].mxu0
    %v3500 = vadd.f32 %v3348, %v3499
    %v3501 = vpop.f32.mrb[0].mxu0
    %v3502 = vpop.f32.mrb[0].mxu0
    %v3503 = vadd.f32 %v3351, %v3502
    %v3504 = vpop.f32.mrb[0].mxu0
    %3505 = vmatprep.mubr.bf16.mxu0 %v2934
    %3506 = vmatmul.mubr.bf16.gmra.mrb[0].mxu0 %v2933
    %v3507 = vpop.f32.mrb[0].mxu0
    %v3508 = vadd.f32 %v3356, %v3507
    %v3509 = vpop.f32.mrb[0].mxu0
    %v3510 = vpop.f32.mrb[0].mxu0
    %v3511 = vpop.f32.mrb[0].mxu0
    %3512 = vdwg.mxu0
    %3513 = vmatprep.subr.bf16.mxu0 0
    %3514 = vmatpush1.bf16.msra.mxu0 %v2453
    %3515 = vmatprep.subr.bf16.mxu0 0
    %3516 = vmatpush1.bf16.msra.mxu0 %v2454
    %3517 = vmatprep.subr.bf16.mxu0 0
    %3518 = vmatpush1.bf16.msra.mxu0 %v2455
    %3519 = vmatprep.subr.bf16.mxu0 0
    %3520 = vmatpush1.bf16.msra.mxu0 %v2456
    %3521 = vmatprep.subr.bf16.mxu0 0
    %3522 = vmatpush1.bf16.msra.mxu0 %v2457
    %3523 = vmatprep.subr.bf16.mxu0 0
    %3524 = vmatpush1.bf16.msra.mxu0 %v2458
    %3525 = vmatprep.subr.bf16.mxu0 0
    %3526 = vmatpush1.bf16.msra.mxu0 %v2459
    %3527 = vmatprep.subr.bf16.mxu0 0
    %3528 = vmatpush1.bf16.msra.mxu0 %v2460
    %3529 = vmatprep.subr.bf16.mxu0 0
    %3530 = vmatpush1.bf16.msra.mxu0 %v2461
    %3531 = vmatprep.subr.bf16.mxu0 0
    %3532 = vmatpush1.bf16.msra.mxu0 %v2462
    %3533 = vmatprep.subr.bf16.mxu0 0
    %3534 = vmatpush1.bf16.msra.mxu0 %v2463
    %3535 = vmatprep.subr.bf16.mxu0 0
    %3536 = vmatpush1.bf16.msra.mxu0 %v2464
    %3537 = vmatprep.subr.bf16.mxu0 0
    %3538 = vmatpush1.bf16.msra.mxu0 %v2465
    %3539 = vmatprep.subr.bf16.mxu0 0
    %3540 = vmatpush1.bf16.msra.mxu0 %v2466
    %3541 = vmatprep.subr.bf16.mxu0 0
    %3542 = vmatpush1.bf16.msra.mxu0 %v2467
    %3543 = vmatprep.subr.bf16.mxu0 0
    %3544 = vmatpush1.bf16.msra.mxu0 %v2468
    %3545 = vmatprep.mubr.bf16.mxu0 %v2824
    %3546 = vmatmul.mubr.bf16.gmra.mrb[0].mxu0 %v2823
    %v3547 = vpop.f32.mrb[0].mxu0
    %v3548 = vadd.f32 %v3396, %v3547
    %v3549 = vpop.f32.mrb[0].mxu0
    %v3550 = vpop.f32.mrb[0].mxu0
    %v3551 = vadd.f32 %v3399, %v3550
    %v3552 = vpop.f32.mrb[0].mxu0
    %3553 = vmatprep.mubr.bf16.mxu0 %v2832
    %3554 = vmatmul.mubr.bf16.gmra.mrb[0].mxu0 %v2831
    %v3555 = vpop.f32.mrb[0].mxu0
    %v3556 = vadd.f32 %v3404, %v3555
    %v3557 = vpop.f32.mrb[0].mxu0
    %v3558 = vpop.f32.mrb[0].mxu0
    %v3559 = vadd.f32 %v3407, %v3558
    %v3560 = vpop.f32.mrb[0].mxu0
    %3561 = vmatprep.mubr.bf16.mxu0 %v2840
    %3562 = vmatmul.mubr.bf16.gmra.mrb[0].mxu0 %v2839
    %v3563 = vpop.f32.mrb[0].mxu0
    %v3564 = vadd.f32 %v3412, %v3563
    %v3565 = vpop.f32.mrb[0].mxu0
    %v3566 = vpop.f32.mrb[0].mxu0
    %v3567 = vadd.f32 %v3415, %v3566
    %v3568 = vpop.f32.mrb[0].mxu0
    %3569 = vmatprep.mubr.bf16.mxu0 %v2848
    %3570 = vmatmul.mubr.bf16.gmra.mrb[0].mxu0 %v2847
    %v3571 = vpop.f32.mrb[0].mxu0
    %v3572 = vadd.f32 %v3420, %v3571
    %v3573 = vpop.f32.mrb[0].mxu0
    %v3574 = vpop.f32.mrb[0].mxu0
    %v3575 = vadd.f32 %v3423, %v3574
    %v3576 = vpop.f32.mrb[0].mxu0
    %3577 = vmatprep.mubr.bf16.mxu0 %v2856
    %3578 = vmatmul.mubr.bf16.gmra.mrb[0].mxu0 %v2855
    %v3579 = vpop.f32.mrb[0].mxu0
    %v3580 = vadd.f32 %v3428, %v3579
    %v3581 = vpop.f32.mrb[0].mxu0
    %v3582 = vpop.f32.mrb[0].mxu0
    %v3583 = vadd.f32 %v3431, %v3582
    %v3584 = vpop.f32.mrb[0].mxu0
    %3585 = vmatprep.mubr.bf16.mxu0 %v2864
    %3586 = vmatmul.mubr.bf16.gmra.mrb[0].mxu0 %v2863
    %v3587 = vpop.f32.mrb[0].mxu0
    %v3588 = vadd.f32 %v3436, %v3587
    %v3589 = vpop.f32.mrb[0].mxu0
    %v3590 = vpop.f32.mrb[0].mxu0
    %v3591 = vadd.f32 %v3439, %v3590
    %v3592 = vpop.f32.mrb[0].mxu0
    %3593 = vmatprep.mubr.bf16.mxu0 %v2872
    %3594 = vmatmul.mubr.bf16.gmra.mrb[0].mxu0 %v2871
    %v3595 = vpop.f32.mrb[0].mxu0
    %v3596 = vadd.f32 %v3444, %v3595
    %v3597 = vpop.f32.mrb[0].mxu0
    %v3598 = vpop.f32.mrb[0].mxu0
    %v3599 = vadd.f32 %v3447, %v3598
    %v3600 = vpop.f32.mrb[0].mxu0
    %3601 = vmatprep.mubr.bf16.mxu0 %v2880
    %3602 = vmatmul.mubr.bf16.gmra.mrb[0].mxu0 %v2879
    %v3603 = vpop.f32.mrb[0].mxu0
    %v3604 = vadd.f32 %v3452, %v3603
    %v3605 = vpop.f32.mrb[0].mxu0
    %v3606 = vpop.f32.mrb[0].mxu0
    %v3607 = vadd.f32 %v3455, %v3606
    %v3608 = vpop.f32.mrb[0].mxu0
    %3609 = vmatprep.mubr.bf16.mxu0 %v2888
    %3610 = vmatmul.mubr.bf16.gmra.mrb[0].mxu0 %v2887
    %v3611 = vpop.f32.mrb[0].mxu0
    %v3612 = vadd.f32 %v3460, %v3611
    %v3613 = vpop.f32.mrb[0].mxu0
    %v3614 = vpop.f32.mrb[0].mxu0
    %v3615 = vadd.f32 %v3463, %v3614
    %v3616 = vpop.f32.mrb[0].mxu0
    %3617 = vmatprep.mubr.bf16.mxu0 %v2896
    %3618 = vmatmul.mubr.bf16.gmra.mrb[0].mxu0 %v2895
    %v3619 = vpop.f32.mrb[0].mxu0
    %v3620 = vadd.f32 %v3468, %v3619
    %v3621 = vpop.f32.mrb[0].mxu0
    %v3622 = vpop.f32.mrb[0].mxu0
    %v3623 = vadd.f32 %v3471, %v3622
    %v3624 = vpop.f32.mrb[0].mxu0
    %3625 = vmatprep.mubr.bf16.mxu0 %v2904
    %3626 = vmatmul.mubr.bf16.gmra.mrb[0].mxu0 %v2903
    %v3627 = vpop.f32.mrb[0].mxu0
    %v3628 = vadd.f32 %v3476, %v3627
    %v3629 = vpop.f32.mrb[0].mxu0
    %v3630 = vpop.f32.mrb[0].mxu0
    %v3631 = vadd.f32 %v3479, %v3630
    %v3632 = vpop.f32.mrb[0].mxu0
    %3633 = vmatprep.mubr.bf16.mxu0 %v2912
    %3634 = vmatmul.mubr.bf16.gmra.mrb[0].mxu0 %v2911
    %v3635 = vpop.f32.mrb[0].mxu0
    %v3636 = vadd.f32 %v3484, %v3635
    %v3637 = vpop.f32.mrb[0].mxu0
    %v3638 = vpop.f32.mrb[0].mxu0
    %v3639 = vadd.f32 %v3487, %v3638
    %v3640 = vpop.f32.mrb[0].mxu0
    %3641 = vmatprep.mubr.bf16.mxu0 %v2920
    %3642 = vmatmul.mubr.bf16.gmra.mrb[0].mxu0 %v2919
    %v3643 = vpop.f32.mrb[0].mxu0
    %v3644 = vadd.f32 %v3492, %v3643
    %v3645 = vpop.f32.mrb[0].mxu0
    %v3646 = vpop.f32.mrb[0].mxu0
    %v3647 = vadd.f32 %v3495, %v3646
    %v3648 = vpop.f32.mrb[0].mxu0
    %3649 = vmatprep.mubr.bf16.mxu0 %v2928
    %3650 = vmatmul.mubr.bf16.gmra.mrb[0].mxu0 %v2927
    %v3651 = vpop.f32.mrb[0].mxu0
    %v3652 = vadd.f32 %v3500, %v3651
    %v3653 = vpop.f32.mrb[0].mxu0
    %v3654 = vpop.f32.mrb[0].mxu0
    %v3655 = vadd.f32 %v3503, %v3654
    %v3656 = vpop.f32.mrb[0].mxu0
    %3657 = vmatprep.mubr.bf16.mxu0 %v2936
    %3658 = vmatmul.mubr.bf16.gmra.mrb[0].mxu0 %v2935
    %v3659 = vpop.f32.mrb[0].mxu0
    %v3660 = vadd.f32 %v3508, %v3659
    %v3661 = vpop.f32.mrb[0].mxu0
    %v3662 = vpop.f32.mrb[0].mxu0
    %v3663 = vpop.f32.mrb[0].mxu0
    %3664 = vdwg.mxu0
    %3665 = vst [vmem:[#allocation3] sm:$0xff] %v3548
    %3666 = vst [vmem:[#allocation3 + $0x8] sm:$0xff] %v3551
    %3667 = vst [vmem:[#allocation3 + $0x10] sm:$0xff] %v3556
    %3668 = vst [vmem:[#allocation3 + $0x18] sm:$0xff] %v3559
    %3669 = vst [vmem:[#allocation3 + $0x20] sm:$0xff] %v3564
    %3670 = vst [vmem:[#allocation3 + $0x28] sm:$0xff] %v3567
    %3671 = vst [vmem:[#allocation3 + $0x30] sm:$0xff] %v3572
    %3672 = vst [vmem:[#allocation3 + $0x38] sm:$0xff] %v3575
    %3673 = vst [vmem:[#allocation3 + $0x40] sm:$0xff] %v3580
    %3674 = vst [vmem:[#allocation3 + $0x48] sm:$0xff] %v3583
    %3675 = vst [vmem:[#allocation3 + $0x50] sm:$0xff] %v3588
    %3676 = vst [vmem:[#allocation3 + $0x58] sm:$0xff] %v3591
    %3677 = vst [vmem:[#allocation3 + $0x60] sm:$0xff] %v3596
    %3678 = vst [vmem:[#allocation3 + $0x68] sm:$0xff] %v3599
    %3679 = vst [vmem:[#allocation3 + $0x70] sm:$0xff] %v3604
    %3680 = vst [vmem:[#allocation3 + $0x78] sm:$0xff] %v3607
    %3681 = vst [vmem:[#allocation3 + $0x80] sm:$0xff] %v3612
    %3682 = vst [vmem:[#allocation3 + $0x88] sm:$0xff] %v3615
    %3683 = vst [vmem:[#allocation3 + $0x90] sm:$0xff] %v3620
    %3684 = vst [vmem:[#allocation3 + $0x98] sm:$0xff] %v3623
    %3685 = vst [vmem:[#allocation3 + $0xa0] sm:$0xff] %v3628
    %3686 = vst [vmem:[#allocation3 + $0xa8] sm:$0xff] %v3631
    %3687 = vst [vmem:[#allocation3 + $0xb0] sm:$0xff] %v3636
    %3688 = vst [vmem:[#allocation3 + $0xb8] sm:$0xff] %v3639
    %3689 = vst [vmem:[#allocation3 + $0xc0] sm:$0xff] %v3644
    %3690 = vst [vmem:[#allocation3 + $0xc8] sm:$0xff] %v3647
    %3691 = vst [vmem:[#allocation3 + $0xd0] sm:$0xff] %v3652
    %3692 = vst [vmem:[#allocation3 + $0xd8] sm:$0xff] %v3655
    %3693 = vst [vmem:[#allocation3 + $0xe0] sm:$0xff] %v3660
    %v3694 = vld [vmem:[#allocation3] sm:$0xff]
    %v3695 = vld [vmem:[#allocation3 + $0x8] sm:$0xff]
    %v3696 = vld [vmem:[#allocation3 + $0x10] sm:$0xff]
    %v3697 = vld [vmem:[#allocation3 + $0x18] sm:$0xff]
    %v3698 = vld [vmem:[#allocation3 + $0x20] sm:$0xff]
    %v3699 = vld [vmem:[#allocation3 + $0x28] sm:$0xff]
    %v3700 = vld [vmem:[#allocation3 + $0x30] sm:$0xff]
    %v3701 = vld [vmem:[#allocation3 + $0x38] sm:$0xff]
    %v3702 = vld [vmem:[#allocation3 + $0x40] sm:$0xff]
    %v3703 = vld [vmem:[#allocation3 + $0x48] sm:$0xff]
    %v3704 = vld [vmem:[#allocation3 + $0x50] sm:$0xff]
    %v3705 = vld [vmem:[#allocation3 + $0x58] sm:$0xff]
    %v3706 = vld [vmem:[#allocation3 + $0x60] sm:$0xff]
    %v3707 = vld [vmem:[#allocation3 + $0x68] sm:$0xff]
    %v3708 = vld [vmem:[#allocation3 + $0x70] sm:$0xff]
    %v3709 = vld [vmem:[#allocation3 + $0x78] sm:$0xff]
    %v3710 = vld [vmem:[#allocation3 + $0x80] sm:$0xff]
    %v3711 = vld [vmem:[#allocation3 + $0x88] sm:$0xff]
    %v3712 = vld [vmem:[#allocation3 + $0x90] sm:$0xff]
    %v3713 = vld [vmem:[#allocation3 + $0x98] sm:$0xff]
    %v3714 = vld [vmem:[#allocation3 + $0xa0] sm:$0xff]
    %v3715 = vld [vmem:[#allocation3 + $0xa8] sm:$0xff]
    %v3716 = vld [vmem:[#allocation3 + $0xb0] sm:$0xff]
    %v3717 = vld [vmem:[#allocation3 + $0xb8] sm:$0xff]
    %v3718 = vld [vmem:[#allocation3 + $0xc0] sm:$0xff]
    %v3719 = vld [vmem:[#allocation3 + $0xc8] sm:$0xff]
    %v3720 = vld [vmem:[#allocation3 + $0xd0] sm:$0x3]
    %v3721 = vld [vmem:[#allocation3 + $0x1] sm:$0xff]
    %v3722 = vld [vmem:[#allocation3 + $0x9] sm:$0xff]
    %v3723 = vld [vmem:[#allocation3 + $0x11] sm:$0xff]
    %v3724 = vld [vmem:[#allocation3 + $0x19] sm:$0xff]
    %v3725 = vld [vmem:[#allocation3 + $0x21] sm:$0xff]
    %v3726 = vld [vmem:[#allocation3 + $0x29] sm:$0xff]
    %v3727 = vld [vmem:[#allocation3 + $0x31] sm:$0xff]
    %v3728 = vld [vmem:[#allocation3 + $0x39] sm:$0xff]
    %v3729 = vld [vmem:[#allocation3 + $0x41] sm:$0xff]
    %v3730 = vld [vmem:[#allocation3 + $0x49] sm:$0xff]
    %v3731 = vld [vmem:[#allocation3 + $0x51] sm:$0xff]
    %v3732 = vld [vmem:[#allocation3 + $0x59] sm:$0xff]
    %v3733 = vld [vmem:[#allocation3 + $0x61] sm:$0xff]
    %v3734 = vld [vmem:[#allocation3 + $0x69] sm:$0xff]
    %v3735 = vld [vmem:[#allocation3 + $0x71] sm:$0xff]
    %v3736 = vld [vmem:[#allocation3 + $0x79] sm:$0xff]
    %v3737 = vld [vmem:[#allocation3 + $0x81] sm:$0xff]
    %v3738 = vld [vmem:[#allocation3 + $0x89] sm:$0xff]
    %v3739 = vld [vmem:[#allocation3 + $0x91] sm:$0xff]
    %v3740 = vld [vmem:[#allocation3 + $0x99] sm:$0xff]
    %v3741 = vld [vmem:[#allocation3 + $0xa1] sm:$0xff]
    %v3742 = vld [vmem:[#allocation3 + $0xa9] sm:$0xff]
    %v3743 = vld [vmem:[#allocation3 + $0xb1] sm:$0xff]
    %v3744 = vld [vmem:[#allocation3 + $0xb9] sm:$0xff]
    %v3745 = vld [vmem:[#allocation3 + $0xc1] sm:$0xff]
    %v3746 = vld [vmem:[#allocation3 + $0xc9] sm:$0xff]
    %v3747 = vld [vmem:[#allocation3 + $0xd1] sm:$0x3]
    %v3748 = vpack.c.bf16 %v3695, %v3694
    %v3749 = vpack.c.bf16 %v3722, %v3721
    %v3750 = vpack.c.bf16 %v3697, %v3696
    %v3751 = vpack.c.bf16 %v3724, %v3723
    %v3752 = vpack.c.bf16 %v3699, %v3698
    %v3753 = vpack.c.bf16 %v3726, %v3725
    %v3754 = vpack.c.bf16 %v3701, %v3700
    %v3755 = vpack.c.bf16 %v3728, %v3727
    %v3756 = vpack.c.bf16 %v3703, %v3702
    %v3757 = vpack.c.bf16 %v3730, %v3729
    %v3758 = vpack.c.bf16 %v3705, %v3704
    %v3759 = vpack.c.bf16 %v3732, %v3731
    %v3760 = vpack.c.bf16 %v3707, %v3706
    %v3761 = vpack.c.bf16 %v3734, %v3733
    %v3762 = vpack.c.bf16 %v3709, %v3708
    %v3763 = vpack.c.bf16 %v3736, %v3735
    %v3764 = vpack.c.bf16 %v3711, %v3710
    %v3765 = vpack.c.bf16 %v3738, %v3737
    %v3766 = vpack.c.bf16 %v3713, %v3712
    %v3767 = vpack.c.bf16 %v3740, %v3739
    %v3768 = vpack.c.bf16 %v3715, %v3714
    %v3769 = vpack.c.bf16 %v3742, %v3741
    %v3770 = vpack.c.bf16 %v3717, %v3716
    %v3771 = vpack.c.bf16 %v3744, %v3743
    %v3772 = vpack.c.bf16 %v3719, %v3718
    %v3773 = vpack.c.bf16 %v3746, %v3745
    %v3774 = vpack.c.bf16 %v3720, %v3720
    %v3775 = vpack.c.bf16 %v3747, %v3747
    %v3776 = vld [vmem:[%s4] sm:$0xf]
    %v3777 = vld [vmem:[%s4 + $0x4] sm:$0xf]
    %v3778 = vld [vmem:[%s4 + $0x8] sm:$0xf]
    %v3779 = vld [vmem:[%s4 + $0xc] sm:$0xf]
    %v3780 = vld [vmem:[%s4 + $0x10] sm:$0xf]
    %v3781 = vld [vmem:[%s4 + $0x14] sm:$0xf]
    %v3782 = vld [vmem:[%s4 + $0x18] sm:$0xf]
    %v3783 = vld [vmem:[%s4 + $0x1c] sm:$0xf]
    %v3784 = vld [vmem:[%s4 + $0x20] sm:$0xf]
    %v3785 = vld [vmem:[%s4 + $0x24] sm:$0xf]
    %v3786 = vld [vmem:[%s4 + $0x28] sm:$0xf]
    %v3787 = vld [vmem:[%s4 + $0x2c] sm:$0xf]
    %v3788 = vld [vmem:[%s4 + $0x30] sm:$0xf]
    %v3789 = vld [vmem:[%s4 + $0x34] sm:$0xf]
    %v3790 = vld [vmem:[%s4 + $0x38] sm:$0xf]
    %v3791 = vld [vmem:[%s4 + $0x3c] sm:$0xf]
    %v3792 = vld [vmem:[%s4 + $0x40] sm:$0xf]
    %v3793 = vld [vmem:[%s4 + $0x44] sm:$0xf]
    %v3794 = vld [vmem:[%s4 + $0x48] sm:$0xf]
    %v3795 = vld [vmem:[%s4 + $0x4c] sm:$0xf]
    %v3796 = vld [vmem:[%s4 + $0x50] sm:$0xf]
    %v3797 = vld [vmem:[%s4 + $0x54] sm:$0xf]
    %v3798 = vld [vmem:[%s4 + $0x58] sm:$0xf]
    %v3799 = vld [vmem:[%s4 + $0x5c] sm:$0xf]
    %v3800 = vld [vmem:[%s4 + $0x60] sm:$0xf]
    %v3801 = vld [vmem:[%s4 + $0x64] sm:$0xf]
    %v3802 = vld [vmem:[%s4 + $0x68] sm:$0xf]
    %v3803 = vld [vmem:[%s4 + $0x6c] sm:$0xf]
    %v3804 = vld [vmem:[%s4 + $0x70] sm:$0xf]
    %v3805 = vld [vmem:[%s4 + $0x74] sm:$0xf]
    %v3806 = vld [vmem:[%s4 + $0x78] sm:$0xf]
    %v3807 = vld [vmem:[%s4 + $0x7c] sm:$0xf]
    %v3808 = vld [vmem:[#allocation3 + $0xf] sm:$0xff]
    %v3809 = vld [vmem:[#allocation3 + $0x17] sm:$0xff]
    %v3810 = vld [vmem:[#allocation3 + $0x1f] sm:$0xff]
    %v3811 = vld [vmem:[#allocation3 + $0x27] sm:$0xff]
    %v3812 = vld [vmem:[#allocation3 + $0x2f] sm:$0xff]
    %v3813 = vld [vmem:[#allocation3 + $0x37] sm:$0xff]
    %v3814 = vld [vmem:[#allocation3 + $0x3f] sm:$0xff]
    %v3815 = vld [vmem:[#allocation3 + $0x47] sm:$0xff]
    %v3816 = vld [vmem:[#allocation3 + $0x4f] sm:$0xff]
    %v3817 = vld [vmem:[#allocation3 + $0x57] sm:$0xff]
    %v3818 = vld [vmem:[#allocation3 + $0x5f] sm:$0xff]
    %v3819 = vld [vmem:[#allocation3 + $0x67] sm:$0xff]
    %v3820 = vld [vmem:[#allocation3 + $0x6f] sm:$0xff]
    %v3821 = vld [vmem:[#allocation3 + $0x77] sm:$0xff]
    %v3822 = vld [vmem:[#allocation3 + $0x7f] sm:$0xff]
    %v3823 = vld [vmem:[#allocation3 + $0x87] sm:$0xff]
    %v3824 = vld [vmem:[#allocation3 + $0x8f] sm:$0xff]
    %v3825 = vld [vmem:[#allocation3 + $0x97] sm:$0xff]
    %v3826 = vld [vmem:[#allocation3 + $0x9f] sm:$0xff]
    %v3827 = vld [vmem:[#allocation3 + $0xa7] sm:$0xff]
    %v3828 = vld [vmem:[#allocation3 + $0xaf] sm:$0xff]
    %v3829 = vld [vmem:[#allocation3 + $0xb7] sm:$0xff]
    %v3830 = vld [vmem:[#allocation3 + $0xbf] sm:$0xff]
    %v3831 = vld [vmem:[#allocation3 + $0xc7] sm:$0xff]
    %v3832 = vld [vmem:[#allocation3 + $0xcf] sm:$0xff]
    %v3833 = vld [vmem:[#allocation3 + $0xd7] sm:$0xff]
    %v3834 = vld [vmem:[#allocation3 + $0xdf] sm:$0x3]
    %v3835 = vld [vmem:[#allocation3 + $0xd0] sm:$0xff]
    %v3836 = vld [vmem:[#allocation3 + $0xd8] sm:$0xff]
    %v3837 = vld [vmem:[#allocation3 + $0xe0] sm:$0x3]
    %v3838 = vpack.c.bf16 %v3809, %v3808
    %v3839 = vpack.c.bf16 %v3811, %v3810
    %v3840 = vpack.c.bf16 %v3813, %v3812
    %v3841 = vpack.c.bf16 %v3815, %v3814
    %v3842 = vpack.c.bf16 %v3817, %v3816
    %v3843 = vpack.c.bf16 %v3819, %v3818
    %v3844 = vpack.c.bf16 %v3821, %v3820
    %v3845 = vpack.c.bf16 %v3823, %v3822
    %v3846 = vpack.c.bf16 %v3825, %v3824
    %v3847 = vpack.c.bf16 %v3827, %v3826
    %v3848 = vpack.c.bf16 %v3829, %v3828
    %v3849 = vpack.c.bf16 %v3831, %v3830
    %v3850 = vpack.c.bf16 %v3833, %v3832
    %v3851 = vpack.c.bf16 %v3836, %v3835
    %v3852 = vpack.c.bf16 %v3834, %v3834
    %v3853 = vpack.c.bf16 %v3837, %v3837
    %v3854 = vld [vmem:[%s4 + $0x80] sm:$0xf]
    %v3855 = vld [vmem:[%s4 + $0x84] sm:$0xf]
    %v3856 = vld [vmem:[%s4 + $0x88] sm:$0xf]
    %v3857 = vld [vmem:[%s4 + $0x8c] sm:$0xf]
    %v3858 = vld [vmem:[%s4 + $0x90] sm:$0xf]
    %v3859 = vld [vmem:[%s4 + $0x94] sm:$0xf]
    %v3860 = vld [vmem:[%s4 + $0x98] sm:$0xf]
    %v3861 = vld [vmem:[%s4 + $0x9c] sm:$0xf]
    %v3862 = vld [vmem:[%s4 + $0xa0] sm:$0xf]
    %v3863 = vld [vmem:[%s4 + $0xa4] sm:$0xf]
    %v3864 = vld [vmem:[%s4 + $0xa8] sm:$0xf]
    %v3865 = vld [vmem:[%s4 + $0xac] sm:$0xf]
    %v3866 = vld [vmem:[%s4 + $0xb0] sm:$0xf]
    %v3867 = vld [vmem:[%s4 + $0xb4] sm:$0xf]
    %v3868 = vld [vmem:[%s4 + $0xb8] sm:$0xf]
    %v3869 = vld [vmem:[%s4 + $0xbc] sm:$0xf]
    %v3870 = vld [vmem:[%s4 + $0xc0] sm:$0xf]
    %v3871 = vld [vmem:[%s4 + $0xc4] sm:$0xf]
    %v3872 = vld [vmem:[%s4 + $0xc8] sm:$0xf]
    %v3873 = vld [vmem:[%s4 + $0xcc] sm:$0xf]
    %v3874 = vld [vmem:[%s4 + $0xd0] sm:$0xf]
    %v3875 = vld [vmem:[%s4 + $0xd4] sm:$0xf]
    %v3876 = vld [vmem:[%s4 + $0xd8] sm:$0xf]
    %v3877 = vld [vmem:[%s4 + $0xdc] sm:$0xf]
    %v3878 = vld [vmem:[%s4 + $0xe0] sm:$0xf]
    %v3879 = vld [vmem:[%s4 + $0xe4] sm:$0xf]
    %v3880 = vld [vmem:[%s4 + $0xe8] sm:$0xf]
    %v3881 = vld [vmem:[%s4 + $0xec] sm:$0xf]
    %v3882 = vld [vmem:[%s4 + $0xf0] sm:$0xf]
    %v3883 = vld [vmem:[%s4 + $0xf4] sm:$0xf]
    %v3884 = vld [vmem:[%s4 + $0xf8] sm:$0xf]
    %v3885 = vld [vmem:[%s4 + $0xfc] sm:$0xf]
    %v3918 = vunpack.c.l.b16 %v3854
    %v3919 = vunpack.c.l.b16 %v3855
    %v3920 = vunpack.c.l.b16 %v3856
    %v3921 = vunpack.c.l.b16 %v3857
    %v3922 = vunpack.c.l.b16 %v3858
    %v3923 = vunpack.c.l.b16 %v3859
    %v3924 = vunpack.c.l.b16 %v3860
    %v3925 = vunpack.c.l.b16 %v3861
    %v3926 = vunpack.c.l.b16 %v3862
    %v3927 = vunpack.c.l.b16 %v3863
    %v3928 = vunpack.c.l.b16 %v3864
    %v3929 = vunpack.c.l.b16 %v3865
    %v3930 = vunpack.c.l.b16 %v3866
    %v3931 = vunpack.c.l.b16 %v3867
    %v3932 = vunpack.c.l.b16 %v3868
    %v3933 = vunpack.c.l.b16 %v3869
    %v3934 = vunpack.c.l.b16 %v3870
    %v3935 = vunpack.c.l.b16 %v3871
    %v3936 = vunpack.c.l.b16 %v3872
    %v3937 = vunpack.c.l.b16 %v3873
    %v3938 = vunpack.c.l.b16 %v3874
    %v3939 = vunpack.c.l.b16 %v3875
    %v3940 = vunpack.c.l.b16 %v3876
    %v3941 = vunpack.c.l.b16 %v3877
    %v3942 = vunpack.c.l.b16 %v3878
    %v3943 = vunpack.c.l.b16 %v3879
    %v3944 = vunpack.c.l.b16 %v3880
    %v3945 = vunpack.c.l.b16 %v3881
    %v3946 = vunpack.c.l.b16 %v3882
    %v3947 = vunpack.c.l.b16 %v3883
    %v3948 = vunpack.c.l.b16 %v3884
    %v3949 = vunpack.c.l.b16 %v3885
    %v3950 = vpack.c.b16 %v3919, %v3918
    %v3951 = vpack.c.b16 %v3921, %v3920
    %v3952 = vpack.c.b16 %v3923, %v3922
    %v3953 = vpack.c.b16 %v3925, %v3924
    %v3954 = vpack.c.b16 %v3927, %v3926
    %v3955 = vpack.c.b16 %v3929, %v3928
    %v3956 = vpack.c.b16 %v3931, %v3930
    %v3957 = vpack.c.b16 %v3933, %v3932
    %v3958 = vpack.c.b16 %v3935, %v3934
    %v3959 = vpack.c.b16 %v3937, %v3936
    %v3960 = vpack.c.b16 %v3939, %v3938
    %v3961 = vpack.c.b16 %v3941, %v3940
    %v3962 = vpack.c.b16 %v3943, %v3942
    %v3963 = vpack.c.b16 %v3945, %v3944
    %v3964 = vpack.c.b16 %v3947, %v3946
    %v3965 = vpack.c.b16 %v3949, %v3948
    %3982 = vmatprep.subr.bf16.mxu0 0
    %3983 = vmatpush1.bf16.msra.mxu0 %v3950
    %3984 = vmatprep.subr.bf16.mxu0 0
    %3985 = vmatpush1.bf16.msra.mxu0 %v3951
    %3986 = vmatprep.subr.bf16.mxu0 0
    %3987 = vmatpush1.bf16.msra.mxu0 %v3952
    %3988 = vmatprep.subr.bf16.mxu0 0
    %3989 = vmatpush1.bf16.msra.mxu0 %v3953
    %3990 = vmatprep.subr.bf16.mxu0 0
    %3991 = vmatpush1.bf16.msra.mxu0 %v3954
    %3992 = vmatprep.subr.bf16.mxu0 0
    %3993 = vmatpush1.bf16.msra.mxu0 %v3955
    %3994 = vmatprep.subr.bf16.mxu0 0
    %3995 = vmatpush1.bf16.msra.mxu0 %v3956
    %3996 = vmatprep.subr.bf16.mxu0 0
    %3997 = vmatpush1.bf16.msra.mxu0 %v3957
    %3998 = vmatprep.subr.bf16.mxu0 0
    %3999 = vmatpush1.bf16.msra.mxu0 %v3958
    %4000 = vmatprep.subr.bf16.mxu0 0
    %4001 = vmatpush1.bf16.msra.mxu0 %v3959
    %4002 = vmatprep.subr.bf16.mxu0 0
    %4003 = vmatpush1.bf16.msra.mxu0 %v3960
    %4004 = vmatprep.subr.bf16.mxu0 0
    %4005 = vmatpush1.bf16.msra.mxu0 %v3961
    %4006 = vmatprep.subr.bf16.mxu0 0
    %4007 = vmatpush1.bf16.msra.mxu0 %v3962
    %4008 = vmatprep.subr.bf16.mxu0 0
    %4009 = vmatpush1.bf16.msra.mxu0 %v3963
    %4010 = vmatprep.subr.bf16.mxu0 0
    %4011 = vmatpush1.bf16.msra.mxu0 %v3964
    %4012 = vmatprep.subr.bf16.mxu0 0
    %4013 = vmatpush1.bf16.msra.mxu0 %v3965
    %4014 = vmatprep.mubr.bf16.mxu0 %v3750
    %4015 = vmatmul.mubr.bf16.gmra.mrb[0].mxu0 %v3838
    %v4016 = vpop.f32.mrb[0].mxu0
    %v4017 = vadd.f32 0.0, %v4016
    %v4018 = vpop.f32.mrb[0].mxu0
    %v4019 = vpop.f32.mrb[0].mxu0
    %v4020 = vadd.f32 0.0, %v4019
    %v4021 = vpop.f32.mrb[0].mxu0
    %4022 = vmatprep.mubr.bf16.mxu0 %v3752
    %4023 = vmatmul.mubr.bf16.gmra.mrb[0].mxu0 %v3839
    %v4024 = vpop.f32.mrb[0].mxu0
    %v4025 = vadd.f32 0.0, %v4024
    %v4026 = vpop.f32.mrb[0].mxu0
    %v4027 = vpop.f32.mrb[0].mxu0
    %v4028 = vadd.f32 0.0, %v4027
    %v4029 = vpop.f32.mrb[0].mxu0
    %4030 = vmatprep.mubr.bf16.mxu0 %v3754
    %4031 = vmatmul.mubr.bf16.gmra.mrb[0].mxu0 %v3840
    %v4032 = vpop.f32.mrb[0].mxu0
    %v4033 = vadd.f32 0.0, %v4032
    %v4034 = vpop.f32.mrb[0].mxu0
    %v4035 = vpop.f32.mrb[0].mxu0
    %v4036 = vadd.f32 0.0, %v4035
    %v4037 = vpop.f32.mrb[0].mxu0
    %4038 = vmatprep.mubr.bf16.mxu0 %v3756
    %4039 = vmatmul.mubr.bf16.gmra.mrb[0].mxu0 %v3841
    %v4040 = vpop.f32.mrb[0].mxu0
    %v4041 = vadd.f32 0.0, %v4040
    %v4042 = vpop.f32.mrb[0].mxu0
    %v4043 = vpop.f32.mrb[0].mxu0
    %v4044 = vadd.f32 0.0, %v4043
    %v4045 = vpop.f32.mrb[0].mxu0
    %4046 = vmatprep.mubr.bf16.mxu0 %v3758
    %4047 = vmatmul.mubr.bf16.gmra.mrb[0].mxu0 %v3842
    %v4048 = vpop.f32.mrb[0].mxu0
    %v4049 = vadd.f32 0.0, %v4048
    %v4050 = vpop.f32.mrb[0].mxu0
    %v4051 = vpop.f32.mrb[0].mxu0
    %v4052 = vadd.f32 0.0, %v4051
    %v4053 = vpop.f32.mrb[0].mxu0
    %4054 = vmatprep.mubr.bf16.mxu0 %v3760
    %4055 = vmatmul.mubr.bf16.gmra.mrb[0].mxu0 %v3843
    %v4056 = vpop.f32.mrb[0].mxu0
    %v4057 = vadd.f32 0.0, %v4056
    %v4058 = vpop.f32.mrb[0].mxu0
    %v4059 = vpop.f32.mrb[0].mxu0
    %v4060 = vadd.f32 0.0, %v4059
    %v4061 = vpop.f32.mrb[0].mxu0
    %4062 = vmatprep.mubr.bf16.mxu0 %v3762
    %4063 = vmatmul.mubr.bf16.gmra.mrb[0].mxu0 %v3844
    %v4064 = vpop.f32.mrb[0].mxu0
    %v4065 = vadd.f32 0.0, %v4064
    %v4066 = vpop.f32.mrb[0].mxu0
    %v4067 = vpop.f32.mrb[0].mxu0
    %v4068 = vadd.f32 0.0, %v4067
    %v4069 = vpop.f32.mrb[0].mxu0
    %4070 = vmatprep.mubr.bf16.mxu0 %v3764
    %4071 = vmatmul.mubr.bf16.gmra.mrb[0].mxu0 %v3845
    %v4072 = vpop.f32.mrb[0].mxu0
    %v4073 = vadd.f32 0.0, %v4072
    %v4074 = vpop.f32.mrb[0].mxu0
    %v4075 = vpop.f32.mrb[0].mxu0
    %v4076 = vadd.f32 0.0, %v4075
    %v4077 = vpop.f32.mrb[0].mxu0
    %4078 = vmatprep.mubr.bf16.mxu0 %v3766
    %4079 = vmatmul.mubr.bf16.gmra.mrb[0].mxu0 %v3846
    %v4080 = vpop.f32.mrb[0].mxu0
    %v4081 = vadd.f32 0.0, %v4080
    %v4082 = vpop.f32.mrb[0].mxu0
    %v4083 = vpop.f32.mrb[0].mxu0
    %v4084 = vadd.f32 0.0, %v4083
    %v4085 = vpop.f32.mrb[0].mxu0
    %4086 = vmatprep.mubr.bf16.mxu0 %v3768
    %4087 = vmatmul.mubr.bf16.gmra.mrb[0].mxu0 %v3847
    %v4088 = vpop.f32.mrb[0].mxu0
    %v4089 = vadd.f32 0.0, %v4088
    %v4090 = vpop.f32.mrb[0].mxu0
    %v4091 = vpop.f32.mrb[0].mxu0
    %v4092 = vadd.f32 0.0, %v4091
    %v4093 = vpop.f32.mrb[0].mxu0
    %4094 = vmatprep.mubr.bf16.mxu0 %v3770
    %4095 = vmatmul.mubr.bf16.gmra.mrb[0].mxu0 %v3848
    %v4096 = vpop.f32.mrb[0].mxu0
    %v4097 = vadd.f32 0.0, %v4096
    %v4098 = vpop.f32.mrb[0].mxu0
    %v4099 = vpop.f32.mrb[0].mxu0
    %v4100 = vadd.f32 0.0, %v4099
    %v4101 = vpop.f32.mrb[0].mxu0
    %4102 = vmatprep.mubr.bf16.mxu0 %v3772
    %4103 = vmatmul.mubr.bf16.gmra.mrb[0].mxu0 %v3849
    %v4104 = vpop.f32.mrb[0].mxu0
    %v4105 = vadd.f32 0.0, %v4104
    %v4106 = vpop.f32.mrb[0].mxu0
    %v4107 = vpop.f32.mrb[0].mxu0
    %v4108 = vadd.f32 0.0, %v4107
    %v4109 = vpop.f32.mrb[0].mxu0
    %4110 = vmatprep.mubr.bf16.mxu0 %v3851
    %4111 = vmatmul.mubr.bf16.gmra.mrb[0].mxu0 %v3850
    %v4112 = vpop.f32.mrb[0].mxu0
    %v4113 = vadd.f32 0.0, %v4112
    %v4114 = vpop.f32.mrb[0].mxu0
    %v4115 = vpop.f32.mrb[0].mxu0
    %v4116 = vadd.f32 0.0, %v4115
    %v4117 = vpop.f32.mrb[0].mxu0
    %4118 = vmatprep.mubr.bf16.mxu0 %v3853
    %4119 = vmatmul.mubr.bf16.gmra.mrb[0].mxu0 %v3852
    %v4120 = vpop.f32.mrb[0].mxu0
    %v4121 = vadd.f32 0.0, %v4120
    %v4122 = vpop.f32.mrb[0].mxu0
    %v4123 = vpop.f32.mrb[0].mxu0
    %v4124 = vpop.f32.mrb[0].mxu0
    %4125 = vdwg.mxu0
    %v4158 = vunpack.c.l.b16 %v3776
    %v4159 = vunpack.c.l.b16 %v3777
    %v4160 = vunpack.c.l.b16 %v3778
    %v4161 = vunpack.c.l.b16 %v3779
    %v4162 = vunpack.c.l.b16 %v3780
    %v4163 = vunpack.c.l.b16 %v3781
    %v4164 = vunpack.c.l.b16 %v3782
    %v4165 = vunpack.c.l.b16 %v3783
    %v4166 = vunpack.c.l.b16 %v3784
    %v4167 = vunpack.c.l.b16 %v3785
    %v4168 = vunpack.c.l.b16 %v3786
    %v4169 = vunpack.c.l.b16 %v3787
    %v4170 = vunpack.c.l.b16 %v3788
    %v4171 = vunpack.c.l.b16 %v3789
    %v4172 = vunpack.c.l.b16 %v3790
    %v4173 = vunpack.c.l.b16 %v3791
    %v4174 = vunpack.c.l.b16 %v3792
    %v4175 = vunpack.c.l.b16 %v3793
    %v4176 = vunpack.c.l.b16 %v3794
    %v4177 = vunpack.c.l.b16 %v3795
    %v4178 = vunpack.c.l.b16 %v3796
    %v4179 = vunpack.c.l.b16 %v3797
    %v4180 = vunpack.c.l.b16 %v3798
    %v4181 = vunpack.c.l.b16 %v3799
    %v4182 = vunpack.c.l.b16 %v3800
    %v4183 = vunpack.c.l.b16 %v3801
    %v4184 = vunpack.c.l.b16 %v3802
    %v4185 = vunpack.c.l.b16 %v3803
    %v4186 = vunpack.c.l.b16 %v3804
    %v4187 = vunpack.c.l.b16 %v3805
    %v4188 = vunpack.c.l.b16 %v3806
    %v4189 = vunpack.c.l.b16 %v3807
    %v4190 = vpack.c.b16 %v4159, %v4158
    %v4191 = vpack.c.b16 %v4161, %v4160
    %v4192 = vpack.c.b16 %v4163, %v4162
    %v4193 = vpack.c.b16 %v4165, %v4164
    %v4194 = vpack.c.b16 %v4167, %v4166
    %v4195 = vpack.c.b16 %v4169, %v4168
    %v4196 = vpack.c.b16 %v4171, %v4170
    %v4197 = vpack.c.b16 %v4173, %v4172
    %v4198 = vpack.c.b16 %v4175, %v4174
    %v4199 = vpack.c.b16 %v4177, %v4176
    %v4200 = vpack.c.b16 %v4179, %v4178
    %v4201 = vpack.c.b16 %v4181, %v4180
    %v4202 = vpack.c.b16 %v4183, %v4182
    %v4203 = vpack.c.b16 %v4185, %v4184
    %v4204 = vpack.c.b16 %v4187, %v4186
    %v4205 = vpack.c.b16 %v4189, %v4188
    %4222 = vmatprep.subr.bf16.mxu0 0
    %4223 = vmatpush1.bf16.msra.mxu0 %v4190
    %4224 = vmatprep.subr.bf16.mxu0 0
    %4225 = vmatpush1.bf16.msra.mxu0 %v4191
    %4226 = vmatprep.subr.bf16.mxu0 0
    %4227 = vmatpush1.bf16.msra.mxu0 %v4192
    %4228 = vmatprep.subr.bf16.mxu0 0
    %4229 = vmatpush1.bf16.msra.mxu0 %v4193
    %4230 = vmatprep.subr.bf16.mxu0 0
    %4231 = vmatpush1.bf16.msra.mxu0 %v4194
    %4232 = vmatprep.subr.bf16.mxu0 0
    %4233 = vmatpush1.bf16.msra.mxu0 %v4195
    %4234 = vmatprep.subr.bf16.mxu0 0
    %4235 = vmatpush1.bf16.msra.mxu0 %v4196
    %4236 = vmatprep.subr.bf16.mxu0 0
    %4237 = vmatpush1.bf16.msra.mxu0 %v4197
    %4238 = vmatprep.subr.bf16.mxu0 0
    %4239 = vmatpush1.bf16.msra.mxu0 %v4198
    %4240 = vmatprep.subr.bf16.mxu0 0
    %4241 = vmatpush1.bf16.msra.mxu0 %v4199
    %4242 = vmatprep.subr.bf16.mxu0 0
    %4243 = vmatpush1.bf16.msra.mxu0 %v4200
    %4244 = vmatprep.subr.bf16.mxu0 0
    %4245 = vmatpush1.bf16.msra.mxu0 %v4201
    %4246 = vmatprep.subr.bf16.mxu0 0
    %4247 = vmatpush1.bf16.msra.mxu0 %v4202
    %4248 = vmatprep.subr.bf16.mxu0 0
    %4249 = vmatpush1.bf16.msra.mxu0 %v4203
    %4250 = vmatprep.subr.bf16.mxu0 0
    %4251 = vmatpush1.bf16.msra.mxu0 %v4204
    %4252 = vmatprep.subr.bf16.mxu0 0
    %4253 = vmatpush1.bf16.msra.mxu0 %v4205
    %4254 = vmatprep.mubr.bf16.mxu0 %v3749
    %4255 = vmatmul.mubr.bf16.gmra.mrb[0].mxu0 %v3748
    %v4256 = vpop.f32.mrb[0].mxu0
    %v4257 = vadd.f32 %v4017, %v4256
    %v4258 = vpop.f32.mrb[0].mxu0
    %v4259 = vpop.f32.mrb[0].mxu0
    %v4260 = vadd.f32 %v4020, %v4259
    %v4261 = vpop.f32.mrb[0].mxu0
    %4262 = vmatprep.mubr.bf16.mxu0 %v3751
    %4263 = vmatmul.mubr.bf16.gmra.mrb[0].mxu0 %v3750
    %v4264 = vpop.f32.mrb[0].mxu0
    %v4265 = vadd.f32 %v4025, %v4264
    %v4266 = vpop.f32.mrb[0].mxu0
    %v4267 = vpop.f32.mrb[0].mxu0
    %v4268 = vadd.f32 %v4028, %v4267
    %v4269 = vpop.f32.mrb[0].mxu0
    %4270 = vmatprep.mubr.bf16.mxu0 %v3753
    %4271 = vmatmul.mubr.bf16.gmra.mrb[0].mxu0 %v3752
    %v4272 = vpop.f32.mrb[0].mxu0
    %v4273 = vadd.f32 %v4033, %v4272
    %v4274 = vpop.f32.mrb[0].mxu0
    %v4275 = vpop.f32.mrb[0].mxu0
    %v4276 = vadd.f32 %v4036, %v4275
    %v4277 = vpop.f32.mrb[0].mxu0
    %4278 = vmatprep.mubr.bf16.mxu0 %v3755
    %4279 = vmatmul.mubr.bf16.gmra.mrb[0].mxu0 %v3754
    %v4280 = vpop.f32.mrb[0].mxu0
    %v4281 = vadd.f32 %v4041, %v4280
    %v4282 = vpop.f32.mrb[0].mxu0
    %v4283 = vpop.f32.mrb[0].mxu0
    %v4284 = vadd.f32 %v4044, %v4283
    %v4285 = vpop.f32.mrb[0].mxu0
    %4286 = vmatprep.mubr.bf16.mxu0 %v3757
    %4287 = vmatmul.mubr.bf16.gmra.mrb[0].mxu0 %v3756
    %v4288 = vpop.f32.mrb[0].mxu0
    %v4289 = vadd.f32 %v4049, %v4288
    %v4290 = vpop.f32.mrb[0].mxu0
    %v4291 = vpop.f32.mrb[0].mxu0
    %v4292 = vadd.f32 %v4052, %v4291
    %v4293 = vpop.f32.mrb[0].mxu0
    %4294 = vmatprep.mubr.bf16.mxu0 %v3759
    %4295 = vmatmul.mubr.bf16.gmra.mrb[0].mxu0 %v3758
    %v4296 = vpop.f32.mrb[0].mxu0
    %v4297 = vadd.f32 %v4057, %v4296
    %v4298 = vpop.f32.mrb[0].mxu0
    %v4299 = vpop.f32.mrb[0].mxu0
    %v4300 = vadd.f32 %v4060, %v4299
    %v4301 = vpop.f32.mrb[0].mxu0
    %4302 = vmatprep.mubr.bf16.mxu0 %v3761
    %4303 = vmatmul.mubr.bf16.gmra.mrb[0].mxu0 %v3760
    %v4304 = vpop.f32.mrb[0].mxu0
    %v4305 = vadd.f32 %v4065, %v4304
    %v4306 = vpop.f32.mrb[0].mxu0
    %v4307 = vpop.f32.mrb[0].mxu0
    %v4308 = vadd.f32 %v4068, %v4307
    %v4309 = vpop.f32.mrb[0].mxu0
    %4310 = vmatprep.mubr.bf16.mxu0 %v3763
    %4311 = vmatmul.mubr.bf16.gmra.mrb[0].mxu0 %v3762
    %v4312 = vpop.f32.mrb[0].mxu0
    %v4313 = vadd.f32 %v4073, %v4312
    %v4314 = vpop.f32.mrb[0].mxu0
    %v4315 = vpop.f32.mrb[0].mxu0
    %v4316 = vadd.f32 %v4076, %v4315
    %v4317 = vpop.f32.mrb[0].mxu0
    %4318 = vmatprep.mubr.bf16.mxu0 %v3765
    %4319 = vmatmul.mubr.bf16.gmra.mrb[0].mxu0 %v3764
    %v4320 = vpop.f32.mrb[0].mxu0
    %v4321 = vadd.f32 %v4081, %v4320
    %v4322 = vpop.f32.mrb[0].mxu0
    %v4323 = vpop.f32.mrb[0].mxu0
    %v4324 = vadd.f32 %v4084, %v4323
    %v4325 = vpop.f32.mrb[0].mxu0
    %4326 = vmatprep.mubr.bf16.mxu0 %v3767
    %4327 = vmatmul.mubr.bf16.gmra.mrb[0].mxu0 %v3766
    %v4328 = vpop.f32.mrb[0].mxu0
    %v4329 = vadd.f32 %v4089, %v4328
    %v4330 = vpop.f32.mrb[0].mxu0
    %v4331 = vpop.f32.mrb[0].mxu0
    %v4332 = vadd.f32 %v4092, %v4331
    %v4333 = vpop.f32.mrb[0].mxu0
    %4334 = vmatprep.mubr.bf16.mxu0 %v3769
    %4335 = vmatmul.mubr.bf16.gmra.mrb[0].mxu0 %v3768
    %v4336 = vpop.f32.mrb[0].mxu0
    %v4337 = vadd.f32 %v4097, %v4336
    %v4338 = vpop.f32.mrb[0].mxu0
    %v4339 = vpop.f32.mrb[0].mxu0
    %v4340 = vadd.f32 %v4100, %v4339
    %v4341 = vpop.f32.mrb[0].mxu0
    %4342 = vmatprep.mubr.bf16.mxu0 %v3771
    %4343 = vmatmul.mubr.bf16.gmra.mrb[0].mxu0 %v3770
    %v4344 = vpop.f32.mrb[0].mxu0
    %v4345 = vadd.f32 %v4105, %v4344
    %v4346 = vpop.f32.mrb[0].mxu0
    %v4347 = vpop.f32.mrb[0].mxu0
    %v4348 = vadd.f32 %v4108, %v4347
    %v4349 = vpop.f32.mrb[0].mxu0
    %4350 = vmatprep.mubr.bf16.mxu0 %v3773
    %4351 = vmatmul.mubr.bf16.gmra.mrb[0].mxu0 %v3772
    %v4352 = vpop.f32.mrb[0].mxu0
    %v4353 = vadd.f32 %v4113, %v4352
    %v4354 = vpop.f32.mrb[0].mxu0
    %v4355 = vpop.f32.mrb[0].mxu0
    %v4356 = vadd.f32 %v4116, %v4355
    %v4357 = vpop.f32.mrb[0].mxu0
    %4358 = vmatprep.mubr.bf16.mxu0 %v3775
    %4359 = vmatmul.mubr.bf16.gmra.mrb[0].mxu0 %v3774
    %v4360 = vpop.f32.mrb[0].mxu0
    %v4361 = vadd.f32 %v4121, %v4360
    %v4362 = vpop.f32.mrb[0].mxu0
    %v4363 = vpop.f32.mrb[0].mxu0
    %v4364 = vpop.f32.mrb[0].mxu0
    %4365 = vdwg.mxu0
    %v4366 = vld [vmem:[%s5] sm:$0x1]
    %v4368 = vlaneseq
    %v4369 = vshrl.u32 %v4368, 7
    %v4370 = vsub.s32 0, %v4369
    %v4371 = vrot.slane %v4366, %v4370
    %v4373 = vadd.f32 %v4257, %v4371
    %v4374 = vadd.f32 %v4260, %v4371
    %v4375 = vadd.f32 %v4265, %v4371
    %v4376 = vadd.f32 %v4268, %v4371
    %v4377 = vadd.f32 %v4273, %v4371
    %v4378 = vadd.f32 %v4276, %v4371
    %v4379 = vadd.f32 %v4281, %v4371
    %v4380 = vadd.f32 %v4284, %v4371
    %v4381 = vadd.f32 %v4289, %v4371
    %v4382 = vadd.f32 %v4292, %v4371
    %v4383 = vadd.f32 %v4297, %v4371
    %v4384 = vadd.f32 %v4300, %v4371
    %v4385 = vadd.f32 %v4305, %v4371
    %v4386 = vadd.f32 %v4308, %v4371
    %v4387 = vadd.f32 %v4313, %v4371
    %v4388 = vadd.f32 %v4316, %v4371
    %v4389 = vadd.f32 %v4321, %v4371
    %v4390 = vadd.f32 %v4324, %v4371
    %v4391 = vadd.f32 %v4329, %v4371
    %v4392 = vadd.f32 %v4332, %v4371
    %v4393 = vadd.f32 %v4337, %v4371
    %v4394 = vadd.f32 %v4340, %v4371
    %v4395 = vadd.f32 %v4345, %v4371
    %v4396 = vadd.f32 %v4348, %v4371
    %v4397 = vadd.f32 %v4353, %v4371
    %v4398 = vadd.f32 %v4356, %v4371
    %v4399 = vadd.f32 %v4361, %v4371
    %v4400 = vmax.f32 %v4373, 0.0
    %v4401 = vmax.f32 %v4374, 0.0
    %v4402 = vmax.f32 %v4375, 0.0
    %v4403 = vmax.f32 %v4376, 0.0
    %v4404 = vmax.f32 %v4377, 0.0
    %v4405 = vmax.f32 %v4378, 0.0
    %v4406 = vmax.f32 %v4379, 0.0
    %v4407 = vmax.f32 %v4380, 0.0
    %v4408 = vmax.f32 %v4381, 0.0
    %v4409 = vmax.f32 %v4382, 0.0
    %v4410 = vmax.f32 %v4383, 0.0
    %v4411 = vmax.f32 %v4384, 0.0
    %v4412 = vmax.f32 %v4385, 0.0
    %v4413 = vmax.f32 %v4386, 0.0
    %v4414 = vmax.f32 %v4387, 0.0
    %v4415 = vmax.f32 %v4388, 0.0
    %v4416 = vmax.f32 %v4389, 0.0
    %v4417 = vmax.f32 %v4390, 0.0
    %v4418 = vmax.f32 %v4391, 0.0
    %v4419 = vmax.f32 %v4392, 0.0
    %v4420 = vmax.f32 %v4393, 0.0
    %v4421 = vmax.f32 %v4394, 0.0
    %v4422 = vmax.f32 %v4395, 0.0
    %v4423 = vmax.f32 %v4396, 0.0
    %v4424 = vmax.f32 %v4397, 0.0
    %v4425 = vmax.f32 %v4398, 0.0
    %v4426 = vmax.f32 %v4399, 0.0
    %4427 = vst [vmem:[#allocation2] sm:$0xff] %v4400
    %4428 = vst [vmem:[#allocation2 + $0x8] sm:$0xff] %v4401
    %4429 = vst [vmem:[#allocation2 + $0x10] sm:$0xff] %v4402
    %4430 = vst [vmem:[#allocation2 + $0x18] sm:$0xff] %v4403
    %4431 = vst [vmem:[#allocation2 + $0x20] sm:$0xff] %v4404
    %4432 = vst [vmem:[#allocation2 + $0x28] sm:$0xff] %v4405
    %4433 = vst [vmem:[#allocation2 + $0x30] sm:$0xff] %v4406
    %4434 = vst [vmem:[#allocation2 + $0x38] sm:$0xff] %v4407
    %4435 = vst [vmem:[#allocation2 + $0x40] sm:$0xff] %v4408
    %4436 = vst [vmem:[#allocation2 + $0x48] sm:$0xff] %v4409
    %4437 = vst [vmem:[#allocation2 + $0x50] sm:$0xff] %v4410
    %4438 = vst [vmem:[#allocation2 + $0x58] sm:$0xff] %v4411
    %4439 = vst [vmem:[#allocation2 + $0x60] sm:$0xff] %v4412
    %4440 = vst [vmem:[#allocation2 + $0x68] sm:$0xff] %v4413
    %4441 = vst [vmem:[#allocation2 + $0x70] sm:$0xff] %v4414
    %4442 = vst [vmem:[#allocation2 + $0x78] sm:$0xff] %v4415
    %4443 = vst [vmem:[#allocation2 + $0x80] sm:$0xff] %v4416
    %4444 = vst [vmem:[#allocation2 + $0x88] sm:$0xff] %v4417
    %4445 = vst [vmem:[#allocation2 + $0x90] sm:$0xff] %v4418
    %4446 = vst [vmem:[#allocation2 + $0x98] sm:$0xff] %v4419
    %4447 = vst [vmem:[#allocation2 + $0xa0] sm:$0xff] %v4420
    %4448 = vst [vmem:[#allocation2 + $0xa8] sm:$0xff] %v4421
    %4449 = vst [vmem:[#allocation2 + $0xb0] sm:$0xff] %v4422
    %4450 = vst [vmem:[#allocation2 + $0xb8] sm:$0xff] %v4423
    %4451 = vst [vmem:[#allocation2 + $0xc0] sm:$0xff] %v4424
    %4452 = vst [vmem:[#allocation2 + $0xc8] sm:$0xff] %v4425
    %4453 = vst [vmem:[#allocation2 + $0xd0] sm:$0x3] %v4426
    %4454 = vst [vmem:[#allocation2 + $0xd2] sm:$0xff] 0.0
    %4455 = vst [vmem:[#allocation2 + $0xda] sm:$0xff] 0.0
    %v4456 = vld [vmem:[#allocation2 + $0x1] sm:$0xff]
    %v4457 = vld [vmem:[#allocation2 + $0x9] sm:$0xff]
    %v4458 = vld [vmem:[#allocation2 + $0x11] sm:$0xff]
    %v4459 = vld [vmem:[#allocation2 + $0x19] sm:$0xff]
    %v4460 = vld [vmem:[#allocation2 + $0x21] sm:$0xff]
    %v4461 = vld [vmem:[#allocation2 + $0x29] sm:$0xff]
    %v4462 = vld [vmem:[#allocation2 + $0x31] sm:$0xff]
    %v4463 = vld [vmem:[#allocation2 + $0x39] sm:$0xff]
    %v4464 = vld [vmem:[#allocation2 + $0x41] sm:$0xff]
    %v4465 = vld [vmem:[#allocation2 + $0x49] sm:$0xff]
    %v4466 = vld [vmem:[#allocation2 + $0x51] sm:$0xff]
    %v4467 = vld [vmem:[#allocation2 + $0x59] sm:$0xff]
    %v4468 = vld [vmem:[#allocation2 + $0x61] sm:$0xff]
    %v4469 = vld [vmem:[#allocation2 + $0x69] sm:$0xff]
    %v4470 = vld [vmem:[#allocation2 + $0x71] sm:$0xff]
    %v4471 = vld [vmem:[#allocation2 + $0x79] sm:$0xff]
    %v4472 = vld [vmem:[#allocation2 + $0x81] sm:$0xff]
    %v4473 = vld [vmem:[#allocation2 + $0x89] sm:$0xff]
    %v4474 = vld [vmem:[#allocation2 + $0x91] sm:$0xff]
    %v4475 = vld [vmem:[#allocation2 + $0x99] sm:$0xff]
    %v4476 = vld [vmem:[#allocation2 + $0xa1] sm:$0xff]
    %v4477 = vld [vmem:[#allocation2 + $0xa9] sm:$0xff]
    %v4478 = vld [vmem:[#allocation2 + $0xb1] sm:$0xff]
    %v4479 = vld [vmem:[#allocation2 + $0xb9] sm:$0xff]
    %v4480 = vld [vmem:[#allocation2 + $0xc1] sm:$0xff]
    %v4481 = vld [vmem:[#allocation2 + $0xc9] sm:$0xff]
    %v4482 = vld [vmem:[#allocation2 + $0xd1] sm:$0x3]
    %v4483 = vmax.f32 %v4400, %v4456
    %v4484 = vmax.f32 %v4401, %v4457
    %v4485 = vmax.f32 %v4402, %v4458
    %v4486 = vmax.f32 %v4403, %v4459
    %v4487 = vmax.f32 %v4404, %v4460
    %v4488 = vmax.f32 %v4405, %v4461
    %v4489 = vmax.f32 %v4406, %v4462
    %v4490 = vmax.f32 %v4407, %v4463
    %v4491 = vmax.f32 %v4408, %v4464
    %v4492 = vmax.f32 %v4409, %v4465
    %v4493 = vmax.f32 %v4410, %v4466
    %v4494 = vmax.f32 %v4411, %v4467
    %v4495 = vmax.f32 %v4412, %v4468
    %v4496 = vmax.f32 %v4413, %v4469
    %v4497 = vmax.f32 %v4414, %v4470
    %v4498 = vmax.f32 %v4415, %v4471
    %v4499 = vmax.f32 %v4416, %v4472
    %v4500 = vmax.f32 %v4417, %v4473
    %v4501 = vmax.f32 %v4418, %v4474
    %v4502 = vmax.f32 %v4419, %v4475
    %v4503 = vmax.f32 %v4420, %v4476
    %v4504 = vmax.f32 %v4421, %v4477
    %v4505 = vmax.f32 %v4422, %v4478
    %v4506 = vmax.f32 %v4423, %v4479
    %v4507 = vmax.f32 %v4424, %v4480
    %v4508 = vmax.f32 %v4425, %v4481
    %v4509 = vmax.f32 %v4426, %v4482
    %v4510 = vld [vmem:[#allocation2 + $0xf] sm:$0xff]
    %v4511 = vld [vmem:[#allocation2 + $0x17] sm:$0xff]
    %v4512 = vld [vmem:[#allocation2 + $0x1f] sm:$0xff]
    %v4513 = vld [vmem:[#allocation2 + $0x27] sm:$0xff]
    %v4514 = vld [vmem:[#allocation2 + $0x2f] sm:$0xff]
    %v4515 = vld [vmem:[#allocation2 + $0x37] sm:$0xff]
    %v4516 = vld [vmem:[#allocation2 + $0x3f] sm:$0xff]
    %v4517 = vld [vmem:[#allocation2 + $0x47] sm:$0xff]
    %v4518 = vld [vmem:[#allocation2 + $0x4f] sm:$0xff]
    %v4519 = vld [vmem:[#allocation2 + $0x57] sm:$0xff]
    %v4520 = vld [vmem:[#allocation2 + $0x5f] sm:$0xff]
    %v4521 = vld [vmem:[#allocation2 + $0x67] sm:$0xff]
    %v4522 = vld [vmem:[#allocation2 + $0x6f] sm:$0xff]
    %v4523 = vld [vmem:[#allocation2 + $0x77] sm:$0xff]
    %v4524 = vld [vmem:[#allocation2 + $0x7f] sm:$0xff]
    %v4525 = vld [vmem:[#allocation2 + $0x87] sm:$0xff]
    %v4526 = vld [vmem:[#allocation2 + $0x8f] sm:$0xff]
    %v4527 = vld [vmem:[#allocation2 + $0x97] sm:$0xff]
    %v4528 = vld [vmem:[#allocation2 + $0x9f] sm:$0xff]
    %v4529 = vld [vmem:[#allocation2 + $0xa7] sm:$0xff]
    %v4530 = vld [vmem:[#allocation2 + $0xaf] sm:$0xff]
    %v4531 = vld [vmem:[#allocation2 + $0xb7] sm:$0xff]
    %v4532 = vld [vmem:[#allocation2 + $0xbf] sm:$0xff]
    %v4533 = vld [vmem:[#allocation2 + $0xc7] sm:$0xff]
    %v4534 = vld [vmem:[#allocation2 + $0xcf] sm:$0xff]
    %v4535 = vld [vmem:[#allocation2 + $0xd7] sm:$0xff]
    %v4536 = vld [vmem:[#allocation2 + $0xdf] sm:$0x3]
    %v4537 = vld [vmem:[#allocation2 + $0x10] sm:$0xff]
    %v4538 = vld [vmem:[#allocation2 + $0x18] sm:$0xff]
    %v4539 = vld [vmem:[#allocation2 + $0x20] sm:$0xff]
    %v4540 = vld [vmem:[#allocation2 + $0x28] sm:$0xff]
    %v4541 = vld [vmem:[#allocation2 + $0x30] sm:$0xff]
    %v4542 = vld [vmem:[#allocation2 + $0x38] sm:$0xff]
    %v4543 = vld [vmem:[#allocation2 + $0x40] sm:$0xff]
    %v4544 = vld [vmem:[#allocation2 + $0x48] sm:$0xff]
    %v4545 = vld [vmem:[#allocation2 + $0x50] sm:$0xff]
    %v4546 = vld [vmem:[#allocation2 + $0x58] sm:$0xff]
    %v4547 = vld [vmem:[#allocation2 + $0x60] sm:$0xff]
    %v4548 = vld [vmem:[#allocation2 + $0x68] sm:$0xff]
    %v4549 = vld [vmem:[#allocation2 + $0x70] sm:$0xff]
    %v4550 = vld [vmem:[#allocation2 + $0x78] sm:$0xff]
    %v4551 = vld [vmem:[#allocation2 + $0x80] sm:$0xff]
    %v4552 = vld [vmem:[#allocation2 + $0x88] sm:$0xff]
    %v4553 = vld [vmem:[#allocation2 + $0x90] sm:$0xff]
    %v4554 = vld [vmem:[#allocation2 + $0x98] sm:$0xff]
    %v4555 = vld [vmem:[#allocation2 + $0xa0] sm:$0xff]
    %v4556 = vld [vmem:[#allocation2 + $0xa8] sm:$0xff]
    %v4557 = vld [vmem:[#allocation2 + $0xb0] sm:$0xff]
    %v4558 = vld [vmem:[#allocation2 + $0xb8] sm:$0xff]
    %v4559 = vld [vmem:[#allocation2 + $0xc0] sm:$0xff]
    %v4560 = vld [vmem:[#allocation2 + $0xc8] sm:$0xff]
    %v4561 = vld [vmem:[#allocation2 + $0xd0] sm:$0xff]
    %v4562 = vld [vmem:[#allocation2 + $0xd8] sm:$0xff]
    %v4563 = vld [vmem:[#allocation2 + $0xe0] sm:$0x3]
    %v4564 = vmax.f32 %v4510, %v4537
    %v4565 = vmax.f32 %v4511, %v4538
    %v4566 = vmax.f32 %v4512, %v4539
    %v4567 = vmax.f32 %v4513, %v4540
    %v4568 = vmax.f32 %v4514, %v4541
    %v4569 = vmax.f32 %v4515, %v4542
    %v4570 = vmax.f32 %v4516, %v4543
    %v4571 = vmax.f32 %v4517, %v4544
    %v4572 = vmax.f32 %v4518, %v4545
    %v4573 = vmax.f32 %v4519, %v4546
    %v4574 = vmax.f32 %v4520, %v4547
    %v4575 = vmax.f32 %v4521, %v4548
    %v4576 = vmax.f32 %v4522, %v4549
    %v4577 = vmax.f32 %v4523, %v4550
    %v4578 = vmax.f32 %v4524, %v4551
    %v4579 = vmax.f32 %v4525, %v4552
    %v4580 = vmax.f32 %v4526, %v4553
    %v4581 = vmax.f32 %v4527, %v4554
    %v4582 = vmax.f32 %v4528, %v4555
    %v4583 = vmax.f32 %v4529, %v4556
    %v4584 = vmax.f32 %v4530, %v4557
    %v4585 = vmax.f32 %v4531, %v4558
    %v4586 = vmax.f32 %v4532, %v4559
    %v4587 = vmax.f32 %v4533, %v4560
    %v4588 = vmax.f32 %v4534, %v4561
    %v4589 = vmax.f32 %v4535, %v4562
    %v4590 = vmax.f32 %v4536, %v4563
    %v4591 = vmax.f32 %v4483, %v4564
    %v4592 = vmax.f32 %v4484, %v4565
    %v4593 = vmax.f32 %v4485, %v4566
    %v4594 = vmax.f32 %v4486, %v4567
    %v4595 = vmax.f32 %v4487, %v4568
    %v4596 = vmax.f32 %v4488, %v4569
    %v4597 = vmax.f32 %v4489, %v4570
    %v4598 = vmax.f32 %v4490, %v4571
    %v4599 = vmax.f32 %v4491, %v4572
    %v4600 = vmax.f32 %v4492, %v4573
    %v4601 = vmax.f32 %v4493, %v4574
    %v4602 = vmax.f32 %v4494, %v4575
    %v4603 = vmax.f32 %v4495, %v4576
    %v4604 = vmax.f32 %v4496, %v4577
    %v4605 = vmax.f32 %v4497, %v4578
    %v4606 = vmax.f32 %v4498, %v4579
    %v4607 = vmax.f32 %v4499, %v4580
    %v4608 = vmax.f32 %v4500, %v4581
    %v4609 = vmax.f32 %v4501, %v4582
    %v4610 = vmax.f32 %v4502, %v4583
    %v4611 = vmax.f32 %v4503, %v4584
    %v4612 = vmax.f32 %v4504, %v4585
    %v4613 = vmax.f32 %v4505, %v4586
    %v4614 = vmax.f32 %v4506, %v4587
    %v4615 = vmax.f32 %v4507, %v4588
    %v4616 = vmax.f32 %v4508, %v4589
    %v4617 = vmax.f32 %v4509, %v4590
    %v4618 = vld [vmem:[%s6] sm:$0xff]
    %v4619 = vld [vmem:[%s6 + $0x8] sm:$0xff]
    %v4620 = vld [vmem:[%s6 + $0x10] sm:$0xff]
    %v4621 = vld [vmem:[%s6 + $0x18] sm:$0xff]
    %v4622 = vld [vmem:[%s6 + $0x20] sm:$0xff]
    %v4623 = vld [vmem:[%s6 + $0x28] sm:$0xff]
    %v4624 = vld [vmem:[%s6 + $0x30] sm:$0xff]
    %v4625 = vpack.c.bf16 %v4592, %v4591
    %v4626 = vpack.c.bf16 %v4594, %v4593
    %v4627 = vpack.c.bf16 %v4596, %v4595
    %v4628 = vpack.c.bf16 %v4598, %v4597
    %v4629 = vpack.c.bf16 %v4600, %v4599
    %v4630 = vpack.c.bf16 %v4602, %v4601
    %v4631 = vpack.c.bf16 %v4604, %v4603
    %v4632 = vpack.c.bf16 %v4606, %v4605
    %v4633 = vpack.c.bf16 %v4608, %v4607
    %v4634 = vpack.c.bf16 %v4610, %v4609
    %v4635 = vpack.c.bf16 %v4612, %v4611
    %v4636 = vpack.c.bf16 %v4614, %v4613
    %v4637 = vpack.c.bf16 %v4616, %v4615
    %v4638 = vpack.c.bf16 %v4617, %v4617
    %v4646 = vunpack.c.l.b16 %v4618
    %v4647 = vunpack.c.h.b16 %v4618
    %v4648 = vunpack.c.l.b16 %v4619
    %v4649 = vunpack.c.h.b16 %v4619
    %v4650 = vunpack.c.l.b16 %v4620
    %v4651 = vunpack.c.h.b16 %v4620
    %v4652 = vunpack.c.l.b16 %v4621
    %v4653 = vunpack.c.h.b16 %v4621
    %v4654 = vunpack.c.l.b16 %v4622
    %v4655 = vunpack.c.h.b16 %v4622
    %v4656 = vunpack.c.l.b16 %v4623
    %v4657 = vunpack.c.h.b16 %v4623
    %v4658 = vunpack.c.l.b16 %v4624
    %v4659 = vunpack.c.h.b16 %v4624
    %v4660 = vpack.c.b16 %v4648, %v4646
    %v4661 = vpack.c.b16 %v4649, %v4647
    %v4662 = vpack.c.b16 %v4652, %v4650
    %v4663 = vpack.c.b16 %v4653, %v4651
    %v4664 = vpack.c.b16 %v4656, %v4654
    %v4665 = vpack.c.b16 %v4657, %v4655
    %v4666 = vpack.c.b16 %v4658, %v4658
    %v4667 = vpack.c.b16 %v4659, %v4659
    %vm4672 = vcmask 670720
    %v4674 = vsel %vm4672, %v4661, 0
    %v4677 = vsel %vm4672, %v4663, 0
    %v4680 = vsel %vm4672, %v4665, 0
    %v4683 = vsel %vm4672, %v4667, 0
    %vm4685 = vcmask 1040384
    %v4687 = vsel %vm4685, %v4638, 0
    %4689 = vmatprep.subr.bf16.mxu0 0
    %4690 = vmatpush1.bf16.msra.mxu0 %v4625
    %4691 = vmatprep.subr.bf16.mxu0 0
    %4692 = vmatpush1.bf16.msra.mxu0 %v4626
    %4693 = vmatprep.subr.bf16.mxu0 0
    %4694 = vmatpush1.bf16.msra.mxu0 %v4627
    %4695 = vmatprep.subr.bf16.mxu0 0
    %4696 = vmatpush1.bf16.msra.mxu0 %v4628
    %4697 = vmatprep.subr.bf16.mxu0 0
    %4698 = vmatpush1.bf16.msra.mxu0 %v4629
    %4699 = vmatprep.subr.bf16.mxu0 0
    %4700 = vmatpush1.bf16.msra.mxu0 %v4630
    %4701 = vmatprep.subr.bf16.mxu0 0
    %4702 = vmatpush1.bf16.msra.mxu0 %v4631
    %4703 = vmatprep.subr.bf16.mxu0 0
    %4704 = vmatpush1.bf16.msra.mxu0 %v4632
    %4705 = vmatprep.subr.bf16.mxu0 0
    %4706 = vmatpush1.bf16.msra.mxu0 %v4633
    %4707 = vmatprep.subr.bf16.mxu0 0
    %4708 = vmatpush1.bf16.msra.mxu0 %v4634
    %4709 = vmatprep.subr.bf16.mxu0 0
    %4710 = vmatpush1.bf16.msra.mxu0 %v4635
    %4711 = vmatprep.subr.bf16.mxu0 0
    %4712 = vmatpush1.bf16.msra.mxu0 %v4636
    %4713 = vmatprep.subr.bf16.mxu0 0
    %4714 = vmatpush1.bf16.msra.mxu0 %v4637
    %4715 = vmatprep.subr.bf16.mxu0 0
    %4716 = vmatpush1.bf16.msra.mxu0 %v4687
    %4717 = vmatprep.subr.bf16.mxu0 0
    %4718 = vmatpush1.bf16.msra.mxu0 0
    %4719 = vmatprep.subr.bf16.mxu0 0
    %4720 = vmatpush1.bf16.msra.mxu0 0
    %4721 = vmatprep.mubr.bf16.mxu0 %v4674
    %4722 = vmatmul.mubr.bf16.gmra.mrb[0].mxu0 %v4660
    %v4723 = vpop.f32.mrb[0].mxu0
    %v4724 = vadd.f32 0.0, %v4723
    %v4725 = vpop.f32.mrb[0].mxu0
    %v4726 = vpop.f32.mrb[0].mxu0
    %v4727 = vadd.f32 0.0, %v4726
    %v4728 = vpop.f32.mrb[0].mxu0
    %4729 = vmatprep.mubr.bf16.mxu0 %v4677
    %4730 = vmatmul.mubr.bf16.gmra.mrb[0].mxu0 %v4662
    %v4731 = vpop.f32.mrb[0].mxu0
    %v4732 = vadd.f32 0.0, %v4731
    %v4733 = vpop.f32.mrb[0].mxu0
    %v4734 = vpop.f32.mrb[0].mxu0
    %v4735 = vadd.f32 0.0, %v4734
    %v4736 = vpop.f32.mrb[0].mxu0
    %4737 = vmatprep.mubr.bf16.mxu0 %v4680
    %4738 = vmatmul.mubr.bf16.gmra.mrb[0].mxu0 %v4664
    %v4739 = vpop.f32.mrb[0].mxu0
    %v4740 = vadd.f32 0.0, %v4739
    %v4741 = vpop.f32.mrb[0].mxu0
    %v4742 = vpop.f32.mrb[0].mxu0
    %v4743 = vadd.f32 0.0, %v4742
    %v4744 = vpop.f32.mrb[0].mxu0
    %4745 = vmatprep.mubr.bf16.mxu0 %v4683
    %4746 = vmatmul.mubr.bf16.gmra.mrb[0].mxu0 %v4666
    %v4747 = vpop.f32.mrb[0].mxu0
    %v4748 = vadd.f32 0.0, %v4747
    %v4749 = vpop.f32.mrb[0].mxu0
    %v4750 = vpop.f32.mrb[0].mxu0
    %v4751 = vpop.f32.mrb[0].mxu0
    %4752 = vdwg.mxu0
    %4753 = vst [vmem:[#allocation3] sm:$0xff] %v4724
    %4754 = vst [vmem:[#allocation3 + $0x8] sm:$0xff] %v4727
    %4755 = vst [vmem:[#allocation3 + $0x10] sm:$0xff] %v4732
    %4756 = vst [vmem:[#allocation3 + $0x18] sm:$0xff] %v4735
    %4757 = vst [vmem:[#allocation3 + $0x20] sm:$0xff] %v4740
    %4758 = vst [vmem:[#allocation3 + $0x28] sm:$0xff] %v4743
    %4759 = vst [vmem:[#allocation3 + $0x30] sm:$0xff] %v4748
    %v4760 = vld [vmem:[#allocation3] sm:$0xff]
    %v4761 = vld [vmem:[#allocation3 + $0x8] sm:$0xff]
    %v4762 = vld [vmem:[#allocation3 + $0x10] sm:$0xff]
    %v4763 = vld [vmem:[#allocation3 + $0x18] sm:$0xff]
    %v4764 = vld [vmem:[#allocation3 + $0x20] sm:$0xff]
    %v4765 = vld [vmem:[#allocation3 + $0x28] sm:$0x3]
    %v4766 = vld [vmem:[#allocation3 + $0x1] sm:$0xff]
    %v4767 = vld [vmem:[#allocation3 + $0x9] sm:$0xff]
    %v4768 = vld [vmem:[#allocation3 + $0x11] sm:$0xff]
    %v4769 = vld [vmem:[#allocation3 + $0x19] sm:$0xff]
    %v4770 = vld [vmem:[#allocation3 + $0x21] sm:$0xff]
    %v4771 = vld [vmem:[#allocation3 + $0x29] sm:$0x3]
    %v4772 = vpack.c.bf16 %v4761, %v4760
    %v4773 = vpack.c.bf16 %v4767, %v4766
    %v4774 = vpack.c.bf16 %v4763, %v4762
    %v4775 = vpack.c.bf16 %v4769, %v4768
    %v4776 = vpack.c.bf16 %v4765, %v4764
    %v4777 = vpack.c.bf16 %v4771, %v4770
    %v4778 = vld [vmem:[%s7] sm:$0xf]
    %v4779 = vld [vmem:[%s7 + $0x4] sm:$0xf]
    %v4780 = vld [vmem:[%s7 + $0x8] sm:$0xf]
    %v4781 = vld [vmem:[%s7 + $0xc] sm:$0xf]
    %v4782 = vld [vmem:[%s7 + $0x10] sm:$0xf]
    %v4783 = vld [vmem:[%s7 + $0x14] sm:$0xf]
    %v4784 = vld [vmem:[%s7 + $0x18] sm:$0xf]
    %v4785 = vld [vmem:[%s7 + $0x1c] sm:$0xf]
    %v4786 = vld [vmem:[%s7 + $0x20] sm:$0xf]
    %v4787 = vld [vmem:[%s7 + $0x24] sm:$0xf]
    %v4788 = vld [vmem:[%s7 + $0x28] sm:$0xf]
    %v4789 = vld [vmem:[%s7 + $0x2c] sm:$0xf]
    %v4790 = vld [vmem:[%s7 + $0x30] sm:$0xf]
    %v4791 = vld [vmem:[%s7 + $0x34] sm:$0xf]
    %v4792 = vld [vmem:[%s7 + $0x38] sm:$0xf]
    %v4793 = vld [vmem:[%s7 + $0x3c] sm:$0xf]
    %v4794 = vld [vmem:[%s7 + $0x40] sm:$0xf]
    %v4795 = vld [vmem:[%s7 + $0x44] sm:$0xf]
    %v4796 = vld [vmem:[%s7 + $0x48] sm:$0xf]
    %v4797 = vld [vmem:[%s7 + $0x4c] sm:$0xf]
    %v4798 = vld [vmem:[%s7 + $0x50] sm:$0xf]
    %v4799 = vld [vmem:[%s7 + $0x54] sm:$0xf]
    %v4800 = vld [vmem:[%s7 + $0x58] sm:$0xf]
    %v4801 = vld [vmem:[%s7 + $0x5c] sm:$0xf]
    %v4802 = vld [vmem:[%s7 + $0x60] sm:$0xf]
    %v4803 = vld [vmem:[%s7 + $0x64] sm:$0xf]
    %v4804 = vld [vmem:[%s7 + $0x68] sm:$0xf]
    %v4805 = vld [vmem:[%s7 + $0x6c] sm:$0xf]
    %v4806 = vld [vmem:[%s7 + $0x70] sm:$0xf]
    %v4807 = vld [vmem:[%s7 + $0x74] sm:$0xf]
    %v4808 = vld [vmem:[%s7 + $0x78] sm:$0xf]
    %v4809 = vld [vmem:[%s7 + $0x7c] sm:$0xf]
    %v4810 = vld [vmem:[#allocation3 + $0x7] sm:$0xff]
    %v4811 = vld [vmem:[#allocation3 + $0xf] sm:$0xff]
    %v4812 = vld [vmem:[#allocation3 + $0x17] sm:$0xff]
    %v4813 = vld [vmem:[#allocation3 + $0x1f] sm:$0xff]
    %v4814 = vld [vmem:[#allocation3 + $0x27] sm:$0xff]
    %v4815 = vld [vmem:[#allocation3 + $0x2f] sm:$0x3]
    %v4816 = vld [vmem:[#allocation3 + $0x28] sm:$0xff]
    %v4817 = vld [vmem:[#allocation3 + $0x30] sm:$0x3]
    %v4818 = vpack.c.bf16 %v4811, %v4810
    %v4819 = vpack.c.bf16 %v4762, %v4761
    %v4820 = vpack.c.bf16 %v4813, %v4812
    %v4821 = vpack.c.bf16 %v4764, %v4763
    %v4822 = vpack.c.bf16 %v4815, %v4814
    %v4823 = vpack.c.bf16 %v4817, %v4816
    %v4824 = vld [vmem:[%s7 + $0x80] sm:$0xf]
    %v4825 = vld [vmem:[%s7 + $0x84] sm:$0xf]
    %v4826 = vld [vmem:[%s7 + $0x88] sm:$0xf]
    %v4827 = vld [vmem:[%s7 + $0x8c] sm:$0xf]
    %v4828 = vld [vmem:[%s7 + $0x90] sm:$0xf]
    %v4829 = vld [vmem:[%s7 + $0x94] sm:$0xf]
    %v4830 = vld [vmem:[%s7 + $0x98] sm:$0xf]
    %v4831 = vld [vmem:[%s7 + $0x9c] sm:$0xf]
    %v4832 = vld [vmem:[%s7 + $0xa0] sm:$0xf]
    %v4833 = vld [vmem:[%s7 + $0xa4] sm:$0xf]
    %v4834 = vld [vmem:[%s7 + $0xa8] sm:$0xf]
    %v4835 = vld [vmem:[%s7 + $0xac] sm:$0xf]
    %v4836 = vld [vmem:[%s7 + $0xb0] sm:$0xf]
    %v4837 = vld [vmem:[%s7 + $0xb4] sm:$0xf]
    %v4838 = vld [vmem:[%s7 + $0xb8] sm:$0xf]
    %v4839 = vld [vmem:[%s7 + $0xbc] sm:$0xf]
    %v4840 = vld [vmem:[%s7 + $0xc0] sm:$0xf]
    %v4841 = vld [vmem:[%s7 + $0xc4] sm:$0xf]
    %v4842 = vld [vmem:[%s7 + $0xc8] sm:$0xf]
    %v4843 = vld [vmem:[%s7 + $0xcc] sm:$0xf]
    %v4844 = vld [vmem:[%s7 + $0xd0] sm:$0xf]
    %v4845 = vld [vmem:[%s7 + $0xd4] sm:$0xf]
    %v4846 = vld [vmem:[%s7 + $0xd8] sm:$0xf]
    %v4847 = vld [vmem:[%s7 + $0xdc] sm:$0xf]
    %v4848 = vld [vmem:[%s7 + $0xe0] sm:$0xf]
    %v4849 = vld [vmem:[%s7 + $0xe4] sm:$0xf]
    %v4850 = vld [vmem:[%s7 + $0xe8] sm:$0xf]
    %v4851 = vld [vmem:[%s7 + $0xec] sm:$0xf]
    %v4852 = vld [vmem:[%s7 + $0xf0] sm:$0xf]
    %v4853 = vld [vmem:[%s7 + $0xf4] sm:$0xf]
    %v4854 = vld [vmem:[%s7 + $0xf8] sm:$0xf]
    %v4855 = vld [vmem:[%s7 + $0xfc] sm:$0xf]
    %v4888 = vunpack.c.l.b16 %v4824
    %v4889 = vunpack.c.l.b16 %v4825
    %v4890 = vunpack.c.l.b16 %v4826
    %v4891 = vunpack.c.l.b16 %v4827
    %v4892 = vunpack.c.l.b16 %v4828
    %v4893 = vunpack.c.l.b16 %v4829
    %v4894 = vunpack.c.l.b16 %v4830
    %v4895 = vunpack.c.l.b16 %v4831
    %v4896 = vunpack.c.l.b16 %v4832
    %v4897 = vunpack.c.l.b16 %v4833
    %v4898 = vunpack.c.l.b16 %v4834
    %v4899 = vunpack.c.l.b16 %v4835
    %v4900 = vunpack.c.l.b16 %v4836
    %v4901 = vunpack.c.l.b16 %v4837
    %v4902 = vunpack.c.l.b16 %v4838
    %v4903 = vunpack.c.l.b16 %v4839
    %v4904 = vunpack.c.l.b16 %v4840
    %v4905 = vunpack.c.l.b16 %v4841
    %v4906 = vunpack.c.l.b16 %v4842
    %v4907 = vunpack.c.l.b16 %v4843
    %v4908 = vunpack.c.l.b16 %v4844
    %v4909 = vunpack.c.l.b16 %v4845
    %v4910 = vunpack.c.l.b16 %v4846
    %v4911 = vunpack.c.l.b16 %v4847
    %v4912 = vunpack.c.l.b16 %v4848
    %v4913 = vunpack.c.l.b16 %v4849
    %v4914 = vunpack.c.l.b16 %v4850
    %v4915 = vunpack.c.l.b16 %v4851
    %v4916 = vunpack.c.l.b16 %v4852
    %v4917 = vunpack.c.l.b16 %v4853
    %v4918 = vunpack.c.l.b16 %v4854
    %v4919 = vunpack.c.l.b16 %v4855
    %v4920 = vpack.c.b16 %v4889, %v4888
    %v4921 = vpack.c.b16 %v4891, %v4890
    %v4922 = vpack.c.b16 %v4893, %v4892
    %v4923 = vpack.c.b16 %v4895, %v4894
    %v4924 = vpack.c.b16 %v4897, %v4896
    %v4925 = vpack.c.b16 %v4899, %v4898
    %v4926 = vpack.c.b16 %v4901, %v4900
    %v4927 = vpack.c.b16 %v4903, %v4902
    %v4928 = vpack.c.b16 %v4905, %v4904
    %v4929 = vpack.c.b16 %v4907, %v4906
    %v4930 = vpack.c.b16 %v4909, %v4908
    %v4931 = vpack.c.b16 %v4911, %v4910
    %v4932 = vpack.c.b16 %v4913, %v4912
    %v4933 = vpack.c.b16 %v4915, %v4914
    %v4934 = vpack.c.b16 %v4917, %v4916
    %v4935 = vpack.c.b16 %v4919, %v4918
    %4952 = vmatprep.subr.bf16.mxu0 0
    %4953 = vmatpush1.bf16.msra.mxu0 %v4920
    %4954 = vmatprep.subr.bf16.mxu0 0
    %4955 = vmatpush1.bf16.msra.mxu0 %v4921
    %4956 = vmatprep.subr.bf16.mxu0 0
    %4957 = vmatpush1.bf16.msra.mxu0 %v4922
    %4958 = vmatprep.subr.bf16.mxu0 0
    %4959 = vmatpush1.bf16.msra.mxu0 %v4923
    %4960 = vmatprep.subr.bf16.mxu0 0
    %4961 = vmatpush1.bf16.msra.mxu0 %v4924
    %4962 = vmatprep.subr.bf16.mxu0 0
    %4963 = vmatpush1.bf16.msra.mxu0 %v4925
    %4964 = vmatprep.subr.bf16.mxu0 0
    %4965 = vmatpush1.bf16.msra.mxu0 %v4926
    %4966 = vmatprep.subr.bf16.mxu0 0
    %4967 = vmatpush1.bf16.msra.mxu0 %v4927
    %4968 = vmatprep.subr.bf16.mxu0 0
    %4969 = vmatpush1.bf16.msra.mxu0 %v4928
    %4970 = vmatprep.subr.bf16.mxu0 0
    %4971 = vmatpush1.bf16.msra.mxu0 %v4929
    %4972 = vmatprep.subr.bf16.mxu0 0
    %4973 = vmatpush1.bf16.msra.mxu0 %v4930
    %4974 = vmatprep.subr.bf16.mxu0 0
    %4975 = vmatpush1.bf16.msra.mxu0 %v4931
    %4976 = vmatprep.subr.bf16.mxu0 0
    %4977 = vmatpush1.bf16.msra.mxu0 %v4932
    %4978 = vmatprep.subr.bf16.mxu0 0
    %4979 = vmatpush1.bf16.msra.mxu0 %v4933
    %4980 = vmatprep.subr.bf16.mxu0 0
    %4981 = vmatpush1.bf16.msra.mxu0 %v4934
    %4982 = vmatprep.subr.bf16.mxu0 0
    %4983 = vmatpush1.bf16.msra.mxu0 %v4935
    %4984 = vmatprep.mubr.bf16.mxu0 %v4819
    %4985 = vmatmul.mubr.bf16.gmra.mrb[0].mxu0 %v4818
    %v4986 = vpop.f32.mrb[0].mxu0
    %v4987 = vadd.f32 0.0, %v4986
    %v4988 = vpop.f32.mrb[0].mxu0
    %v4989 = vpop.f32.mrb[0].mxu0
    %v4990 = vadd.f32 0.0, %v4989
    %v4991 = vpop.f32.mrb[0].mxu0
    %4992 = vmatprep.mubr.bf16.mxu0 %v4821
    %4993 = vmatmul.mubr.bf16.gmra.mrb[0].mxu0 %v4820
    %v4994 = vpop.f32.mrb[0].mxu0
    %v4995 = vadd.f32 0.0, %v4994
    %v4996 = vpop.f32.mrb[0].mxu0
    %v4997 = vpop.f32.mrb[0].mxu0
    %v4998 = vadd.f32 0.0, %v4997
    %v4999 = vpop.f32.mrb[0].mxu0
    %5000 = vmatprep.mubr.bf16.mxu0 %v4823
    %5001 = vmatmul.mubr.bf16.gmra.mrb[0].mxu0 %v4822
    %v5002 = vpop.f32.mrb[0].mxu0
    %v5003 = vadd.f32 0.0, %v5002
    %v5004 = vpop.f32.mrb[0].mxu0
    %v5005 = vpop.f32.mrb[0].mxu0
    %v5006 = vadd.f32 0.0, %v5005
    %v5007 = vpop.f32.mrb[0].mxu0
    %5008 = vdwg.mxu0
    %v5041 = vunpack.c.l.b16 %v4778
    %v5042 = vunpack.c.l.b16 %v4779
    %v5043 = vunpack.c.l.b16 %v4780
    %v5044 = vunpack.c.l.b16 %v4781
    %v5045 = vunpack.c.l.b16 %v4782
    %v5046 = vunpack.c.l.b16 %v4783
    %v5047 = vunpack.c.l.b16 %v4784
    %v5048 = vunpack.c.l.b16 %v4785
    %v5049 = vunpack.c.l.b16 %v4786
    %v5050 = vunpack.c.l.b16 %v4787
    %v5051 = vunpack.c.l.b16 %v4788
    %v5052 = vunpack.c.l.b16 %v4789
    %v5053 = vunpack.c.l.b16 %v4790
    %v5054 = vunpack.c.l.b16 %v4791
    %v5055 = vunpack.c.l.b16 %v4792
    %v5056 = vunpack.c.l.b16 %v4793
    %v5057 = vunpack.c.l.b16 %v4794
    %v5058 = vunpack.c.l.b16 %v4795
    %v5059 = vunpack.c.l.b16 %v4796
    %v5060 = vunpack.c.l.b16 %v4797
    %v5061 = vunpack.c.l.b16 %v4798
    %v5062 = vunpack.c.l.b16 %v4799
    %v5063 = vunpack.c.l.b16 %v4800
    %v5064 = vunpack.c.l.b16 %v4801
    %v5065 = vunpack.c.l.b16 %v4802
    %v5066 = vunpack.c.l.b16 %v4803
    %v5067 = vunpack.c.l.b16 %v4804
    %v5068 = vunpack.c.l.b16 %v4805
    %v5069 = vunpack.c.l.b16 %v4806
    %v5070 = vunpack.c.l.b16 %v4807
    %v5071 = vunpack.c.l.b16 %v4808
    %v5072 = vunpack.c.l.b16 %v4809
    %v5073 = vpack.c.b16 %v5042, %v5041
    %v5074 = vpack.c.b16 %v5044, %v5043
    %v5075 = vpack.c.b16 %v5046, %v5045
    %v5076 = vpack.c.b16 %v5048, %v5047
    %v5077 = vpack.c.b16 %v5050, %v5049
    %v5078 = vpack.c.b16 %v5052, %v5051
    %v5079 = vpack.c.b16 %v5054, %v5053
    %v5080 = vpack.c.b16 %v5056, %v5055
    %v5081 = vpack.c.b16 %v5058, %v5057
    %v5082 = vpack.c.b16 %v5060, %v5059
    %v5083 = vpack.c.b16 %v5062, %v5061
    %v5084 = vpack.c.b16 %v5064, %v5063
    %v5085 = vpack.c.b16 %v5066, %v5065
    %v5086 = vpack.c.b16 %v5068, %v5067
    %v5087 = vpack.c.b16 %v5070, %v5069
    %v5088 = vpack.c.b16 %v5072, %v5071
    %5105 = vmatprep.subr.bf16.mxu0 0
    %5106 = vmatpush1.bf16.msra.mxu0 %v5073
    %5107 = vmatprep.subr.bf16.mxu0 0
    %5108 = vmatpush1.bf16.msra.mxu0 %v5074
    %5109 = vmatprep.subr.bf16.mxu0 0
    %5110 = vmatpush1.bf16.msra.mxu0 %v5075
    %5111 = vmatprep.subr.bf16.mxu0 0
    %5112 = vmatpush1.bf16.msra.mxu0 %v5076
    %5113 = vmatprep.subr.bf16.mxu0 0
    %5114 = vmatpush1.bf16.msra.mxu0 %v5077
    %5115 = vmatprep.subr.bf16.mxu0 0
    %5116 = vmatpush1.bf16.msra.mxu0 %v5078
    %5117 = vmatprep.subr.bf16.mxu0 0
    %5118 = vmatpush1.bf16.msra.mxu0 %v5079
    %5119 = vmatprep.subr.bf16.mxu0 0
    %5120 = vmatpush1.bf16.msra.mxu0 %v5080
    %5121 = vmatprep.subr.bf16.mxu0 0
    %5122 = vmatpush1.bf16.msra.mxu0 %v5081
    %5123 = vmatprep.subr.bf16.mxu0 0
    %5124 = vmatpush1.bf16.msra.mxu0 %v5082
    %5125 = vmatprep.subr.bf16.mxu0 0
    %5126 = vmatpush1.bf16.msra.mxu0 %v5083
    %5127 = vmatprep.subr.bf16.mxu0 0
    %5128 = vmatpush1.bf16.msra.mxu0 %v5084
    %5129 = vmatprep.subr.bf16.mxu0 0
    %5130 = vmatpush1.bf16.msra.mxu0 %v5085
    %5131 = vmatprep.subr.bf16.mxu0 0
    %5132 = vmatpush1.bf16.msra.mxu0 %v5086
    %5133 = vmatprep.subr.bf16.mxu0 0
    %5134 = vmatpush1.bf16.msra.mxu0 %v5087
    %5135 = vmatprep.subr.bf16.mxu0 0
    %5136 = vmatpush1.bf16.msra.mxu0 %v5088
    %5137 = vmatprep.mubr.bf16.mxu0 %v4773
    %5138 = vmatmul.mubr.bf16.gmra.mrb[0].mxu0 %v4772
    %v5139 = vpop.f32.mrb[0].mxu0
    %v5140 = vadd.f32 %v4987, %v5139
    %v5141 = vpop.f32.mrb[0].mxu0
    %v5142 = vpop.f32.mrb[0].mxu0
    %v5143 = vadd.f32 %v4990, %v5142
    %v5144 = vpop.f32.mrb[0].mxu0
    %5145 = vmatprep.mubr.bf16.mxu0 %v4775
    %5146 = vmatmul.mubr.bf16.gmra.mrb[0].mxu0 %v4774
    %v5147 = vpop.f32.mrb[0].mxu0
    %v5148 = vadd.f32 %v4995, %v5147
    %v5149 = vpop.f32.mrb[0].mxu0
    %v5150 = vpop.f32.mrb[0].mxu0
    %v5151 = vadd.f32 %v4998, %v5150
    %v5152 = vpop.f32.mrb[0].mxu0
    %5153 = vmatprep.mubr.bf16.mxu0 %v4777
    %5154 = vmatmul.mubr.bf16.gmra.mrb[0].mxu0 %v4776
    %v5155 = vpop.f32.mrb[0].mxu0
    %v5156 = vadd.f32 %v5003, %v5155
    %v5157 = vpop.f32.mrb[0].mxu0
    %v5158 = vpop.f32.mrb[0].mxu0
    %v5159 = vadd.f32 %v5006, %v5158
    %v5160 = vpop.f32.mrb[0].mxu0
    %5161 = vdwg.mxu0
    %v5162 = vld [vmem:[%s8] sm:$0x1]
    %v5164 = vlaneseq
    %v5165 = vshrl.u32 %v5164, 7
    %v5166 = vsub.s32 0, %v5165
    %v5167 = vrot.slane %v5162, %v5166
    %v5169 = vadd.f32 %v5140, %v5167
    %v5170 = vadd.f32 %v5143, %v5167
    %v5171 = vadd.f32 %v5148, %v5167
    %v5172 = vadd.f32 %v5151, %v5167
    %v5173 = vadd.f32 %v5156, %v5167
    %v5174 = vadd.f32 %v5159, %v5167
    %v5175 = vmax.f32 %v5169, 0.0
    %v5176 = vmax.f32 %v5170, 0.0
    %v5177 = vmax.f32 %v5171, 0.0
    %v5178 = vmax.f32 %v5172, 0.0
    %v5179 = vmax.f32 %v5173, 0.0
    %v5180 = vmax.f32 %v5174, 0.0
    %5181 = vst [vmem:[#allocation2] sm:$0xff] %v5175
    %5182 = vst [vmem:[#allocation2 + $0x8] sm:$0xff] %v5176
    %5183 = vst [vmem:[#allocation2 + $0x10] sm:$0xff] %v5177
    %5184 = vst [vmem:[#allocation2 + $0x18] sm:$0xff] %v5178
    %5185 = vst [vmem:[#allocation2 + $0x20] sm:$0xff] %v5179
    %5186 = vst [vmem:[#allocation2 + $0x28] sm:$0x3] %v5180
    %5187 = vst [vmem:[#allocation2 + $0x2a] sm:$0xff] 0.0
    %v5188 = vld [vmem:[#allocation2 + $0x1] sm:$0xff]
    %v5189 = vld [vmem:[#allocation2 + $0x9] sm:$0xff]
    %v5190 = vld [vmem:[#allocation2 + $0x11] sm:$0xff]
    %v5191 = vld [vmem:[#allocation2 + $0x19] sm:$0xff]
    %v5192 = vld [vmem:[#allocation2 + $0x21] sm:$0xff]
    %v5193 = vld [vmem:[#allocation2 + $0x29] sm:$0x3]
    %v5194 = vmax.f32 %v5175, %v5188
    %v5195 = vmax.f32 %v5176, %v5189
    %v5196 = vmax.f32 %v5177, %v5190
    %v5197 = vmax.f32 %v5178, %v5191
    %v5198 = vmax.f32 %v5179, %v5192
    %v5199 = vmax.f32 %v5180, %v5193
    %v5200 = vld [vmem:[#allocation2 + $0x7] sm:$0xff]
    %v5201 = vld [vmem:[#allocation2 + $0xf] sm:$0xff]
    %v5202 = vld [vmem:[#allocation2 + $0x17] sm:$0xff]
    %v5203 = vld [vmem:[#allocation2 + $0x1f] sm:$0xff]
    %v5204 = vld [vmem:[#allocation2 + $0x27] sm:$0xff]
    %v5205 = vld [vmem:[#allocation2 + $0x2f] sm:$0x3]
    %v5206 = vld [vmem:[#allocation2 + $0x8] sm:$0xff]
    %v5207 = vld [vmem:[#allocation2 + $0x10] sm:$0xff]
    %v5208 = vld [vmem:[#allocation2 + $0x18] sm:$0xff]
    %v5209 = vld [vmem:[#allocation2 + $0x20] sm:$0xff]
    %v5210 = vld [vmem:[#allocation2 + $0x28] sm:$0xff]
    %v5211 = vld [vmem:[#allocation2 + $0x30] sm:$0x3]
    %v5212 = vmax.f32 %v5200, %v5206
    %v5213 = vmax.f32 %v5201, %v5207
    %v5214 = vmax.f32 %v5202, %v5208
    %v5215 = vmax.f32 %v5203, %v5209
    %v5216 = vmax.f32 %v5204, %v5210
    %v5217 = vmax.f32 %v5205, %v5211
    %v5218 = vmax.f32 %v5194, %v5212
    %v5219 = vmax.f32 %v5195, %v5213
    %v5220 = vmax.f32 %v5196, %v5214
    %v5221 = vmax.f32 %v5197, %v5215
    %v5222 = vmax.f32 %v5198, %v5216
    %v5223 = vmax.f32 %v5199, %v5217
    %v5224 = vld [vmem:[%s9] sm:$0xf]
    %v5225 = vld [vmem:[%s9 + $0x4] sm:$0xf]
    %v5226 = vpack.c.bf16 %v5219, %v5218
    %v5227 = vpack.c.bf16 %v5221, %v5220
    %v5228 = vpack.c.bf16 %v5223, %v5222
    %v5231 = vunpack.c.l.b16 %v5224
    %v5232 = vunpack.c.l.b16 %v5225
    %v5233 = vpack.c.b16 %v5232, %v5231
    %vm5234 = vcmask 343040
    %v5236 = vsel %vm5234, %v5233, 0
    %vm5238 = vcmask 1044480
    %v5240 = vsel %vm5238, %v5228, 0
    %5242 = vmatprep.subr.bf16.mxu0 0
    %5243 = vmatpush1.bf16.msra.mxu0 %v5226
    %5244 = vmatprep.subr.bf16.mxu0 0
    %5245 = vmatpush1.bf16.msra.mxu0 %v5227
    %5246 = vmatprep.subr.bf16.mxu0 0
    %5247 = vmatpush1.bf16.msra.mxu0 %v5240
    %5248 = vmatprep.subr.bf16.mxu0 0
    %5249 = vmatpush1.bf16.msra.mxu0 0
    %5250 = vmatprep.subr.bf16.mxu0 0
    %5251 = vmatpush1.bf16.msra.mxu0 0
    %5252 = vmatprep.subr.bf16.mxu0 0
    %5253 = vmatpush1.bf16.msra.mxu0 0
    %5254 = vmatprep.subr.bf16.mxu0 0
    %5255 = vmatpush1.bf16.msra.mxu0 0
    %5256 = vmatprep.subr.bf16.mxu0 0
    %5257 = vmatpush1.bf16.msra.mxu0 0
    %5258 = vmatprep.subr.bf16.mxu0 0
    %5259 = vmatpush1.bf16.msra.mxu0 0
    %5260 = vmatprep.subr.bf16.mxu0 0
    %5261 = vmatpush1.bf16.msra.mxu0 0
    %5262 = vmatprep.subr.bf16.mxu0 0
    %5263 = vmatpush1.bf16.msra.mxu0 0
    %5264 = vmatprep.subr.bf16.mxu0 0
    %5265 = vmatpush1.bf16.msra.mxu0 0
    %5266 = vmatprep.subr.bf16.mxu0 0
    %5267 = vmatpush1.bf16.msra.mxu0 0
    %5268 = vmatprep.subr.bf16.mxu0 0
    %5269 = vmatpush1.bf16.msra.mxu0 0
    %5270 = vmatprep.subr.bf16.mxu0 0
    %5271 = vmatpush1.bf16.msra.mxu0 0
    %5272 = vmatprep.subr.bf16.mxu0 0
    %5273 = vmatpush1.bf16.msra.mxu0 0
    %5274 = vmatprep.mubr.bf16.mxu0 0
    %5275 = vmatmul.mubr.bf16.gmra.mrb[0].mxu0 %v5236
    %v5276 = vpop.f32.mrb[0].mxu0
    %v5277 = vadd.f32 0.0, %v5276
    %v5278 = vpop.f32.mrb[0].mxu0
    %v5279 = vpop.f32.mrb[0].mxu0
    %v5280 = vadd.f32 0.0, %v5279
    %v5281 = vpop.f32.mrb[0].mxu0
    %5282 = vdwg.mxu0
    %5283 = vst [vmem:[#allocation3] sm:$0xff] %v5277
    %5284 = vst [vmem:[#allocation3 + $0x8] sm:$0xff] %v5280
    %v5285 = vld [vmem:[#allocation3] sm:$0x3f]
    %v5286 = vld [vmem:[#allocation3 + $0x1] sm:$0x3f]
    %v5287 = vpack.c.bf16 %v5285, %v5285
    %v5288 = vpack.c.bf16 %v5286, %v5286
    %v5289 = vld [vmem:[%s10] sm:$0xff]
    %v5290 = vld [vmem:[%s10 + $0x8] sm:$0xff]
    %v5291 = vld [vmem:[%s10 + $0x10] sm:$0xff]
    %v5292 = vld [vmem:[%s10 + $0x18] sm:$0xff]
    %v5293 = vld [vmem:[%s10 + $0x20] sm:$0xff]
    %v5294 = vld [vmem:[%s10 + $0x28] sm:$0xff]
    %v5295 = vld [vmem:[%s10 + $0x30] sm:$0xff]
    %v5296 = vld [vmem:[%s10 + $0x38] sm:$0xff]
    %v5297 = vld [vmem:[%s10 + $0x40] sm:$0xff]
    %v5298 = vld [vmem:[%s10 + $0x48] sm:$0xff]
    %v5299 = vld [vmem:[%s10 + $0x50] sm:$0xff]
    %v5300 = vld [vmem:[%s10 + $0x58] sm:$0xff]
    %v5301 = vld [vmem:[%s10 + $0x60] sm:$0xff]
    %v5302 = vld [vmem:[%s10 + $0x68] sm:$0xff]
    %v5303 = vld [vmem:[%s10 + $0x70] sm:$0xff]
    %v5304 = vld [vmem:[%s10 + $0x78] sm:$0xff]
    %v5305 = vld [vmem:[%s10 + $0x80] sm:$0xff]
    %v5306 = vld [vmem:[%s10 + $0x88] sm:$0xff]
    %v5307 = vld [vmem:[%s10 + $0x90] sm:$0xff]
    %v5308 = vld [vmem:[%s10 + $0x98] sm:$0xff]
    %v5309 = vld [vmem:[%s10 + $0xa0] sm:$0xff]
    %v5310 = vld [vmem:[%s10 + $0xa8] sm:$0xff]
    %v5311 = vld [vmem:[%s10 + $0xb0] sm:$0xff]
    %v5312 = vld [vmem:[%s10 + $0xb8] sm:$0xff]
    %v5313 = vld [vmem:[%s10 + $0xc0] sm:$0xff]
    %v5314 = vld [vmem:[%s10 + $0xc8] sm:$0xff]
    %v5315 = vld [vmem:[%s10 + $0xd0] sm:$0xff]
    %v5316 = vld [vmem:[%s10 + $0xd8] sm:$0xff]
    %v5317 = vld [vmem:[%s10 + $0xe0] sm:$0xff]
    %v5318 = vld [vmem:[%s10 + $0xe8] sm:$0xff]
    %v5319 = vld [vmem:[%s10 + $0xf0] sm:$0xff]
    %v5320 = vld [vmem:[%s10 + $0xf8] sm:$0xff]
    %v5321 = vld [vmem:[#allocation3 + $0x3] sm:$0x3f]
    %v5322 = vld [vmem:[#allocation3 + $0x4] sm:$0x3f]
    %v5323 = vpack.c.bf16 %v5321, %v5321
    %v5324 = vpack.c.bf16 %v5322, %v5322
    %v5325 = vld [vmem:[%s10 + $0x100] sm:$0xff]
    %v5326 = vld [vmem:[%s10 + $0x108] sm:$0xff]
    %v5327 = vld [vmem:[%s10 + $0x110] sm:$0xff]
    %v5328 = vld [vmem:[%s10 + $0x118] sm:$0xff]
    %v5329 = vld [vmem:[%s10 + $0x120] sm:$0xff]
    %v5330 = vld [vmem:[%s10 + $0x128] sm:$0xff]
    %v5331 = vld [vmem:[%s10 + $0x130] sm:$0xff]
    %v5332 = vld [vmem:[%s10 + $0x138] sm:$0xff]
    %v5333 = vld [vmem:[%s10 + $0x140] sm:$0xff]
    %v5334 = vld [vmem:[%s10 + $0x148] sm:$0xff]
    %v5335 = vld [vmem:[%s10 + $0x150] sm:$0xff]
    %v5336 = vld [vmem:[%s10 + $0x158] sm:$0xff]
    %v5337 = vld [vmem:[%s10 + $0x160] sm:$0xff]
    %v5338 = vld [vmem:[%s10 + $0x168] sm:$0xff]
    %v5339 = vld [vmem:[%s10 + $0x170] sm:$0xff]
    %v5340 = vld [vmem:[%s10 + $0x178] sm:$0xff]
    %v5341 = vld [vmem:[%s10 + $0x180] sm:$0xff]
    %v5342 = vld [vmem:[%s10 + $0x188] sm:$0xff]
    %v5343 = vld [vmem:[%s10 + $0x190] sm:$0xff]
    %v5344 = vld [vmem:[%s10 + $0x198] sm:$0xff]
    %v5345 = vld [vmem:[%s10 + $0x1a0] sm:$0xff]
    %v5346 = vld [vmem:[%s10 + $0x1a8] sm:$0xff]
    %v5347 = vld [vmem:[%s10 + $0x1b0] sm:$0xff]
    %v5348 = vld [vmem:[%s10 + $0x1b8] sm:$0xff]
    %v5349 = vld [vmem:[%s10 + $0x1c0] sm:$0xff]
    %v5350 = vld [vmem:[%s10 + $0x1c8] sm:$0xff]
    %v5351 = vld [vmem:[%s10 + $0x1d0] sm:$0xff]
    %v5352 = vld [vmem:[%s10 + $0x1d8] sm:$0xff]
    %v5353 = vld [vmem:[%s10 + $0x1e0] sm:$0xff]
    %v5354 = vld [vmem:[%s10 + $0x1e8] sm:$0xff]
    %v5355 = vld [vmem:[%s10 + $0x1f0] sm:$0xff]
    %v5356 = vld [vmem:[%s10 + $0x1f8] sm:$0xff]
    %v5389 = vunpack.c.l.b16 %v5325
    %v5390 = vunpack.c.h.b16 %v5325
    %v5391 = vunpack.c.l.b16 %v5326
    %v5392 = vunpack.c.h.b16 %v5326
    %v5393 = vunpack.c.l.b16 %v5327
    %v5394 = vunpack.c.h.b16 %v5327
    %v5395 = vunpack.c.l.b16 %v5328
    %v5396 = vunpack.c.h.b16 %v5328
    %v5397 = vunpack.c.l.b16 %v5329
    %v5398 = vunpack.c.h.b16 %v5329
    %v5399 = vunpack.c.l.b16 %v5330
    %v5400 = vunpack.c.h.b16 %v5330
    %v5401 = vunpack.c.l.b16 %v5331
    %v5402 = vunpack.c.h.b16 %v5331
    %v5403 = vunpack.c.l.b16 %v5332
    %v5404 = vunpack.c.h.b16 %v5332
    %v5405 = vunpack.c.l.b16 %v5333
    %v5406 = vunpack.c.h.b16 %v5333
    %v5407 = vunpack.c.l.b16 %v5334
    %v5408 = vunpack.c.h.b16 %v5334
    %v5409 = vunpack.c.l.b16 %v5335
    %v5410 = vunpack.c.h.b16 %v5335
    %v5411 = vunpack.c.l.b16 %v5336
    %v5412 = vunpack.c.h.b16 %v5336
    %v5413 = vunpack.c.l.b16 %v5337
    %v5414 = vunpack.c.h.b16 %v5337
    %v5415 = vunpack.c.l.b16 %v5338
    %v5416 = vunpack.c.h.b16 %v5338
    %v5417 = vunpack.c.l.b16 %v5339
    %v5418 = vunpack.c.h.b16 %v5339
    %v5419 = vunpack.c.l.b16 %v5340
    %v5420 = vunpack.c.h.b16 %v5340
    %v5421 = vunpack.c.l.b16 %v5341
    %v5422 = vunpack.c.h.b16 %v5341
    %v5423 = vunpack.c.l.b16 %v5342
    %v5424 = vunpack.c.h.b16 %v5342
    %v5425 = vunpack.c.l.b16 %v5343
    %v5426 = vunpack.c.h.b16 %v5343
    %v5427 = vunpack.c.l.b16 %v5344
    %v5428 = vunpack.c.h.b16 %v5344
    %v5429 = vunpack.c.l.b16 %v5345
    %v5430 = vunpack.c.h.b16 %v5345
    %v5431 = vunpack.c.l.b16 %v5346
    %v5432 = vunpack.c.h.b16 %v5346
    %v5433 = vunpack.c.l.b16 %v5347
    %v5434 = vunpack.c.h.b16 %v5347
    %v5435 = vunpack.c.l.b16 %v5348
    %v5436 = vunpack.c.h.b16 %v5348
    %v5437 = vunpack.c.l.b16 %v5349
    %v5438 = vunpack.c.h.b16 %v5349
    %v5439 = vunpack.c.l.b16 %v5350
    %v5440 = vunpack.c.h.b16 %v5350
    %v5441 = vunpack.c.l.b16 %v5351
    %v5442 = vunpack.c.h.b16 %v5351
    %v5443 = vunpack.c.l.b16 %v5352
    %v5444 = vunpack.c.h.b16 %v5352
    %v5445 = vunpack.c.l.b16 %v5353
    %v5446 = vunpack.c.h.b16 %v5353
    %v5447 = vunpack.c.l.b16 %v5354
    %v5448 = vunpack.c.h.b16 %v5354
    %v5449 = vunpack.c.l.b16 %v5355
    %v5450 = vunpack.c.h.b16 %v5355
    %v5451 = vunpack.c.l.b16 %v5356
    %v5452 = vunpack.c.h.b16 %v5356
    %v5453 = vpack.c.b16 %v5391, %v5389
    %v5454 = vpack.c.b16 %v5392, %v5390
    %v5455 = vpack.c.b16 %v5395, %v5393
    %v5456 = vpack.c.b16 %v5396, %v5394
    %v5457 = vpack.c.b16 %v5399, %v5397
    %v5458 = vpack.c.b16 %v5400, %v5398
    %v5459 = vpack.c.b16 %v5403, %v5401
    %v5460 = vpack.c.b16 %v5404, %v5402
    %v5461 = vpack.c.b16 %v5407, %v5405
    %v5462 = vpack.c.b16 %v5408, %v5406
    %v5463 = vpack.c.b16 %v5411, %v5409
    %v5464 = vpack.c.b16 %v5412, %v5410
    %v5465 = vpack.c.b16 %v5415, %v5413
    %v5466 = vpack.c.b16 %v5416, %v5414
    %v5467 = vpack.c.b16 %v5419, %v5417
    %v5468 = vpack.c.b16 %v5420, %v5418
    %v5469 = vpack.c.b16 %v5423, %v5421
    %v5470 = vpack.c.b16 %v5424, %v5422
    %v5471 = vpack.c.b16 %v5427, %v5425
    %v5472 = vpack.c.b16 %v5428, %v5426
    %v5473 = vpack.c.b16 %v5431, %v5429
    %v5474 = vpack.c.b16 %v5432, %v5430
    %v5475 = vpack.c.b16 %v5435, %v5433
    %v5476 = vpack.c.b16 %v5436, %v5434
    %v5477 = vpack.c.b16 %v5439, %v5437
    %v5478 = vpack.c.b16 %v5440, %v5438
    %v5479 = vpack.c.b16 %v5443, %v5441
    %v5480 = vpack.c.b16 %v5444, %v5442
    %v5481 = vpack.c.b16 %v5447, %v5445
    %v5482 = vpack.c.b16 %v5448, %v5446
    %v5483 = vpack.c.b16 %v5451, %v5449
    %v5484 = vpack.c.b16 %v5452, %v5450
    %5517 = vmatprep.subr.bf16.mxu0 %v5454
    %5518 = vmatpush1.bf16.msra.mxu0 %v5453
    %5519 = vmatprep.subr.bf16.mxu0 %v5456
    %5520 = vmatpush1.bf16.msra.mxu0 %v5455
    %5521 = vmatprep.subr.bf16.mxu0 %v5458
    %5522 = vmatpush1.bf16.msra.mxu0 %v5457
    %5523 = vmatprep.subr.bf16.mxu0 %v5460
    %5524 = vmatpush1.bf16.msra.mxu0 %v5459
    %5525 = vmatprep.subr.bf16.mxu0 %v5462
    %5526 = vmatpush1.bf16.msra.mxu0 %v5461
    %5527 = vmatprep.subr.bf16.mxu0 %v5464
    %5528 = vmatpush1.bf16.msra.mxu0 %v5463
    %5529 = vmatprep.subr.bf16.mxu0 %v5466
    %5530 = vmatpush1.bf16.msra.mxu0 %v5465
    %5531 = vmatprep.subr.bf16.mxu0 %v5468
    %5532 = vmatpush1.bf16.msra.mxu0 %v5467
    %5533 = vmatprep.subr.bf16.mxu0 %v5470
    %5534 = vmatpush1.bf16.msra.mxu0 %v5469
    %5535 = vmatprep.subr.bf16.mxu0 %v5472
    %5536 = vmatpush1.bf16.msra.mxu0 %v5471
    %5537 = vmatprep.subr.bf16.mxu0 %v5474
    %5538 = vmatpush1.bf16.msra.mxu0 %v5473
    %5539 = vmatprep.subr.bf16.mxu0 %v5476
    %5540 = vmatpush1.bf16.msra.mxu0 %v5475
    %5541 = vmatprep.subr.bf16.mxu0 %v5478
    %5542 = vmatpush1.bf16.msra.mxu0 %v5477
    %5543 = vmatprep.subr.bf16.mxu0 %v5480
    %5544 = vmatpush1.bf16.msra.mxu0 %v5479
    %5545 = vmatprep.subr.bf16.mxu0 %v5482
    %5546 = vmatpush1.bf16.msra.mxu0 %v5481
    %5547 = vmatprep.subr.bf16.mxu0 %v5484
    %5548 = vmatpush1.bf16.msra.mxu0 %v5483
    %5549 = vmatprep.mubr.bf16.mxu0 %v5324
    %5550 = vmatmul.mubr.bf16.gmra.mrb[0].mxu0 %v5323
    %v5551 = vpop.f32.mrb[0].mxu0
    %v5552 = vadd.f32 0.0, %v5551
    %v5553 = vpop.f32.mrb[0].mxu0
    %v5554 = vadd.f32 0.0, %v5553
    %v5555 = vpop.f32.mrb[0].mxu0
    %v5556 = vpop.f32.mrb[0].mxu0
    %5557 = vdwg.mxu0
    %v5590 = vunpack.c.l.b16 %v5289
    %v5591 = vunpack.c.h.b16 %v5289
    %v5592 = vunpack.c.l.b16 %v5290
    %v5593 = vunpack.c.h.b16 %v5290
    %v5594 = vunpack.c.l.b16 %v5291
    %v5595 = vunpack.c.h.b16 %v5291
    %v5596 = vunpack.c.l.b16 %v5292
    %v5597 = vunpack.c.h.b16 %v5292
    %v5598 = vunpack.c.l.b16 %v5293
    %v5599 = vunpack.c.h.b16 %v5293
    %v5600 = vunpack.c.l.b16 %v5294
    %v5601 = vunpack.c.h.b16 %v5294
    %v5602 = vunpack.c.l.b16 %v5295
    %v5603 = vunpack.c.h.b16 %v5295
    %v5604 = vunpack.c.l.b16 %v5296
    %v5605 = vunpack.c.h.b16 %v5296
    %v5606 = vunpack.c.l.b16 %v5297
    %v5607 = vunpack.c.h.b16 %v5297
    %v5608 = vunpack.c.l.b16 %v5298
    %v5609 = vunpack.c.h.b16 %v5298
    %v5610 = vunpack.c.l.b16 %v5299
    %v5611 = vunpack.c.h.b16 %v5299
    %v5612 = vunpack.c.l.b16 %v5300
    %v5613 = vunpack.c.h.b16 %v5300
    %v5614 = vunpack.c.l.b16 %v5301
    %v5615 = vunpack.c.h.b16 %v5301
    %v5616 = vunpack.c.l.b16 %v5302
    %v5617 = vunpack.c.h.b16 %v5302
    %v5618 = vunpack.c.l.b16 %v5303
    %v5619 = vunpack.c.h.b16 %v5303
    %v5620 = vunpack.c.l.b16 %v5304
    %v5621 = vunpack.c.h.b16 %v5304
    %v5622 = vunpack.c.l.b16 %v5305
    %v5623 = vunpack.c.h.b16 %v5305
    %v5624 = vunpack.c.l.b16 %v5306
    %v5625 = vunpack.c.h.b16 %v5306
    %v5626 = vunpack.c.l.b16 %v5307
    %v5627 = vunpack.c.h.b16 %v5307
    %v5628 = vunpack.c.l.b16 %v5308
    %v5629 = vunpack.c.h.b16 %v5308
    %v5630 = vunpack.c.l.b16 %v5309
    %v5631 = vunpack.c.h.b16 %v5309
    %v5632 = vunpack.c.l.b16 %v5310
    %v5633 = vunpack.c.h.b16 %v5310
    %v5634 = vunpack.c.l.b16 %v5311
    %v5635 = vunpack.c.h.b16 %v5311
    %v5636 = vunpack.c.l.b16 %v5312
    %v5637 = vunpack.c.h.b16 %v5312
    %v5638 = vunpack.c.l.b16 %v5313
    %v5639 = vunpack.c.h.b16 %v5313
    %v5640 = vunpack.c.l.b16 %v5314
    %v5641 = vunpack.c.h.b16 %v5314
    %v5642 = vunpack.c.l.b16 %v5315
    %v5643 = vunpack.c.h.b16 %v5315
    %v5644 = vunpack.c.l.b16 %v5316
    %v5645 = vunpack.c.h.b16 %v5316
    %v5646 = vunpack.c.l.b16 %v5317
    %v5647 = vunpack.c.h.b16 %v5317
    %v5648 = vunpack.c.l.b16 %v5318
    %v5649 = vunpack.c.h.b16 %v5318
    %v5650 = vunpack.c.l.b16 %v5319
    %v5651 = vunpack.c.h.b16 %v5319
    %v5652 = vunpack.c.l.b16 %v5320
    %v5653 = vunpack.c.h.b16 %v5320
    %v5654 = vpack.c.b16 %v5592, %v5590
    %v5655 = vpack.c.b16 %v5593, %v5591
    %v5656 = vpack.c.b16 %v5596, %v5594
    %v5657 = vpack.c.b16 %v5597, %v5595
    %v5658 = vpack.c.b16 %v5600, %v5598
    %v5659 = vpack.c.b16 %v5601, %v5599
    %v5660 = vpack.c.b16 %v5604, %v5602
    %v5661 = vpack.c.b16 %v5605, %v5603
    %v5662 = vpack.c.b16 %v5608, %v5606
    %v5663 = vpack.c.b16 %v5609, %v5607
    %v5664 = vpack.c.b16 %v5612, %v5610
    %v5665 = vpack.c.b16 %v5613, %v5611
    %v5666 = vpack.c.b16 %v5616, %v5614
    %v5667 = vpack.c.b16 %v5617, %v5615
    %v5668 = vpack.c.b16 %v5620, %v5618
    %v5669 = vpack.c.b16 %v5621, %v5619
    %v5670 = vpack.c.b16 %v5624, %v5622
    %v5671 = vpack.c.b16 %v5625, %v5623
    %v5672 = vpack.c.b16 %v5628, %v5626
    %v5673 = vpack.c.b16 %v5629, %v5627
    %v5674 = vpack.c.b16 %v5632, %v5630
    %v5675 = vpack.c.b16 %v5633, %v5631
    %v5676 = vpack.c.b16 %v5636, %v5634
    %v5677 = vpack.c.b16 %v5637, %v5635
    %v5678 = vpack.c.b16 %v5640, %v5638
    %v5679 = vpack.c.b16 %v5641, %v5639
    %v5680 = vpack.c.b16 %v5644, %v5642
    %v5681 = vpack.c.b16 %v5645, %v5643
    %v5682 = vpack.c.b16 %v5648, %v5646
    %v5683 = vpack.c.b16 %v5649, %v5647
    %v5684 = vpack.c.b16 %v5652, %v5650
    %v5685 = vpack.c.b16 %v5653, %v5651
    %5718 = vmatprep.subr.bf16.mxu0 %v5655
    %5719 = vmatpush1.bf16.msra.mxu0 %v5654
    %5720 = vmatprep.subr.bf16.mxu0 %v5657
    %5721 = vmatpush1.bf16.msra.mxu0 %v5656
    %5722 = vmatprep.subr.bf16.mxu0 %v5659
    %5723 = vmatpush1.bf16.msra.mxu0 %v5658
    %5724 = vmatprep.subr.bf16.mxu0 %v5661
    %5725 = vmatpush1.bf16.msra.mxu0 %v5660
    %5726 = vmatprep.subr.bf16.mxu0 %v5663
    %5727 = vmatpush1.bf16.msra.mxu0 %v5662
    %5728 = vmatprep.subr.bf16.mxu0 %v5665
    %5729 = vmatpush1.bf16.msra.mxu0 %v5664
    %5730 = vmatprep.subr.bf16.mxu0 %v5667
    %5731 = vmatpush1.bf16.msra.mxu0 %v5666
    %5732 = vmatprep.subr.bf16.mxu0 %v5669
    %5733 = vmatpush1.bf16.msra.mxu0 %v5668
    %5734 = vmatprep.subr.bf16.mxu0 %v5671
    %5735 = vmatpush1.bf16.msra.mxu0 %v5670
    %5736 = vmatprep.subr.bf16.mxu0 %v5673
    %5737 = vmatpush1.bf16.msra.mxu0 %v5672
    %5738 = vmatprep.subr.bf16.mxu0 %v5675
    %5739 = vmatpush1.bf16.msra.mxu0 %v5674
    %5740 = vmatprep.subr.bf16.mxu0 %v5677
    %5741 = vmatpush1.bf16.msra.mxu0 %v5676
    %5742 = vmatprep.subr.bf16.mxu0 %v5679
    %5743 = vmatpush1.bf16.msra.mxu0 %v5678
    %5744 = vmatprep.subr.bf16.mxu0 %v5681
    %5745 = vmatpush1.bf16.msra.mxu0 %v5680
    %5746 = vmatprep.subr.bf16.mxu0 %v5683
    %5747 = vmatpush1.bf16.msra.mxu0 %v5682
    %5748 = vmatprep.subr.bf16.mxu0 %v5685
    %5749 = vmatpush1.bf16.msra.mxu0 %v5684
    %5750 = vmatprep.mubr.bf16.mxu0 %v5288
    %5751 = vmatmul.mubr.bf16.gmra.mrb[0].mxu0 %v5287
    %v5752 = vpop.f32.mrb[0].mxu0
    %v5753 = vadd.f32 %v5552, %v5752
    %v5754 = vpop.f32.mrb[0].mxu0
    %v5755 = vadd.f32 %v5554, %v5754
    %v5756 = vpop.f32.mrb[0].mxu0
    %v5757 = vpop.f32.mrb[0].mxu0
    %5758 = vdwg.mxu0
    %v5759 = vld [vmem:[%s11] sm:$0x3]
    %v5761 = vlaneseq
    %v5762 = vshrl.u32 %v5761, 7
    %v5763 = vsub.s32 0, %v5762
    %v5764 = vrot.slane %v5759, %v5763
    %v5765 = vlaneseq
    %v5766 = vshrl.u32 %v5765, 7
    %v5767 = vsub.s32 1, %v5766
    %v5768 = vrot.slane %v5759, %v5767
    %v5771 = vadd.f32 %v5753, %v5764
    %v5772 = vadd.f32 %v5755, %v5768
    %v5773 = vmax.f32 %v5771, 0.0
    %v5774 = vmax.f32 %v5772, 0.0
    %v5777 = vrot.slane %v5773, 1
    %v5778 = vrot.slane %v5774, 1
    %v5781 = vmax.f32 %v5773, %v5777
    %v5782 = vmax.f32 %v5774, %v5778
    %v5785 = vrot.slane %v5781, 3
    %v5786 = vrot.slane %v5782, 3
    %v5789 = vmax.f32 %v5781, %v5785
    %v5790 = vmax.f32 %v5782, %v5786
    %v5793 = vcombine.low %v5789, %v5790
    %v5795 = vunpack.c.l.s4 1966171168
    %v5796 = vunpack.c.0.s8 %v5795
    %v5797 = vlaneseq
    %v5798 = vshrl.u32 %v5797, 7
    %v5799 = vsub.s32 %v5796, %v5798
    %v5800 = vrot.slane %v5793, %v5799
    %v5802 = vunpack.c.l.s4 1966171168
    %v5803 = vunpack.c.0.s8 %v5802
    %v5804 = vlaneseq
    %v5805 = vshrl.u32 %v5804, 7
    %v5806 = vsub.s32 %v5803, %v5805
    %v5807 = vrot.slane %v5800, %v5806
    %v5809 = vlaneseq
    %vm5810 = vcmp.ge.s32.totalorder %v5809, 0
    %vm5811 = vcmp.lt.s32.totalorder %v5809, 256
    %vm5812 = vmand %vm5810, %vm5811
    %s5813 = sshra.s32 %s43, 3
    %s5814 = sand.u32 %s43, 7
    %s5815 = sshra.s32 %s43, 3
    %s5816 = sand.u32 %s43, 7
    %s5817 = smul.u32 %s5813, 2
    %s5818 = smul.u32 %s5817, 8
    %s5819 = sadd.s32 %s5818, %s5816
    %s5820 = scalar_lea.vmem [#allocation4], %s5819
    %5821 = vst.msk [vmem:[%s5820] ss:$8 sm:$0x3] %vm5812, %v5807
    %5822 = vst.msk [vmem:[%s5820] ss:$8 sm:$0x0] %vm5812, %v5807
  $region54: #{cnn_forward.2} parent=0 // loop_footer
    %s47 = sadd.s32 1, %s43
  $region55: #{cnn_forward.2} parent=0 // loop_footer_branch
    %42 = sbr.rel target = $region51
  $region56: #{cnn_forward.2} parent=0 // loop_exit
    _
  %v5823 = vld [vmem:[#allocation4] sm:$0xff]
  %v5824 = vld [vmem:[#allocation4 + $0x8] sm:$0xff]
  %v5825 = vpack.c.bf16 %v5823, %v5823
  %v5826 = vpack.c.bf16 %v5824, %v5824
  %v5829 = vunpack.c.l.b16 %v5825
  %v5830 = vunpack.c.l.b16 %v5826
  %v5831 = vpack.c.b16 %v5830, %v5829
  %5833 = vst [vmem:[%s12] sm:$0xff] %v5831
  // Predicated region
  $region57: #{cnn_forward.2} parent=0 // pred_check
    _
  $region58: #{cnn_forward.2} parent=0 // pred_check_branch
    %5835 = sbr.rel (0) target = $region60
  $region59: #{cnn_forward.2} parent=0 // pred_region
    _
  $region60: #{cnn_forward.2} parent=0 // pred_fallthru
    _
  // Predicated region
  $region61: #{cnn_forward.2} parent=0 // pred_check
    _
  $region62: #{cnn_forward.2} parent=0 // pred_check_branch
    %5837 = sbr.rel (0) target = $region64
  $region63: #{cnn_forward.2} parent=0 // pred_region
    _
  $region64: #{cnn_forward.2} parent=0 // pred_fallthru
    _

</llo_original>
